<compile_context>
chip_gen: v6e
topology: v6e:2x2x1
jax: 0.10.0
libtpu: 0.0.40
codegen_flags: <defaults>
</compile_context>

<pallas_src>
import functools

import jax
import jax.numpy as jnp
from jax import lax
from jax.experimental import pallas as pl
from jax.experimental.pallas import tpu as pltpu

LEAKY_SLOPE = 0.01   # F.leaky_relu default
BN_EPS = 1e-5        # nn.BatchNorm2d default
LANE = 128


def _round_up(x, m):
    return (x + m - 1) // m * m


def _leaky_relu(v):
    return jnp.where(v > 0, v, LEAKY_SLOPE * v)


def _vmem_capacity():
    """Generation-aware VMEM size; conservative fallback (v7x) if unknown."""
    try:
        return int(pltpu.get_tpu_info().vmem_capacity_bytes)
    except Exception:
        return 64 * 1024 * 1024


def _pick_rows(h_out, per_row_bytes, fixed_bytes, w_pad, vmem_cap):
    """Largest divisor of h_out whose pipelined footprint fits the budget."""
    budget = int(0.4 * vmem_cap)
    cap = (budget - fixed_bytes) // max(per_row_bytes, 1)
    cap = int(min(max(cap, 1), max(2048 // w_pad, 1), h_out))
    best = 1
    for d in range(1, h_out + 1):
        if h_out % d == 0 and d <= cap:
            best = d
    return best


def _mosaic_params(vmem_need, vmem_cap):
    limit = int(min(max(32 << 20, int(1.5 * vmem_need)), int(0.9 * vmem_cap)))
    return pltpu.CompilerParams(
        dimension_semantics=("parallel", "parallel"),
        vmem_limit_bytes=limit)


# ---------------------------------------------------------------------------
# Kernels
# ---------------------------------------------------------------------------
def _conv3x3_kernel(*refs, prenorm, w_pad):
    """TR output rows of a VALID 3x3 conv (+bias) on the flattened layout.

    Optionally fuses the previous stage's BN affine + LeakyReLU onto the
    input rows, and emits this stage's partial BN sum / sum-of-squares.
    """
    if prenorm:
        (body_ref, h1_ref, h2_ref, scale_ref, shift_ref, w_ref, b_ref,
         mask_ref, y_ref, stats_ref, slab_ref) = refs
    else:
        (body_ref, h1_ref, h2_ref, w_ref, b_ref,
         mask_ref, y_ref, stats_ref, slab_ref) = refs
        scale_ref = shift_ref = None

    body_rows, cin = body_ref.shape

    def prep(v):                       # previous-stage BN + lrelu, bf16 cast
        v = v.astype(jnp.float32)
        if prenorm:
            v = v * scale_ref[...] + shift_ref[...]
            v = _leaky_relu(v)
        return v.astype(jnp.bfloat16)

    # Stitch body + 2 halo rows into one contiguous bf16 slab (VMEM scratch).
    slab_ref[0:body_rows, :] = prep(body_ref[...])
    slab_ref[body_rows:body_rows + w_pad, :] = prep(h1_ref[...])
    slab_ref[body_rows + w_pad:body_rows + 2 * w_pad, :] = prep(h2_ref[...])
    slab_ref[body_rows + 2 * w_pad:body_rows + 2 * w_pad + 8, :] = jnp.zeros(
        (8, cin), jnp.bfloat16)        # keep slack rows finite

    # 9 taps = contiguous 2D slices of the slab; MXU dots, f32 accumulation.
    acc = None
    for di in range(3):
        base = di * w_pad
        for dj in range(3):
            tap = slab_ref[base + dj:base + dj + body_rows, :]
            part = jnp.dot(tap, w_ref[di, dj],
                           preferred_element_type=jnp.float32)
            acc = part if acc is None else acc + part
    y = acc + b_ref[...]
    y_ref[...] = y.astype(y_ref.dtype)

    # Partial BN statistics (masked to the valid image columns).
    yv = jnp.where(mask_ref[...] > 0.5, y, 0.0)
    stats_ref[0:1, :] = jnp.sum(yv, axis=0, keepdims=True)
    stats_ref[1:2, :] = jnp.sum(yv * yv, axis=0, keepdims=True)


def _conv1x1_kernel(body_ref, scale_ref, shift_ref, w_ref, b_ref, mask_ref,
                    y_ref, stats_ref):
    """TR rows of the 1x1 conv (+bias), fused with BN2+LeakyReLU on its input
    and partial BN3 statistics."""
    v = body_ref[...].astype(jnp.float32) * scale_ref[...] + shift_ref[...]
    v = _leaky_relu(v).astype(jnp.bfloat16)
    y = jnp.dot(v, w_ref[...], preferred_element_type=jnp.float32) + b_ref[...]
    y_ref[...] = y.astype(y_ref.dtype)

    yv = jnp.where(mask_ref[...] > 0.5, y, 0.0)
    stats_ref[0:1, :] = jnp.sum(yv, axis=0, keepdims=True)
    stats_ref[1:2, :] = jnp.sum(yv * yv, axis=0, keepdims=True)


def _bn_lrelu_kernel(y_ref, scale_ref, shift_ref, o_ref):
    """Final BN3 affine + LeakyReLU with the channel un-pad fused in."""
    v = y_ref[...].astype(jnp.float32) * scale_ref[...] + shift_ref[...]
    v = _leaky_relu(v)
    o_ref[...] = v[:, :o_ref.shape[-1]]


# ---------------------------------------------------------------------------
# pallas_call wrappers
# ---------------------------------------------------------------------------
def _conv3x3_stage(x, w_hwio, b_row, scale_row, shift_row, *, w_pad, valid_w,
                   prenorm, vmem_cap):
    n, l_in, cin = x.shape
    h_in = l_in // w_pad
    h_out = h_in - 2
    co_p = w_hwio.shape[-1]
    in_es = x.dtype.itemsize

    per_row = w_pad * (2 * cin * in_es + 2 * co_p * 2 + cin * 2
                       + co_p * 4 + 3 * cin * 2 + 16)
    fixed = (2 * 9 * cin * co_p * 2 + 4 * w_pad * cin * in_es
             + 8 * co_p * 4 + (2 * w_pad + 8) * cin * 2 + (2 << 20))
    tr = _pick_rows(h_out, per_row, fixed, w_pad, vmem_cap)
    r = h_out // tr
    body_rows = tr * w_pad

    col_mask = (jnp.arange(w_pad) < valid_w).astype(jnp.float32)[:, None]
    mask = jnp.tile(col_mask, (tr, 1))

    in_specs = [
        pl.BlockSpec((None, body_rows, cin), lambda nn, ii: (nn, ii, 0)),
        pl.BlockSpec((None, w_pad, cin), lambda nn, ii: (nn, ii * tr + tr, 0)),
        pl.BlockSpec((None, w_pad, cin),
                     lambda nn, ii: (nn, ii * tr + tr + 1, 0)),
    ]
    args = [x, x, x]
    if prenorm:
        in_specs += [pl.BlockSpec((1, cin), lambda nn, ii: (0, 0)),
                     pl.BlockSpec((1, cin), lambda nn, ii: (0, 0))]
        args += [scale_row, shift_row]
    in_specs += [
        pl.BlockSpec((3, 3, cin, co_p), lambda nn, ii: (0, 0, 0, 0)),
        pl.BlockSpec((1, co_p), lambda nn, ii: (0, 0)),
        pl.BlockSpec((body_rows, 1), lambda nn, ii: (0, 0)),
    ]
    args += [w_hwio, b_row, mask]

    cost = pl.CostEstimate(
        flops=2 * n * h_out * w_pad * 9 * cin * co_p,
        transcendentals=0,
        bytes_accessed=(n * (h_out + 2 * r) * w_pad * cin * in_es
                        + n * h_out * w_pad * co_p * 2
                        + 9 * cin * co_p * 2 + n * r * 2 * co_p * 4))

    return pl.pallas_call(
        functools.partial(_conv3x3_kernel, prenorm=prenorm, w_pad=w_pad),
        grid=(n, r),
        in_specs=in_specs,
        out_specs=(
            pl.BlockSpec((None, body_rows, co_p), lambda nn, ii: (nn, ii, 0)),
            pl.BlockSpec((None, None, 2, co_p),
                         lambda nn, ii: (nn, ii, 0, 0)),
        ),
        out_shape=(
            jax.ShapeDtypeStruct((n, h_out * w_pad, co_p), jnp.bfloat16),
            jax.ShapeDtypeStruct((n, r, 2, co_p), jnp.float32),
        ),
        scratch_shapes=[pltpu.VMEM(((tr + 2) * w_pad + 8, cin), jnp.bfloat16)],
        compiler_params=_mosaic_params(fixed + tr * per_row, vmem_cap),
        cost_estimate=cost,
    )(*args)


def _conv1x1_stage(x, w_mat, b_row, scale_row, shift_row, *, w_pad, valid_w,
                   vmem_cap):
    n, l, cin = x.shape
    h = l // w_pad
    co_p = w_mat.shape[-1]
    in_es = x.dtype.itemsize

    per_row = w_pad * (2 * cin * in_es + 2 * co_p * 2 + cin * 2 + co_p * 4 + 16)
    fixed = 2 * cin * co_p * 2 + 8 * co_p * 4 + (2 << 20)
    tr = _pick_rows(h, per_row, fixed, w_pad, vmem_cap)
    r = h // tr
    body_rows = tr * w_pad

    col_mask = (jnp.arange(w_pad) < valid_w).astype(jnp.float32)[:, None]
    mask = jnp.tile(col_mask, (tr, 1))

    cost = pl.CostEstimate(
        flops=2 * n * l * cin * co_p,
        transcendentals=0,
        bytes_accessed=(n * l * cin * in_es + n * l * co_p * 2
                        + cin * co_p * 2 + n * r * 2 * co_p * 4))

    return pl.pallas_call(
        _conv1x1_kernel,
        grid=(n, r),
        in_specs=[
            pl.BlockSpec((None, body_rows, cin), lambda nn, ii: (nn, ii, 0)),
            pl.BlockSpec((1, cin), lambda nn, ii: (0, 0)),
            pl.BlockSpec((1, cin), lambda nn, ii: (0, 0)),
            pl.BlockSpec((cin, co_p), lambda nn, ii: (0, 0)),
            pl.BlockSpec((1, co_p), lambda nn, ii: (0, 0)),
            pl.BlockSpec((body_rows, 1), lambda nn, ii: (0, 0)),
        ],
        out_specs=(
            pl.BlockSpec((None, body_rows, co_p), lambda nn, ii: (nn, ii, 0)),
            pl.BlockSpec((None, None, 2, co_p), lambda nn, ii: (nn, ii, 0, 0)),
        ),
        out_shape=(
            jax.ShapeDtypeStruct((n, l, co_p), jnp.bfloat16),
            jax.ShapeDtypeStruct((n, r, 2, co_p), jnp.float32),
        ),
        compiler_params=_mosaic_params(fixed + tr * per_row, vmem_cap),
        cost_estimate=cost,
    )(x, scale_row, shift_row, w_mat, b_row, mask)


def _bn_lrelu_stage(y, scale_row, shift_row, *, cout, w_pad, vmem_cap):
    n, l, co_p = y.shape
    h = l // w_pad
    per_row = w_pad * (2 * co_p * 2 + 2 * cout * 4 + co_p * 4 + 16)
    fixed = 8 * co_p * 4 + (2 << 20)
    tr = _pick_rows(h, per_row, fixed, w_pad, vmem_cap)
    r = h // tr
    body_rows = tr * w_pad

    cost = pl.CostEstimate(
        flops=4 * n * l * co_p, transcendentals=0,
        bytes_accessed=n * l * (co_p * 2 + cout * 4))

    return pl.pallas_call(
        _bn_lrelu_kernel,
        grid=(n, r),
        in_specs=[
            pl.BlockSpec((None, body_rows, co_p), lambda nn, ii: (nn, ii, 0)),
            pl.BlockSpec((1, co_p), lambda nn, ii: (0, 0)),
            pl.BlockSpec((1, co_p), lambda nn, ii: (0, 0)),
        ],
        out_specs=pl.BlockSpec((None, body_rows, cout),
                               lambda nn, ii: (nn, ii, 0)),
        out_shape=jax.ShapeDtypeStruct((n, l, cout), jnp.float32),
        compiler_params=_mosaic_params(fixed + tr * per_row, vmem_cap),
        cost_estimate=cost,
    )(y, scale_row, shift_row)


def _bn_affine(stats, count, gamma_p, beta_p):
    """Fold training-mode BN (batch stats, biased var) into y*scale + shift.

    NOTE: single-pass E[y^2]-E[y]^2 in f32; adequate at these sizes, can
    cancel for very large spatial extents (see review)."""
    s = jnp.sum(stats, axis=(0, 1))                  # (2, Co_p): sum, sumsq
    mean = s[0] / count
    var = jnp.maximum(s[1] / count - mean * mean, 0.0)
    scale = gamma_p * lax.rsqrt(var + BN_EPS)
    shift = beta_p - mean * scale
    return scale.reshape(1, -1), shift.reshape(1, -1)


# ---------------------------------------------------------------------------
# Public forward pass (NCHW in / NCHW out, like the PyTorch module)
# ---------------------------------------------------------------------------
@jax.jit
def conv_block2d(x_nchw, params):
    (w1, b1, g1, be1, w2, b2, g2, be2, w3, b3, g3, be3) = params
    cout = w1.shape[-1]
    co_p = _round_up(cout, LANE)
    vmem_cap = _vmem_capacity()

    n, cin, h, w = x_nchw.shape
    w_pad = _round_up(w, 8)

    # NCHW -> NHWC, pad width to a multiple of 8, flatten to (N, H*W_pad, C).
    x = jnp.transpose(x_nchw, (0, 2, 3, 1)).astype(jnp.float32)
    x = jnp.pad(x, ((0, 0), (0, 0), (0, w_pad - w), (0, 0)))
    x = x.reshape(n, h * w_pad, cin)

    def pad_c(a):                      # pad last (out-channel) dim
        return jnp.pad(a, [(0, 0)] * (a.ndim - 1) + [(0, co_p - cout)])

    def pad_io(wt):                    # pad in- and out-channel dims
        return jnp.pad(wt, ((0, 0), (0, 0), (0, co_p - wt.shape[2]),
                            (0, co_p - wt.shape[3])))

    w1p = pad_c(w1).astype(jnp.bfloat16)                       # (3,3,cin,co_p)
    w2p = pad_io(w2).astype(jnp.bfloat16)                      # (3,3,co_p,co_p)
    w3p = pad_io(w3).reshape(co_p, co_p).astype(jnp.bfloat16)  # (co_p,co_p)
    b1p, b2p, b3p = (pad_c(b).reshape(1, co_p) for b in (b1, b2, b3))
    g1p, g2p, g3p = (pad_c(g) for g in (g1, g2, g3))
    be1p, be2p, be3p = (pad_c(b) for b in (be1, be2, be3))

    # Stage 1: conv1(3x3)+bias -> y1 (bf16) + partial BN1 stats.
    y1, s1 = _conv3x3_stage(x, w1p, b1p, None, None, w_pad=w_pad,
                            valid_w=w - 2, prenorm=False, vmem_cap=vmem_cap)
    m1 = n * (h - 2) * (w - 2)
    sc1, sh1 = _bn_affine(s1, m1, g1p, be1p)

    # Stage 2: BN1+lrelu fused into conv2(3x3)+bias -> y2 (bf16) + BN2 stats.
    y2, s2 = _conv3x3_stage(y1, w2p, b2p, sc1, sh1, w_pad=w_pad,
                            valid_w=w - 4, prenorm=True, vmem_cap=vmem_cap)
    m2 = n * (h - 4) * (w - 4)
    sc2, sh2 = _bn_affine(s2, m2, g2p, be2p)

    # Stage 3: BN2+lrelu fused into conv3(1x1)+bias -> y3 (bf16) + BN3 stats.
    y3, s3 = _conv1x1_stage(y2, w3p, b3p, sc2, sh2, w_pad=w_pad,
                            valid_w=w - 4, vmem_cap=vmem_cap)
    sc3, sh3 = _bn_affine(s3, m2, g3p, be3p)

    # Stage 4: BN3 + lrelu + channel un-pad.
    out = _bn_lrelu_stage(y3, sc3, sh3, cout=cout, w_pad=w_pad,
                          vmem_cap=vmem_cap)

    out = out.reshape(n, h - 4, w_pad, cout)[:, :, :w - 4, :]
    return jnp.transpose(out, (0, 3, 1, 2))          # NHWC -> NCHW


# ---------------------------------------------------------------------------
# Reference with the same numerics choices (bf16 MXU operands, bf16 storage
# of the pre-BN activations, f32 stats), built on lax.conv.
# ---------------------------------------------------------------------------
@jax.jit
def conv_block2d_ref(x_nchw, params):
    (w1, b1, g1, be1, w2, b2, g2, be2, w3, b3, g3, be3) = params
    x = jnp.transpose(x_nchw, (0, 2, 3, 1)).astype(jnp.float32)

    def conv(x, w, b):
        y = lax.conv_general_dilated(
            x.astype(jnp.bfloat16), w.astype(jnp.bfloat16), (1, 1), 'VALID',
            dimension_numbers=('NHWC', 'HWIO', 'NHWC'),
            preferred_element_type=jnp.float32)
        return y + b

    def bn_lrelu(y, g, be):
        mean = jnp.mean(y, axis=(0, 1, 2), keepdims=True)
        var = jnp.mean((y - mean) ** 2, axis=(0, 1, 2), keepdims=True)
        ys = y.astype(jnp.bfloat16).astype(jnp.float32)   # bf16 y storage
        yn = (ys - mean) * lax.rsqrt(var + BN_EPS) * g + be
        return jnp.where(yn > 0, yn, LEAKY_SLOPE * yn)

    x = bn_lrelu(conv(x, w1, b1), g1, be1)
    x = bn_lrelu(conv(x, w2, b2), g2, be2)
    x = bn_lrelu(conv(x, w3, b3), g3, be3)
    return jnp.transpose(x, (0, 3, 1, 2))


# ---------------------------------------------------------------------------
# Deterministic parameter init (PyTorch-like uniform bounds), HWIO weights
# ---------------------------------------------------------------------------
def init_params(key, n_ch_in, n_ch_out):
    def conv_init(key, kh, kw, cin, cout):
        kw_key, b_key = jax.random.split(key)
        bound = 1.0 / jnp.sqrt(float(cin * kh * kw))
        w = jax.random.uniform(kw_key, (kh, kw, cin, cout), jnp.float32,
                               -bound, bound)
        b = jax.random.uniform(b_key, (cout,), jnp.float32, -bound, bound)
        return w, b

    k1, k2, k3 = jax.random.split(key, 3)
    w1, b1 = conv_init(k1, 3, 3, n_ch_in, n_ch_out)
    w2, b2 = conv_init(k2, 3, 3, n_ch_out, n_ch_out)
    w3, b3 = conv_init(k3, 1, 1, n_ch_out, n_ch_out)
    ones = jnp.ones((n_ch_out,), jnp.float32)
    zeros = jnp.zeros((n_ch_out,), jnp.float32)
    return (w1, b1, ones, zeros,
            w2, b2, ones, zeros,
            w3, b3, ones, zeros)


if __name__ == "__main__":
    key = jax.random.PRNGKey(0)
    x_key, p_key = jax.random.split(key)

    N, CIN, COUT, H, W = 2, 4, 8, 16, 16
    x = jax.random.normal(x_key, (N, CIN, H, W), jnp.float32)
    params = init_params(p_key, CIN, COUT)

    out = jax.block_until_ready(conv_block2d(x, params))
    ref = jax.block_until_ready(conv_block2d_ref(x, params))

    assert out.shape == (N, COUT, H - 4, W - 4), out.shape
    err = float(jnp.max(jnp.abs(out - ref)))
    assert jnp.allclose(out, ref, rtol=1e-2, atol=1e-2), err

    print("KERNEL_OK")
</pallas_src>

<mosaic_0001>
module attributes {stable_mosaic.version = 11 : i64} {
  func.func @_conv3x3_kernel(%arg0: i32, %arg1: i32, %arg2: memref<1x224x4xf32, #tpu.memory_space<vmem>>, %arg3: memref<1x16x4xf32, #tpu.memory_space<vmem>>, %arg4: memref<1x16x4xf32, #tpu.memory_space<vmem>>, %arg5: memref<3x3x4x128xbf16, #tpu.memory_space<vmem>>, %arg6: memref<1x128xf32, #tpu.memory_space<vmem>>, %arg7: memref<224x1xf32, #tpu.memory_space<vmem>>, %arg8: memref<1x224x128xbf16, #tpu.memory_space<vmem>>, %arg9: memref<1x1x2x128xf32, #tpu.memory_space<vmem>>, %arg10: memref<264x4xbf16, #tpu.memory_space<vmem>>) attributes {dimension_semantics = [#tpu.dimension_semantics<parallel>, #tpu.dimension_semantics<parallel>], iteration_bounds = array<i64: 2, 1>, scalar_prefetch = 0 : i64, scratch_operands = 1 : i64, tpu.core_type = #tpu.core_type<tc>, window_params = [{transform_indices = @transform_0, window_bounds = array<i64: 1, 224, 4>}, {transform_indices = @transform_1, window_bounds = array<i64: 1, 16, 4>}, {transform_indices = @transform_2, window_bounds = array<i64: 1, 16, 4>}, {pipeline_mode = #tpu.pipeline_mode<synchronous>, transform_indices = @transform_3, window_bounds = array<i64: 3, 3, 4, 128>}, {pipeline_mode = #tpu.pipeline_mode<synchronous>, transform_indices = @transform_4, window_bounds = array<i64: 1, 128>}, {pipeline_mode = #tpu.pipeline_mode<synchronous>, transform_indices = @transform_5, window_bounds = array<i64: 224, 1>}, {transform_indices = @transform_6, window_bounds = array<i64: 1, 224, 128>}, {transform_indices = @transform_7, window_bounds = array<i64: 1, 1, 2, 128>}]} {
    %c0 = arith.constant 0 : index
    %c0_0 = arith.constant 0 : index
    %c0_1 = arith.constant 0 : index
    %0 = vector.load %arg2[%c0, %c0_0, %c0_1] : memref<1x224x4xf32, #tpu.memory_space<vmem>>, vector<1x224x4xf32>
    %1 = vector.shape_cast %0 : vector<1x224x4xf32> to vector<224x4xf32>
    %2 = arith.truncf %1 : vector<224x4xf32> to vector<224x4xbf16>
    %c0_2 = arith.constant 0 : index
    %c0_3 = arith.constant 0 : index
    %3 = vector.load %arg10[%c0_2, %c0_3] : memref<264x4xbf16, #tpu.memory_space<vmem>>, vector<224x4xbf16>
    tpu.vector_store %arg10[%c0_2, %c0_3], %2 {strides = array<i32>} : memref<264x4xbf16, #tpu.memory_space<vmem>>, vector<224x4xbf16>,
    %c0_4 = arith.constant 0 : index
    %c0_5 = arith.constant 0 : index
    %c0_6 = arith.constant 0 : index
    %4 = vector.load %arg3[%c0_4, %c0_5, %c0_6] : memref<1x16x4xf32, #tpu.memory_space<vmem>>, vector<1x16x4xf32>
    %5 = vector.shape_cast %4 : vector<1x16x4xf32> to vector<16x4xf32>
    %6 = arith.truncf %5 : vector<16x4xf32> to vector<16x4xbf16>
    %c224 = arith.constant 224 : index
    %c0_7 = arith.constant 0 : index
    %7 = vector.load %arg10[%c224, %c0_7] : memref<264x4xbf16, #tpu.memory_space<vmem>>, vector<16x4xbf16>
    tpu.vector_store %arg10[%c224, %c0_7], %6 {strides = array<i32>} : memref<264x4xbf16, #tpu.memory_space<vmem>>, vector<16x4xbf16>,
    %c0_8 = arith.constant 0 : index
    %c0_9 = arith.constant 0 : index
    %c0_10 = arith.constant 0 : index
    %8 = vector.load %arg4[%c0_8, %c0_9, %c0_10] : memref<1x16x4xf32, #tpu.memory_space<vmem>>, vector<1x16x4xf32>
    %9 = vector.shape_cast %8 : vector<1x16x4xf32> to vector<16x4xf32>
    %10 = arith.truncf %9 : vector<16x4xf32> to vector<16x4xbf16>
    %c240 = arith.constant 240 : index
    %c0_11 = arith.constant 0 : index
    %11 = vector.load %arg10[%c240, %c0_11] : memref<264x4xbf16, #tpu.memory_space<vmem>>, vector<16x4xbf16>
    tpu.vector_store %arg10[%c240, %c0_11], %10 {strides = array<i32>} : memref<264x4xbf16, #tpu.memory_space<vmem>>, vector<16x4xbf16>,
    %cst = arith.constant 0.000000e+00 : bf16
    %12 = vector.broadcast %cst : bf16 to vector<8x4xbf16>
    %c256 = arith.constant 256 : index
    %c0_12 = arith.constant 0 : index
    %13 = vector.load %arg10[%c256, %c0_12] : memref<264x4xbf16, #tpu.memory_space<vmem>>, vector<8x4xbf16>
    tpu.vector_store %arg10[%c256, %c0_12], %12 {strides = array<i32>} : memref<264x4xbf16, #tpu.memory_space<vmem>>, vector<8x4xbf16>,
    %c0_13 = arith.constant 0 : index
    %c0_14 = arith.constant 0 : index
    %14 = vector.load %arg10[%c0_13, %c0_14] : memref<264x4xbf16, #tpu.memory_space<vmem>>, vector<224x4xbf16>
    %c0_15 = arith.constant 0 : index
    %c0_16 = arith.constant 0 : index
    %c0_17 = arith.constant 0 : index
    %c0_18 = arith.constant 0 : index
    %15 = vector.load %arg5[%c0_15, %c0_16, %c0_17, %c0_18] : memref<3x3x4x128xbf16, #tpu.memory_space<vmem>>, vector<1x1x4x128xbf16>
    %16 = vector.shape_cast %15 : vector<1x1x4x128xbf16> to vector<4x128xbf16>
    %cst_19 = arith.constant dense<0.000000e+00> : vector<224x128xf32>
    %17 = tpu.matmul %14, %16, %cst_19 {dimension_numbers = #tpu.dot_dimension_numbers<[1], [0], [0], [1], [0, 0, 1, 1], [], []>} : vector<224x4xbf16>, vector<4x128xbf16>, vector<224x128xf32> -> vector<224x128xf32>
    %c1 = arith.constant 1 : index
    %c0_20 = arith.constant 0 : index
    %18 = vector.load %arg10[%c1, %c0_20] : memref<264x4xbf16, #tpu.memory_space<vmem>>, vector<224x4xbf16>
    %c0_21 = arith.constant 0 : index
    %c1_22 = arith.constant 1 : index
    %c0_23 = arith.constant 0 : index
    %c0_24 = arith.constant 0 : index
    %19 = vector.load %arg5[%c0_21, %c1_22, %c0_23, %c0_24] : memref<3x3x4x128xbf16, #tpu.memory_space<vmem>>, vector<1x1x4x128xbf16>
    %20 = vector.shape_cast %19 : vector<1x1x4x128xbf16> to vector<4x128xbf16>
    %cst_25 = arith.constant dense<0.000000e+00> : vector<224x128xf32>
    %21 = tpu.matmul %18, %20, %cst_25 {dimension_numbers = #tpu.dot_dimension_numbers<[1], [0], [0], [1], [0, 0, 1, 1], [], []>} : vector<224x4xbf16>, vector<4x128xbf16>, vector<224x128xf32> -> vector<224x128xf32>
    %22 = arith.addf %17, %21 : vector<224x128xf32>
    %c2 = arith.constant 2 : index
    %c0_26 = arith.constant 0 : index
    %23 = vector.load %arg10[%c2, %c0_26] : memref<264x4xbf16, #tpu.memory_space<vmem>>, vector<224x4xbf16>
    %c0_27 = arith.constant 0 : index
    %c2_28 = arith.constant 2 : index
    %c0_29 = arith.constant 0 : index
    %c0_30 = arith.constant 0 : index
    %24 = vector.load %arg5[%c0_27, %c2_28, %c0_29, %c0_30] : memref<3x3x4x128xbf16, #tpu.memory_space<vmem>>, vector<1x1x4x128xbf16>
    %25 = vector.shape_cast %24 : vector<1x1x4x128xbf16> to vector<4x128xbf16>
    %cst_31 = arith.constant dense<0.000000e+00> : vector<224x128xf32>
    %26 = tpu.matmul %23, %25, %cst_31 {dimension_numbers = #tpu.dot_dimension_numbers<[1], [0], [0], [1], [0, 0, 1, 1], [], []>} : vector<224x4xbf16>, vector<4x128xbf16>, vector<224x128xf32> -> vector<224x128xf32>
    %27 = arith.addf %22, %26 : vector<224x128xf32>
    %c16 = arith.constant 16 : index
    %c0_32 = arith.constant 0 : index
    %28 = vector.load %arg10[%c16, %c0_32] : memref<264x4xbf16, #tpu.memory_space<vmem>>, vector<224x4xbf16>
    %c1_33 = arith.constant 1 : index
    %c0_34 = arith.constant 0 : index
    %c0_35 = arith.constant 0 : index
    %c0_36 = arith.constant 0 : index
    %29 = vector.load %arg5[%c1_33, %c0_34, %c0_35, %c0_36] : memref<3x3x4x128xbf16, #tpu.memory_space<vmem>>, vector<1x1x4x128xbf16>
    %30 = vector.shape_cast %29 : vector<1x1x4x128xbf16> to vector<4x128xbf16>
    %cst_37 = arith.constant dense<0.000000e+00> : vector<224x128xf32>
    %31 = tpu.matmul %28, %30, %cst_37 {dimension_numbers = #tpu.dot_dimension_numbers<[1], [0], [0], [1], [0, 0, 1, 1], [], []>} : vector<224x4xbf16>, vector<4x128xbf16>, vector<224x128xf32> -> vector<224x128xf32>
    %32 = arith.addf %27, %31 : vector<224x128xf32>
    %c17 = arith.constant 17 : index
    %c0_38 = arith.constant 0 : index
    %33 = vector.load %arg10[%c17, %c0_38] : memref<264x4xbf16, #tpu.memory_space<vmem>>, vector<224x4xbf16>
    %c1_39 = arith.constant 1 : index
    %c1_40 = arith.constant 1 : index
    %c0_41 = arith.constant 0 : index
    %c0_42 = arith.constant 0 : index
    %34 = vector.load %arg5[%c1_39, %c1_40, %c0_41, %c0_42] : memref<3x3x4x128xbf16, #tpu.memory_space<vmem>>, vector<1x1x4x128xbf16>
    %35 = vector.shape_cast %34 : vector<1x1x4x128xbf16> to vector<4x128xbf16>
    %cst_43 = arith.constant dense<0.000000e+00> : vector<224x128xf32>
    %36 = tpu.matmul %33, %35, %cst_43 {dimension_numbers = #tpu.dot_dimension_numbers<[1], [0], [0], [1], [0, 0, 1, 1], [], []>} : vector<224x4xbf16>, vector<4x128xbf16>, vector<224x128xf32> -> vector<224x128xf32>
    %37 = arith.addf %32, %36 : vector<224x128xf32>
    %c18 = arith.constant 18 : index
    %c0_44 = arith.constant 0 : index
    %38 = vector.load %arg10[%c18, %c0_44] : memref<264x4xbf16, #tpu.memory_space<vmem>>, vector<224x4xbf16>
    %c1_45 = arith.constant 1 : index
    %c2_46 = arith.constant 2 : index
    %c0_47 = arith.constant 0 : index
    %c0_48 = arith.constant 0 : index
    %39 = vector.load %arg5[%c1_45, %c2_46, %c0_47, %c0_48] : memref<3x3x4x128xbf16, #tpu.memory_space<vmem>>, vector<1x1x4x128xbf16>
    %40 = vector.shape_cast %39 : vector<1x1x4x128xbf16> to vector<4x128xbf16>
    %cst_49 = arith.constant dense<0.000000e+00> : vector<224x128xf32>
    %41 = tpu.matmul %38, %40, %cst_49 {dimension_numbers = #tpu.dot_dimension_numbers<[1], [0], [0], [1], [0, 0, 1, 1], [], []>} : vector<224x4xbf16>, vector<4x128xbf16>, vector<224x128xf32> -> vector<224x128xf32>
    %42 = arith.addf %37, %41 : vector<224x128xf32>
    %c32 = arith.constant 32 : index
    %c0_50 = arith.constant 0 : index
    %43 = vector.load %arg10[%c32, %c0_50] : memref<264x4xbf16, #tpu.memory_space<vmem>>, vector<224x4xbf16>
    %c2_51 = arith.constant 2 : index
    %c0_52 = arith.constant 0 : index
    %c0_53 = arith.constant 0 : index
    %c0_54 = arith.constant 0 : index
    %44 = vector.load %arg5[%c2_51, %c0_52, %c0_53, %c0_54] : memref<3x3x4x128xbf16, #tpu.memory_space<vmem>>, vector<1x1x4x128xbf16>
    %45 = vector.shape_cast %44 : vector<1x1x4x128xbf16> to vector<4x128xbf16>
    %cst_55 = arith.constant dense<0.000000e+00> : vector<224x128xf32>
    %46 = tpu.matmul %43, %45, %cst_55 {dimension_numbers = #tpu.dot_dimension_numbers<[1], [0], [0], [1], [0, 0, 1, 1], [], []>} : vector<224x4xbf16>, vector<4x128xbf16>, vector<224x128xf32> -> vector<224x128xf32>
    %47 = arith.addf %42, %46 : vector<224x128xf32>
    %c33 = arith.constant 33 : index
    %c0_56 = arith.constant 0 : index
    %48 = vector.load %arg10[%c33, %c0_56] : memref<264x4xbf16, #tpu.memory_space<vmem>>, vector<224x4xbf16>
    %c2_57 = arith.constant 2 : index
    %c1_58 = arith.constant 1 : index
    %c0_59 = arith.constant 0 : index
    %c0_60 = arith.constant 0 : index
    %49 = vector.load %arg5[%c2_57, %c1_58, %c0_59, %c0_60] : memref<3x3x4x128xbf16, #tpu.memory_space<vmem>>, vector<1x1x4x128xbf16>
    %50 = vector.shape_cast %49 : vector<1x1x4x128xbf16> to vector<4x128xbf16>
    %cst_61 = arith.constant dense<0.000000e+00> : vector<224x128xf32>
    %51 = tpu.matmul %48, %50, %cst_61 {dimension_numbers = #tpu.dot_dimension_numbers<[1], [0], [0], [1], [0, 0, 1, 1], [], []>} : vector<224x4xbf16>, vector<4x128xbf16>, vector<224x128xf32> -> vector<224x128xf32>
    %52 = arith.addf %47, %51 : vector<224x128xf32>
    %c34 = arith.constant 34 : index
    %c0_62 = arith.constant 0 : index
    %53 = vector.load %arg10[%c34, %c0_62] : memref<264x4xbf16, #tpu.memory_space<vmem>>, vector<224x4xbf16>
    %c2_63 = arith.constant 2 : index
    %c2_64 = arith.constant 2 : index
    %c0_65 = arith.constant 0 : index
    %c0_66 = arith.constant 0 : index
    %54 = vector.load %arg5[%c2_63, %c2_64, %c0_65, %c0_66] : memref<3x3x4x128xbf16, #tpu.memory_space<vmem>>, vector<1x1x4x128xbf16>
    %55 = vector.shape_cast %54 : vector<1x1x4x128xbf16> to vector<4x128xbf16>
    %cst_67 = arith.constant dense<0.000000e+00> : vector<224x128xf32>
    %56 = tpu.matmul %53, %55, %cst_67 {dimension_numbers = #tpu.dot_dimension_numbers<[1], [0], [0], [1], [0, 0, 1, 1], [], []>} : vector<224x4xbf16>, vector<4x128xbf16>, vector<224x128xf32> -> vector<224x128xf32>
    %57 = arith.addf %52, %56 : vector<224x128xf32>
    %c0_68 = arith.constant 0 : index
    %c0_69 = arith.constant 0 : index
    %58 = vector.load %arg6[%c0_68, %c0_69] : memref<1x128xf32, #tpu.memory_space<vmem>>, vector<1x128xf32>
    %59 = vector.broadcast %58 : vector<1x128xf32> to vector<224x128xf32>
    %60 = arith.addf %57, %59 : vector<224x128xf32>
    %61 = arith.truncf %60 : vector<224x128xf32> to vector<224x128xbf16>
    %c0_70 = arith.constant 0 : index
    %c0_71 = arith.constant 0 : index
    %c0_72 = arith.constant 0 : index
    %62 = vector.load %arg8[%c0_70, %c0_71, %c0_72] : memref<1x224x128xbf16, #tpu.memory_space<vmem>>, vector<1x224x128xbf16>
    %63 = vector.shape_cast %62 : vector<1x224x128xbf16> to vector<224x128xbf16>
    %64 = vector.shape_cast %61 : vector<224x128xbf16> to vector<1x224x128xbf16>
    tpu.vector_store %arg8[%c0_70, %c0_71, %c0_72], %64 {strides = array<i32>} : memref<1x224x128xbf16, #tpu.memory_space<vmem>>, vector<1x224x128xbf16>,
    %c0_73 = arith.constant 0 : index
    %c0_74 = arith.constant 0 : index
    %65 = vector.load %arg7[%c0_73, %c0_74] : memref<224x1xf32, #tpu.memory_space<vmem>>, vector<224x1xf32>
    %cst_75 = arith.constant 5.000000e-01 : f32
    %66 = vector.broadcast %cst_75 : f32 to vector<224x1xf32>
    %67 = arith.cmpf ogt, %65, %66 : vector<224x1xf32>
    %cst_76 = arith.constant 0.000000e+00 : f32
    %68 = vector.shape_cast %67 : vector<224x1xi1> to vector<224x1xi1>
    %69 = vector.broadcast %68 : vector<224x1xi1> to vector<224x128xi1>
    %70 = vector.broadcast %cst_76 : f32 to vector<224x128xf32>
    %71 = arith.select %69, %60, %70 : vector<224x128xi1>, vector<224x128xf32>
    %cst_77 = arith.constant dense<0.000000e+00> : vector<128xf32>
    %72 = vector.multi_reduction <add>, %71, %cst_77 [0] : vector<224x128xf32> to vector<128xf32>
    %73 = vector.shape_cast %72 : vector<128xf32> to vector<1x128xf32>
    %c0_78 = arith.constant 0 : index
    %c0_79 = arith.constant 0 : index
    %c0_80 = arith.constant 0 : index
    %c0_81 = arith.constant 0 : index
    %74 = vector.load %arg9[%c0_78, %c0_79, %c0_80, %c0_81] : memref<1x1x2x128xf32, #tpu.memory_space<vmem>>, vector<1x1x1x128xf32>
    %75 = vector.shape_cast %74 : vector<1x1x1x128xf32> to vector<1x128xf32>
    %76 = vector.shape_cast %73 : vector<1x128xf32> to vector<1x1x1x128xf32>
    tpu.vector_store %arg9[%c0_78, %c0_79, %c0_80, %c0_81], %76 {strides = array<i32>} : memref<1x1x2x128xf32, #tpu.memory_space<vmem>>, vector<1x1x1x128xf32>,
    %77 = arith.mulf %71, %71 : vector<224x128xf32>
    %cst_82 = arith.constant dense<0.000000e+00> : vector<128xf32>
    %78 = vector.multi_reduction <add>, %77, %cst_82 [0] : vector<224x128xf32> to vector<128xf32>
    %79 = vector.shape_cast %78 : vector<128xf32> to vector<1x128xf32>
    %c0_83 = arith.constant 0 : index
    %c0_84 = arith.constant 0 : index
    %c1_85 = arith.constant 1 : index
    %c0_86 = arith.constant 0 : index
    %80 = vector.load %arg9[%c0_83, %c0_84, %c1_85, %c0_86] : memref<1x1x2x128xf32, #tpu.memory_space<vmem>>, vector<1x1x1x128xf32>
    %81 = vector.shape_cast %80 : vector<1x1x1x128xf32> to vector<1x128xf32>
    %82 = vector.shape_cast %79 : vector<1x128xf32> to vector<1x1x1x128xf32>
    tpu.vector_store %arg9[%c0_83, %c0_84, %c1_85, %c0_86], %82 {strides = array<i32>} : memref<1x1x2x128xf32, #tpu.memory_space<vmem>>, vector<1x1x1x128xf32>,
    return
  }
  func.func @transform_0(%arg0: i32, %arg1: i32) -> (i32, i32, i32) {
    %c0_i32 = arith.constant 0 : i32
    %c0_i32_0 = arith.constant 0 : i32
    return %arg0, %arg1, %c0_i32 : i32, i32, i32
  }
  func.func @transform_1(%arg0: i32, %arg1: i32) -> (i32, i32, i32) {
    %c14_i32 = arith.constant 14 : i32
    %0 = arith.muli %arg1, %c14_i32 : i32
    %c14_i32_0 = arith.constant 14 : i32
    %1 = arith.addi %0, %c14_i32_0 : i32
    %c0_i32 = arith.constant 0 : i32
    %c0_i32_1 = arith.constant 0 : i32
    return %arg0, %1, %c0_i32 : i32, i32, i32
  }
  func.func @transform_2(%arg0: i32, %arg1: i32) -> (i32, i32, i32) {
    %c14_i32 = arith.constant 14 : i32
    %0 = arith.muli %arg1, %c14_i32 : i32
    %c14_i32_0 = arith.constant 14 : i32
    %1 = arith.addi %0, %c14_i32_0 : i32
    %c1_i32 = arith.constant 1 : i32
    %2 = arith.addi %1, %c1_i32 : i32
    %c0_i32 = arith.constant 0 : i32
    %c0_i32_1 = arith.constant 0 : i32
    return %arg0, %2, %c0_i32 : i32, i32, i32
  }
  func.func @transform_3(%arg0: i32, %arg1: i32) -> (i32, i32, i32, i32) {
    %c0_i32 = arith.constant 0 : i32
    %c0_i32_0 = arith.constant 0 : i32
    %c0_i32_1 = arith.constant 0 : i32
    %c0_i32_2 = arith.constant 0 : i32
    %c0_i32_3 = arith.constant 0 : i32
    return %c0_i32, %c0_i32_0, %c0_i32_1, %c0_i32_2 : i32, i32, i32, i32
  }
  func.func @transform_4(%arg0: i32, %arg1: i32) -> (i32, i32) {
    %c0_i32 = arith.constant 0 : i32
    %c0_i32_0 = arith.constant 0 : i32
    %c0_i32_1 = arith.constant 0 : i32
    return %c0_i32, %c0_i32_0 : i32, i32
  }
  func.func @transform_5(%arg0: i32, %arg1: i32) -> (i32, i32) {
    %c0_i32 = arith.constant 0 : i32
    %c0_i32_0 = arith.constant 0 : i32
    %c0_i32_1 = arith.constant 0 : i32
    return %c0_i32, %c0_i32_0 : i32, i32
  }
  func.func @transform_6(%arg0: i32, %arg1: i32) -> (i32, i32, i32) {
    %c0_i32 = arith.constant 0 : i32
    %c0_i32_0 = arith.constant 0 : i32
    return %arg0, %arg1, %c0_i32 : i32, i32, i32
  }
  func.func @transform_7(%arg0: i32, %arg1: i32) -> (i32, i32, i32, i32) {
    %c0_i32 = arith.constant 0 : i32
    %c0_i32_0 = arith.constant 0 : i32
    %c0_i32_1 = arith.constant 0 : i32
    return %arg0, %arg1, %c0_i32, %c0_i32_0 : i32, i32, i32, i32
  }
}

module attributes {stable_mosaic.version = 11 : i64} {
  func.func @_conv3x3_kernel(%arg0: i32, %arg1: i32, %arg2: memref<1x192x128xbf16, #tpu.memory_space<vmem>>, %arg3: memref<1x16x128xbf16, #tpu.memory_space<vmem>>, %arg4: memref<1x16x128xbf16, #tpu.memory_space<vmem>>, %arg5: memref<1x128xf32, #tpu.memory_space<vmem>>, %arg6: memref<1x128xf32, #tpu.memory_space<vmem>>, %arg7: memref<3x3x128x128xbf16, #tpu.memory_space<vmem>>, %arg8: memref<1x128xf32, #tpu.memory_space<vmem>>, %arg9: memref<192x1xf32, #tpu.memory_space<vmem>>, %arg10: memref<1x192x128xbf16, #tpu.memory_space<vmem>>, %arg11: memref<1x1x2x128xf32, #tpu.memory_space<vmem>>, %arg12: memref<232x128xbf16, #tpu.memory_space<vmem>>) attributes {dimension_semantics = [#tpu.dimension_semantics<parallel>, #tpu.dimension_semantics<parallel>], iteration_bounds = array<i64: 2, 1>, scalar_prefetch = 0 : i64, scratch_operands = 1 : i64, tpu.core_type = #tpu.core_type<tc>, window_params = [{transform_indices = @transform_0, window_bounds = array<i64: 1, 192, 128>}, {transform_indices = @transform_1, window_bounds = array<i64: 1, 16, 128>}, {transform_indices = @transform_2, window_bounds = array<i64: 1, 16, 128>}, {pipeline_mode = #tpu.pipeline_mode<synchronous>, transform_indices = @transform_3, window_bounds = array<i64: 1, 128>}, {pipeline_mode = #tpu.pipeline_mode<synchronous>, transform_indices = @transform_4, window_bounds = array<i64: 1, 128>}, {pipeline_mode = #tpu.pipeline_mode<synchronous>, transform_indices = @transform_5, window_bounds = array<i64: 3, 3, 128, 128>}, {pipeline_mode = #tpu.pipeline_mode<synchronous>, transform_indices = @transform_6, window_bounds = array<i64: 1, 128>}, {pipeline_mode = #tpu.pipeline_mode<synchronous>, transform_indices = @transform_7, window_bounds = array<i64: 192, 1>}, {transform_indices = @transform_8, window_bounds = array<i64: 1, 192, 128>}, {transform_indices = @transform_9, window_bounds = array<i64: 1, 1, 2, 128>}]} {
    %c0 = arith.constant 0 : index
    %c0_0 = arith.constant 0 : index
    %c0_1 = arith.constant 0 : index
    %0 = vector.load %arg2[%c0, %c0_0, %c0_1] : memref<1x192x128xbf16, #tpu.memory_space<vmem>>, vector<1x192x128xbf16>
    %1 = vector.shape_cast %0 : vector<1x192x128xbf16> to vector<192x128xbf16>
    %2 = arith.extf %1 : vector<192x128xbf16> to vector<192x128xf32>
    %c0_2 = arith.constant 0 : index
    %c0_3 = arith.constant 0 : index
    %3 = vector.load %arg5[%c0_2, %c0_3] : memref<1x128xf32, #tpu.memory_space<vmem>>, vector<1x128xf32>
    %4 = vector.broadcast %3 : vector<1x128xf32> to vector<192x128xf32>
    %5 = arith.mulf %2, %4 : vector<192x128xf32>
    %c0_4 = arith.constant 0 : index
    %c0_5 = arith.constant 0 : index
    %6 = vector.load %arg6[%c0_4, %c0_5] : memref<1x128xf32, #tpu.memory_space<vmem>>, vector<1x128xf32>
    %7 = vector.broadcast %6 : vector<1x128xf32> to vector<192x128xf32>
    %8 = arith.addf %5, %7 : vector<192x128xf32>
    %cst = arith.constant 0.000000e+00 : f32
    %9 = vector.broadcast %cst : f32 to vector<192x128xf32>
    %10 = arith.cmpf ogt, %8, %9 : vector<192x128xf32>
    %cst_6 = arith.constant 0.00999999977 : f32
    %11 = vector.broadcast %cst_6 : f32 to vector<192x128xf32>
    %12 = arith.mulf %11, %8 : vector<192x128xf32>
    %13 = arith.select %10, %8, %12 : vector<192x128xi1>, vector<192x128xf32>
    %14 = arith.truncf %13 : vector<192x128xf32> to vector<192x128xbf16>
    %c0_7 = arith.constant 0 : index
    %c0_8 = arith.constant 0 : index
    %15 = vector.load %arg12[%c0_7, %c0_8] : memref<232x128xbf16, #tpu.memory_space<vmem>>, vector<192x128xbf16>
    tpu.vector_store %arg12[%c0_7, %c0_8], %14 {strides = array<i32>} : memref<232x128xbf16, #tpu.memory_space<vmem>>, vector<192x128xbf16>,
    %c0_9 = arith.constant 0 : index
    %c0_10 = arith.constant 0 : index
    %c0_11 = arith.constant 0 : index
    %16 = vector.load %arg3[%c0_9, %c0_10, %c0_11] : memref<1x16x128xbf16, #tpu.memory_space<vmem>>, vector<1x16x128xbf16>
    %17 = vector.shape_cast %16 : vector<1x16x128xbf16> to vector<16x128xbf16>
    %18 = arith.extf %17 : vector<16x128xbf16> to vector<16x128xf32>
    %c0_12 = arith.constant 0 : index
    %c0_13 = arith.constant 0 : index
    %19 = vector.load %arg5[%c0_12, %c0_13] : memref<1x128xf32, #tpu.memory_space<vmem>>, vector<1x128xf32>
    %20 = vector.broadcast %19 : vector<1x128xf32> to vector<16x128xf32>
    %21 = arith.mulf %18, %20 : vector<16x128xf32>
    %c0_14 = arith.constant 0 : index
    %c0_15 = arith.constant 0 : index
    %22 = vector.load %arg6[%c0_14, %c0_15] : memref<1x128xf32, #tpu.memory_space<vmem>>, vector<1x128xf32>
    %23 = vector.broadcast %22 : vector<1x128xf32> to vector<16x128xf32>
    %24 = arith.addf %21, %23 : vector<16x128xf32>
    %cst_16 = arith.constant 0.000000e+00 : f32
    %25 = vector.broadcast %cst_16 : f32 to vector<16x128xf32>
    %26 = arith.cmpf ogt, %24, %25 : vector<16x128xf32>
    %cst_17 = arith.constant 0.00999999977 : f32
    %27 = vector.broadcast %cst_17 : f32 to vector<16x128xf32>
    %28 = arith.mulf %27, %24 : vector<16x128xf32>
    %29 = arith.select %26, %24, %28 : vector<16x128xi1>, vector<16x128xf32>
    %30 = arith.truncf %29 : vector<16x128xf32> to vector<16x128xbf16>
    %c192 = arith.constant 192 : index
    %c0_18 = arith.constant 0 : index
    %31 = vector.load %arg12[%c192, %c0_18] : memref<232x128xbf16, #tpu.memory_space<vmem>>, vector<16x128xbf16>
    tpu.vector_store %arg12[%c192, %c0_18], %30 {strides = array<i32>} : memref<232x128xbf16, #tpu.memory_space<vmem>>, vector<16x128xbf16>,
    %c0_19 = arith.constant 0 : index
    %c0_20 = arith.constant 0 : index
    %c0_21 = arith.constant 0 : index
    %32 = vector.load %arg4[%c0_19, %c0_20, %c0_21] : memref<1x16x128xbf16, #tpu.memory_space<vmem>>, vector<1x16x128xbf16>
    %33 = vector.shape_cast %32 : vector<1x16x128xbf16> to vector<16x128xbf16>
    %34 = arith.extf %33 : vector<16x128xbf16> to vector<16x128xf32>
    %c0_22 = arith.constant 0 : index
    %c0_23 = arith.constant 0 : index
    %35 = vector.load %arg5[%c0_22, %c0_23] : memref<1x128xf32, #tpu.memory_space<vmem>>, vector<1x128xf32>
    %36 = vector.broadcast %35 : vector<1x128xf32> to vector<16x128xf32>
    %37 = arith.mulf %34, %36 : vector<16x128xf32>
    %c0_24 = arith.constant 0 : index
    %c0_25 = arith.constant 0 : index
    %38 = vector.load %arg6[%c0_24, %c0_25] : memref<1x128xf32, #tpu.memory_space<vmem>>, vector<1x128xf32>
    %39 = vector.broadcast %38 : vector<1x128xf32> to vector<16x128xf32>
    %40 = arith.addf %37, %39 : vector<16x128xf32>
    %cst_26 = arith.constant 0.000000e+00 : f32
    %41 = vector.broadcast %cst_26 : f32 to vector<16x128xf32>
    %42 = arith.cmpf ogt, %40, %41 : vector<16x128xf32>
    %cst_27 = arith.constant 0.00999999977 : f32
    %43 = vector.broadcast %cst_27 : f32 to vector<16x128xf32>
    %44 = arith.mulf %43, %40 : vector<16x128xf32>
    %45 = arith.select %42, %40, %44 : vector<16x128xi1>, vector<16x128xf32>
    %46 = arith.truncf %45 : vector<16x128xf32> to vector<16x128xbf16>
    %c208 = arith.constant 208 : index
    %c0_28 = arith.constant 0 : index
    %47 = vector.load %arg12[%c208, %c0_28] : memref<232x128xbf16, #tpu.memory_space<vmem>>, vector<16x128xbf16>
    tpu.vector_store %arg12[%c208, %c0_28], %46 {strides = array<i32>} : memref<232x128xbf16, #tpu.memory_space<vmem>>, vector<16x128xbf16>,
    %cst_29 = arith.constant 0.000000e+00 : bf16
    %48 = vector.broadcast %cst_29 : bf16 to vector<8x128xbf16>
    %c224 = arith.constant 224 : index
    %c0_30 = arith.constant 0 : index
    %49 = vector.load %arg12[%c224, %c0_30] : memref<232x128xbf16, #tpu.memory_space<vmem>>, vector<8x128xbf16>
    tpu.vector_store %arg12[%c224, %c0_30], %48 {strides = array<i32>} : memref<232x128xbf16, #tpu.memory_space<vmem>>, vector<8x128xbf16>,
    %c0_31 = arith.constant 0 : index
    %c0_32 = arith.constant 0 : index
    %50 = vector.load %arg12[%c0_31, %c0_32] : memref<232x128xbf16, #tpu.memory_space<vmem>>, vector<192x128xbf16>
    %c0_33 = arith.constant 0 : index
    %c0_34 = arith.constant 0 : index
    %c0_35 = arith.constant 0 : index
    %c0_36 = arith.constant 0 : index
    %51 = vector.load %arg7[%c0_33, %c0_34, %c0_35, %c0_36] : memref<3x3x128x128xbf16, #tpu.memory_space<vmem>>, vector<1x1x128x128xbf16>
    %52 = vector.shape_cast %51 : vector<1x1x128x128xbf16> to vector<128x128xbf16>
    %cst_37 = arith.constant dense<0.000000e+00> : vector<192x128xf32>
    %53 = tpu.matmul %50, %52, %cst_37 {dimension_numbers = #tpu.dot_dimension_numbers<[1], [0], [0], [1], [0, 0, 1, 1], [], []>} : vector<192x128xbf16>, vector<128x128xbf16>, vector<192x128xf32> -> vector<192x128xf32>
    %c1 = arith.constant 1 : index
    %c0_38 = arith.constant 0 : index
    %54 = vector.load %arg12[%c1, %c0_38] : memref<232x128xbf16, #tpu.memory_space<vmem>>, vector<192x128xbf16>
    %c0_39 = arith.constant 0 : index
    %c1_40 = arith.constant 1 : index
    %c0_41 = arith.constant 0 : index
    %c0_42 = arith.constant 0 : index
    %55 = vector.load %arg7[%c0_39, %c1_40, %c0_41, %c0_42] : memref<3x3x128x128xbf16, #tpu.memory_space<vmem>>, vector<1x1x128x128xbf16>
    %56 = vector.shape_cast %55 : vector<1x1x128x128xbf16> to vector<128x128xbf16>
    %cst_43 = arith.constant dense<0.000000e+00> : vector<192x128xf32>
    %57 = tpu.matmul %54, %56, %cst_43 {dimension_numbers = #tpu.dot_dimension_numbers<[1], [0], [0], [1], [0, 0, 1, 1], [], []>} : vector<192x128xbf16>, vector<128x128xbf16>, vector<192x128xf32> -> vector<192x128xf32>
    %58 = arith.addf %53, %57 : vector<192x128xf32>
    %c2 = arith.constant 2 : index
    %c0_44 = arith.constant 0 : index
    %59 = vector.load %arg12[%c2, %c0_44] : memref<232x128xbf16, #tpu.memory_space<vmem>>, vector<192x128xbf16>
    %c0_45 = arith.constant 0 : index
    %c2_46 = arith.constant 2 : index
    %c0_47 = arith.constant 0 : index
    %c0_48 = arith.constant 0 : index
    %60 = vector.load %arg7[%c0_45, %c2_46, %c0_47, %c0_48] : memref<3x3x128x128xbf16, #tpu.memory_space<vmem>>, vector<1x1x128x128xbf16>
    %61 = vector.shape_cast %60 : vector<1x1x128x128xbf16> to vector<128x128xbf16>
    %cst_49 = arith.constant dense<0.000000e+00> : vector<192x128xf32>
    %62 = tpu.matmul %59, %61, %cst_49 {dimension_numbers = #tpu.dot_dimension_numbers<[1], [0], [0], [1], [0, 0, 1, 1], [], []>} : vector<192x128xbf16>, vector<128x128xbf16>, vector<192x128xf32> -> vector<192x128xf32>
    %63 = arith.addf %58, %62 : vector<192x128xf32>
    %c16 = arith.constant 16 : index
    %c0_50 = arith.constant 0 : index
    %64 = vector.load %arg12[%c16, %c0_50] : memref<232x128xbf16, #tpu.memory_space<vmem>>, vector<192x128xbf16>
    %c1_51 = arith.constant 1 : index
    %c0_52 = arith.constant 0 : index
    %c0_53 = arith.constant 0 : index
    %c0_54 = arith.constant 0 : index
    %65 = vector.load %arg7[%c1_51, %c0_52, %c0_53, %c0_54] : memref<3x3x128x128xbf16, #tpu.memory_space<vmem>>, vector<1x1x128x128xbf16>
    %66 = vector.shape_cast %65 : vector<1x1x128x128xbf16> to vector<128x128xbf16>
    %cst_55 = arith.constant dense<0.000000e+00> : vector<192x128xf32>
    %67 = tpu.matmul %64, %66, %cst_55 {dimension_numbers = #tpu.dot_dimension_numbers<[1], [0], [0], [1], [0, 0, 1, 1], [], []>} : vector<192x128xbf16>, vector<128x128xbf16>, vector<192x128xf32> -> vector<192x128xf32>
    %68 = arith.addf %63, %67 : vector<192x128xf32>
    %c17 = arith.constant 17 : index
    %c0_56 = arith.constant 0 : index
    %69 = vector.load %arg12[%c17, %c0_56] : memref<232x128xbf16, #tpu.memory_space<vmem>>, vector<192x128xbf16>
    %c1_57 = arith.constant 1 : index
    %c1_58 = arith.constant 1 : index
    %c0_59 = arith.constant 0 : index
    %c0_60 = arith.constant 0 : index
    %70 = vector.load %arg7[%c1_57, %c1_58, %c0_59, %c0_60] : memref<3x3x128x128xbf16, #tpu.memory_space<vmem>>, vector<1x1x128x128xbf16>
    %71 = vector.shape_cast %70 : vector<1x1x128x128xbf16> to vector<128x128xbf16>
    %cst_61 = arith.constant dense<0.000000e+00> : vector<192x128xf32>
    %72 = tpu.matmul %69, %71, %cst_61 {dimension_numbers = #tpu.dot_dimension_numbers<[1], [0], [0], [1], [0, 0, 1, 1], [], []>} : vector<192x128xbf16>, vector<128x128xbf16>, vector<192x128xf32> -> vector<192x128xf32>
    %73 = arith.addf %68, %72 : vector<192x128xf32>
    %c18 = arith.constant 18 : index
    %c0_62 = arith.constant 0 : index
    %74 = vector.load %arg12[%c18, %c0_62] : memref<232x128xbf16, #tpu.memory_space<vmem>>, vector<192x128xbf16>
    %c1_63 = arith.constant 1 : index
    %c2_64 = arith.constant 2 : index
    %c0_65 = arith.constant 0 : index
    %c0_66 = arith.constant 0 : index
    %75 = vector.load %arg7[%c1_63, %c2_64, %c0_65, %c0_66] : memref<3x3x128x128xbf16, #tpu.memory_space<vmem>>, vector<1x1x128x128xbf16>
    %76 = vector.shape_cast %75 : vector<1x1x128x128xbf16> to vector<128x128xbf16>
    %cst_67 = arith.constant dense<0.000000e+00> : vector<192x128xf32>
    %77 = tpu.matmul %74, %76, %cst_67 {dimension_numbers = #tpu.dot_dimension_numbers<[1], [0], [0], [1], [0, 0, 1, 1], [], []>} : vector<192x128xbf16>, vector<128x128xbf16>, vector<192x128xf32> -> vector<192x128xf32>
    %78 = arith.addf %73, %77 : vector<192x128xf32>
    %c32 = arith.constant 32 : index
    %c0_68 = arith.constant 0 : index
    %79 = vector.load %arg12[%c32, %c0_68] : memref<232x128xbf16, #tpu.memory_space<vmem>>, vector<192x128xbf16>
    %c2_69 = arith.constant 2 : index
    %c0_70 = arith.constant 0 : index
    %c0_71 = arith.constant 0 : index
    %c0_72 = arith.constant 0 : index
    %80 = vector.load %arg7[%c2_69, %c0_70, %c0_71, %c0_72] : memref<3x3x128x128xbf16, #tpu.memory_space<vmem>>, vector<1x1x128x128xbf16>
    %81 = vector.shape_cast %80 : vector<1x1x128x128xbf16> to vector<128x128xbf16>
    %cst_73 = arith.constant dense<0.000000e+00> : vector<192x128xf32>
    %82 = tpu.matmul %79, %81, %cst_73 {dimension_numbers = #tpu.dot_dimension_numbers<[1], [0], [0], [1], [0, 0, 1, 1], [], []>} : vector<192x128xbf16>, vector<128x128xbf16>, vector<192x128xf32> -> vector<192x128xf32>
    %83 = arith.addf %78, %82 : vector<192x128xf32>
    %c33 = arith.constant 33 : index
    %c0_74 = arith.constant 0 : index
    %84 = vector.load %arg12[%c33, %c0_74] : memref<232x128xbf16, #tpu.memory_space<vmem>>, vector<192x128xbf16>
    %c2_75 = arith.constant 2 : index
    %c1_76 = arith.constant 1 : index
    %c0_77 = arith.constant 0 : index
    %c0_78 = arith.constant 0 : index
    %85 = vector.load %arg7[%c2_75, %c1_76, %c0_77, %c0_78] : memref<3x3x128x128xbf16, #tpu.memory_space<vmem>>, vector<1x1x128x128xbf16>
    %86 = vector.shape_cast %85 : vector<1x1x128x128xbf16> to vector<128x128xbf16>
    %cst_79 = arith.constant dense<0.000000e+00> : vector<192x128xf32>
    %87 = tpu.matmul %84, %86, %cst_79 {dimension_numbers = #tpu.dot_dimension_numbers<[1], [0], [0], [1], [0, 0, 1, 1], [], []>} : vector<192x128xbf16>, vector<128x128xbf16>, vector<192x128xf32> -> vector<192x128xf32>
    %88 = arith.addf %83, %87 : vector<192x128xf32>
    %c34 = arith.constant 34 : index
    %c0_80 = arith.constant 0 : index
    %89 = vector.load %arg12[%c34, %c0_80] : memref<232x128xbf16, #tpu.memory_space<vmem>>, vector<192x128xbf16>
    %c2_81 = arith.constant 2 : index
    %c2_82 = arith.constant 2 : index
    %c0_83 = arith.constant 0 : index
    %c0_84 = arith.constant 0 : index
    %90 = vector.load %arg7[%c2_81, %c2_82, %c0_83, %c0_84] : memref<3x3x128x128xbf16, #tpu.memory_space<vmem>>, vector<1x1x128x128xbf16>
    %91 = vector.shape_cast %90 : vector<1x1x128x128xbf16> to vector<128x128xbf16>
    %cst_85 = arith.constant dense<0.000000e+00> : vector<192x128xf32>
    %92 = tpu.matmul %89, %91, %cst_85 {dimension_numbers = #tpu.dot_dimension_numbers<[1], [0], [0], [1], [0, 0, 1, 1], [], []>} : vector<192x128xbf16>, vector<128x128xbf16>, vector<192x128xf32> -> vector<192x128xf32>
    %93 = arith.addf %88, %92 : vector<192x128xf32>
    %c0_86 = arith.constant 0 : index
    %c0_87 = arith.constant 0 : index
    %94 = vector.load %arg8[%c0_86, %c0_87] : memref<1x128xf32, #tpu.memory_space<vmem>>, vector<1x128xf32>
    %95 = vector.broadcast %94 : vector<1x128xf32> to vector<192x128xf32>
    %96 = arith.addf %93, %95 : vector<192x128xf32>
    %97 = arith.truncf %96 : vector<192x128xf32> to vector<192x128xbf16>
    %c0_88 = arith.constant 0 : index
    %c0_89 = arith.constant 0 : index
    %c0_90 = arith.constant 0 : index
    %98 = vector.load %arg10[%c0_88, %c0_89, %c0_90] : memref<1x192x128xbf16, #tpu.memory_space<vmem>>, vector<1x192x128xbf16>
    %99 = vector.shape_cast %98 : vector<1x192x128xbf16> to vector<192x128xbf16>
    %100 = vector.shape_cast %97 : vector<192x128xbf16> to vector<1x192x128xbf16>
    tpu.vector_store %arg10[%c0_88, %c0_89, %c0_90], %100 {strides = array<i32>} : memref<1x192x128xbf16, #tpu.memory_space<vmem>>, vector<1x192x128xbf16>,
    %c0_91 = arith.constant 0 : index
    %c0_92 = arith.constant 0 : index
    %101 = vector.load %arg9[%c0_91, %c0_92] : memref<192x1xf32, #tpu.memory_space<vmem>>, vector<192x1xf32>
    %cst_93 = arith.constant 5.000000e-01 : f32
    %102 = vector.broadcast %cst_93 : f32 to vector<192x1xf32>
    %103 = arith.cmpf ogt, %101, %102 : vector<192x1xf32>
    %cst_94 = arith.constant 0.000000e+00 : f32
    %104 = vector.shape_cast %103 : vector<192x1xi1> to vector<192x1xi1>
    %105 = vector.broadcast %104 : vector<192x1xi1> to vector<192x128xi1>
    %106 = vector.broadcast %cst_94 : f32 to vector<192x128xf32>
    %107 = arith.select %105, %96, %106 : vector<192x128xi1>, vector<192x128xf32>
    %cst_95 = arith.constant dense<0.000000e+00> : vector<128xf32>
    %108 = vector.multi_reduction <add>, %107, %cst_95 [0] : vector<192x128xf32> to vector<128xf32>
    %109 = vector.shape_cast %108 : vector<128xf32> to vector<1x128xf32>
    %c0_96 = arith.constant 0 : index
    %c0_97 = arith.constant 0 : index
    %c0_98 = arith.constant 0 : index
    %c0_99 = arith.constant 0 : index
    %110 = vector.load %arg11[%c0_96, %c0_97, %c0_98, %c0_99] : memref<1x1x2x128xf32, #tpu.memory_space<vmem>>, vector<1x1x1x128xf32>
    %111 = vector.shape_cast %110 : vector<1x1x1x128xf32> to vector<1x128xf32>
    %112 = vector.shape_cast %109 : vector<1x128xf32> to vector<1x1x1x128xf32>
    tpu.vector_store %arg11[%c0_96, %c0_97, %c0_98, %c0_99], %112 {strides = array<i32>} : memref<1x1x2x128xf32, #tpu.memory_space<vmem>>, vector<1x1x1x128xf32>,
    %113 = arith.mulf %107, %107 : vector<192x128xf32>
    %cst_100 = arith.constant dense<0.000000e+00> : vector<128xf32>
    %114 = vector.multi_reduction <add>, %113, %cst_100 [0] : vector<192x128xf32> to vector<128xf32>
    %115 = vector.shape_cast %114 : vector<128xf32> to vector<1x128xf32>
    %c0_101 = arith.constant 0 : index
    %c0_102 = arith.constant 0 : index
    %c1_103 = arith.constant 1 : index
    %c0_104 = arith.constant 0 : index
    %116 = vector.load %arg11[%c0_101, %c0_102, %c1_103, %c0_104] : memref<1x1x2x128xf32, #tpu.memory_space<vmem>>, vector<1x1x1x128xf32>
    %117 = vector.shape_cast %116 : vector<1x1x1x128xf32> to vector<1x128xf32>
    %118 = vector.shape_cast %115 : vector<1x128xf32> to vector<1x1x1x128xf32>
    tpu.vector_store %arg11[%c0_101, %c0_102, %c1_103, %c0_104], %118 {strides = array<i32>} : memref<1x1x2x128xf32, #tpu.memory_space<vmem>>, vector<1x1x1x128xf32>,
    return
  }
  func.func @transform_0(%arg0: i32, %arg1: i32) -> (i32, i32, i32) {
    %c0_i32 = arith.constant 0 : i32
    %c0_i32_0 = arith.constant 0 : i32
    return %arg0, %arg1, %c0_i32 : i32, i32, i32
  }
  func.func @transform_1(%arg0: i32, %arg1: i32) -> (i32, i32, i32) {
    %c12_i32 = arith.constant 12 : i32
    %0 = arith.muli %arg1, %c12_i32 : i32
    %c12_i32_0 = arith.constant 12 : i32
    %1 = arith.addi %0, %c12_i32_0 : i32
    %c0_i32 = arith.constant 0 : i32
    %c0_i32_1 = arith.constant 0 : i32
    return %arg0, %1, %c0_i32 : i32, i32, i32
  }
  func.func @transform_2(%arg0: i32, %arg1: i32) -> (i32, i32, i32) {
    %c12_i32 = arith.constant 12 : i32
    %0 = arith.muli %arg1, %c12_i32 : i32
    %c12_i32_0 = arith.constant 12 : i32
    %1 = arith.addi %0, %c12_i32_0 : i32
    %c1_i32 = arith.constant 1 : i32
    %2 = arith.addi %1, %c1_i32 : i32
    %c0_i32 = arith.constant 0 : i32
    %c0_i32_1 = arith.constant 0 : i32
    return %arg0, %2, %c0_i32 : i32, i32, i32
  }
  func.func @transform_3(%arg0: i32, %arg1: i32) -> (i32, i32) {
    %c0_i32 = arith.constant 0 : i32
    %c0_i32_0 = arith.constant 0 : i32
    %c0_i32_1 = arith.constant 0 : i32
    return %c0_i32, %c0_i32_0 : i32, i32
  }
  func.func @transform_4(%arg0: i32, %arg1: i32) -> (i32, i32) {
    %c0_i32 = arith.constant 0 : i32
    %c0_i32_0 = arith.constant 0 : i32
    %c0_i32_1 = arith.constant 0 : i32
    return %c0_i32, %c0_i32_0 : i32, i32
  }
  func.func @transform_5(%arg0: i32, %arg1: i32) -> (i32, i32, i32, i32) {
    %c0_i32 = arith.constant 0 : i32
    %c0_i32_0 = arith.constant 0 : i32
    %c0_i32_1 = arith.constant 0 : i32
    %c0_i32_2 = arith.constant 0 : i32
    %c0_i32_3 = arith.constant 0 : i32
    return %c0_i32, %c0_i32_0, %c0_i32_1, %c0_i32_2 : i32, i32, i32, i32
  }
  func.func @transform_6(%arg0: i32, %arg1: i32) -> (i32, i32) {
    %c0_i32 = arith.constant 0 : i32
    %c0_i32_0 = arith.constant 0 : i32
    %c0_i32_1 = arith.constant 0 : i32
    return %c0_i32, %c0_i32_0 : i32, i32
  }
  func.func @transform_7(%arg0: i32, %arg1: i32) -> (i32, i32) {
    %c0_i32 = arith.constant 0 : i32
    %c0_i32_0 = arith.constant 0 : i32
    %c0_i32_1 = arith.constant 0 : i32
    return %c0_i32, %c0_i32_0 : i32, i32
  }
  func.func @transform_8(%arg0: i32, %arg1: i32) -> (i32, i32, i32) {
    %c0_i32 = arith.constant 0 : i32
    %c0_i32_0 = arith.constant 0 : i32
    return %arg0, %arg1, %c0_i32 : i32, i32, i32
  }
  func.func @transform_9(%arg0: i32, %arg1: i32) -> (i32, i32, i32, i32) {
    %c0_i32 = arith.constant 0 : i32
    %c0_i32_0 = arith.constant 0 : i32
    %c0_i32_1 = arith.constant 0 : i32
    return %arg0, %arg1, %c0_i32, %c0_i32_0 : i32, i32, i32, i32
  }
}

module attributes {stable_mosaic.version = 11 : i64} {
  func.func @_bn_lrelu_kernel(%arg0: i32, %arg1: i32, %arg2: memref<1x192x128xbf16, #tpu.memory_space<vmem>>, %arg3: memref<1x128xf32, #tpu.memory_space<vmem>>, %arg4: memref<1x128xf32, #tpu.memory_space<vmem>>, %arg5: memref<1x192x8xf32, #tpu.memory_space<vmem>>) attributes {dimension_semantics = [#tpu.dimension_semantics<parallel>, #tpu.dimension_semantics<parallel>], iteration_bounds = array<i64: 2, 1>, scalar_prefetch = 0 : i64, scratch_operands = 0 : i64, tpu.core_type = #tpu.core_type<tc>, window_params = [{transform_indices = @transform_0, window_bounds = array<i64: 1, 192, 128>}, {pipeline_mode = #tpu.pipeline_mode<synchronous>, transform_indices = @transform_1, window_bounds = array<i64: 1, 128>}, {pipeline_mode = #tpu.pipeline_mode<synchronous>, transform_indices = @transform_2, window_bounds = array<i64: 1, 128>}, {transform_indices = @transform_3, window_bounds = array<i64: 1, 192, 8>}]} {
    %c0 = arith.constant 0 : index
    %c0_0 = arith.constant 0 : index
    %c0_1 = arith.constant 0 : index
    %0 = vector.load %arg2[%c0, %c0_0, %c0_1] : memref<1x192x128xbf16, #tpu.memory_space<vmem>>, vector<1x192x128xbf16>
    %1 = vector.shape_cast %0 : vector<1x192x128xbf16> to vector<192x128xbf16>
    %2 = arith.extf %1 : vector<192x128xbf16> to vector<192x128xf32>
    %c0_2 = arith.constant 0 : index
    %c0_3 = arith.constant 0 : index
    %3 = vector.load %arg3[%c0_2, %c0_3] : memref<1x128xf32, #tpu.memory_space<vmem>>, vector<1x128xf32>
    %4 = vector.broadcast %3 : vector<1x128xf32> to vector<192x128xf32>
    %5 = arith.mulf %2, %4 : vector<192x128xf32>
    %c0_4 = arith.constant 0 : index
    %c0_5 = arith.constant 0 : index
    %6 = vector.load %arg4[%c0_4, %c0_5] : memref<1x128xf32, #tpu.memory_space<vmem>>, vector<1x128xf32>
    %7 = vector.broadcast %6 : vector<1x128xf32> to vector<192x128xf32>
    %8 = arith.addf %5, %7 : vector<192x128xf32>
    %cst = arith.constant 0.000000e+00 : f32
    %9 = vector.broadcast %cst : f32 to vector<192x128xf32>
    %10 = arith.cmpf ogt, %8, %9 : vector<192x128xf32>
    %cst_6 = arith.constant 0.00999999977 : f32
    %11 = vector.broadcast %cst_6 : f32 to vector<192x128xf32>
    %12 = arith.mulf %11, %8 : vector<192x128xf32>
    %13 = arith.select %10, %8, %12 : vector<192x128xi1>, vector<192x128xf32>
    %14 = vector.extract_strided_slice %13 {offsets = [0, 0], sizes = [192, 8], strides = [1, 1]} : vector<192x128xf32> to vector<192x8xf32>
    %c0_7 = arith.constant 0 : index
    %c0_8 = arith.constant 0 : index
    %c0_9 = arith.constant 0 : index
    %15 = vector.load %arg5[%c0_7, %c0_8, %c0_9] : memref<1x192x8xf32, #tpu.memory_space<vmem>>, vector<1x192x8xf32>
    %16 = vector.shape_cast %15 : vector<1x192x8xf32> to vector<192x8xf32>
    %17 = vector.shape_cast %14 : vector<192x8xf32> to vector<1x192x8xf32>
    tpu.vector_store %arg5[%c0_7, %c0_8, %c0_9], %17 {strides = array<i32>} : memref<1x192x8xf32, #tpu.memory_space<vmem>>, vector<1x192x8xf32>,
    return
  }
  func.func @transform_0(%arg0: i32, %arg1: i32) -> (i32, i32, i32) {
    %c0_i32 = arith.constant 0 : i32
    %c0_i32_0 = arith.constant 0 : i32
    return %arg0, %arg1, %c0_i32 : i32, i32, i32
  }
  func.func @transform_1(%arg0: i32, %arg1: i32) -> (i32, i32) {
    %c0_i32 = arith.constant 0 : i32
    %c0_i32_0 = arith.constant 0 : i32
    %c0_i32_1 = arith.constant 0 : i32
    return %c0_i32, %c0_i32_0 : i32, i32
  }
  func.func @transform_2(%arg0: i32, %arg1: i32) -> (i32, i32) {
    %c0_i32 = arith.constant 0 : i32
    %c0_i32_0 = arith.constant 0 : i32
    %c0_i32_1 = arith.constant 0 : i32
    return %c0_i32, %c0_i32_0 : i32, i32
  }
  func.func @transform_3(%arg0: i32, %arg1: i32) -> (i32, i32, i32) {
    %c0_i32 = arith.constant 0 : i32
    %c0_i32_0 = arith.constant 0 : i32
    return %arg0, %arg1, %c0_i32 : i32, i32, i32
  }
}

module attributes {stable_mosaic.version = 11 : i64} {
  func.func @_conv1x1_kernel(%arg0: i32, %arg1: i32, %arg2: memref<1x192x128xbf16, #tpu.memory_space<vmem>>, %arg3: memref<1x128xf32, #tpu.memory_space<vmem>>, %arg4: memref<1x128xf32, #tpu.memory_space<vmem>>, %arg5: memref<128x128xbf16, #tpu.memory_space<vmem>>, %arg6: memref<1x128xf32, #tpu.memory_space<vmem>>, %arg7: memref<192x1xf32, #tpu.memory_space<vmem>>, %arg8: memref<1x192x128xbf16, #tpu.memory_space<vmem>>, %arg9: memref<1x1x2x128xf32, #tpu.memory_space<vmem>>) attributes {dimension_semantics = [#tpu.dimension_semantics<parallel>, #tpu.dimension_semantics<parallel>], iteration_bounds = array<i64: 2, 1>, scalar_prefetch = 0 : i64, scratch_operands = 0 : i64, tpu.core_type = #tpu.core_type<tc>, window_params = [{transform_indices = @transform_0, window_bounds = array<i64: 1, 192, 128>}, {pipeline_mode = #tpu.pipeline_mode<synchronous>, transform_indices = @transform_1, window_bounds = array<i64: 1, 128>}, {pipeline_mode = #tpu.pipeline_mode<synchronous>, transform_indices = @transform_2, window_bounds = array<i64: 1, 128>}, {pipeline_mode = #tpu.pipeline_mode<synchronous>, transform_indices = @transform_3, window_bounds = array<i64: 128, 128>}, {pipeline_mode = #tpu.pipeline_mode<synchronous>, transform_indices = @transform_4, window_bounds = array<i64: 1, 128>}, {pipeline_mode = #tpu.pipeline_mode<synchronous>, transform_indices = @transform_5, window_bounds = array<i64: 192, 1>}, {transform_indices = @transform_6, window_bounds = array<i64: 1, 192, 128>}, {transform_indices = @transform_7, window_bounds = array<i64: 1, 1, 2, 128>}]} {
    %c0 = arith.constant 0 : index
    %c0_0 = arith.constant 0 : index
    %c0_1 = arith.constant 0 : index
    %0 = vector.load %arg2[%c0, %c0_0, %c0_1] : memref<1x192x128xbf16, #tpu.memory_space<vmem>>, vector<1x192x128xbf16>
    %1 = vector.shape_cast %0 : vector<1x192x128xbf16> to vector<192x128xbf16>
    %2 = arith.extf %1 : vector<192x128xbf16> to vector<192x128xf32>
    %c0_2 = arith.constant 0 : index
    %c0_3 = arith.constant 0 : index
    %3 = vector.load %arg3[%c0_2, %c0_3] : memref<1x128xf32, #tpu.memory_space<vmem>>, vector<1x128xf32>
    %4 = vector.broadcast %3 : vector<1x128xf32> to vector<192x128xf32>
    %5 = arith.mulf %2, %4 : vector<192x128xf32>
    %c0_4 = arith.constant 0 : index
    %c0_5 = arith.constant 0 : index
    %6 = vector.load %arg4[%c0_4, %c0_5] : memref<1x128xf32, #tpu.memory_space<vmem>>, vector<1x128xf32>
    %7 = vector.broadcast %6 : vector<1x128xf32> to vector<192x128xf32>
    %8 = arith.addf %5, %7 : vector<192x128xf32>
    %cst = arith.constant 0.000000e+00 : f32
    %9 = vector.broadcast %cst : f32 to vector<192x128xf32>
    %10 = arith.cmpf ogt, %8, %9 : vector<192x128xf32>
    %cst_6 = arith.constant 0.00999999977 : f32
    %11 = vector.broadcast %cst_6 : f32 to vector<192x128xf32>
    %12 = arith.mulf %11, %8 : vector<192x128xf32>
    %13 = arith.select %10, %8, %12 : vector<192x128xi1>, vector<192x128xf32>
    %14 = arith.truncf %13 : vector<192x128xf32> to vector<192x128xbf16>
    %c0_7 = arith.constant 0 : index
    %c0_8 = arith.constant 0 : index
    %15 = vector.load %arg5[%c0_7, %c0_8] : memref<128x128xbf16, #tpu.memory_space<vmem>>, vector<128x128xbf16>
    %cst_9 = arith.constant dense<0.000000e+00> : vector<192x128xf32>
    %16 = tpu.matmul %14, %15, %cst_9 {dimension_numbers = #tpu.dot_dimension_numbers<[1], [0], [0], [1], [0, 0, 1, 1], [], []>} : vector<192x128xbf16>, vector<128x128xbf16>, vector<192x128xf32> -> vector<192x128xf32>
    %c0_10 = arith.constant 0 : index
    %c0_11 = arith.constant 0 : index
    %17 = vector.load %arg6[%c0_10, %c0_11] : memref<1x128xf32, #tpu.memory_space<vmem>>, vector<1x128xf32>
    %18 = vector.broadcast %17 : vector<1x128xf32> to vector<192x128xf32>
    %19 = arith.addf %16, %18 : vector<192x128xf32>
    %20 = arith.truncf %19 : vector<192x128xf32> to vector<192x128xbf16>
    %c0_12 = arith.constant 0 : index
    %c0_13 = arith.constant 0 : index
    %c0_14 = arith.constant 0 : index
    %21 = vector.load %arg8[%c0_12, %c0_13, %c0_14] : memref<1x192x128xbf16, #tpu.memory_space<vmem>>, vector<1x192x128xbf16>
    %22 = vector.shape_cast %21 : vector<1x192x128xbf16> to vector<192x128xbf16>
    %23 = vector.shape_cast %20 : vector<192x128xbf16> to vector<1x192x128xbf16>
    tpu.vector_store %arg8[%c0_12, %c0_13, %c0_14], %23 {strides = array<i32>} : memref<1x192x128xbf16, #tpu.memory_space<vmem>>, vector<1x192x128xbf16>,
    %c0_15 = arith.constant 0 : index
    %c0_16 = arith.constant 0 : index
    %24 = vector.load %arg7[%c0_15, %c0_16] : memref<192x1xf32, #tpu.memory_space<vmem>>, vector<192x1xf32>
    %cst_17 = arith.constant 5.000000e-01 : f32
    %25 = vector.broadcast %cst_17 : f32 to vector<192x1xf32>
    %26 = arith.cmpf ogt, %24, %25 : vector<192x1xf32>
    %cst_18 = arith.constant 0.000000e+00 : f32
    %27 = vector.shape_cast %26 : vector<192x1xi1> to vector<192x1xi1>
    %28 = vector.broadcast %27 : vector<192x1xi1> to vector<192x128xi1>
    %29 = vector.broadcast %cst_18 : f32 to vector<192x128xf32>
    %30 = arith.select %28, %19, %29 : vector<192x128xi1>, vector<192x128xf32>
    %cst_19 = arith.constant dense<0.000000e+00> : vector<128xf32>
    %31 = vector.multi_reduction <add>, %30, %cst_19 [0] : vector<192x128xf32> to vector<128xf32>
    %32 = vector.shape_cast %31 : vector<128xf32> to vector<1x128xf32>
    %c0_20 = arith.constant 0 : index
    %c0_21 = arith.constant 0 : index
    %c0_22 = arith.constant 0 : index
    %c0_23 = arith.constant 0 : index
    %33 = vector.load %arg9[%c0_20, %c0_21, %c0_22, %c0_23] : memref<1x1x2x128xf32, #tpu.memory_space<vmem>>, vector<1x1x1x128xf32>
    %34 = vector.shape_cast %33 : vector<1x1x1x128xf32> to vector<1x128xf32>
    %35 = vector.shape_cast %32 : vector<1x128xf32> to vector<1x1x1x128xf32>
    tpu.vector_store %arg9[%c0_20, %c0_21, %c0_22, %c0_23], %35 {strides = array<i32>} : memref<1x1x2x128xf32, #tpu.memory_space<vmem>>, vector<1x1x1x128xf32>,
    %36 = arith.mulf %30, %30 : vector<192x128xf32>
    %cst_24 = arith.constant dense<0.000000e+00> : vector<128xf32>
    %37 = vector.multi_reduction <add>, %36, %cst_24 [0] : vector<192x128xf32> to vector<128xf32>
    %38 = vector.shape_cast %37 : vector<128xf32> to vector<1x128xf32>
    %c0_25 = arith.constant 0 : index
    %c0_26 = arith.constant 0 : index
    %c1 = arith.constant 1 : index
    %c0_27 = arith.constant 0 : index
    %39 = vector.load %arg9[%c0_25, %c0_26, %c1, %c0_27] : memref<1x1x2x128xf32, #tpu.memory_space<vmem>>, vector<1x1x1x128xf32>
    %40 = vector.shape_cast %39 : vector<1x1x1x128xf32> to vector<1x128xf32>
    %41 = vector.shape_cast %38 : vector<1x128xf32> to vector<1x1x1x128xf32>
    tpu.vector_store %arg9[%c0_25, %c0_26, %c1, %c0_27], %41 {strides = array<i32>} : memref<1x1x2x128xf32, #tpu.memory_space<vmem>>, vector<1x1x1x128xf32>,
    return
  }
  func.func @transform_0(%arg0: i32, %arg1: i32) -> (i32, i32, i32) {
    %c0_i32 = arith.constant 0 : i32
    %c0_i32_0 = arith.constant 0 : i32
    return %arg0, %arg1, %c0_i32 : i32, i32, i32
  }
  func.func @transform_1(%arg0: i32, %arg1: i32) -> (i32, i32) {
    %c0_i32 = arith.constant 0 : i32
    %c0_i32_0 = arith.constant 0 : i32
    %c0_i32_1 = arith.constant 0 : i32
    return %c0_i32, %c0_i32_0 : i32, i32
  }
  func.func @transform_2(%arg0: i32, %arg1: i32) -> (i32, i32) {
    %c0_i32 = arith.constant 0 : i32
    %c0_i32_0 = arith.constant 0 : i32
    %c0_i32_1 = arith.constant 0 : i32
    return %c0_i32, %c0_i32_0 : i32, i32
  }
  func.func @transform_3(%arg0: i32, %arg1: i32) -> (i32, i32) {
    %c0_i32 = arith.constant 0 : i32
    %c0_i32_0 = arith.constant 0 : i32
    %c0_i32_1 = arith.constant 0 : i32
    return %c0_i32, %c0_i32_0 : i32, i32
  }
  func.func @transform_4(%arg0: i32, %arg1: i32) -> (i32, i32) {
    %c0_i32 = arith.constant 0 : i32
    %c0_i32_0 = arith.constant 0 : i32
    %c0_i32_1 = arith.constant 0 : i32
    return %c0_i32, %c0_i32_0 : i32, i32
  }
  func.func @transform_5(%arg0: i32, %arg1: i32) -> (i32, i32) {
    %c0_i32 = arith.constant 0 : i32
    %c0_i32_0 = arith.constant 0 : i32
    %c0_i32_1 = arith.constant 0 : i32
    return %c0_i32, %c0_i32_0 : i32, i32
  }
  func.func @transform_6(%arg0: i32, %arg1: i32) -> (i32, i32, i32) {
    %c0_i32 = arith.constant 0 : i32
    %c0_i32_0 = arith.constant 0 : i32
    return %arg0, %arg1, %c0_i32 : i32, i32, i32
  }
  func.func @transform_7(%arg0: i32, %arg1: i32) -> (i32, i32, i32, i32) {
    %c0_i32 = arith.constant 0 : i32
    %c0_i32_0 = arith.constant 0 : i32
    %c0_i32_1 = arith.constant 0 : i32
    return %arg0, %arg1, %c0_i32, %c0_i32_0 : i32, i32, i32, i32
  }
}

</mosaic_0001>

<llo_original>
// kernel: conv_block2d.7
$region0: #{conv_block2d.7}
  #allocation0 [shape = 'u32[]', space=smem, size = 0x4, offset = 0x4, fixed_abs, tag = 'smem constant byte address 0x4 - core index']
  #allocation1 [shape = 'u32[144,128]{1,0:T(1,128)}', space=vmem, size = 0x12000, scoped, tag = 'internal scratch']
  %s0 = inlined_call_operand.vmem [shape: bf16[2,192,128], index: 0, kind: input, shape index: {}]
  %s1 = inlined_call_operand.vmem [shape: f32[1,128], index: 1, kind: input, shape index: {}]
  %s2 = inlined_call_operand.vmem [shape: f32[1,128], index: 2, kind: input, shape index: {}]
  %s3 = inlined_call_operand.vmem [shape: f32[2,192,8], index: 3, kind: output, shape index: {}]
  %s4 = sld [smem:[#allocation0]]
  $region45: #{conv_block2d.7} parent=0
    _
  %s6 = ssub.s32 1, %s4
  %s7 = scalar_select 0, %s6, %s4
  loop: start=0, step=1, limit=4
  $region2: #{conv_block2d.7} parent=0 // loop_pre_header
    _
  $region3: #{conv_block2d.7} parent=0 // loop_header
    %s9 = sphi 0, %s13
    %p10 = scmp.ge.s32.totalorder %s9, 4
    %s16 = sphi 0, %s28
    %s17 = sphi 0, %s24
    %s18 = sphi 0, %s16
    %s19 = sphi 0, %s17
    %s20 = sphi 0, %s18
    %s21 = sphi 0, %s19
    %s33 = sphi 0, %s35
    %s36 = sphi 0, %s33
    %s37 = sphi 0, %s36
    %s53 = sphi 0, %s37
    %s57 = sphi 0, %s57
    %s59 = sphi 0, %s57
    %s60 = sphi 0, %s59
    %s74 = sphi 0, %s60
    %s78 = sphi 0, %s78
    %s80 = sphi 0, %s78
    %s81 = sphi 0, %s80
    %s95 = sphi 0, %s81
    %s103 = sphi 0, %s105
    %s106 = sphi 0, %s103
    %s107 = sphi 0, %s106
    %s123 = sphi 0, %s107
  $region4: #{conv_block2d.7} parent=0 // loop_header_branch
    %12 = sbr.rel (%p10) target = $region8
  $region5: #{conv_block2d.7} parent=0 // loop_body
    %s14 = ssub.s32 %s9, 1
    %s15 = ssub.s32 %s9, 2
    %s22 = sadd.s32 1, %s17
    %p23 = scmp.ge.s32.totalorder %s22, 1
    %s24 = scalar_select %p23, 0, %s22
    %s25 = sadd.s32 1, %s16
    %s26 = scalar_select %p23, %s25, %s16
    %p27 = scmp.ge.s32.totalorder %s26, 2
    %s28 = scalar_select %p27, 0, %s26
    %s29 = ssub.s32 %s16, %s28
    %s30 = ssub.s32 %s17, %s24
    %s31 = sor.u32 %s29, %s30
    %p32 = scmp.eq.s32.totalorder %s31, 0
    %s34 = sadd.s32 %s33, 1
    %s35 = scalar_select %p32, %s33, %s34
    %p38 = pneg %p32
    %p39 = scmp.eq.s32.totalorder %s9, 1
    %p40 = por %p38, %p39
    %p41 = scmp.ne.s32.totalorder %s33, %s36
    %p42 = scmp.eq.s32.totalorder %s9, 0
    %p43 = por %p41, %p42
    %p44 = scmp.ne.s32.totalorder %s33, %s36
    %p45 = scmp.eq.s32.totalorder %s14, 1
    %p46 = por %p44, %p45
    %p47 = scmp.ne.s32.totalorder %s36, %s37
    %p48 = scmp.eq.s32.totalorder %s14, 0
    %p49 = por %p47, %p48
    %p50 = scmp.ne.s32.totalorder %s36, %s37
    %p51 = scmp.eq.s32.totalorder %s15, 1
    %p52 = por %p50, %p51
    %p54 = scmp.ne.s32.totalorder %s37, %s53
    %p55 = scmp.eq.s32.totalorder %s15, 0
    %p56 = por %p54, %p55
    %s58 = sadd.s32 %s57, 1
    %p61 = scmp.eq.s32.totalorder %s9, 1
    %p62 = scmp.ne.s32.totalorder %s57, %s59
    %p63 = scmp.eq.s32.totalorder %s9, 0
    %p64 = por %p62, %p63
    %p65 = scmp.ne.s32.totalorder %s57, %s59
    %p66 = scmp.eq.s32.totalorder %s14, 1
    %p67 = por %p65, %p66
    %p68 = scmp.ne.s32.totalorder %s59, %s60
    %p69 = scmp.eq.s32.totalorder %s14, 0
    %p70 = por %p68, %p69
    %p71 = scmp.ne.s32.totalorder %s59, %s60
    %p72 = scmp.eq.s32.totalorder %s15, 1
    %p73 = por %p71, %p72
    %p75 = scmp.ne.s32.totalorder %s60, %s74
    %p76 = scmp.eq.s32.totalorder %s15, 0
    %p77 = por %p75, %p76
    %s79 = sadd.s32 %s78, 1
    %p82 = scmp.eq.s32.totalorder %s9, 1
    %p83 = scmp.ne.s32.totalorder %s78, %s80
    %p84 = scmp.eq.s32.totalorder %s9, 0
    %p85 = por %p83, %p84
    %p86 = scmp.ne.s32.totalorder %s78, %s80
    %p87 = scmp.eq.s32.totalorder %s14, 1
    %p88 = por %p86, %p87
    %p89 = scmp.ne.s32.totalorder %s80, %s81
    %p90 = scmp.eq.s32.totalorder %s14, 0
    %p91 = por %p89, %p90
    %p92 = scmp.ne.s32.totalorder %s80, %s81
    %p93 = scmp.eq.s32.totalorder %s15, 1
    %p94 = por %p92, %p93
    %p96 = scmp.ne.s32.totalorder %s81, %s95
    %p97 = scmp.eq.s32.totalorder %s15, 0
    %p98 = por %p96, %p97
    %s99 = ssub.s32 %s16, %s28
    %s100 = ssub.s32 %s17, %s24
    %s101 = sor.u32 %s99, %s100
    %p102 = scmp.eq.s32.totalorder %s101, 0
    %s104 = sadd.s32 %s103, 1
    %s105 = scalar_select %p102, %s103, %s104
    %p108 = pneg %p102
    %p109 = scmp.eq.s32.totalorder %s9, 1
    %p110 = por %p108, %p109
    %p111 = scmp.ne.s32.totalorder %s103, %s106
    %p112 = scmp.eq.s32.totalorder %s9, 0
    %p113 = por %p111, %p112
    %p114 = scmp.ne.s32.totalorder %s103, %s106
    %p115 = scmp.eq.s32.totalorder %s14, 1
    %p116 = por %p114, %p115
    %p117 = scmp.ne.s32.totalorder %s106, %s107
    %p118 = scmp.eq.s32.totalorder %s14, 0
    %p119 = por %p117, %p118
    %p120 = scmp.ne.s32.totalorder %s106, %s107
    %p121 = scmp.eq.s32.totalorder %s15, 1
    %p122 = por %p120, %p121
    %p124 = scmp.ne.s32.totalorder %s107, %s123
    %p125 = scmp.eq.s32.totalorder %s15, 0
    %p126 = por %p124, %p125
    %p127 = scmp.le.s32.totalorder 1, %s9
    %p128 = scmp.lt.s32.totalorder %s9, 3
    %p129 = pnand %p127, %p128
    %p130 = pneg %p129
    // Predicated region
    $region9: #{conv_block2d.7} parent=5 // pred_check
      _
    $region10: #{conv_block2d.7} parent=5 // pred_check_branch
      %132 = sbr.rel (%p129) target = $region12
    $region11: #{conv_block2d.7} parent=5 // pred_region
      %s133 = ssub.s32 %s9, 1
      // Predicated region
      $region13: #{conv_block2d.7} parent=11 // pred_check
        %p134 = pneg %p70
      $region14: #{conv_block2d.7} parent=11 // pred_check_branch
        %136 = sbr.rel (%p134) target = $region16
      $region15: #{conv_block2d.7} parent=11 // pred_region
        _
      $region16: #{conv_block2d.7} parent=11 // pred_fallthru
        _
      // Predicated region
      $region17: #{conv_block2d.7} parent=11 // pred_check
        %p137 = pneg %p91
      $region18: #{conv_block2d.7} parent=11 // pred_check_branch
        %139 = sbr.rel (%p137) target = $region20
      $region19: #{conv_block2d.7} parent=11 // pred_region
        _
      $region20: #{conv_block2d.7} parent=11 // pred_fallthru
        _
    $region12: #{conv_block2d.7} parent=5 // pred_fallthru
      _
    %p140 = scmp.lt.s32.totalorder %s9, 2
    // Predicated region
    $region21: #{conv_block2d.7} parent=5 // pred_check
      %p141 = pneg %p140
    $region22: #{conv_block2d.7} parent=5 // pred_check_branch
      %143 = sbr.rel (%p141) target = $region24
    $region23: #{conv_block2d.7} parent=5 // pred_region
      // Predicated region
      $region25: #{conv_block2d.7} parent=23 // pred_check
        %p144 = pneg %p43
      $region26: #{conv_block2d.7} parent=23 // pred_check_branch
        %146 = sbr.rel (%p144) target = $region28
      $region27: #{conv_block2d.7} parent=23 // pred_region
        %s147 = smul.u32 24, %s17
        %p148 = scmp.lt.s32.totalorder %s16, 1
        %s149 = scalar_select %p148, %s16, 1
        %p150 = scmp.lt.s32.totalorder %s147, 23
        %s151 = scalar_select %p150, %s147, 23
        %s152 = smul.addr %s149, 24
        %s153 = sadd.s32 %s151, %s152
        %s154 = smul.addr %s153, 4
        %s155 = scalar_lea.vmem %s0, %s154
        %s156 = smul.u32 24, %s17
      $region28: #{conv_block2d.7} parent=23 // pred_fallthru
        _
    $region24: #{conv_block2d.7} parent=5 // pred_fallthru
      _
    %p157 = scmp.le.s32.totalorder 1, %s9
    %p158 = scmp.lt.s32.totalorder %s9, 3
    %p159 = pnand %p157, %p158
    %p160 = pneg %p159
    // Predicated region
    $region29: #{conv_block2d.7} parent=5 // pred_check
      _
    $region30: #{conv_block2d.7} parent=5 // pred_check_branch
      %162 = sbr.rel (%p159) target = $region32
    $region31: #{conv_block2d.7} parent=5 // pred_region
      %s163 = ssub.s32 %s9, 1
      %s164 = smul.u32 24, %s19
      %p165 = scmp.lt.s32.totalorder %s18, 1
      %s166 = scalar_select %p165, %s18, 1
      %p167 = scmp.lt.s32.totalorder %s164, 23
      %s168 = scalar_select %p167, %s164, 23
      %s169 = smul.addr %s166, 24
      %s170 = sadd.s32 %s168, %s169
      %s171 = smul.addr %s170, 4
      %s172 = scalar_lea.vmem %s0, %s171
      %p173 = pneg %p49
      %p174 = pneg %p46
      %p175 = pneg %p70
      %p176 = pneg %p67
      %p177 = pneg %p91
      %p178 = pneg %p88
      %p179 = pneg %p119
      %p180 = pneg %p116
      %s181 = smul.u32 24, %s19
      %p182 = scmp.lt.s32.totalorder %s18, 1
      %s183 = scalar_select %p182, %s18, 1
      %p184 = scmp.lt.s32.totalorder %s181, 23
      %s185 = scalar_select %p184, %s181, 23
      %s186 = smul.addr %s183, 24
      %s187 = sadd.s32 %s185, %s186
      %s188 = smul.addr %s187, 8
      %s189 = scalar_lea.vmem %s3, %s188
      %s190 = smul.u32 24, %s19
      %p191 = scmp.lt.s32.totalorder %s18, 1
      %s192 = scalar_select %p191, %s18, 1
      %p193 = scmp.lt.s32.totalorder %s190, 23
      %s194 = scalar_select %p193, %s190, 23
      %s195 = smul.addr %s192, 24
      %s196 = sadd.s32 %s194, %s195
      %s197 = smul.addr %s196, 4
      %s198 = scalar_lea.vmem %s0, %s197
      %s199 = smul.u32 24, %s19
      %s200 = smul.u32 24, %s19
      %p201 = scmp.lt.s32.totalorder %s18, 1
      %s202 = scalar_select %p201, %s18, 1
      %p203 = scmp.lt.s32.totalorder %s200, 23
      %s204 = scalar_select %p203, %s200, 23
      %s205 = smul.addr %s202, 24
      %s206 = sadd.s32 %s204, %s205
      %s207 = smul.addr %s206, 8
      %s208 = scalar_lea.vmem %s3, %s207
      %s209 = smul.u32 24, %s19
      %v210 = vld [vmem:[%s198] sm:$0xf]
      %v211 = vld [vmem:[%s198 + $0x4] sm:$0xf]
      %v212 = vld [vmem:[%s198 + $0x8] sm:$0xf]
      %v213 = vld [vmem:[%s198 + $0xc] sm:$0xf]
      %v214 = vld [vmem:[%s198 + $0x10] sm:$0xf]
      %v215 = vld [vmem:[%s198 + $0x14] sm:$0xf]
      %v216 = vld [vmem:[%s198 + $0x18] sm:$0xf]
      %v217 = vld [vmem:[%s198 + $0x1c] sm:$0xf]
      %v218 = vld [vmem:[%s198 + $0x20] sm:$0xf]
      %v219 = vld [vmem:[%s198 + $0x24] sm:$0xf]
      %v220 = vld [vmem:[%s198 + $0x28] sm:$0xf]
      %v221 = vld [vmem:[%s198 + $0x2c] sm:$0xf]
      %v222 = vld [vmem:[%s198 + $0x30] sm:$0xf]
      %v223 = vld [vmem:[%s198 + $0x34] sm:$0xf]
      %v224 = vld [vmem:[%s198 + $0x38] sm:$0xf]
      %v225 = vld [vmem:[%s198 + $0x3c] sm:$0xf]
      %v226 = vld [vmem:[%s198 + $0x40] sm:$0xf]
      %v227 = vld [vmem:[%s198 + $0x44] sm:$0xf]
      %v228 = vld [vmem:[%s198 + $0x48] sm:$0xf]
      %v229 = vld [vmem:[%s198 + $0x4c] sm:$0xf]
      %v230 = vld [vmem:[%s198 + $0x50] sm:$0xf]
      %v231 = vld [vmem:[%s198 + $0x54] sm:$0xf]
      %v232 = vld [vmem:[%s198 + $0x58] sm:$0xf]
      %v233 = vld [vmem:[%s198 + $0x5c] sm:$0xf]
      %v234 = vunpack.c.l.bf16 %v210
      %v235 = vunpack.c.l.bf16 %v211
      %v236 = vunpack.c.l.bf16 %v212
      %v237 = vunpack.c.l.bf16 %v213
      %v238 = vunpack.c.l.bf16 %v214
      %v239 = vunpack.c.l.bf16 %v215
      %v240 = vunpack.c.l.bf16 %v216
      %v241 = vunpack.c.l.bf16 %v217
      %v242 = vunpack.c.l.bf16 %v218
      %v243 = vunpack.c.l.bf16 %v219
      %v244 = vunpack.c.l.bf16 %v220
      %v245 = vunpack.c.l.bf16 %v221
      %v246 = vunpack.c.l.bf16 %v222
      %v247 = vunpack.c.l.bf16 %v223
      %v248 = vunpack.c.l.bf16 %v224
      %v249 = vunpack.c.l.bf16 %v225
      %v250 = vunpack.c.l.bf16 %v226
      %v251 = vunpack.c.l.bf16 %v227
      %v252 = vunpack.c.l.bf16 %v228
      %v253 = vunpack.c.l.bf16 %v229
      %v254 = vunpack.c.l.bf16 %v230
      %v255 = vunpack.c.l.bf16 %v231
      %v256 = vunpack.c.l.bf16 %v232
      %v257 = vunpack.c.l.bf16 %v233
      %v258 = vld [vmem:[%s1] sm:$0x1]
      %v260 = vlaneseq
      %v261 = vshrl.u32 %v260, 7
      %v262 = vsub.s32 0, %v261
      %v263 = vrot.slane %v258, %v262
      %v265 = vmul.f32 %v234, %v263
      %v266 = vmul.f32 %v235, %v263
      %v267 = vmul.f32 %v236, %v263
      %v268 = vmul.f32 %v237, %v263
      %v269 = vmul.f32 %v238, %v263
      %v270 = vmul.f32 %v239, %v263
      %v271 = vmul.f32 %v240, %v263
      %v272 = vmul.f32 %v241, %v263
      %v273 = vmul.f32 %v242, %v263
      %v274 = vmul.f32 %v243, %v263
      %v275 = vmul.f32 %v244, %v263
      %v276 = vmul.f32 %v245, %v263
      %v277 = vmul.f32 %v246, %v263
      %v278 = vmul.f32 %v247, %v263
      %v279 = vmul.f32 %v248, %v263
      %v280 = vmul.f32 %v249, %v263
      %v281 = vmul.f32 %v250, %v263
      %v282 = vmul.f32 %v251, %v263
      %v283 = vmul.f32 %v252, %v263
      %v284 = vmul.f32 %v253, %v263
      %v285 = vmul.f32 %v254, %v263
      %v286 = vmul.f32 %v255, %v263
      %v287 = vmul.f32 %v256, %v263
      %v288 = vmul.f32 %v257, %v263
      %v289 = vld [vmem:[%s2] sm:$0x1]
      %v291 = vlaneseq
      %v292 = vshrl.u32 %v291, 7
      %v293 = vsub.s32 0, %v292
      %v294 = vrot.slane %v289, %v293
      %v296 = vadd.f32 %v265, %v294
      %v297 = vadd.f32 %v266, %v294
      %v298 = vadd.f32 %v267, %v294
      %v299 = vadd.f32 %v268, %v294
      %v300 = vadd.f32 %v269, %v294
      %v301 = vadd.f32 %v270, %v294
      %v302 = vadd.f32 %v271, %v294
      %v303 = vadd.f32 %v272, %v294
      %v304 = vadd.f32 %v273, %v294
      %v305 = vadd.f32 %v274, %v294
      %v306 = vadd.f32 %v275, %v294
      %v307 = vadd.f32 %v276, %v294
      %v308 = vadd.f32 %v277, %v294
      %v309 = vadd.f32 %v278, %v294
      %v310 = vadd.f32 %v279, %v294
      %v311 = vadd.f32 %v280, %v294
      %v312 = vadd.f32 %v281, %v294
      %v313 = vadd.f32 %v282, %v294
      %v314 = vadd.f32 %v283, %v294
      %v315 = vadd.f32 %v284, %v294
      %v316 = vadd.f32 %v285, %v294
      %v317 = vadd.f32 %v286, %v294
      %v318 = vadd.f32 %v287, %v294
      %v319 = vadd.f32 %v288, %v294
      %vm320 = vcmp.gt.f32.partialorder %v296, 0.0
      %vm321 = vcmp.gt.f32.partialorder %v297, 0.0
      %vm322 = vcmp.gt.f32.partialorder %v298, 0.0
      %vm323 = vcmp.gt.f32.partialorder %v299, 0.0
      %vm324 = vcmp.gt.f32.partialorder %v300, 0.0
      %vm325 = vcmp.gt.f32.partialorder %v301, 0.0
      %vm326 = vcmp.gt.f32.partialorder %v302, 0.0
      %vm327 = vcmp.gt.f32.partialorder %v303, 0.0
      %vm328 = vcmp.gt.f32.partialorder %v304, 0.0
      %vm329 = vcmp.gt.f32.partialorder %v305, 0.0
      %vm330 = vcmp.gt.f32.partialorder %v306, 0.0
      %vm331 = vcmp.gt.f32.partialorder %v307, 0.0
      %vm332 = vcmp.gt.f32.partialorder %v308, 0.0
      %vm333 = vcmp.gt.f32.partialorder %v309, 0.0
      %vm334 = vcmp.gt.f32.partialorder %v310, 0.0
      %vm335 = vcmp.gt.f32.partialorder %v311, 0.0
      %vm336 = vcmp.gt.f32.partialorder %v312, 0.0
      %vm337 = vcmp.gt.f32.partialorder %v313, 0.0
      %vm338 = vcmp.gt.f32.partialorder %v314, 0.0
      %vm339 = vcmp.gt.f32.partialorder %v315, 0.0
      %vm340 = vcmp.gt.f32.partialorder %v316, 0.0
      %vm341 = vcmp.gt.f32.partialorder %v317, 0.0
      %vm342 = vcmp.gt.f32.partialorder %v318, 0.0
      %vm343 = vcmp.gt.f32.partialorder %v319, 0.0
      %v344 = vmul.f32 %v296, 0.01
      %v345 = vmul.f32 %v297, 0.01
      %v346 = vmul.f32 %v298, 0.01
      %v347 = vmul.f32 %v299, 0.01
      %v348 = vmul.f32 %v300, 0.01
      %v349 = vmul.f32 %v301, 0.01
      %v350 = vmul.f32 %v302, 0.01
      %v351 = vmul.f32 %v303, 0.01
      %v352 = vmul.f32 %v304, 0.01
      %v353 = vmul.f32 %v305, 0.01
      %v354 = vmul.f32 %v306, 0.01
      %v355 = vmul.f32 %v307, 0.01
      %v356 = vmul.f32 %v308, 0.01
      %v357 = vmul.f32 %v309, 0.01
      %v358 = vmul.f32 %v310, 0.01
      %v359 = vmul.f32 %v311, 0.01
      %v360 = vmul.f32 %v312, 0.01
      %v361 = vmul.f32 %v313, 0.01
      %v362 = vmul.f32 %v314, 0.01
      %v363 = vmul.f32 %v315, 0.01
      %v364 = vmul.f32 %v316, 0.01
      %v365 = vmul.f32 %v317, 0.01
      %v366 = vmul.f32 %v318, 0.01
      %v367 = vmul.f32 %v319, 0.01
      %v368 = vsel %vm320, %v296, %v344
      %v369 = vsel %vm321, %v297, %v345
      %v370 = vsel %vm322, %v298, %v346
      %v371 = vsel %vm323, %v299, %v347
      %v372 = vsel %vm324, %v300, %v348
      %v373 = vsel %vm325, %v301, %v349
      %v374 = vsel %vm326, %v302, %v350
      %v375 = vsel %vm327, %v303, %v351
      %v376 = vsel %vm328, %v304, %v352
      %v377 = vsel %vm329, %v305, %v353
      %v378 = vsel %vm330, %v306, %v354
      %v379 = vsel %vm331, %v307, %v355
      %v380 = vsel %vm332, %v308, %v356
      %v381 = vsel %vm333, %v309, %v357
      %v382 = vsel %vm334, %v310, %v358
      %v383 = vsel %vm335, %v311, %v359
      %v384 = vsel %vm336, %v312, %v360
      %v385 = vsel %vm337, %v313, %v361
      %v386 = vsel %vm338, %v314, %v362
      %v387 = vsel %vm339, %v315, %v363
      %v388 = vsel %vm340, %v316, %v364
      %v389 = vsel %vm341, %v317, %v365
      %v390 = vsel %vm342, %v318, %v366
      %v391 = vsel %vm343, %v319, %v367
      %vm392 = vcmask 64512
      %393 = vst.msk [vmem:[%s208] sm:$0xff] %vm392, %v368
      %394 = vst.msk [vmem:[%s208 + $0x8] sm:$0xff] %vm392, %v369
      %395 = vst.msk [vmem:[%s208 + $0x10] sm:$0xff] %vm392, %v370
      %396 = vst.msk [vmem:[%s208 + $0x18] sm:$0xff] %vm392, %v371
      %397 = vst.msk [vmem:[%s208 + $0x20] sm:$0xff] %vm392, %v372
      %398 = vst.msk [vmem:[%s208 + $0x28] sm:$0xff] %vm392, %v373
      %399 = vst.msk [vmem:[%s208 + $0x30] sm:$0xff] %vm392, %v374
      %400 = vst.msk [vmem:[%s208 + $0x38] sm:$0xff] %vm392, %v375
      %401 = vst.msk [vmem:[%s208 + $0x40] sm:$0xff] %vm392, %v376
      %402 = vst.msk [vmem:[%s208 + $0x48] sm:$0xff] %vm392, %v377
      %403 = vst.msk [vmem:[%s208 + $0x50] sm:$0xff] %vm392, %v378
      %404 = vst.msk [vmem:[%s208 + $0x58] sm:$0xff] %vm392, %v379
      %405 = vst.msk [vmem:[%s208 + $0x60] sm:$0xff] %vm392, %v380
      %406 = vst.msk [vmem:[%s208 + $0x68] sm:$0xff] %vm392, %v381
      %407 = vst.msk [vmem:[%s208 + $0x70] sm:$0xff] %vm392, %v382
      %408 = vst.msk [vmem:[%s208 + $0x78] sm:$0xff] %vm392, %v383
      %409 = vst.msk [vmem:[%s208 + $0x80] sm:$0xff] %vm392, %v384
      %410 = vst.msk [vmem:[%s208 + $0x88] sm:$0xff] %vm392, %v385
      %411 = vst.msk [vmem:[%s208 + $0x90] sm:$0xff] %vm392, %v386
      %412 = vst.msk [vmem:[%s208 + $0x98] sm:$0xff] %vm392, %v387
      %413 = vst.msk [vmem:[%s208 + $0xa0] sm:$0xff] %vm392, %v388
      %414 = vst.msk [vmem:[%s208 + $0xa8] sm:$0xff] %vm392, %v389
      %415 = vst.msk [vmem:[%s208 + $0xb0] sm:$0xff] %vm392, %v390
      %416 = vst.msk [vmem:[%s208 + $0xb8] sm:$0xff] %vm392, %v391
      %s417 = smul.u32 24, %s19
      %p418 = scmp.lt.s32.totalorder %s18, 1
      %s419 = scalar_select %p418, %s18, 1
      %p420 = scmp.lt.s32.totalorder %s417, 23
      %s421 = scalar_select %p420, %s417, 23
      %s422 = smul.addr %s419, 24
      %s423 = sadd.s32 %s421, %s422
      %s424 = smul.addr %s423, 8
      %s425 = scalar_lea.vmem %s3, %s424
      // Predicated region
      $region33: #{conv_block2d.7} parent=31 // pred_check
        %p426 = pneg %p116
      $region34: #{conv_block2d.7} parent=31 // pred_check_branch
        %428 = sbr.rel (%p426) target = $region36
      $region35: #{conv_block2d.7} parent=31 // pred_region
        %s429 = smul.u32 24, %s19
      $region36: #{conv_block2d.7} parent=31 // pred_fallthru
        _
    $region32: #{conv_block2d.7} parent=5 // pred_fallthru
      _
    %p430 = scmp.le.s32.totalorder 2, %s9
    // Predicated region
    $region37: #{conv_block2d.7} parent=5 // pred_check
      %p431 = pneg %p430
    $region38: #{conv_block2d.7} parent=5 // pred_check_branch
      %433 = sbr.rel (%p431) target = $region40
    $region39: #{conv_block2d.7} parent=5 // pred_region
      %s434 = ssub.s32 %s9, 2
      // Predicated region
      $region41: #{conv_block2d.7} parent=39 // pred_check
        %p435 = pneg %p122
      $region42: #{conv_block2d.7} parent=39 // pred_check_branch
        %437 = sbr.rel (%p435) target = $region44
      $region43: #{conv_block2d.7} parent=39 // pred_region
        %s438 = smul.u32 24, %s21
        %p439 = scmp.lt.s32.totalorder %s20, 1
        %s440 = scalar_select %p439, %s20, 1
        %p441 = scmp.lt.s32.totalorder %s438, 23
        %s442 = scalar_select %p441, %s438, 23
        %s443 = smul.addr %s440, 24
        %s444 = sadd.s32 %s442, %s443
        %s445 = smul.addr %s444, 8
        %s446 = scalar_lea.vmem %s3, %s445
      $region44: #{conv_block2d.7} parent=39 // pred_fallthru
        _
    $region40: #{conv_block2d.7} parent=5 // pred_fallthru
      _
  $region6: #{conv_block2d.7} parent=0 // loop_footer
    %s13 = sadd.s32 1, %s9
  $region7: #{conv_block2d.7} parent=0 // loop_footer_branch
    %8 = sbr.rel target = $region3
  $region8: #{conv_block2d.7} parent=0 // loop_exit
    _

// kernel: conv_block2d.6
$region0: #{conv_block2d.6}
  #allocation0 [shape = 'u32[]', space=smem, size = 0x4, offset = 0x4, fixed_abs, tag = 'smem constant byte address 0x4 - core index']
  #allocation1 [shape = 'u32[144,128]{1,0:T(1,128)}', space=vmem, size = 0x12000, scoped, tag = 'internal scratch']
  %s0 = inlined_call_operand.vmem [shape: bf16[2,192,128], index: 0, kind: input, shape index: {}]
  %s1 = inlined_call_operand.vmem [shape: f32[1,128], index: 1, kind: input, shape index: {}]
  %s2 = inlined_call_operand.vmem [shape: f32[1,128], index: 2, kind: input, shape index: {}]
  %s3 = inlined_call_operand.vmem [shape: bf16[128,128], index: 3, kind: input, shape index: {}]
  %s4 = inlined_call_operand.vmem [shape: f32[1,128], index: 4, kind: input, shape index: {}]
  %s5 = inlined_call_operand.vmem [shape: f32[192,1], index: 5, kind: input, shape index: {}]
  %s6 = inlined_call_operand.vmem [shape: bf16[2,192,128], index: 6, kind: output, shape index: {0}]
  %s7 = inlined_call_operand.vmem [shape: f32[2,1,2,128], index: 7, kind: output, shape index: {1}]
  %8 = xla_tuple %s6, %s7
  %s9 = sld [smem:[#allocation0]]
  $region65: #{conv_block2d.6} parent=0
    _
  %s11 = ssub.s32 1, %s9
  %s12 = scalar_select 0, %s11, %s9
  loop: start=0, step=1, limit=4
  $region2: #{conv_block2d.6} parent=0 // loop_pre_header
    _
  $region3: #{conv_block2d.6} parent=0 // loop_header
    %s14 = sphi 0, %s18
    %p15 = scmp.ge.s32.totalorder %s14, 4
    %s21 = sphi 0, %s33
    %s22 = sphi 0, %s29
    %s23 = sphi 0, %s21
    %s24 = sphi 0, %s22
    %s25 = sphi 0, %s23
    %s26 = sphi 0, %s24
    %s38 = sphi 0, %s40
    %s41 = sphi 0, %s38
    %s42 = sphi 0, %s41
    %s58 = sphi 0, %s42
    %s62 = sphi 0, %s62
    %s64 = sphi 0, %s62
    %s65 = sphi 0, %s64
    %s79 = sphi 0, %s65
    %s83 = sphi 0, %s83
    %s85 = sphi 0, %s83
    %s86 = sphi 0, %s85
    %s100 = sphi 0, %s86
    %s104 = sphi 0, %s104
    %s106 = sphi 0, %s104
    %s107 = sphi 0, %s106
    %s121 = sphi 0, %s107
    %s125 = sphi 0, %s125
    %s127 = sphi 0, %s125
    %s128 = sphi 0, %s127
    %s142 = sphi 0, %s128
    %s146 = sphi 0, %s146
    %s148 = sphi 0, %s146
    %s149 = sphi 0, %s148
    %s163 = sphi 0, %s149
    %s171 = sphi 0, %s173
    %s174 = sphi 0, %s171
    %s175 = sphi 0, %s174
    %s191 = sphi 0, %s175
    %s199 = sphi 0, %s201
    %s202 = sphi 0, %s199
    %s203 = sphi 0, %s202
    %s219 = sphi 0, %s203
  $region4: #{conv_block2d.6} parent=0 // loop_header_branch
    %17 = sbr.rel (%p15) target = $region8
  $region5: #{conv_block2d.6} parent=0 // loop_body
    %s19 = ssub.s32 %s14, 1
    %s20 = ssub.s32 %s14, 2
    %s27 = sadd.s32 1, %s22
    %p28 = scmp.ge.s32.totalorder %s27, 1
    %s29 = scalar_select %p28, 0, %s27
    %s30 = sadd.s32 1, %s21
    %s31 = scalar_select %p28, %s30, %s21
    %p32 = scmp.ge.s32.totalorder %s31, 2
    %s33 = scalar_select %p32, 0, %s31
    %s34 = ssub.s32 %s21, %s33
    %s35 = ssub.s32 %s22, %s29
    %s36 = sor.u32 %s34, %s35
    %p37 = scmp.eq.s32.totalorder %s36, 0
    %s39 = sadd.s32 %s38, 1
    %s40 = scalar_select %p37, %s38, %s39
    %p43 = pneg %p37
    %p44 = scmp.eq.s32.totalorder %s14, 1
    %p45 = por %p43, %p44
    %p46 = scmp.ne.s32.totalorder %s38, %s41
    %p47 = scmp.eq.s32.totalorder %s14, 0
    %p48 = por %p46, %p47
    %p49 = scmp.ne.s32.totalorder %s38, %s41
    %p50 = scmp.eq.s32.totalorder %s19, 1
    %p51 = por %p49, %p50
    %p52 = scmp.ne.s32.totalorder %s41, %s42
    %p53 = scmp.eq.s32.totalorder %s19, 0
    %p54 = por %p52, %p53
    %p55 = scmp.ne.s32.totalorder %s41, %s42
    %p56 = scmp.eq.s32.totalorder %s20, 1
    %p57 = por %p55, %p56
    %p59 = scmp.ne.s32.totalorder %s42, %s58
    %p60 = scmp.eq.s32.totalorder %s20, 0
    %p61 = por %p59, %p60
    %s63 = sadd.s32 %s62, 1
    %p66 = scmp.eq.s32.totalorder %s14, 1
    %p67 = scmp.ne.s32.totalorder %s62, %s64
    %p68 = scmp.eq.s32.totalorder %s14, 0
    %p69 = por %p67, %p68
    %p70 = scmp.ne.s32.totalorder %s62, %s64
    %p71 = scmp.eq.s32.totalorder %s19, 1
    %p72 = por %p70, %p71
    %p73 = scmp.ne.s32.totalorder %s64, %s65
    %p74 = scmp.eq.s32.totalorder %s19, 0
    %p75 = por %p73, %p74
    %p76 = scmp.ne.s32.totalorder %s64, %s65
    %p77 = scmp.eq.s32.totalorder %s20, 1
    %p78 = por %p76, %p77
    %p80 = scmp.ne.s32.totalorder %s65, %s79
    %p81 = scmp.eq.s32.totalorder %s20, 0
    %p82 = por %p80, %p81
    %s84 = sadd.s32 %s83, 1
    %p87 = scmp.eq.s32.totalorder %s14, 1
    %p88 = scmp.ne.s32.totalorder %s83, %s85
    %p89 = scmp.eq.s32.totalorder %s14, 0
    %p90 = por %p88, %p89
    %p91 = scmp.ne.s32.totalorder %s83, %s85
    %p92 = scmp.eq.s32.totalorder %s19, 1
    %p93 = por %p91, %p92
    %p94 = scmp.ne.s32.totalorder %s85, %s86
    %p95 = scmp.eq.s32.totalorder %s19, 0
    %p96 = por %p94, %p95
    %p97 = scmp.ne.s32.totalorder %s85, %s86
    %p98 = scmp.eq.s32.totalorder %s20, 1
    %p99 = por %p97, %p98
    %p101 = scmp.ne.s32.totalorder %s86, %s100
    %p102 = scmp.eq.s32.totalorder %s20, 0
    %p103 = por %p101, %p102
    %s105 = sadd.s32 %s104, 1
    %p108 = scmp.eq.s32.totalorder %s14, 1
    %p109 = scmp.ne.s32.totalorder %s104, %s106
    %p110 = scmp.eq.s32.totalorder %s14, 0
    %p111 = por %p109, %p110
    %p112 = scmp.ne.s32.totalorder %s104, %s106
    %p113 = scmp.eq.s32.totalorder %s19, 1
    %p114 = por %p112, %p113
    %p115 = scmp.ne.s32.totalorder %s106, %s107
    %p116 = scmp.eq.s32.totalorder %s19, 0
    %p117 = por %p115, %p116
    %p118 = scmp.ne.s32.totalorder %s106, %s107
    %p119 = scmp.eq.s32.totalorder %s20, 1
    %p120 = por %p118, %p119
    %p122 = scmp.ne.s32.totalorder %s107, %s121
    %p123 = scmp.eq.s32.totalorder %s20, 0
    %p124 = por %p122, %p123
    %s126 = sadd.s32 %s125, 1
    %p129 = scmp.eq.s32.totalorder %s14, 1
    %p130 = scmp.ne.s32.totalorder %s125, %s127
    %p131 = scmp.eq.s32.totalorder %s14, 0
    %p132 = por %p130, %p131
    %p133 = scmp.ne.s32.totalorder %s125, %s127
    %p134 = scmp.eq.s32.totalorder %s19, 1
    %p135 = por %p133, %p134
    %p136 = scmp.ne.s32.totalorder %s127, %s128
    %p137 = scmp.eq.s32.totalorder %s19, 0
    %p138 = por %p136, %p137
    %p139 = scmp.ne.s32.totalorder %s127, %s128
    %p140 = scmp.eq.s32.totalorder %s20, 1
    %p141 = por %p139, %p140
    %p143 = scmp.ne.s32.totalorder %s128, %s142
    %p144 = scmp.eq.s32.totalorder %s20, 0
    %p145 = por %p143, %p144
    %s147 = sadd.s32 %s146, 1
    %p150 = scmp.eq.s32.totalorder %s14, 1
    %p151 = scmp.ne.s32.totalorder %s146, %s148
    %p152 = scmp.eq.s32.totalorder %s14, 0
    %p153 = por %p151, %p152
    %p154 = scmp.ne.s32.totalorder %s146, %s148
    %p155 = scmp.eq.s32.totalorder %s19, 1
    %p156 = por %p154, %p155
    %p157 = scmp.ne.s32.totalorder %s148, %s149
    %p158 = scmp.eq.s32.totalorder %s19, 0
    %p159 = por %p157, %p158
    %p160 = scmp.ne.s32.totalorder %s148, %s149
    %p161 = scmp.eq.s32.totalorder %s20, 1
    %p162 = por %p160, %p161
    %p164 = scmp.ne.s32.totalorder %s149, %s163
    %p165 = scmp.eq.s32.totalorder %s20, 0
    %p166 = por %p164, %p165
    %s167 = ssub.s32 %s21, %s33
    %s168 = ssub.s32 %s22, %s29
    %s169 = sor.u32 %s167, %s168
    %p170 = scmp.eq.s32.totalorder %s169, 0
    %s172 = sadd.s32 %s171, 1
    %s173 = scalar_select %p170, %s171, %s172
    %p176 = pneg %p170
    %p177 = scmp.eq.s32.totalorder %s14, 1
    %p178 = por %p176, %p177
    %p179 = scmp.ne.s32.totalorder %s171, %s174
    %p180 = scmp.eq.s32.totalorder %s14, 0
    %p181 = por %p179, %p180
    %p182 = scmp.ne.s32.totalorder %s171, %s174
    %p183 = scmp.eq.s32.totalorder %s19, 1
    %p184 = por %p182, %p183
    %p185 = scmp.ne.s32.totalorder %s174, %s175
    %p186 = scmp.eq.s32.totalorder %s19, 0
    %p187 = por %p185, %p186
    %p188 = scmp.ne.s32.totalorder %s174, %s175
    %p189 = scmp.eq.s32.totalorder %s20, 1
    %p190 = por %p188, %p189
    %p192 = scmp.ne.s32.totalorder %s175, %s191
    %p193 = scmp.eq.s32.totalorder %s20, 0
    %p194 = por %p192, %p193
    %s195 = ssub.s32 %s21, %s33
    %s196 = ssub.s32 %s22, %s29
    %s197 = sor.u32 %s195, %s196
    %p198 = scmp.eq.s32.totalorder %s197, 0
    %s200 = sadd.s32 %s199, 1
    %s201 = scalar_select %p198, %s199, %s200
    %p204 = pneg %p198
    %p205 = scmp.eq.s32.totalorder %s14, 1
    %p206 = por %p204, %p205
    %p207 = scmp.ne.s32.totalorder %s199, %s202
    %p208 = scmp.eq.s32.totalorder %s14, 0
    %p209 = por %p207, %p208
    %p210 = scmp.ne.s32.totalorder %s199, %s202
    %p211 = scmp.eq.s32.totalorder %s19, 1
    %p212 = por %p210, %p211
    %p213 = scmp.ne.s32.totalorder %s202, %s203
    %p214 = scmp.eq.s32.totalorder %s19, 0
    %p215 = por %p213, %p214
    %p216 = scmp.ne.s32.totalorder %s202, %s203
    %p217 = scmp.eq.s32.totalorder %s20, 1
    %p218 = por %p216, %p217
    %p220 = scmp.ne.s32.totalorder %s203, %s219
    %p221 = scmp.eq.s32.totalorder %s20, 0
    %p222 = por %p220, %p221
    %p223 = scmp.le.s32.totalorder 1, %s14
    %p224 = scmp.lt.s32.totalorder %s14, 3
    %p225 = pnand %p223, %p224
    %p226 = pneg %p225
    // Predicated region
    $region9: #{conv_block2d.6} parent=5 // pred_check
      _
    $region10: #{conv_block2d.6} parent=5 // pred_check_branch
      %228 = sbr.rel (%p225) target = $region12
    $region11: #{conv_block2d.6} parent=5 // pred_region
      %s229 = ssub.s32 %s14, 1
      // Predicated region
      $region13: #{conv_block2d.6} parent=11 // pred_check
        %p230 = pneg %p75
      $region14: #{conv_block2d.6} parent=11 // pred_check_branch
        %232 = sbr.rel (%p230) target = $region16
      $region15: #{conv_block2d.6} parent=11 // pred_region
        _
      $region16: #{conv_block2d.6} parent=11 // pred_fallthru
        _
      // Predicated region
      $region17: #{conv_block2d.6} parent=11 // pred_check
        %p233 = pneg %p96
      $region18: #{conv_block2d.6} parent=11 // pred_check_branch
        %235 = sbr.rel (%p233) target = $region20
      $region19: #{conv_block2d.6} parent=11 // pred_region
        _
      $region20: #{conv_block2d.6} parent=11 // pred_fallthru
        _
      // Predicated region
      $region21: #{conv_block2d.6} parent=11 // pred_check
        %p236 = pneg %p117
      $region22: #{conv_block2d.6} parent=11 // pred_check_branch
        %238 = sbr.rel (%p236) target = $region24
      $region23: #{conv_block2d.6} parent=11 // pred_region
        _
      $region24: #{conv_block2d.6} parent=11 // pred_fallthru
        _
      // Predicated region
      $region25: #{conv_block2d.6} parent=11 // pred_check
        %p239 = pneg %p138
      $region26: #{conv_block2d.6} parent=11 // pred_check_branch
        %241 = sbr.rel (%p239) target = $region28
      $region27: #{conv_block2d.6} parent=11 // pred_region
        _
      $region28: #{conv_block2d.6} parent=11 // pred_fallthru
        _
      // Predicated region
      $region29: #{conv_block2d.6} parent=11 // pred_check
        %p242 = pneg %p159
      $region30: #{conv_block2d.6} parent=11 // pred_check_branch
        %244 = sbr.rel (%p242) target = $region32
      $region31: #{conv_block2d.6} parent=11 // pred_region
        _
      $region32: #{conv_block2d.6} parent=11 // pred_fallthru
        _
    $region12: #{conv_block2d.6} parent=5 // pred_fallthru
      _
    %p245 = scmp.lt.s32.totalorder %s14, 2
    // Predicated region
    $region33: #{conv_block2d.6} parent=5 // pred_check
      %p246 = pneg %p245
    $region34: #{conv_block2d.6} parent=5 // pred_check_branch
      %248 = sbr.rel (%p246) target = $region36
    $region35: #{conv_block2d.6} parent=5 // pred_region
      // Predicated region
      $region37: #{conv_block2d.6} parent=35 // pred_check
        %p249 = pneg %p48
      $region38: #{conv_block2d.6} parent=35 // pred_check_branch
        %251 = sbr.rel (%p249) target = $region40
      $region39: #{conv_block2d.6} parent=35 // pred_region
        %s252 = smul.u32 24, %s22
        %p253 = scmp.lt.s32.totalorder %s21, 1
        %s254 = scalar_select %p253, %s21, 1
        %p255 = scmp.lt.s32.totalorder %s252, 23
        %s256 = scalar_select %p255, %s252, 23
        %s257 = smul.addr %s254, 24
        %s258 = sadd.s32 %s256, %s257
        %s259 = smul.addr %s258, 4
        %s260 = scalar_lea.vmem %s0, %s259
        %s261 = smul.u32 24, %s22
      $region40: #{conv_block2d.6} parent=35 // pred_fallthru
        _
    $region36: #{conv_block2d.6} parent=5 // pred_fallthru
      _
    %p262 = scmp.le.s32.totalorder 1, %s14
    %p263 = scmp.lt.s32.totalorder %s14, 3
    %p264 = pnand %p262, %p263
    %p265 = pneg %p264
    // Predicated region
    $region41: #{conv_block2d.6} parent=5 // pred_check
      _
    $region42: #{conv_block2d.6} parent=5 // pred_check_branch
      %267 = sbr.rel (%p264) target = $region44
    $region43: #{conv_block2d.6} parent=5 // pred_region
      %s268 = ssub.s32 %s14, 1
      %s269 = smul.u32 24, %s24
      %p270 = scmp.lt.s32.totalorder %s23, 1
      %s271 = scalar_select %p270, %s23, 1
      %p272 = scmp.lt.s32.totalorder %s269, 23
      %s273 = scalar_select %p272, %s269, 23
      %s274 = smul.addr %s271, 24
      %s275 = sadd.s32 %s273, %s274
      %s276 = smul.addr %s275, 4
      %s277 = scalar_lea.vmem %s0, %s276
      %p278 = pneg %p54
      %p279 = pneg %p51
      %p280 = pneg %p75
      %p281 = pneg %p72
      %p282 = pneg %p96
      %p283 = pneg %p93
      %p284 = pneg %p117
      %p285 = pneg %p114
      %p286 = pneg %p138
      %p287 = pneg %p135
      %p288 = pneg %p159
      %p289 = pneg %p156
      %p290 = pneg %p187
      %p291 = pneg %p184
      %s292 = smul.u32 24, %s24
      %p293 = scmp.lt.s32.totalorder %s23, 1
      %s294 = scalar_select %p293, %s23, 1
      %p295 = scmp.lt.s32.totalorder %s292, 23
      %s296 = scalar_select %p295, %s292, 23
      %s297 = smul.addr %s294, 24
      %s298 = sadd.s32 %s296, %s297
      %s299 = smul.addr %s298, 4
      %s300 = scalar_lea.vmem %s6, %s299
      %p301 = pneg %p215
      %p302 = pneg %p212
      %p303 = scmp.lt.s32.totalorder %s23, 1
      %s304 = scalar_select %p303, %s23, 1
      %p305 = scmp.lt.s32.totalorder %s24, 0
      %s306 = scalar_select %p305, %s24, 0
      %s307 = sadd.s32 %s306, %s304
      %s308 = smul.addr %s307, 2
      %s309 = scalar_lea.vmem %s7, %s308
      %s310 = smul.u32 24, %s24
      %p311 = scmp.lt.s32.totalorder %s23, 1
      %s312 = scalar_select %p311, %s23, 1
      %p313 = scmp.lt.s32.totalorder %s310, 23
      %s314 = scalar_select %p313, %s310, 23
      %s315 = smul.addr %s312, 24
      %s316 = sadd.s32 %s314, %s315
      %s317 = smul.addr %s316, 4
      %s318 = scalar_lea.vmem %s0, %s317
      %s319 = smul.u32 24, %s24
      %s320 = smul.u32 24, %s24
      %p321 = scmp.lt.s32.totalorder %s23, 1
      %s322 = scalar_select %p321, %s23, 1
      %p323 = scmp.lt.s32.totalorder %s320, 23
      %s324 = scalar_select %p323, %s320, 23
      %s325 = smul.addr %s322, 24
      %s326 = sadd.s32 %s324, %s325
      %s327 = smul.addr %s326, 4
      %s328 = scalar_lea.vmem %s6, %s327
      %s329 = smul.u32 24, %s24
      %p330 = scmp.lt.s32.totalorder %s23, 1
      %s331 = scalar_select %p330, %s23, 1
      %p332 = scmp.lt.s32.totalorder %s24, 0
      %s333 = scalar_select %p332, %s24, 0
      %s334 = sadd.s32 %s333, %s331
      %s335 = smul.addr %s334, 2
      %s336 = scalar_lea.vmem %s7, %s335
      %v338 = vld [vmem:[%s318] sm:$0xf]
      %v339 = vld [vmem:[%s318 + $0x4] sm:$0xf]
      %v340 = vld [vmem:[%s318 + $0x8] sm:$0xf]
      %v341 = vld [vmem:[%s318 + $0xc] sm:$0xf]
      %v342 = vld [vmem:[%s318 + $0x10] sm:$0xf]
      %v343 = vld [vmem:[%s318 + $0x14] sm:$0xf]
      %v344 = vld [vmem:[%s318 + $0x18] sm:$0xf]
      %v345 = vld [vmem:[%s318 + $0x1c] sm:$0xf]
      %v346 = vld [vmem:[%s318 + $0x20] sm:$0xf]
      %v347 = vld [vmem:[%s318 + $0x24] sm:$0xf]
      %v348 = vld [vmem:[%s318 + $0x28] sm:$0xf]
      %v349 = vld [vmem:[%s318 + $0x2c] sm:$0xf]
      %v350 = vld [vmem:[%s318 + $0x30] sm:$0xf]
      %v351 = vld [vmem:[%s318 + $0x34] sm:$0xf]
      %v352 = vld [vmem:[%s318 + $0x38] sm:$0xf]
      %v353 = vld [vmem:[%s318 + $0x3c] sm:$0xf]
      %v354 = vld [vmem:[%s318 + $0x40] sm:$0xf]
      %v355 = vld [vmem:[%s318 + $0x44] sm:$0xf]
      %v356 = vld [vmem:[%s318 + $0x48] sm:$0xf]
      %v357 = vld [vmem:[%s318 + $0x4c] sm:$0xf]
      %v358 = vld [vmem:[%s318 + $0x50] sm:$0xf]
      %v359 = vld [vmem:[%s318 + $0x54] sm:$0xf]
      %v360 = vld [vmem:[%s318 + $0x58] sm:$0xf]
      %v361 = vld [vmem:[%s318 + $0x5c] sm:$0xf]
      %v362 = vunpack.c.l.bf16 %v338
      %v363 = vunpack.c.l.bf16 %v339
      %v364 = vunpack.c.l.bf16 %v340
      %v365 = vunpack.c.l.bf16 %v341
      %v366 = vunpack.c.l.bf16 %v342
      %v367 = vunpack.c.l.bf16 %v343
      %v368 = vunpack.c.l.bf16 %v344
      %v369 = vunpack.c.l.bf16 %v345
      %v370 = vunpack.c.l.bf16 %v346
      %v371 = vunpack.c.l.bf16 %v347
      %v372 = vunpack.c.l.bf16 %v348
      %v373 = vunpack.c.l.bf16 %v349
      %v374 = vunpack.c.l.bf16 %v350
      %v375 = vunpack.c.l.bf16 %v351
      %v376 = vunpack.c.l.bf16 %v352
      %v377 = vunpack.c.l.bf16 %v353
      %v378 = vunpack.c.l.bf16 %v354
      %v379 = vunpack.c.l.bf16 %v355
      %v380 = vunpack.c.l.bf16 %v356
      %v381 = vunpack.c.l.bf16 %v357
      %v382 = vunpack.c.l.bf16 %v358
      %v383 = vunpack.c.l.bf16 %v359
      %v384 = vunpack.c.l.bf16 %v360
      %v385 = vunpack.c.l.bf16 %v361
      %v386 = vld [vmem:[%s1] sm:$0x1]
      %v388 = vlaneseq
      %v389 = vshrl.u32 %v388, 7
      %v390 = vsub.s32 0, %v389
      %v391 = vrot.slane %v386, %v390
      %v393 = vmul.f32 %v362, %v391
      %v394 = vmul.f32 %v363, %v391
      %v395 = vmul.f32 %v364, %v391
      %v396 = vmul.f32 %v365, %v391
      %v397 = vmul.f32 %v366, %v391
      %v398 = vmul.f32 %v367, %v391
      %v399 = vmul.f32 %v368, %v391
      %v400 = vmul.f32 %v369, %v391
      %v401 = vmul.f32 %v370, %v391
      %v402 = vmul.f32 %v371, %v391
      %v403 = vmul.f32 %v372, %v391
      %v404 = vmul.f32 %v373, %v391
      %v405 = vmul.f32 %v374, %v391
      %v406 = vmul.f32 %v375, %v391
      %v407 = vmul.f32 %v376, %v391
      %v408 = vmul.f32 %v377, %v391
      %v409 = vmul.f32 %v378, %v391
      %v410 = vmul.f32 %v379, %v391
      %v411 = vmul.f32 %v380, %v391
      %v412 = vmul.f32 %v381, %v391
      %v413 = vmul.f32 %v382, %v391
      %v414 = vmul.f32 %v383, %v391
      %v415 = vmul.f32 %v384, %v391
      %v416 = vmul.f32 %v385, %v391
      %v417 = vld [vmem:[%s2] sm:$0x1]
      %v419 = vlaneseq
      %v420 = vshrl.u32 %v419, 7
      %v421 = vsub.s32 0, %v420
      %v422 = vrot.slane %v417, %v421
      %v424 = vadd.f32 %v393, %v422
      %v425 = vadd.f32 %v394, %v422
      %v426 = vadd.f32 %v395, %v422
      %v427 = vadd.f32 %v396, %v422
      %v428 = vadd.f32 %v397, %v422
      %v429 = vadd.f32 %v398, %v422
      %v430 = vadd.f32 %v399, %v422
      %v431 = vadd.f32 %v400, %v422
      %v432 = vadd.f32 %v401, %v422
      %v433 = vadd.f32 %v402, %v422
      %v434 = vadd.f32 %v403, %v422
      %v435 = vadd.f32 %v404, %v422
      %v436 = vadd.f32 %v405, %v422
      %v437 = vadd.f32 %v406, %v422
      %v438 = vadd.f32 %v407, %v422
      %v439 = vadd.f32 %v408, %v422
      %v440 = vadd.f32 %v409, %v422
      %v441 = vadd.f32 %v410, %v422
      %v442 = vadd.f32 %v411, %v422
      %v443 = vadd.f32 %v412, %v422
      %v444 = vadd.f32 %v413, %v422
      %v445 = vadd.f32 %v414, %v422
      %v446 = vadd.f32 %v415, %v422
      %v447 = vadd.f32 %v416, %v422
      %vm448 = vcmp.gt.f32.partialorder %v424, 0.0
      %vm449 = vcmp.gt.f32.partialorder %v425, 0.0
      %vm450 = vcmp.gt.f32.partialorder %v426, 0.0
      %vm451 = vcmp.gt.f32.partialorder %v427, 0.0
      %vm452 = vcmp.gt.f32.partialorder %v428, 0.0
      %vm453 = vcmp.gt.f32.partialorder %v429, 0.0
      %vm454 = vcmp.gt.f32.partialorder %v430, 0.0
      %vm455 = vcmp.gt.f32.partialorder %v431, 0.0
      %vm456 = vcmp.gt.f32.partialorder %v432, 0.0
      %vm457 = vcmp.gt.f32.partialorder %v433, 0.0
      %vm458 = vcmp.gt.f32.partialorder %v434, 0.0
      %vm459 = vcmp.gt.f32.partialorder %v435, 0.0
      %vm460 = vcmp.gt.f32.partialorder %v436, 0.0
      %vm461 = vcmp.gt.f32.partialorder %v437, 0.0
      %vm462 = vcmp.gt.f32.partialorder %v438, 0.0
      %vm463 = vcmp.gt.f32.partialorder %v439, 0.0
      %vm464 = vcmp.gt.f32.partialorder %v440, 0.0
      %vm465 = vcmp.gt.f32.partialorder %v441, 0.0
      %vm466 = vcmp.gt.f32.partialorder %v442, 0.0
      %vm467 = vcmp.gt.f32.partialorder %v443, 0.0
      %vm468 = vcmp.gt.f32.partialorder %v444, 0.0
      %vm469 = vcmp.gt.f32.partialorder %v445, 0.0
      %vm470 = vcmp.gt.f32.partialorder %v446, 0.0
      %vm471 = vcmp.gt.f32.partialorder %v447, 0.0
      %v472 = vmul.f32 %v424, 0.01
      %v473 = vmul.f32 %v425, 0.01
      %v474 = vmul.f32 %v426, 0.01
      %v475 = vmul.f32 %v427, 0.01
      %v476 = vmul.f32 %v428, 0.01
      %v477 = vmul.f32 %v429, 0.01
      %v478 = vmul.f32 %v430, 0.01
      %v479 = vmul.f32 %v431, 0.01
      %v480 = vmul.f32 %v432, 0.01
      %v481 = vmul.f32 %v433, 0.01
      %v482 = vmul.f32 %v434, 0.01
      %v483 = vmul.f32 %v435, 0.01
      %v484 = vmul.f32 %v436, 0.01
      %v485 = vmul.f32 %v437, 0.01
      %v486 = vmul.f32 %v438, 0.01
      %v487 = vmul.f32 %v439, 0.01
      %v488 = vmul.f32 %v440, 0.01
      %v489 = vmul.f32 %v441, 0.01
      %v490 = vmul.f32 %v442, 0.01
      %v491 = vmul.f32 %v443, 0.01
      %v492 = vmul.f32 %v444, 0.01
      %v493 = vmul.f32 %v445, 0.01
      %v494 = vmul.f32 %v446, 0.01
      %v495 = vmul.f32 %v447, 0.01
      %v496 = vsel %vm448, %v424, %v472
      %v497 = vsel %vm449, %v425, %v473
      %v498 = vsel %vm450, %v426, %v474
      %v499 = vsel %vm451, %v427, %v475
      %v500 = vsel %vm452, %v428, %v476
      %v501 = vsel %vm453, %v429, %v477
      %v502 = vsel %vm454, %v430, %v478
      %v503 = vsel %vm455, %v431, %v479
      %v504 = vsel %vm456, %v432, %v480
      %v505 = vsel %vm457, %v433, %v481
      %v506 = vsel %vm458, %v434, %v482
      %v507 = vsel %vm459, %v435, %v483
      %v508 = vsel %vm460, %v436, %v484
      %v509 = vsel %vm461, %v437, %v485
      %v510 = vsel %vm462, %v438, %v486
      %v511 = vsel %vm463, %v439, %v487
      %v512 = vsel %vm464, %v440, %v488
      %v513 = vsel %vm465, %v441, %v489
      %v514 = vsel %vm466, %v442, %v490
      %v515 = vsel %vm467, %v443, %v491
      %v516 = vsel %vm468, %v444, %v492
      %v517 = vsel %vm469, %v445, %v493
      %v518 = vsel %vm470, %v446, %v494
      %v519 = vsel %vm471, %v447, %v495
      %v520 = vpack.c.bf16 %v497, %v496
      %v521 = vpack.c.bf16 %v499, %v498
      %v522 = vpack.c.bf16 %v501, %v500
      %v523 = vpack.c.bf16 %v503, %v502
      %v524 = vpack.c.bf16 %v505, %v504
      %v525 = vpack.c.bf16 %v507, %v506
      %v526 = vpack.c.bf16 %v509, %v508
      %v527 = vpack.c.bf16 %v511, %v510
      %v528 = vpack.c.bf16 %v513, %v512
      %v529 = vpack.c.bf16 %v515, %v514
      %v530 = vpack.c.bf16 %v517, %v516
      %v531 = vpack.c.bf16 %v519, %v518
      %v532 = vld [vmem:[%s3] sm:$0xf]
      %v533 = vld [vmem:[%s3 + $0x4] sm:$0xf]
      %v534 = vld [vmem:[%s3 + $0x8] sm:$0xf]
      %v535 = vld [vmem:[%s3 + $0xc] sm:$0xf]
      %v536 = vld [vmem:[%s3 + $0x10] sm:$0xf]
      %v537 = vld [vmem:[%s3 + $0x14] sm:$0xf]
      %v538 = vld [vmem:[%s3 + $0x18] sm:$0xf]
      %v539 = vld [vmem:[%s3 + $0x1c] sm:$0xf]
      %v540 = vld [vmem:[%s3 + $0x20] sm:$0xf]
      %v541 = vld [vmem:[%s3 + $0x24] sm:$0xf]
      %v542 = vld [vmem:[%s3 + $0x28] sm:$0xf]
      %v543 = vld [vmem:[%s3 + $0x2c] sm:$0xf]
      %v544 = vld [vmem:[%s3 + $0x30] sm:$0xf]
      %v545 = vld [vmem:[%s3 + $0x34] sm:$0xf]
      %v546 = vld [vmem:[%s3 + $0x38] sm:$0xf]
      %v547 = vld [vmem:[%s3 + $0x3c] sm:$0xf]
      %v548 = vld [vmem:[%s4] sm:$0x1]
      %v550 = vlaneseq
      %v551 = vshrl.u32 %v550, 7
      %v552 = vsub.s32 0, %v551
      %v553 = vrot.slane %v548, %v552
      %v571 = vunpack.c.l.b16 %v532
      %v572 = vunpack.c.l.b16 %v533
      %v573 = vunpack.c.l.b16 %v534
      %v574 = vunpack.c.l.b16 %v535
      %v575 = vunpack.c.l.b16 %v536
      %v576 = vunpack.c.l.b16 %v537
      %v577 = vunpack.c.l.b16 %v538
      %v578 = vunpack.c.l.b16 %v539
      %v579 = vunpack.c.l.b16 %v540
      %v580 = vunpack.c.l.b16 %v541
      %v581 = vunpack.c.l.b16 %v542
      %v582 = vunpack.c.l.b16 %v543
      %v583 = vunpack.c.l.b16 %v544
      %v584 = vunpack.c.l.b16 %v545
      %v585 = vunpack.c.l.b16 %v546
      %v586 = vunpack.c.l.b16 %v547
      %v587 = vpack.c.b16 %v572, %v571
      %v588 = vpack.c.b16 %v574, %v573
      %v589 = vpack.c.b16 %v576, %v575
      %v590 = vpack.c.b16 %v578, %v577
      %v591 = vpack.c.b16 %v580, %v579
      %v592 = vpack.c.b16 %v582, %v581
      %v593 = vpack.c.b16 %v584, %v583
      %v594 = vpack.c.b16 %v586, %v585
      %603 = vmatprep.subr.bf16.mxu0 0
      %604 = vmatpush1.bf16.msra.mxu0 %v594
      %605 = vmatprep.subr.bf16.mxu0 0
      %606 = vmatpush1.bf16.msra.mxu0 %v593
      %607 = vmatprep.subr.bf16.mxu0 0
      %608 = vmatpush1.bf16.msra.mxu0 %v592
      %609 = vmatprep.subr.bf16.mxu0 0
      %610 = vmatpush1.bf16.msra.mxu0 %v591
      %611 = vmatprep.subr.bf16.mxu0 0
      %612 = vmatpush1.bf16.msra.mxu0 %v590
      %613 = vmatprep.subr.bf16.mxu0 0
      %614 = vmatpush1.bf16.msra.mxu0 %v589
      %615 = vmatprep.subr.bf16.mxu0 0
      %616 = vmatpush1.bf16.msra.mxu0 %v588
      %617 = vmatprep.subr.bf16.mxu0 0
      %618 = vmatpush1.bf16.msra.mxu0 %v587
      %619 = vmatprep.subr.bf16.mxu0 0
      %620 = vmatpush2.bf16.msra.mxu0 0
      %621 = vmatprep.subr.bf16.mxu0 0
      %622 = vmatpush2.bf16.msra.mxu0 0
      %623 = vmatprep.subr.bf16.mxu0 0
      %624 = vmatpush2.bf16.msra.mxu0 0
      %625 = vmatprep.subr.bf16.mxu0 0
      %626 = vmatpush2.bf16.msra.mxu0 0
      %627 = vmatprep.subr.bf16.mxu0 0
      %628 = vmatpush2.bf16.msra.mxu0 0
      %629 = vmatprep.subr.bf16.mxu0 0
      %630 = vmatpush2.bf16.msra.mxu0 0
      %631 = vmatprep.subr.bf16.mxu0 0
      %632 = vmatpush2.bf16.msra.mxu0 0
      %633 = vmatprep.subr.bf16.mxu0 0
      %634 = vmatpush2.bf16.msra.mxu0 0
      %635 = vmatprep.mubr.bf16.mxu0 0
      %636 = vmatmul.mubr.bf16.gmra.mxu0 %v520
      %v637 = vpop.f32.mrf.mxu0
      %v638 = vadd.f32 %v553, %v637
      %v639 = vpop.f32.mrf.mxu0
      %v640 = vpop.f32.mrf.mxu0
      %v641 = vadd.f32 %v553, %v640
      %v642 = vpop.f32.mrf.mxu0
      %643 = vmatprep.mubr.bf16.mxu0 0
      %644 = vmatmul.mubr.bf16.gmra.mxu0 %v521
      %v645 = vpop.f32.mrf.mxu0
      %v646 = vadd.f32 %v553, %v645
      %v647 = vpop.f32.mrf.mxu0
      %v648 = vpop.f32.mrf.mxu0
      %v649 = vadd.f32 %v553, %v648
      %v650 = vpop.f32.mrf.mxu0
      %651 = vmatprep.mubr.bf16.mxu0 0
      %652 = vmatmul.mubr.bf16.gmra.mxu0 %v522
      %v653 = vpop.f32.mrf.mxu0
      %v654 = vadd.f32 %v553, %v653
      %v655 = vpop.f32.mrf.mxu0
      %v656 = vpop.f32.mrf.mxu0
      %v657 = vadd.f32 %v553, %v656
      %v658 = vpop.f32.mrf.mxu0
      %659 = vmatprep.mubr.bf16.mxu0 0
      %660 = vmatmul.mubr.bf16.gmra.mxu0 %v523
      %v661 = vpop.f32.mrf.mxu0
      %v662 = vadd.f32 %v553, %v661
      %v663 = vpop.f32.mrf.mxu0
      %v664 = vpop.f32.mrf.mxu0
      %v665 = vadd.f32 %v553, %v664
      %v666 = vpop.f32.mrf.mxu0
      %667 = vmatprep.mubr.bf16.mxu0 0
      %668 = vmatmul.mubr.bf16.gmra.mxu0 %v524
      %v669 = vpop.f32.mrf.mxu0
      %v670 = vadd.f32 %v553, %v669
      %v671 = vpop.f32.mrf.mxu0
      %v672 = vpop.f32.mrf.mxu0
      %v673 = vadd.f32 %v553, %v672
      %v674 = vpop.f32.mrf.mxu0
      %675 = vmatprep.mubr.bf16.mxu0 0
      %676 = vmatmul.mubr.bf16.gmra.mxu0 %v525
      %v677 = vpop.f32.mrf.mxu0
      %v678 = vadd.f32 %v553, %v677
      %v679 = vpop.f32.mrf.mxu0
      %v680 = vpop.f32.mrf.mxu0
      %v681 = vadd.f32 %v553, %v680
      %v682 = vpop.f32.mrf.mxu0
      %683 = vmatprep.mubr.bf16.mxu0 0
      %684 = vmatmul.mubr.bf16.gmra.mxu0 %v526
      %v685 = vpop.f32.mrf.mxu0
      %v686 = vadd.f32 %v553, %v685
      %v687 = vpop.f32.mrf.mxu0
      %v688 = vpop.f32.mrf.mxu0
      %v689 = vadd.f32 %v553, %v688
      %v690 = vpop.f32.mrf.mxu0
      %691 = vmatprep.mubr.bf16.mxu0 0
      %692 = vmatmul.mubr.bf16.gmra.mxu0 %v527
      %v693 = vpop.f32.mrf.mxu0
      %v694 = vadd.f32 %v553, %v693
      %v695 = vpop.f32.mrf.mxu0
      %v696 = vpop.f32.mrf.mxu0
      %v697 = vadd.f32 %v553, %v696
      %v698 = vpop.f32.mrf.mxu0
      %699 = vmatprep.mubr.bf16.mxu0 0
      %700 = vmatmul.mubr.bf16.gmra.mxu0 %v528
      %v701 = vpop.f32.mrf.mxu0
      %v702 = vadd.f32 %v553, %v701
      %v703 = vpop.f32.mrf.mxu0
      %v704 = vpop.f32.mrf.mxu0
      %v705 = vadd.f32 %v553, %v704
      %v706 = vpop.f32.mrf.mxu0
      %707 = vmatprep.mubr.bf16.mxu0 0
      %708 = vmatmul.mubr.bf16.gmra.mxu0 %v529
      %v709 = vpop.f32.mrf.mxu0
      %v710 = vadd.f32 %v553, %v709
      %v711 = vpop.f32.mrf.mxu0
      %v712 = vpop.f32.mrf.mxu0
      %v713 = vadd.f32 %v553, %v712
      %v714 = vpop.f32.mrf.mxu0
      %715 = vmatprep.mubr.bf16.mxu0 0
      %716 = vmatmul.mubr.bf16.gmra.mxu0 %v530
      %v717 = vpop.f32.mrf.mxu0
      %v718 = vadd.f32 %v553, %v717
      %v719 = vpop.f32.mrf.mxu0
      %v720 = vpop.f32.mrf.mxu0
      %v721 = vadd.f32 %v553, %v720
      %v722 = vpop.f32.mrf.mxu0
      %723 = vmatprep.mubr.bf16.mxu0 0
      %724 = vmatmul.mubr.bf16.gmra.mxu0 %v531
      %v725 = vpop.f32.mrf.mxu0
      %v726 = vadd.f32 %v553, %v725
      %v727 = vpop.f32.mrf.mxu0
      %v728 = vpop.f32.mrf.mxu0
      %v729 = vadd.f32 %v553, %v728
      %v730 = vpop.f32.mrf.mxu0
      %731 = vdwg.mxu0
      %v732 = vpack.c.bf16 %v641, %v638
      %v733 = vpack.c.bf16 %v649, %v646
      %v734 = vpack.c.bf16 %v657, %v654
      %v735 = vpack.c.bf16 %v665, %v662
      %v736 = vpack.c.bf16 %v673, %v670
      %v737 = vpack.c.bf16 %v681, %v678
      %v738 = vpack.c.bf16 %v689, %v686
      %v739 = vpack.c.bf16 %v697, %v694
      %v740 = vpack.c.bf16 %v705, %v702
      %v741 = vpack.c.bf16 %v713, %v710
      %v742 = vpack.c.bf16 %v721, %v718
      %v743 = vpack.c.bf16 %v729, %v726
      %v756 = vunpack.c.l.b16 %v732
      %v757 = vunpack.c.h.b16 %v732
      %v758 = vunpack.c.l.b16 %v733
      %v759 = vunpack.c.h.b16 %v733
      %v760 = vunpack.c.l.b16 %v734
      %v761 = vunpack.c.h.b16 %v734
      %v762 = vunpack.c.l.b16 %v735
      %v763 = vunpack.c.h.b16 %v735
      %v764 = vunpack.c.l.b16 %v736
      %v765 = vunpack.c.h.b16 %v736
      %v766 = vunpack.c.l.b16 %v737
      %v767 = vunpack.c.h.b16 %v737
      %v768 = vunpack.c.l.b16 %v738
      %v769 = vunpack.c.h.b16 %v738
      %v770 = vunpack.c.l.b16 %v739
      %v771 = vunpack.c.h.b16 %v739
      %v772 = vunpack.c.l.b16 %v740
      %v773 = vunpack.c.h.b16 %v740
      %v774 = vunpack.c.l.b16 %v741
      %v775 = vunpack.c.h.b16 %v741
      %v776 = vunpack.c.l.b16 %v742
      %v777 = vunpack.c.h.b16 %v742
      %v778 = vunpack.c.l.b16 %v743
      %v779 = vunpack.c.h.b16 %v743
      %v780 = vpack.c.b16 %v756, %v756
      %v781 = vpack.c.b16 %v757, %v757
      %v782 = vpack.c.b16 %v758, %v758
      %v783 = vpack.c.b16 %v759, %v759
      %v784 = vpack.c.b16 %v760, %v760
      %v785 = vpack.c.b16 %v761, %v761
      %v786 = vpack.c.b16 %v762, %v762
      %v787 = vpack.c.b16 %v763, %v763
      %v788 = vpack.c.b16 %v764, %v764
      %v789 = vpack.c.b16 %v765, %v765
      %v790 = vpack.c.b16 %v766, %v766
      %v791 = vpack.c.b16 %v767, %v767
      %v792 = vpack.c.b16 %v768, %v768
      %v793 = vpack.c.b16 %v769, %v769
      %v794 = vpack.c.b16 %v770, %v770
      %v795 = vpack.c.b16 %v771, %v771
      %v796 = vpack.c.b16 %v772, %v772
      %v797 = vpack.c.b16 %v773, %v773
      %v798 = vpack.c.b16 %v774, %v774
      %v799 = vpack.c.b16 %v775, %v775
      %v800 = vpack.c.b16 %v776, %v776
      %v801 = vpack.c.b16 %v777, %v777
      %v802 = vpack.c.b16 %v778, %v778
      %v803 = vpack.c.b16 %v779, %v779
      %828 = vst [vmem:[%s328] sm:$0xf] %v780
      %829 = vst [vmem:[%s328 + $0x4] sm:$0xf] %v781
      %830 = vst [vmem:[%s328 + $0x8] sm:$0xf] %v782
      %831 = vst [vmem:[%s328 + $0xc] sm:$0xf] %v783
      %832 = vst [vmem:[%s328 + $0x10] sm:$0xf] %v784
      %833 = vst [vmem:[%s328 + $0x14] sm:$0xf] %v785
      %834 = vst [vmem:[%s328 + $0x18] sm:$0xf] %v786
      %835 = vst [vmem:[%s328 + $0x1c] sm:$0xf] %v787
      %836 = vst [vmem:[%s328 + $0x20] sm:$0xf] %v788
      %837 = vst [vmem:[%s328 + $0x24] sm:$0xf] %v789
      %838 = vst [vmem:[%s328 + $0x28] sm:$0xf] %v790
      %839 = vst [vmem:[%s328 + $0x2c] sm:$0xf] %v791
      %840 = vst [vmem:[%s328 + $0x30] sm:$0xf] %v792
      %841 = vst [vmem:[%s328 + $0x34] sm:$0xf] %v793
      %842 = vst [vmem:[%s328 + $0x38] sm:$0xf] %v794
      %843 = vst [vmem:[%s328 + $0x3c] sm:$0xf] %v795
      %844 = vst [vmem:[%s328 + $0x40] sm:$0xf] %v796
      %845 = vst [vmem:[%s328 + $0x44] sm:$0xf] %v797
      %846 = vst [vmem:[%s328 + $0x48] sm:$0xf] %v798
      %847 = vst [vmem:[%s328 + $0x4c] sm:$0xf] %v799
      %848 = vst [vmem:[%s328 + $0x50] sm:$0xf] %v800
      %849 = vst [vmem:[%s328 + $0x54] sm:$0xf] %v801
      %850 = vst [vmem:[%s328 + $0x58] sm:$0xf] %v802
      %851 = vst [vmem:[%s328 + $0x5c] sm:$0xf] %v803
      %v852 = vld [vmem:[%s5] sm:$0xff]
      %v853 = vld [vmem:[%s5 + $0x8] sm:$0xff]
      %v854 = vld [vmem:[%s5 + $0x10] sm:$0xff]
      %v855 = vld [vmem:[%s5 + $0x18] sm:$0xff]
      %v856 = vld [vmem:[%s5 + $0x20] sm:$0xff]
      %v857 = vld [vmem:[%s5 + $0x28] sm:$0xff]
      %v858 = vld [vmem:[%s5 + $0x30] sm:$0xff]
      %v859 = vld [vmem:[%s5 + $0x38] sm:$0xff]
      %v860 = vld [vmem:[%s5 + $0x40] sm:$0xff]
      %v861 = vld [vmem:[%s5 + $0x48] sm:$0xff]
      %v862 = vld [vmem:[%s5 + $0x50] sm:$0xff]
      %v863 = vld [vmem:[%s5 + $0x58] sm:$0xff]
      %v864 = vld [vmem:[%s5 + $0x60] sm:$0xff]
      %v865 = vld [vmem:[%s5 + $0x68] sm:$0xff]
      %v866 = vld [vmem:[%s5 + $0x70] sm:$0xff]
      %v867 = vld [vmem:[%s5 + $0x78] sm:$0xff]
      %v868 = vld [vmem:[%s5 + $0x80] sm:$0xff]
      %v869 = vld [vmem:[%s5 + $0x88] sm:$0xff]
      %v870 = vld [vmem:[%s5 + $0x90] sm:$0xff]
      %v871 = vld [vmem:[%s5 + $0x98] sm:$0xff]
      %v872 = vld [vmem:[%s5 + $0xa0] sm:$0xff]
      %v873 = vld [vmem:[%s5 + $0xa8] sm:$0xff]
      %v874 = vld [vmem:[%s5 + $0xb0] sm:$0xff]
      %v875 = vld [vmem:[%s5 + $0xb8] sm:$0xff]
      %vm876 = vcmp.gt.f32.partialorder %v852, 0.5
      %vm877 = vcmp.gt.f32.partialorder %v853, 0.5
      %vm878 = vcmp.gt.f32.partialorder %v854, 0.5
      %vm879 = vcmp.gt.f32.partialorder %v855, 0.5
      %vm880 = vcmp.gt.f32.partialorder %v856, 0.5
      %vm881 = vcmp.gt.f32.partialorder %v857, 0.5
      %vm882 = vcmp.gt.f32.partialorder %v858, 0.5
      %vm883 = vcmp.gt.f32.partialorder %v859, 0.5
      %vm884 = vcmp.gt.f32.partialorder %v860, 0.5
      %vm885 = vcmp.gt.f32.partialorder %v861, 0.5
      %vm886 = vcmp.gt.f32.partialorder %v862, 0.5
      %vm887 = vcmp.gt.f32.partialorder %v863, 0.5
      %vm888 = vcmp.gt.f32.partialorder %v864, 0.5
      %vm889 = vcmp.gt.f32.partialorder %v865, 0.5
      %vm890 = vcmp.gt.f32.partialorder %v866, 0.5
      %vm891 = vcmp.gt.f32.partialorder %v867, 0.5
      %vm892 = vcmp.gt.f32.partialorder %v868, 0.5
      %vm893 = vcmp.gt.f32.partialorder %v869, 0.5
      %vm894 = vcmp.gt.f32.partialorder %v870, 0.5
      %vm895 = vcmp.gt.f32.partialorder %v871, 0.5
      %vm896 = vcmp.gt.f32.partialorder %v872, 0.5
      %vm897 = vcmp.gt.f32.partialorder %v873, 0.5
      %vm898 = vcmp.gt.f32.partialorder %v874, 0.5
      %vm899 = vcmp.gt.f32.partialorder %v875, 0.5
      %v900 = vsel %vm876, 1, 0
      %v901 = vsel %vm877, 1, 0
      %v902 = vsel %vm878, 1, 0
      %v903 = vsel %vm879, 1, 0
      %v904 = vsel %vm880, 1, 0
      %v905 = vsel %vm881, 1, 0
      %v906 = vsel %vm882, 1, 0
      %v907 = vsel %vm883, 1, 0
      %v908 = vsel %vm884, 1, 0
      %v909 = vsel %vm885, 1, 0
      %v910 = vsel %vm886, 1, 0
      %v911 = vsel %vm887, 1, 0
      %v912 = vsel %vm888, 1, 0
      %v913 = vsel %vm889, 1, 0
      %v914 = vsel %vm890, 1, 0
      %v915 = vsel %vm891, 1, 0
      %v916 = vsel %vm892, 1, 0
      %v917 = vsel %vm893, 1, 0
      %v918 = vsel %vm894, 1, 0
      %v919 = vsel %vm895, 1, 0
      %v920 = vsel %vm896, 1, 0
      %v921 = vsel %vm897, 1, 0
      %v922 = vsel %vm898, 1, 0
      %v923 = vsel %vm899, 1, 0
      %924 = vset.pattern.permute.xlu0 0
      %925 = vperm.xlu0 %924, %v900
      %v926 = vpop.permute.xlu0 %925
      %927 = vset.pattern.permute.xlu0 0
      %928 = vperm.xlu0 %927, %v901
      %v929 = vpop.permute.xlu0 %928
      %930 = vset.pattern.permute.xlu0 0
      %931 = vperm.xlu0 %930, %v902
      %v932 = vpop.permute.xlu0 %931
      %933 = vset.pattern.permute.xlu0 0
      %934 = vperm.xlu0 %933, %v903
      %v935 = vpop.permute.xlu0 %934
      %936 = vset.pattern.permute.xlu0 0
      %937 = vperm.xlu0 %936, %v904
      %v938 = vpop.permute.xlu0 %937
      %939 = vset.pattern.permute.xlu0 0
      %940 = vperm.xlu0 %939, %v905
      %v941 = vpop.permute.xlu0 %940
      %942 = vset.pattern.permute.xlu0 0
      %943 = vperm.xlu0 %942, %v906
      %v944 = vpop.permute.xlu0 %943
      %945 = vset.pattern.permute.xlu0 0
      %946 = vperm.xlu0 %945, %v907
      %v947 = vpop.permute.xlu0 %946
      %948 = vset.pattern.permute.xlu0 0
      %949 = vperm.xlu0 %948, %v908
      %v950 = vpop.permute.xlu0 %949
      %951 = vset.pattern.permute.xlu0 0
      %952 = vperm.xlu0 %951, %v909
      %v953 = vpop.permute.xlu0 %952
      %954 = vset.pattern.permute.xlu0 0
      %955 = vperm.xlu0 %954, %v910
      %v956 = vpop.permute.xlu0 %955
      %957 = vset.pattern.permute.xlu0 0
      %958 = vperm.xlu0 %957, %v911
      %v959 = vpop.permute.xlu0 %958
      %960 = vset.pattern.permute.xlu0 0
      %961 = vperm.xlu0 %960, %v912
      %v962 = vpop.permute.xlu0 %961
      %963 = vset.pattern.permute.xlu0 0
      %964 = vperm.xlu0 %963, %v913
      %v965 = vpop.permute.xlu0 %964
      %966 = vset.pattern.permute.xlu0 0
      %967 = vperm.xlu0 %966, %v914
      %v968 = vpop.permute.xlu0 %967
      %969 = vset.pattern.permute.xlu0 0
      %970 = vperm.xlu0 %969, %v915
      %v971 = vpop.permute.xlu0 %970
      %972 = vset.pattern.permute.xlu0 0
      %973 = vperm.xlu0 %972, %v916
      %v974 = vpop.permute.xlu0 %973
      %975 = vset.pattern.permute.xlu0 0
      %976 = vperm.xlu0 %975, %v917
      %v977 = vpop.permute.xlu0 %976
      %978 = vset.pattern.permute.xlu0 0
      %979 = vperm.xlu0 %978, %v918
      %v980 = vpop.permute.xlu0 %979
      %981 = vset.pattern.permute.xlu0 0
      %982 = vperm.xlu0 %981, %v919
      %v983 = vpop.permute.xlu0 %982
      %984 = vset.pattern.permute.xlu0 0
      %985 = vperm.xlu0 %984, %v920
      %v986 = vpop.permute.xlu0 %985
      %987 = vset.pattern.permute.xlu0 0
      %988 = vperm.xlu0 %987, %v921
      %v989 = vpop.permute.xlu0 %988
      %990 = vset.pattern.permute.xlu0 0
      %991 = vperm.xlu0 %990, %v922
      %v992 = vpop.permute.xlu0 %991
      %993 = vset.pattern.permute.xlu0 0
      %994 = vperm.xlu0 %993, %v923
      %v995 = vpop.permute.xlu0 %994
      %vm996 = vcmp.eq.s32.totalorder %v926, 1
      %vm997 = vcmp.eq.s32.totalorder %v929, 1
      %vm998 = vcmp.eq.s32.totalorder %v932, 1
      %vm999 = vcmp.eq.s32.totalorder %v935, 1
      %vm1000 = vcmp.eq.s32.totalorder %v938, 1
      %vm1001 = vcmp.eq.s32.totalorder %v941, 1
      %vm1002 = vcmp.eq.s32.totalorder %v944, 1
      %vm1003 = vcmp.eq.s32.totalorder %v947, 1
      %vm1004 = vcmp.eq.s32.totalorder %v950, 1
      %vm1005 = vcmp.eq.s32.totalorder %v953, 1
      %vm1006 = vcmp.eq.s32.totalorder %v956, 1
      %vm1007 = vcmp.eq.s32.totalorder %v959, 1
      %vm1008 = vcmp.eq.s32.totalorder %v962, 1
      %vm1009 = vcmp.eq.s32.totalorder %v965, 1
      %vm1010 = vcmp.eq.s32.totalorder %v968, 1
      %vm1011 = vcmp.eq.s32.totalorder %v971, 1
      %vm1012 = vcmp.eq.s32.totalorder %v974, 1
      %vm1013 = vcmp.eq.s32.totalorder %v977, 1
      %vm1014 = vcmp.eq.s32.totalorder %v980, 1
      %vm1015 = vcmp.eq.s32.totalorder %v983, 1
      %vm1016 = vcmp.eq.s32.totalorder %v986, 1
      %vm1017 = vcmp.eq.s32.totalorder %v989, 1
      %vm1018 = vcmp.eq.s32.totalorder %v992, 1
      %vm1019 = vcmp.eq.s32.totalorder %v995, 1
      %v1020 = vsel %vm996, %v638, 0.0
      %v1021 = vsel %vm997, %v641, 0.0
      %v1022 = vsel %vm998, %v646, 0.0
      %v1023 = vsel %vm999, %v649, 0.0
      %v1024 = vsel %vm1000, %v654, 0.0
      %v1025 = vsel %vm1001, %v657, 0.0
      %v1026 = vsel %vm1002, %v662, 0.0
      %v1027 = vsel %vm1003, %v665, 0.0
      %v1028 = vsel %vm1004, %v670, 0.0
      %v1029 = vsel %vm1005, %v673, 0.0
      %v1030 = vsel %vm1006, %v678, 0.0
      %v1031 = vsel %vm1007, %v681, 0.0
      %v1032 = vsel %vm1008, %v686, 0.0
      %v1033 = vsel %vm1009, %v689, 0.0
      %v1034 = vsel %vm1010, %v694, 0.0
      %v1035 = vsel %vm1011, %v697, 0.0
      %v1036 = vsel %vm1012, %v702, 0.0
      %v1037 = vsel %vm1013, %v705, 0.0
      %v1038 = vsel %vm1014, %v710, 0.0
      %v1039 = vsel %vm1015, %v713, 0.0
      %v1040 = vsel %vm1016, %v718, 0.0
      %v1041 = vsel %vm1017, %v721, 0.0
      %v1042 = vsel %vm1018, %v726, 0.0
      %v1043 = vsel %vm1019, %v729, 0.0
      %v1044 = vadd.f32 %v1020, %v1021
      %v1045 = vadd.f32 %v1044, %v1022
      %v1046 = vadd.f32 %v1045, %v1023
      %v1047 = vadd.f32 %v1046, %v1024
      %v1048 = vadd.f32 %v1047, %v1025
      %v1049 = vadd.f32 %v1048, %v1026
      %v1050 = vadd.f32 %v1049, %v1027
      %v1051 = vadd.f32 %v1050, %v1028
      %v1052 = vadd.f32 %v1051, %v1029
      %v1053 = vadd.f32 %v1052, %v1030
      %v1054 = vadd.f32 %v1053, %v1031
      %v1055 = vadd.f32 %v1054, %v1032
      %v1056 = vadd.f32 %v1055, %v1033
      %v1057 = vadd.f32 %v1056, %v1034
      %v1058 = vadd.f32 %v1057, %v1035
      %v1059 = vadd.f32 %v1058, %v1036
      %v1060 = vadd.f32 %v1059, %v1037
      %v1061 = vadd.f32 %v1060, %v1038
      %v1062 = vadd.f32 %v1061, %v1039
      %v1063 = vadd.f32 %v1062, %v1040
      %v1064 = vadd.f32 %v1063, %v1041
      %v1065 = vadd.f32 %v1064, %v1042
      %v1066 = vadd.f32 %v1065, %v1043
      %v1067 = vrot.slane %v1066, 4
      %v1068 = vadd.f32 %v1066, %v1067
      %v1069 = vrot.slane %v1068, 2
      %v1070 = vadd.f32 %v1068, %v1069
      %v1071 = vrot.slane %v1070, 1
      %v1072 = vadd.f32 %v1070, %v1071
      %1073 = vst [vmem:[%s336] sm:$0x1] %v1072
      %v1074 = vmul.f32 %v1020, %v1020
      %v1075 = vmul.f32 %v1021, %v1021
      %v1076 = vmul.f32 %v1022, %v1022
      %v1077 = vmul.f32 %v1023, %v1023
      %v1078 = vmul.f32 %v1024, %v1024
      %v1079 = vmul.f32 %v1025, %v1025
      %v1080 = vmul.f32 %v1026, %v1026
      %v1081 = vmul.f32 %v1027, %v1027
      %v1082 = vmul.f32 %v1028, %v1028
      %v1083 = vmul.f32 %v1029, %v1029
      %v1084 = vmul.f32 %v1030, %v1030
      %v1085 = vmul.f32 %v1031, %v1031
      %v1086 = vmul.f32 %v1032, %v1032
      %v1087 = vmul.f32 %v1033, %v1033
      %v1088 = vmul.f32 %v1034, %v1034
      %v1089 = vmul.f32 %v1035, %v1035
      %v1090 = vmul.f32 %v1036, %v1036
      %v1091 = vmul.f32 %v1037, %v1037
      %v1092 = vmul.f32 %v1038, %v1038
      %v1093 = vmul.f32 %v1039, %v1039
      %v1094 = vmul.f32 %v1040, %v1040
      %v1095 = vmul.f32 %v1041, %v1041
      %v1096 = vmul.f32 %v1042, %v1042
      %v1097 = vmul.f32 %v1043, %v1043
      %v1098 = vadd.f32 %v1074, %v1075
      %v1099 = vadd.f32 %v1098, %v1076
      %v1100 = vadd.f32 %v1099, %v1077
      %v1101 = vadd.f32 %v1100, %v1078
      %v1102 = vadd.f32 %v1101, %v1079
      %v1103 = vadd.f32 %v1102, %v1080
      %v1104 = vadd.f32 %v1103, %v1081
      %v1105 = vadd.f32 %v1104, %v1082
      %v1106 = vadd.f32 %v1105, %v1083
      %v1107 = vadd.f32 %v1106, %v1084
      %v1108 = vadd.f32 %v1107, %v1085
      %v1109 = vadd.f32 %v1108, %v1086
      %v1110 = vadd.f32 %v1109, %v1087
      %v1111 = vadd.f32 %v1110, %v1088
      %v1112 = vadd.f32 %v1111, %v1089
      %v1113 = vadd.f32 %v1112, %v1090
      %v1114 = vadd.f32 %v1113, %v1091
      %v1115 = vadd.f32 %v1114, %v1092
      %v1116 = vadd.f32 %v1115, %v1093
      %v1117 = vadd.f32 %v1116, %v1094
      %v1118 = vadd.f32 %v1117, %v1095
      %v1119 = vadd.f32 %v1118, %v1096
      %v1120 = vadd.f32 %v1119, %v1097
      %v1121 = vrot.slane %v1120, 4
      %v1122 = vadd.f32 %v1120, %v1121
      %v1123 = vrot.slane %v1122, 2
      %v1124 = vadd.f32 %v1122, %v1123
      %v1125 = vrot.slane %v1124, 1
      %v1126 = vadd.f32 %v1124, %v1125
      %1127 = vst [vmem:[%s336 + $0x1] sm:$0x1] %v1126
      %s1128 = smul.u32 24, %s24
      %p1129 = scmp.lt.s32.totalorder %s23, 1
      %s1130 = scalar_select %p1129, %s23, 1
      %p1131 = scmp.lt.s32.totalorder %s1128, 23
      %s1132 = scalar_select %p1131, %s1128, 23
      %s1133 = smul.addr %s1130, 24
      %s1134 = sadd.s32 %s1132, %s1133
      %s1135 = smul.addr %s1134, 4
      %s1136 = scalar_lea.vmem %s6, %s1135
      %p1137 = scmp.lt.s32.totalorder %s23, 1
      %s1138 = scalar_select %p1137, %s23, 1
      %p1139 = scmp.lt.s32.totalorder %s24, 0
      %s1140 = scalar_select %p1139, %s24, 0
      %s1141 = sadd.s32 %s1140, %s1138
      %s1142 = smul.addr %s1141, 2
      %s1143 = scalar_lea.vmem %s7, %s1142
      // Predicated region
      $region45: #{conv_block2d.6} parent=43 // pred_check
        %p1144 = pneg %p184
      $region46: #{conv_block2d.6} parent=43 // pred_check_branch
        %1146 = sbr.rel (%p1144) target = $region48
      $region47: #{conv_block2d.6} parent=43 // pred_region
        %s1147 = smul.u32 24, %s24
      $region48: #{conv_block2d.6} parent=43 // pred_fallthru
        _
      // Predicated region
      $region49: #{conv_block2d.6} parent=43 // pred_check
        %p1148 = pneg %p212
      $region50: #{conv_block2d.6} parent=43 // pred_check_branch
        %1150 = sbr.rel (%p1148) target = $region52
      $region51: #{conv_block2d.6} parent=43 // pred_region
        _
      $region52: #{conv_block2d.6} parent=43 // pred_fallthru
        _
    $region44: #{conv_block2d.6} parent=5 // pred_fallthru
      _
    %p1151 = scmp.le.s32.totalorder 2, %s14
    // Predicated region
    $region53: #{conv_block2d.6} parent=5 // pred_check
      %p1152 = pneg %p1151
    $region54: #{conv_block2d.6} parent=5 // pred_check_branch
      %1154 = sbr.rel (%p1152) target = $region56
    $region55: #{conv_block2d.6} parent=5 // pred_region
      %s1155 = ssub.s32 %s14, 2
      // Predicated region
      $region57: #{conv_block2d.6} parent=55 // pred_check
        %p1156 = pneg %p190
      $region58: #{conv_block2d.6} parent=55 // pred_check_branch
        %1158 = sbr.rel (%p1156) target = $region60
      $region59: #{conv_block2d.6} parent=55 // pred_region
        %s1159 = smul.u32 24, %s26
        %p1160 = scmp.lt.s32.totalorder %s25, 1
        %s1161 = scalar_select %p1160, %s25, 1
        %p1162 = scmp.lt.s32.totalorder %s1159, 23
        %s1163 = scalar_select %p1162, %s1159, 23
        %s1164 = smul.addr %s1161, 24
        %s1165 = sadd.s32 %s1163, %s1164
        %s1166 = smul.addr %s1165, 4
        %s1167 = scalar_lea.vmem %s6, %s1166
      $region60: #{conv_block2d.6} parent=55 // pred_fallthru
        _
      // Predicated region
      $region61: #{conv_block2d.6} parent=55 // pred_check
        %p1168 = pneg %p218
      $region62: #{conv_block2d.6} parent=55 // pred_check_branch
        %1170 = sbr.rel (%p1168) target = $region64
      $region63: #{conv_block2d.6} parent=55 // pred_region
        %p1171 = scmp.lt.s32.totalorder %s25, 1
        %s1172 = scalar_select %p1171, %s25, 1
        %p1173 = scmp.lt.s32.totalorder %s26, 0
        %s1174 = scalar_select %p1173, %s26, 0
        %s1175 = sadd.s32 %s1174, %s1172
        %s1176 = smul.addr %s1175, 2
        %s1177 = scalar_lea.vmem %s7, %s1176
      $region64: #{conv_block2d.6} parent=55 // pred_fallthru
        _
    $region56: #{conv_block2d.6} parent=5 // pred_fallthru
      _
  $region6: #{conv_block2d.6} parent=0 // loop_footer
    %s18 = sadd.s32 1, %s14
  $region7: #{conv_block2d.6} parent=0 // loop_footer_branch
    %13 = sbr.rel target = $region3
  $region8: #{conv_block2d.6} parent=0 // loop_exit
    _

// kernel: conv_block2d.4
$region0: #{conv_block2d.4}
  #allocation0 [shape = 'u32[]', space=smem, size = 0x4, offset = 0x4, fixed_abs, tag = 'smem constant byte address 0x4 - core index']
  #allocation1 [shape = 'u32[144,128]{1,0:T(1,128)}', space=vmem, size = 0x12000, scoped, tag = 'internal scratch']
  #allocation2 [shape = 'bf16[264,4]{1,0:T(8,128)(2,1)}', space=vmem, size = 0x10800, scoped, tag = 'scratch operand']
  %s0 = inlined_call_operand.vmem [shape: f32[2,256,4], index: 0, kind: input, shape index: {}, may-alias: {0,1,2}]
  %s1 = inlined_call_operand.vmem [shape: f32[2,256,4], index: 1, kind: input, shape index: {}, may-alias: {0,1,2}]
  %s2 = inlined_call_operand.vmem [shape: f32[2,256,4], index: 2, kind: input, shape index: {}, may-alias: {0,1,2}]
  %s3 = inlined_call_operand.vmem [shape: bf16[3,3,4,128], index: 3, kind: input, shape index: {}]
  %s4 = inlined_call_operand.vmem [shape: f32[1,128], index: 4, kind: input, shape index: {}]
  %s5 = inlined_call_operand.vmem [shape: f32[224,1], index: 5, kind: input, shape index: {}]
  %s6 = inlined_call_operand.vmem [shape: bf16[2,224,128], index: 6, kind: output, shape index: {0}]
  %s7 = inlined_call_operand.vmem [shape: f32[2,1,2,128], index: 7, kind: output, shape index: {1}]
  %8 = xla_tuple %s6, %s7
  %s9 = sld [smem:[#allocation0]]
  $region65: #{conv_block2d.4} parent=0
    _
  %s11 = ssub.s32 1, %s9
  %s12 = scalar_select 0, %s11, %s9
  loop: start=0, step=1, limit=4
  $region2: #{conv_block2d.4} parent=0 // loop_pre_header
    _
  $region3: #{conv_block2d.4} parent=0 // loop_header
    %s14 = sphi 0, %s18
    %p15 = scmp.ge.s32.totalorder %s14, 4
    %s21 = sphi 0, %s33
    %s22 = sphi 0, %s29
    %s23 = sphi 0, %s21
    %s24 = sphi 0, %s22
    %s25 = sphi 0, %s23
    %s26 = sphi 0, %s24
    %s38 = sphi 0, %s40
    %s41 = sphi 0, %s38
    %s42 = sphi 0, %s41
    %s58 = sphi 0, %s42
    %s70 = sphi 0, %s72
    %s73 = sphi 0, %s70
    %s74 = sphi 0, %s73
    %s90 = sphi 0, %s74
    %s102 = sphi 0, %s104
    %s105 = sphi 0, %s102
    %s106 = sphi 0, %s105
    %s122 = sphi 0, %s106
    %s126 = sphi 0, %s126
    %s128 = sphi 0, %s126
    %s129 = sphi 0, %s128
    %s143 = sphi 0, %s129
    %s147 = sphi 0, %s147
    %s149 = sphi 0, %s147
    %s150 = sphi 0, %s149
    %s164 = sphi 0, %s150
    %s168 = sphi 0, %s168
    %s170 = sphi 0, %s168
    %s171 = sphi 0, %s170
    %s185 = sphi 0, %s171
    %s193 = sphi 0, %s195
    %s196 = sphi 0, %s193
    %s197 = sphi 0, %s196
    %s213 = sphi 0, %s197
    %s221 = sphi 0, %s223
    %s224 = sphi 0, %s221
    %s225 = sphi 0, %s224
    %s241 = sphi 0, %s225
  $region4: #{conv_block2d.4} parent=0 // loop_header_branch
    %17 = sbr.rel (%p15) target = $region8
  $region5: #{conv_block2d.4} parent=0 // loop_body
    %s19 = ssub.s32 %s14, 1
    %s20 = ssub.s32 %s14, 2
    %s27 = sadd.s32 1, %s22
    %p28 = scmp.ge.s32.totalorder %s27, 1
    %s29 = scalar_select %p28, 0, %s27
    %s30 = sadd.s32 1, %s21
    %s31 = scalar_select %p28, %s30, %s21
    %p32 = scmp.ge.s32.totalorder %s31, 2
    %s33 = scalar_select %p32, 0, %s31
    %s34 = ssub.s32 %s21, %s33
    %s35 = ssub.s32 %s22, %s29
    %s36 = sor.u32 %s34, %s35
    %p37 = scmp.eq.s32.totalorder %s36, 0
    %s39 = sadd.s32 %s38, 1
    %s40 = scalar_select %p37, %s38, %s39
    %p43 = pneg %p37
    %p44 = scmp.eq.s32.totalorder %s14, 1
    %p45 = por %p43, %p44
    %p46 = scmp.ne.s32.totalorder %s38, %s41
    %p47 = scmp.eq.s32.totalorder %s14, 0
    %p48 = por %p46, %p47
    %p49 = scmp.ne.s32.totalorder %s38, %s41
    %p50 = scmp.eq.s32.totalorder %s19, 1
    %p51 = por %p49, %p50
    %p52 = scmp.ne.s32.totalorder %s41, %s42
    %p53 = scmp.eq.s32.totalorder %s19, 0
    %p54 = por %p52, %p53
    %p55 = scmp.ne.s32.totalorder %s41, %s42
    %p56 = scmp.eq.s32.totalorder %s20, 1
    %p57 = por %p55, %p56
    %p59 = scmp.ne.s32.totalorder %s42, %s58
    %p60 = scmp.eq.s32.totalorder %s20, 0
    %p61 = por %p59, %p60
    %s62 = smul.u32 %s22, 14
    %s63 = sadd.s32 %s62, 14
    %s64 = smul.u32 %s29, 14
    %s65 = sadd.s32 %s64, 14
    %s66 = ssub.s32 %s21, %s33
    %s67 = ssub.s32 %s63, %s65
    %s68 = sor.u32 %s66, %s67
    %p69 = scmp.eq.s32.totalorder %s68, 0
    %s71 = sadd.s32 %s70, 1
    %s72 = scalar_select %p69, %s70, %s71
    %p75 = pneg %p69
    %p76 = scmp.eq.s32.totalorder %s14, 1
    %p77 = por %p75, %p76
    %p78 = scmp.ne.s32.totalorder %s70, %s73
    %p79 = scmp.eq.s32.totalorder %s14, 0
    %p80 = por %p78, %p79
    %p81 = scmp.ne.s32.totalorder %s70, %s73
    %p82 = scmp.eq.s32.totalorder %s19, 1
    %p83 = por %p81, %p82
    %p84 = scmp.ne.s32.totalorder %s73, %s74
    %p85 = scmp.eq.s32.totalorder %s19, 0
    %p86 = por %p84, %p85
    %p87 = scmp.ne.s32.totalorder %s73, %s74
    %p88 = scmp.eq.s32.totalorder %s20, 1
    %p89 = por %p87, %p88
    %p91 = scmp.ne.s32.totalorder %s74, %s90
    %p92 = scmp.eq.s32.totalorder %s20, 0
    %p93 = por %p91, %p92
    %s94 = smul.u32 %s22, 14
    %s95 = sadd.s32 %s94, 15
    %s96 = smul.u32 %s29, 14
    %s97 = sadd.s32 %s96, 15
    %s98 = ssub.s32 %s21, %s33
    %s99 = ssub.s32 %s95, %s97
    %s100 = sor.u32 %s98, %s99
    %p101 = scmp.eq.s32.totalorder %s100, 0
    %s103 = sadd.s32 %s102, 1
    %s104 = scalar_select %p101, %s102, %s103
    %p107 = pneg %p101
    %p108 = scmp.eq.s32.totalorder %s14, 1
    %p109 = por %p107, %p108
    %p110 = scmp.ne.s32.totalorder %s102, %s105
    %p111 = scmp.eq.s32.totalorder %s14, 0
    %p112 = por %p110, %p111
    %p113 = scmp.ne.s32.totalorder %s102, %s105
    %p114 = scmp.eq.s32.totalorder %s19, 1
    %p115 = por %p113, %p114
    %p116 = scmp.ne.s32.totalorder %s105, %s106
    %p117 = scmp.eq.s32.totalorder %s19, 0
    %p118 = por %p116, %p117
    %p119 = scmp.ne.s32.totalorder %s105, %s106
    %p120 = scmp.eq.s32.totalorder %s20, 1
    %p121 = por %p119, %p120
    %p123 = scmp.ne.s32.totalorder %s106, %s122
    %p124 = scmp.eq.s32.totalorder %s20, 0
    %p125 = por %p123, %p124
    %s127 = sadd.s32 %s126, 1
    %p130 = scmp.eq.s32.totalorder %s14, 1
    %p131 = scmp.ne.s32.totalorder %s126, %s128
    %p132 = scmp.eq.s32.totalorder %s14, 0
    %p133 = por %p131, %p132
    %p134 = scmp.ne.s32.totalorder %s126, %s128
    %p135 = scmp.eq.s32.totalorder %s19, 1
    %p136 = por %p134, %p135
    %p137 = scmp.ne.s32.totalorder %s128, %s129
    %p138 = scmp.eq.s32.totalorder %s19, 0
    %p139 = por %p137, %p138
    %p140 = scmp.ne.s32.totalorder %s128, %s129
    %p141 = scmp.eq.s32.totalorder %s20, 1
    %p142 = por %p140, %p141
    %p144 = scmp.ne.s32.totalorder %s129, %s143
    %p145 = scmp.eq.s32.totalorder %s20, 0
    %p146 = por %p144, %p145
    %s148 = sadd.s32 %s147, 1
    %p151 = scmp.eq.s32.totalorder %s14, 1
    %p152 = scmp.ne.s32.totalorder %s147, %s149
    %p153 = scmp.eq.s32.totalorder %s14, 0
    %p154 = por %p152, %p153
    %p155 = scmp.ne.s32.totalorder %s147, %s149
    %p156 = scmp.eq.s32.totalorder %s19, 1
    %p157 = por %p155, %p156
    %p158 = scmp.ne.s32.totalorder %s149, %s150
    %p159 = scmp.eq.s32.totalorder %s19, 0
    %p160 = por %p158, %p159
    %p161 = scmp.ne.s32.totalorder %s149, %s150
    %p162 = scmp.eq.s32.totalorder %s20, 1
    %p163 = por %p161, %p162
    %p165 = scmp.ne.s32.totalorder %s150, %s164
    %p166 = scmp.eq.s32.totalorder %s20, 0
    %p167 = por %p165, %p166
    %s169 = sadd.s32 %s168, 1
    %p172 = scmp.eq.s32.totalorder %s14, 1
    %p173 = scmp.ne.s32.totalorder %s168, %s170
    %p174 = scmp.eq.s32.totalorder %s14, 0
    %p175 = por %p173, %p174
    %p176 = scmp.ne.s32.totalorder %s168, %s170
    %p177 = scmp.eq.s32.totalorder %s19, 1
    %p178 = por %p176, %p177
    %p179 = scmp.ne.s32.totalorder %s170, %s171
    %p180 = scmp.eq.s32.totalorder %s19, 0
    %p181 = por %p179, %p180
    %p182 = scmp.ne.s32.totalorder %s170, %s171
    %p183 = scmp.eq.s32.totalorder %s20, 1
    %p184 = por %p182, %p183
    %p186 = scmp.ne.s32.totalorder %s171, %s185
    %p187 = scmp.eq.s32.totalorder %s20, 0
    %p188 = por %p186, %p187
    %s189 = ssub.s32 %s21, %s33
    %s190 = ssub.s32 %s22, %s29
    %s191 = sor.u32 %s189, %s190
    %p192 = scmp.eq.s32.totalorder %s191, 0
    %s194 = sadd.s32 %s193, 1
    %s195 = scalar_select %p192, %s193, %s194
    %p198 = pneg %p192
    %p199 = scmp.eq.s32.totalorder %s14, 1
    %p200 = por %p198, %p199
    %p201 = scmp.ne.s32.totalorder %s193, %s196
    %p202 = scmp.eq.s32.totalorder %s14, 0
    %p203 = por %p201, %p202
    %p204 = scmp.ne.s32.totalorder %s193, %s196
    %p205 = scmp.eq.s32.totalorder %s19, 1
    %p206 = por %p204, %p205
    %p207 = scmp.ne.s32.totalorder %s196, %s197
    %p208 = scmp.eq.s32.totalorder %s19, 0
    %p209 = por %p207, %p208
    %p210 = scmp.ne.s32.totalorder %s196, %s197
    %p211 = scmp.eq.s32.totalorder %s20, 1
    %p212 = por %p210, %p211
    %p214 = scmp.ne.s32.totalorder %s197, %s213
    %p215 = scmp.eq.s32.totalorder %s20, 0
    %p216 = por %p214, %p215
    %s217 = ssub.s32 %s21, %s33
    %s218 = ssub.s32 %s22, %s29
    %s219 = sor.u32 %s217, %s218
    %p220 = scmp.eq.s32.totalorder %s219, 0
    %s222 = sadd.s32 %s221, 1
    %s223 = scalar_select %p220, %s221, %s222
    %p226 = pneg %p220
    %p227 = scmp.eq.s32.totalorder %s14, 1
    %p228 = por %p226, %p227
    %p229 = scmp.ne.s32.totalorder %s221, %s224
    %p230 = scmp.eq.s32.totalorder %s14, 0
    %p231 = por %p229, %p230
    %p232 = scmp.ne.s32.totalorder %s221, %s224
    %p233 = scmp.eq.s32.totalorder %s19, 1
    %p234 = por %p232, %p233
    %p235 = scmp.ne.s32.totalorder %s224, %s225
    %p236 = scmp.eq.s32.totalorder %s19, 0
    %p237 = por %p235, %p236
    %p238 = scmp.ne.s32.totalorder %s224, %s225
    %p239 = scmp.eq.s32.totalorder %s20, 1
    %p240 = por %p238, %p239
    %p242 = scmp.ne.s32.totalorder %s225, %s241
    %p243 = scmp.eq.s32.totalorder %s20, 0
    %p244 = por %p242, %p243
    %p245 = scmp.le.s32.totalorder 1, %s14
    %p246 = scmp.lt.s32.totalorder %s14, 3
    %p247 = pnand %p245, %p246
    %p248 = pneg %p247
    // Predicated region
    $region9: #{conv_block2d.4} parent=5 // pred_check
      _
    $region10: #{conv_block2d.4} parent=5 // pred_check_branch
      %250 = sbr.rel (%p247) target = $region12
    $region11: #{conv_block2d.4} parent=5 // pred_region
      %s251 = ssub.s32 %s14, 1
      // Predicated region
      $region13: #{conv_block2d.4} parent=11 // pred_check
        %p252 = pneg %p139
      $region14: #{conv_block2d.4} parent=11 // pred_check_branch
        %254 = sbr.rel (%p252) target = $region16
      $region15: #{conv_block2d.4} parent=11 // pred_region
        _
      $region16: #{conv_block2d.4} parent=11 // pred_fallthru
        _
      // Predicated region
      $region17: #{conv_block2d.4} parent=11 // pred_check
        %p255 = pneg %p160
      $region18: #{conv_block2d.4} parent=11 // pred_check_branch
        %257 = sbr.rel (%p255) target = $region20
      $region19: #{conv_block2d.4} parent=11 // pred_region
        _
      $region20: #{conv_block2d.4} parent=11 // pred_fallthru
        _
      // Predicated region
      $region21: #{conv_block2d.4} parent=11 // pred_check
        %p258 = pneg %p181
      $region22: #{conv_block2d.4} parent=11 // pred_check_branch
        %260 = sbr.rel (%p258) target = $region24
      $region23: #{conv_block2d.4} parent=11 // pred_region
        _
      $region24: #{conv_block2d.4} parent=11 // pred_fallthru
        _
    $region12: #{conv_block2d.4} parent=5 // pred_fallthru
      _
    %p261 = scmp.lt.s32.totalorder %s14, 2
    // Predicated region
    $region25: #{conv_block2d.4} parent=5 // pred_check
      %p262 = pneg %p261
    $region26: #{conv_block2d.4} parent=5 // pred_check_branch
      %264 = sbr.rel (%p262) target = $region28
    $region27: #{conv_block2d.4} parent=5 // pred_region
      // Predicated region
      $region29: #{conv_block2d.4} parent=27 // pred_check
        %p265 = pneg %p48
      $region30: #{conv_block2d.4} parent=27 // pred_check_branch
        %267 = sbr.rel (%p265) target = $region32
      $region31: #{conv_block2d.4} parent=27 // pred_region
        %s268 = smul.u32 28, %s22
        %s269 = ssub.s32 32, %s268
        %p270 = scmp.lt.s32.totalorder %s269, 28
        %s271 = scalar_select %p270, %s269, 28
        %s272 = smul.u32 128, %s271
        %p273 = scmp.lt.s32.totalorder %s21, 1
        %s274 = scalar_select %p273, %s21, 1
        %p275 = scmp.lt.s32.totalorder %s268, 31
        %s276 = scalar_select %p275, %s268, 31
        %s277 = smul.addr %s274, 32
        %s278 = sadd.s32 %s276, %s277
        %s279 = smul.addr %s278, 8
        %s280 = scalar_lea.vmem %s0, %s279
        %s281 = smul.u32 28, %s22
        %s282 = ssub.s32 32, %s281
        %p283 = scmp.lt.s32.totalorder %s282, 28
        %s284 = scalar_select %p283, %s282, 28
        %s285 = smul.u32 128, %s284
      $region32: #{conv_block2d.4} parent=27 // pred_fallthru
        _
      // Predicated region
      $region33: #{conv_block2d.4} parent=27 // pred_check
        %p286 = pneg %p80
      $region34: #{conv_block2d.4} parent=27 // pred_check_branch
        %288 = sbr.rel (%p286) target = $region36
      $region35: #{conv_block2d.4} parent=27 // pred_region
        %s289 = smul.u32 %s22, 14
        %s290 = sadd.s32 %s289, 14
        %s291 = smul.u32 2, %s290
        %p292 = scmp.lt.s32.totalorder %s21, 1
        %s293 = scalar_select %p292, %s21, 1
        %p294 = scmp.lt.s32.totalorder %s291, 31
        %s295 = scalar_select %p294, %s291, 31
        %s296 = smul.addr %s293, 32
        %s297 = sadd.s32 %s295, %s296
        %s298 = smul.addr %s297, 8
        %s299 = scalar_lea.vmem %s1, %s298
        %s300 = smul.u32 %s22, 14
        %s301 = sadd.s32 %s300, 14
        %s302 = smul.u32 2, %s301
      $region36: #{conv_block2d.4} parent=27 // pred_fallthru
        _
      // Predicated region
      $region37: #{conv_block2d.4} parent=27 // pred_check
        %p303 = pneg %p112
      $region38: #{conv_block2d.4} parent=27 // pred_check_branch
        %305 = sbr.rel (%p303) target = $region40
      $region39: #{conv_block2d.4} parent=27 // pred_region
        %s306 = smul.u32 %s22, 14
        %s307 = sadd.s32 %s306, 15
        %s308 = smul.u32 2, %s307
        %p309 = scmp.lt.s32.totalorder %s21, 1
        %s310 = scalar_select %p309, %s21, 1
        %p311 = scmp.lt.s32.totalorder %s308, 31
        %s312 = scalar_select %p311, %s308, 31
        %s313 = smul.addr %s310, 32
        %s314 = sadd.s32 %s312, %s313
        %s315 = smul.addr %s314, 8
        %s316 = scalar_lea.vmem %s2, %s315
        %s317 = smul.u32 %s22, 14
        %s318 = sadd.s32 %s317, 15
        %s319 = smul.u32 2, %s318
      $region40: #{conv_block2d.4} parent=27 // pred_fallthru
        _
    $region28: #{conv_block2d.4} parent=5 // pred_fallthru
      _
    %p320 = scmp.le.s32.totalorder 1, %s14
    %p321 = scmp.lt.s32.totalorder %s14, 3
    %p322 = pnand %p320, %p321
    %p323 = pneg %p322
    // Predicated region
    $region41: #{conv_block2d.4} parent=5 // pred_check
      _
    $region42: #{conv_block2d.4} parent=5 // pred_check_branch
      %325 = sbr.rel (%p322) target = $region44
    $region43: #{conv_block2d.4} parent=5 // pred_region
      %s326 = ssub.s32 %s14, 1
      %s327 = smul.u32 28, %s24
      %s328 = ssub.s32 32, %s327
      %p329 = scmp.lt.s32.totalorder %s328, 28
      %s330 = scalar_select %p329, %s328, 28
      %s331 = smul.u32 128, %s330
      %p332 = scmp.lt.s32.totalorder %s23, 1
      %s333 = scalar_select %p332, %s23, 1
      %p334 = scmp.lt.s32.totalorder %s327, 31
      %s335 = scalar_select %p334, %s327, 31
      %s336 = smul.addr %s333, 32
      %s337 = sadd.s32 %s335, %s336
      %s338 = smul.addr %s337, 8
      %s339 = scalar_lea.vmem %s0, %s338
      %p340 = pneg %p54
      %p341 = pneg %p51
      %s342 = smul.u32 %s24, 14
      %s343 = sadd.s32 %s342, 14
      %s344 = smul.u32 2, %s343
      %p345 = scmp.lt.s32.totalorder %s23, 1
      %s346 = scalar_select %p345, %s23, 1
      %p347 = scmp.lt.s32.totalorder %s344, 31
      %s348 = scalar_select %p347, %s344, 31
      %s349 = smul.addr %s346, 32
      %s350 = sadd.s32 %s348, %s349
      %s351 = smul.addr %s350, 8
      %s352 = scalar_lea.vmem %s1, %s351
      %p353 = pneg %p86
      %p354 = pneg %p83
      %s355 = smul.u32 %s24, 14
      %s356 = sadd.s32 %s355, 15
      %s357 = smul.u32 2, %s356
      %p358 = scmp.lt.s32.totalorder %s23, 1
      %s359 = scalar_select %p358, %s23, 1
      %p360 = scmp.lt.s32.totalorder %s357, 31
      %s361 = scalar_select %p360, %s357, 31
      %s362 = smul.addr %s359, 32
      %s363 = sadd.s32 %s361, %s362
      %s364 = smul.addr %s363, 8
      %s365 = scalar_lea.vmem %s2, %s364
      %p366 = pneg %p118
      %p367 = pneg %p115
      %p368 = pneg %p139
      %p369 = pneg %p136
      %p370 = pneg %p160
      %p371 = pneg %p157
      %p372 = pneg %p181
      %p373 = pneg %p178
      %p374 = pneg %p209
      %p375 = pneg %p206
      %s376 = smul.u32 28, %s24
      %p377 = scmp.lt.s32.totalorder %s23, 1
      %s378 = scalar_select %p377, %s23, 1
      %p379 = scmp.lt.s32.totalorder %s376, 27
      %s380 = scalar_select %p379, %s376, 27
      %s381 = smul.addr %s378, 28
      %s382 = sadd.s32 %s380, %s381
      %s383 = smul.addr %s382, 4
      %s384 = scalar_lea.vmem %s6, %s383
      %p385 = pneg %p237
      %p386 = pneg %p234
      %p387 = scmp.lt.s32.totalorder %s23, 1
      %s388 = scalar_select %p387, %s23, 1
      %p389 = scmp.lt.s32.totalorder %s24, 0
      %s390 = scalar_select %p389, %s24, 0
      %s391 = sadd.s32 %s390, %s388
      %s392 = smul.addr %s391, 2
      %s393 = scalar_lea.vmem %s7, %s392
      %s394 = smul.u32 28, %s24
      %s395 = ssub.s32 32, %s394
      %p396 = scmp.lt.s32.totalorder %s395, 28
      %s397 = scalar_select %p396, %s395, 28
      %s398 = smul.u32 128, %s397
      %p399 = scmp.lt.s32.totalorder %s23, 1
      %s400 = scalar_select %p399, %s23, 1
      %p401 = scmp.lt.s32.totalorder %s394, 31
      %s402 = scalar_select %p401, %s394, 31
      %s403 = smul.addr %s400, 32
      %s404 = sadd.s32 %s402, %s403
      %s405 = smul.addr %s404, 8
      %s406 = scalar_lea.vmem %s0, %s405
      %s407 = smul.u32 28, %s24
      %s408 = ssub.s32 32, %s407
      %p409 = scmp.lt.s32.totalorder %s408, 28
      %s410 = scalar_select %p409, %s408, 28
      %s411 = smul.u32 128, %s410
      %s412 = smul.u32 %s24, 14
      %s413 = sadd.s32 %s412, 14
      %s414 = smul.u32 2, %s413
      %p415 = scmp.lt.s32.totalorder %s23, 1
      %s416 = scalar_select %p415, %s23, 1
      %p417 = scmp.lt.s32.totalorder %s414, 31
      %s418 = scalar_select %p417, %s414, 31
      %s419 = smul.addr %s416, 32
      %s420 = sadd.s32 %s418, %s419
      %s421 = smul.addr %s420, 8
      %s422 = scalar_lea.vmem %s1, %s421
      %s423 = smul.u32 %s24, 14
      %s424 = sadd.s32 %s423, 14
      %s425 = smul.u32 2, %s424
      %s426 = smul.u32 %s24, 14
      %s427 = sadd.s32 %s426, 15
      %s428 = smul.u32 2, %s427
      %p429 = scmp.lt.s32.totalorder %s23, 1
      %s430 = scalar_select %p429, %s23, 1
      %p431 = scmp.lt.s32.totalorder %s428, 31
      %s432 = scalar_select %p431, %s428, 31
      %s433 = smul.addr %s430, 32
      %s434 = sadd.s32 %s432, %s433
      %s435 = smul.addr %s434, 8
      %s436 = scalar_lea.vmem %s2, %s435
      %s437 = smul.u32 %s24, 14
      %s438 = sadd.s32 %s437, 15
      %s439 = smul.u32 2, %s438
      %s440 = smul.u32 28, %s24
      %p441 = scmp.lt.s32.totalorder %s23, 1
      %s442 = scalar_select %p441, %s23, 1
      %p443 = scmp.lt.s32.totalorder %s440, 27
      %s444 = scalar_select %p443, %s440, 27
      %s445 = smul.addr %s442, 28
      %s446 = sadd.s32 %s444, %s445
      %s447 = smul.addr %s446, 4
      %s448 = scalar_lea.vmem %s6, %s447
      %s449 = smul.u32 28, %s24
      %p450 = scmp.lt.s32.totalorder %s23, 1
      %s451 = scalar_select %p450, %s23, 1
      %p452 = scmp.lt.s32.totalorder %s24, 0
      %s453 = scalar_select %p452, %s24, 0
      %s454 = sadd.s32 %s453, %s451
      %s455 = smul.addr %s454, 2
      %s456 = scalar_lea.vmem %s7, %s455
      %v458 = vld [vmem:[%s406] sm:$0xff]
      %v459 = vld [vmem:[%s406 + $0x8] sm:$0xff]
      %v460 = vld [vmem:[%s406 + $0x10] sm:$0xff]
      %v461 = vld [vmem:[%s406 + $0x18] sm:$0xff]
      %v462 = vld [vmem:[%s406 + $0x20] sm:$0xff]
      %v463 = vld [vmem:[%s406 + $0x28] sm:$0xff]
      %v464 = vld [vmem:[%s406 + $0x30] sm:$0xff]
      %v465 = vld [vmem:[%s406 + $0x38] sm:$0xff]
      %v466 = vld [vmem:[%s406 + $0x40] sm:$0xff]
      %v467 = vld [vmem:[%s406 + $0x48] sm:$0xff]
      %v468 = vld [vmem:[%s406 + $0x50] sm:$0xff]
      %v469 = vld [vmem:[%s406 + $0x58] sm:$0xff]
      %v470 = vld [vmem:[%s406 + $0x60] sm:$0xff]
      %v471 = vld [vmem:[%s406 + $0x68] sm:$0xff]
      %v472 = vld [vmem:[%s406 + $0x70] sm:$0xff]
      %v473 = vld [vmem:[%s406 + $0x78] sm:$0xff]
      %v474 = vld [vmem:[%s406 + $0x80] sm:$0xff]
      %v475 = vld [vmem:[%s406 + $0x88] sm:$0xff]
      %v476 = vld [vmem:[%s406 + $0x90] sm:$0xff]
      %v477 = vld [vmem:[%s406 + $0x98] sm:$0xff]
      %v478 = vld [vmem:[%s406 + $0xa0] sm:$0xff]
      %v479 = vld [vmem:[%s406 + $0xa8] sm:$0xff]
      %v480 = vld [vmem:[%s406 + $0xb0] sm:$0xff]
      %v481 = vld [vmem:[%s406 + $0xb8] sm:$0xff]
      %v482 = vld [vmem:[%s406 + $0xc0] sm:$0xff]
      %v483 = vld [vmem:[%s406 + $0xc8] sm:$0xff]
      %v484 = vld [vmem:[%s406 + $0xd0] sm:$0xff]
      %v485 = vld [vmem:[%s406 + $0xd8] sm:$0xff]
      %v486 = vpack.c.bf16 %v459, %v458
      %v487 = vpack.c.bf16 %v461, %v460
      %v488 = vpack.c.bf16 %v463, %v462
      %v489 = vpack.c.bf16 %v465, %v464
      %v490 = vpack.c.bf16 %v467, %v466
      %v491 = vpack.c.bf16 %v469, %v468
      %v492 = vpack.c.bf16 %v471, %v470
      %v493 = vpack.c.bf16 %v473, %v472
      %v494 = vpack.c.bf16 %v475, %v474
      %v495 = vpack.c.bf16 %v477, %v476
      %v496 = vpack.c.bf16 %v479, %v478
      %v497 = vpack.c.bf16 %v481, %v480
      %v498 = vpack.c.bf16 %v483, %v482
      %v499 = vpack.c.bf16 %v485, %v484
      %v514 = vunpack.c.l.b16 %v486
      %v515 = vunpack.c.h.b16 %v486
      %v516 = vunpack.c.l.b16 %v487
      %v517 = vunpack.c.h.b16 %v487
      %v518 = vunpack.c.l.b16 %v488
      %v519 = vunpack.c.h.b16 %v488
      %v520 = vunpack.c.l.b16 %v489
      %v521 = vunpack.c.h.b16 %v489
      %v522 = vunpack.c.l.b16 %v490
      %v523 = vunpack.c.h.b16 %v490
      %v524 = vunpack.c.l.b16 %v491
      %v525 = vunpack.c.h.b16 %v491
      %v526 = vunpack.c.l.b16 %v492
      %v527 = vunpack.c.h.b16 %v492
      %v528 = vunpack.c.l.b16 %v493
      %v529 = vunpack.c.h.b16 %v493
      %v530 = vunpack.c.l.b16 %v494
      %v531 = vunpack.c.h.b16 %v494
      %v532 = vunpack.c.l.b16 %v495
      %v533 = vunpack.c.h.b16 %v495
      %v534 = vunpack.c.l.b16 %v496
      %v535 = vunpack.c.h.b16 %v496
      %v536 = vunpack.c.l.b16 %v497
      %v537 = vunpack.c.h.b16 %v497
      %v538 = vunpack.c.l.b16 %v498
      %v539 = vunpack.c.h.b16 %v498
      %v540 = vunpack.c.l.b16 %v499
      %v541 = vunpack.c.h.b16 %v499
      %v542 = vpack.c.b16 %v514, %v514
      %v543 = vpack.c.b16 %v515, %v515
      %v544 = vpack.c.b16 %v516, %v516
      %v545 = vpack.c.b16 %v517, %v517
      %v546 = vpack.c.b16 %v518, %v518
      %v547 = vpack.c.b16 %v519, %v519
      %v548 = vpack.c.b16 %v520, %v520
      %v549 = vpack.c.b16 %v521, %v521
      %v550 = vpack.c.b16 %v522, %v522
      %v551 = vpack.c.b16 %v523, %v523
      %v552 = vpack.c.b16 %v524, %v524
      %v553 = vpack.c.b16 %v525, %v525
      %v554 = vpack.c.b16 %v526, %v526
      %v555 = vpack.c.b16 %v527, %v527
      %v556 = vpack.c.b16 %v528, %v528
      %v557 = vpack.c.b16 %v529, %v529
      %v558 = vpack.c.b16 %v530, %v530
      %v559 = vpack.c.b16 %v531, %v531
      %v560 = vpack.c.b16 %v532, %v532
      %v561 = vpack.c.b16 %v533, %v533
      %v562 = vpack.c.b16 %v534, %v534
      %v563 = vpack.c.b16 %v535, %v535
      %v564 = vpack.c.b16 %v536, %v536
      %v565 = vpack.c.b16 %v537, %v537
      %v566 = vpack.c.b16 %v538, %v538
      %v567 = vpack.c.b16 %v539, %v539
      %v568 = vpack.c.b16 %v540, %v540
      %v569 = vpack.c.b16 %v541, %v541
      %vm598 = vcmask 27648
      %599 = vst.msk [vmem:[#allocation2] sm:$0xf] %vm598, %v542
      %600 = vst.msk [vmem:[#allocation2 + $0x4] sm:$0xf] %vm598, %v543
      %601 = vst.msk [vmem:[#allocation2 + $0x8] sm:$0xf] %vm598, %v544
      %602 = vst.msk [vmem:[#allocation2 + $0xc] sm:$0xf] %vm598, %v545
      %603 = vst.msk [vmem:[#allocation2 + $0x10] sm:$0xf] %vm598, %v546
      %604 = vst.msk [vmem:[#allocation2 + $0x14] sm:$0xf] %vm598, %v547
      %605 = vst.msk [vmem:[#allocation2 + $0x18] sm:$0xf] %vm598, %v548
      %606 = vst.msk [vmem:[#allocation2 + $0x1c] sm:$0xf] %vm598, %v549
      %607 = vst.msk [vmem:[#allocation2 + $0x20] sm:$0xf] %vm598, %v550
      %608 = vst.msk [vmem:[#allocation2 + $0x24] sm:$0xf] %vm598, %v551
      %609 = vst.msk [vmem:[#allocation2 + $0x28] sm:$0xf] %vm598, %v552
      %610 = vst.msk [vmem:[#allocation2 + $0x2c] sm:$0xf] %vm598, %v553
      %611 = vst.msk [vmem:[#allocation2 + $0x30] sm:$0xf] %vm598, %v554
      %612 = vst.msk [vmem:[#allocation2 + $0x34] sm:$0xf] %vm598, %v555
      %613 = vst.msk [vmem:[#allocation2 + $0x38] sm:$0xf] %vm598, %v556
      %614 = vst.msk [vmem:[#allocation2 + $0x3c] sm:$0xf] %vm598, %v557
      %615 = vst.msk [vmem:[#allocation2 + $0x40] sm:$0xf] %vm598, %v558
      %616 = vst.msk [vmem:[#allocation2 + $0x44] sm:$0xf] %vm598, %v559
      %617 = vst.msk [vmem:[#allocation2 + $0x48] sm:$0xf] %vm598, %v560
      %618 = vst.msk [vmem:[#allocation2 + $0x4c] sm:$0xf] %vm598, %v561
      %619 = vst.msk [vmem:[#allocation2 + $0x50] sm:$0xf] %vm598, %v562
      %620 = vst.msk [vmem:[#allocation2 + $0x54] sm:$0xf] %vm598, %v563
      %621 = vst.msk [vmem:[#allocation2 + $0x58] sm:$0xf] %vm598, %v564
      %622 = vst.msk [vmem:[#allocation2 + $0x5c] sm:$0xf] %vm598, %v565
      %623 = vst.msk [vmem:[#allocation2 + $0x60] sm:$0xf] %vm598, %v566
      %624 = vst.msk [vmem:[#allocation2 + $0x64] sm:$0xf] %vm598, %v567
      %625 = vst.msk [vmem:[#allocation2 + $0x68] sm:$0xf] %vm598, %v568
      %626 = vst.msk [vmem:[#allocation2 + $0x6c] sm:$0xf] %vm598, %v569
      %v627 = vld [vmem:[%s422] sm:$0xff]
      %v628 = vld [vmem:[%s422 + $0x8] sm:$0xff]
      %v629 = vpack.c.bf16 %v628, %v627
      %v631 = vunpack.c.l.b16 %v629
      %v632 = vunpack.c.h.b16 %v629
      %v633 = vpack.c.b16 %v631, %v631
      %v634 = vpack.c.b16 %v632, %v632
      %637 = vst.msk [vmem:[#allocation2 + $0x70] sm:$0xf] %vm598, %v633
      %638 = vst.msk [vmem:[#allocation2 + $0x74] sm:$0xf] %vm598, %v634
      %v639 = vld [vmem:[%s436] sm:$0xff]
      %v640 = vld [vmem:[%s436 + $0x8] sm:$0xff]
      %v641 = vpack.c.bf16 %v640, %v639
      %v643 = vunpack.c.l.b16 %v641
      %v644 = vunpack.c.h.b16 %v641
      %v645 = vpack.c.b16 %v643, %v643
      %v646 = vpack.c.b16 %v644, %v644
      %649 = vst.msk [vmem:[#allocation2 + $0x78] sm:$0xf] %vm598, %v645
      %650 = vst.msk [vmem:[#allocation2 + $0x7c] sm:$0xf] %vm598, %v646
      %651 = vst.msk [vmem:[#allocation2 + $0x80] sm:$0xf] %vm598, 0
      %v652 = vld [vmem:[#allocation2] sm:$0xf]
      %v653 = vld [vmem:[#allocation2 + $0x4] sm:$0xf]
      %v654 = vld [vmem:[#allocation2 + $0x8] sm:$0xf]
      %v655 = vld [vmem:[#allocation2 + $0xc] sm:$0xf]
      %v656 = vld [vmem:[#allocation2 + $0x10] sm:$0xf]
      %v657 = vld [vmem:[#allocation2 + $0x14] sm:$0xf]
      %v658 = vld [vmem:[#allocation2 + $0x18] sm:$0xf]
      %v659 = vld [vmem:[#allocation2 + $0x1c] sm:$0xf]
      %v660 = vld [vmem:[#allocation2 + $0x20] sm:$0xf]
      %v661 = vld [vmem:[#allocation2 + $0x24] sm:$0xf]
      %v662 = vld [vmem:[#allocation2 + $0x28] sm:$0xf]
      %v663 = vld [vmem:[#allocation2 + $0x2c] sm:$0xf]
      %v664 = vld [vmem:[#allocation2 + $0x30] sm:$0xf]
      %v665 = vld [vmem:[#allocation2 + $0x34] sm:$0xf]
      %v666 = vld [vmem:[#allocation2 + $0x38] sm:$0xf]
      %v667 = vld [vmem:[#allocation2 + $0x3c] sm:$0xf]
      %v668 = vld [vmem:[#allocation2 + $0x40] sm:$0xf]
      %v669 = vld [vmem:[#allocation2 + $0x44] sm:$0xf]
      %v670 = vld [vmem:[#allocation2 + $0x48] sm:$0xf]
      %v671 = vld [vmem:[#allocation2 + $0x4c] sm:$0xf]
      %v672 = vld [vmem:[#allocation2 + $0x50] sm:$0xf]
      %v673 = vld [vmem:[#allocation2 + $0x54] sm:$0xf]
      %v674 = vld [vmem:[#allocation2 + $0x58] sm:$0xf]
      %v675 = vld [vmem:[#allocation2 + $0x5c] sm:$0xf]
      %v676 = vld [vmem:[#allocation2 + $0x60] sm:$0xf]
      %v677 = vld [vmem:[#allocation2 + $0x64] sm:$0xf]
      %v678 = vld [vmem:[#allocation2 + $0x68] sm:$0xf]
      %v679 = vld [vmem:[#allocation2 + $0x6c] sm:$0xf]
      %v680 = vld [vmem:[%s3] sm:$0x3]
      %v681 = vld [vmem:[#allocation2 + $0x70] sm:$0x1]
      %s682 = scalar_lea.vmem %s3, 2
      %v683 = vld [vmem:[%s682] sm:$0x3]
      %v713 = vunpack.c.l.b16 %v652
      %v714 = vunpack.c.l.b16 %v653
      %v715 = vunpack.c.l.b16 %v654
      %v716 = vunpack.c.l.b16 %v655
      %v717 = vunpack.c.l.b16 %v656
      %v718 = vunpack.c.l.b16 %v657
      %v719 = vunpack.c.l.b16 %v658
      %v720 = vunpack.c.l.b16 %v659
      %v721 = vunpack.c.l.b16 %v660
      %v722 = vunpack.c.l.b16 %v661
      %v723 = vunpack.c.l.b16 %v662
      %v724 = vunpack.c.l.b16 %v663
      %v725 = vunpack.c.l.b16 %v664
      %v726 = vunpack.c.l.b16 %v665
      %v727 = vunpack.c.l.b16 %v666
      %v728 = vunpack.c.l.b16 %v667
      %v729 = vunpack.c.l.b16 %v668
      %v730 = vunpack.c.l.b16 %v669
      %v731 = vunpack.c.l.b16 %v670
      %v732 = vunpack.c.l.b16 %v671
      %v733 = vunpack.c.l.b16 %v672
      %v734 = vunpack.c.l.b16 %v673
      %v735 = vunpack.c.l.b16 %v674
      %v736 = vunpack.c.l.b16 %v675
      %v737 = vunpack.c.l.b16 %v676
      %v738 = vunpack.c.l.b16 %v677
      %v739 = vunpack.c.l.b16 %v678
      %v740 = vunpack.c.l.b16 %v679
      %v741 = vunpack.c.l.b16 %v681
      %v742 = vpack.c.b16 %v714, %v713
      %v743 = vpack.c.b16 %v716, %v715
      %v744 = vpack.c.b16 %v718, %v717
      %v745 = vpack.c.b16 %v720, %v719
      %v746 = vpack.c.b16 %v722, %v721
      %v747 = vpack.c.b16 %v724, %v723
      %v748 = vpack.c.b16 %v726, %v725
      %v749 = vpack.c.b16 %v728, %v727
      %v750 = vpack.c.b16 %v730, %v729
      %v751 = vpack.c.b16 %v732, %v731
      %v752 = vpack.c.b16 %v734, %v733
      %v753 = vpack.c.b16 %v736, %v735
      %v754 = vpack.c.b16 %v738, %v737
      %v755 = vpack.c.b16 %v740, %v739
      %v756 = vpack.c.b16 %v741, %v741
      %vm757 = vsmask.f32 7424
      %v759 = vshrl.u32 %v742, 16
      %v761 = vshll.u32 %v742, 16
      %v763 = vrot.slane %v761, 1
      %v764 = vor.u32 %v759, %v763
      %v766 = vshll.u32 %v743, 16
      %v768 = vrot.slane %v766, 1
      %v769 = vsel %vm757, %v764, %v768
      %v770 = vshrl.u32 %v743, 16
      %v772 = vor.u32 %v770, %v768
      %v774 = vshll.u32 %v744, 16
      %v776 = vrot.slane %v774, 1
      %v777 = vsel %vm757, %v772, %v776
      %v778 = vshrl.u32 %v744, 16
      %v780 = vor.u32 %v778, %v776
      %v782 = vshll.u32 %v745, 16
      %v784 = vrot.slane %v782, 1
      %v785 = vsel %vm757, %v780, %v784
      %v786 = vshrl.u32 %v745, 16
      %v788 = vor.u32 %v786, %v784
      %v790 = vshll.u32 %v746, 16
      %v792 = vrot.slane %v790, 1
      %v793 = vsel %vm757, %v788, %v792
      %v794 = vshrl.u32 %v746, 16
      %v796 = vor.u32 %v794, %v792
      %v798 = vshll.u32 %v747, 16
      %v800 = vrot.slane %v798, 1
      %v801 = vsel %vm757, %v796, %v800
      %v802 = vshrl.u32 %v747, 16
      %v804 = vor.u32 %v802, %v800
      %v806 = vshll.u32 %v748, 16
      %v808 = vrot.slane %v806, 1
      %v809 = vsel %vm757, %v804, %v808
      %v810 = vshrl.u32 %v748, 16
      %v812 = vor.u32 %v810, %v808
      %v814 = vshll.u32 %v749, 16
      %v816 = vrot.slane %v814, 1
      %v817 = vsel %vm757, %v812, %v816
      %v818 = vshrl.u32 %v749, 16
      %v820 = vor.u32 %v818, %v816
      %v822 = vshll.u32 %v750, 16
      %v824 = vrot.slane %v822, 1
      %v825 = vsel %vm757, %v820, %v824
      %v826 = vshrl.u32 %v750, 16
      %v828 = vor.u32 %v826, %v824
      %v830 = vshll.u32 %v751, 16
      %v832 = vrot.slane %v830, 1
      %v833 = vsel %vm757, %v828, %v832
      %v834 = vshrl.u32 %v751, 16
      %v836 = vor.u32 %v834, %v832
      %v838 = vshll.u32 %v752, 16
      %v840 = vrot.slane %v838, 1
      %v841 = vsel %vm757, %v836, %v840
      %v842 = vshrl.u32 %v752, 16
      %v844 = vor.u32 %v842, %v840
      %v846 = vshll.u32 %v753, 16
      %v848 = vrot.slane %v846, 1
      %v849 = vsel %vm757, %v844, %v848
      %v850 = vshrl.u32 %v753, 16
      %v852 = vor.u32 %v850, %v848
      %v854 = vshll.u32 %v754, 16
      %v856 = vrot.slane %v854, 1
      %v857 = vsel %vm757, %v852, %v856
      %v858 = vshrl.u32 %v754, 16
      %v860 = vor.u32 %v858, %v856
      %v862 = vshll.u32 %v755, 16
      %v864 = vrot.slane %v862, 1
      %v865 = vsel %vm757, %v860, %v864
      %v866 = vshrl.u32 %v755, 16
      %v868 = vor.u32 %v866, %v864
      %v870 = vshll.u32 %v756, 16
      %v872 = vrot.slane %v870, 1
      %v873 = vsel %vm757, %v868, %v872
      %vm874 = vcmask 31744
      %v876 = vsel %vm874, %v769, 0
      %v879 = vsel %vm874, %v777, 0
      %v882 = vsel %vm874, %v785, 0
      %v885 = vsel %vm874, %v793, 0
      %v888 = vsel %vm874, %v801, 0
      %v891 = vsel %vm874, %v809, 0
      %v894 = vsel %vm874, %v817, 0
      %v897 = vsel %vm874, %v825, 0
      %v900 = vsel %vm874, %v833, 0
      %v903 = vsel %vm874, %v841, 0
      %v906 = vsel %vm874, %v849, 0
      %v909 = vsel %vm874, %v857, 0
      %v912 = vsel %vm874, %v865, 0
      %v915 = vsel %vm874, %v873, 0
      %vm917 = vcmask 1041408
      %v919 = vsel %vm917, %v683, 0
      %921 = vmatprep.subr.bf16.mxu0 0
      %922 = vmatpush1.bf16.msra.mxu0 0
      %923 = vmatprep.subr.bf16.mxu0 0
      %924 = vmatpush1.bf16.msra.mxu0 0
      %925 = vmatprep.subr.bf16.mxu0 0
      %926 = vmatpush1.bf16.msra.mxu0 0
      %927 = vmatprep.subr.bf16.mxu0 0
      %928 = vmatpush1.bf16.msra.mxu0 0
      %929 = vmatprep.subr.bf16.mxu0 0
      %930 = vmatpush1.bf16.msra.mxu0 0
      %931 = vmatprep.subr.bf16.mxu0 0
      %932 = vmatpush1.bf16.msra.mxu0 0
      %933 = vmatprep.subr.bf16.mxu0 0
      %934 = vmatpush1.bf16.msra.mxu0 0
      %935 = vmatprep.subr.bf16.mxu0 0
      %936 = vmatpush1.bf16.msra.mxu0 %v919
      %937 = vmatprep.subr.bf16.mxu0 0
      %938 = vmatpush2.bf16.msra.mxu0 0
      %939 = vmatprep.subr.bf16.mxu0 0
      %940 = vmatpush2.bf16.msra.mxu0 0
      %941 = vmatprep.subr.bf16.mxu0 0
      %942 = vmatpush2.bf16.msra.mxu0 0
      %943 = vmatprep.subr.bf16.mxu0 0
      %944 = vmatpush2.bf16.msra.mxu0 0
      %945 = vmatprep.subr.bf16.mxu0 0
      %946 = vmatpush2.bf16.msra.mxu0 0
      %947 = vmatprep.subr.bf16.mxu0 0
      %948 = vmatpush2.bf16.msra.mxu0 0
      %949 = vmatprep.subr.bf16.mxu0 0
      %950 = vmatpush2.bf16.msra.mxu0 0
      %951 = vmatprep.subr.bf16.mxu0 0
      %952 = vmatpush2.bf16.msra.mxu0 0
      %953 = vmatprep.mubr.bf16.mxu0 0
      %954 = vmatmul.mubr.bf16.gmra.mxu0 %v876
      %v955 = vpop.f32.mrf.mxu0
      %v956 = vadd.f32 0.0, %v955
      %v957 = vpop.f32.mrf.mxu0
      %v958 = vpop.f32.mrf.mxu0
      %v959 = vadd.f32 0.0, %v958
      %v960 = vpop.f32.mrf.mxu0
      %961 = vmatprep.mubr.bf16.mxu0 0
      %962 = vmatmul.mubr.bf16.gmra.mxu0 %v879
      %v963 = vpop.f32.mrf.mxu0
      %v964 = vadd.f32 0.0, %v963
      %v965 = vpop.f32.mrf.mxu0
      %v966 = vpop.f32.mrf.mxu0
      %v967 = vadd.f32 0.0, %v966
      %v968 = vpop.f32.mrf.mxu0
      %969 = vmatprep.mubr.bf16.mxu0 0
      %970 = vmatmul.mubr.bf16.gmra.mxu0 %v882
      %v971 = vpop.f32.mrf.mxu0
      %v972 = vadd.f32 0.0, %v971
      %v973 = vpop.f32.mrf.mxu0
      %v974 = vpop.f32.mrf.mxu0
      %v975 = vadd.f32 0.0, %v974
      %v976 = vpop.f32.mrf.mxu0
      %977 = vmatprep.mubr.bf16.mxu0 0
      %978 = vmatmul.mubr.bf16.gmra.mxu0 %v885
      %v979 = vpop.f32.mrf.mxu0
      %v980 = vadd.f32 0.0, %v979
      %v981 = vpop.f32.mrf.mxu0
      %v982 = vpop.f32.mrf.mxu0
      %v983 = vadd.f32 0.0, %v982
      %v984 = vpop.f32.mrf.mxu0
      %985 = vmatprep.mubr.bf16.mxu0 0
      %986 = vmatmul.mubr.bf16.gmra.mxu0 %v888
      %v987 = vpop.f32.mrf.mxu0
      %v988 = vadd.f32 0.0, %v987
      %v989 = vpop.f32.mrf.mxu0
      %v990 = vpop.f32.mrf.mxu0
      %v991 = vadd.f32 0.0, %v990
      %v992 = vpop.f32.mrf.mxu0
      %993 = vmatprep.mubr.bf16.mxu0 0
      %994 = vmatmul.mubr.bf16.gmra.mxu0 %v891
      %v995 = vpop.f32.mrf.mxu0
      %v996 = vadd.f32 0.0, %v995
      %v997 = vpop.f32.mrf.mxu0
      %v998 = vpop.f32.mrf.mxu0
      %v999 = vadd.f32 0.0, %v998
      %v1000 = vpop.f32.mrf.mxu0
      %1001 = vmatprep.mubr.bf16.mxu0 0
      %1002 = vmatmul.mubr.bf16.gmra.mxu0 %v894
      %v1003 = vpop.f32.mrf.mxu0
      %v1004 = vadd.f32 0.0, %v1003
      %v1005 = vpop.f32.mrf.mxu0
      %v1006 = vpop.f32.mrf.mxu0
      %v1007 = vadd.f32 0.0, %v1006
      %v1008 = vpop.f32.mrf.mxu0
      %1009 = vmatprep.mubr.bf16.mxu0 0
      %1010 = vmatmul.mubr.bf16.gmra.mxu0 %v897
      %v1011 = vpop.f32.mrf.mxu0
      %v1012 = vadd.f32 0.0, %v1011
      %v1013 = vpop.f32.mrf.mxu0
      %v1014 = vpop.f32.mrf.mxu0
      %v1015 = vadd.f32 0.0, %v1014
      %v1016 = vpop.f32.mrf.mxu0
      %1017 = vmatprep.mubr.bf16.mxu0 0
      %1018 = vmatmul.mubr.bf16.gmra.mxu0 %v900
      %v1019 = vpop.f32.mrf.mxu0
      %v1020 = vadd.f32 0.0, %v1019
      %v1021 = vpop.f32.mrf.mxu0
      %v1022 = vpop.f32.mrf.mxu0
      %v1023 = vadd.f32 0.0, %v1022
      %v1024 = vpop.f32.mrf.mxu0
      %1025 = vmatprep.mubr.bf16.mxu0 0
      %1026 = vmatmul.mubr.bf16.gmra.mxu0 %v903
      %v1027 = vpop.f32.mrf.mxu0
      %v1028 = vadd.f32 0.0, %v1027
      %v1029 = vpop.f32.mrf.mxu0
      %v1030 = vpop.f32.mrf.mxu0
      %v1031 = vadd.f32 0.0, %v1030
      %v1032 = vpop.f32.mrf.mxu0
      %1033 = vmatprep.mubr.bf16.mxu0 0
      %1034 = vmatmul.mubr.bf16.gmra.mxu0 %v906
      %v1035 = vpop.f32.mrf.mxu0
      %v1036 = vadd.f32 0.0, %v1035
      %v1037 = vpop.f32.mrf.mxu0
      %v1038 = vpop.f32.mrf.mxu0
      %v1039 = vadd.f32 0.0, %v1038
      %v1040 = vpop.f32.mrf.mxu0
      %1041 = vmatprep.mubr.bf16.mxu0 0
      %1042 = vmatmul.mubr.bf16.gmra.mxu0 %v909
      %v1043 = vpop.f32.mrf.mxu0
      %v1044 = vadd.f32 0.0, %v1043
      %v1045 = vpop.f32.mrf.mxu0
      %v1046 = vpop.f32.mrf.mxu0
      %v1047 = vadd.f32 0.0, %v1046
      %v1048 = vpop.f32.mrf.mxu0
      %1049 = vmatprep.mubr.bf16.mxu0 0
      %1050 = vmatmul.mubr.bf16.gmra.mxu0 %v912
      %v1051 = vpop.f32.mrf.mxu0
      %v1052 = vadd.f32 0.0, %v1051
      %v1053 = vpop.f32.mrf.mxu0
      %v1054 = vpop.f32.mrf.mxu0
      %v1055 = vadd.f32 0.0, %v1054
      %v1056 = vpop.f32.mrf.mxu0
      %1057 = vmatprep.mubr.bf16.mxu0 0
      %1058 = vmatmul.mubr.bf16.gmra.mxu0 %v915
      %v1059 = vpop.f32.mrf.mxu0
      %v1060 = vadd.f32 0.0, %v1059
      %v1061 = vpop.f32.mrf.mxu0
      %v1062 = vpop.f32.mrf.mxu0
      %v1063 = vadd.f32 0.0, %v1062
      %v1064 = vpop.f32.mrf.mxu0
      %1065 = vdwg.mxu0
      %v1066 = vsel %vm874, %v742, 0
      %v1068 = vsel %vm874, %v743, 0
      %v1070 = vsel %vm874, %v744, 0
      %v1072 = vsel %vm874, %v745, 0
      %v1074 = vsel %vm874, %v746, 0
      %v1076 = vsel %vm874, %v747, 0
      %v1078 = vsel %vm874, %v748, 0
      %v1080 = vsel %vm874, %v749, 0
      %v1082 = vsel %vm874, %v750, 0
      %v1084 = vsel %vm874, %v751, 0
      %v1086 = vsel %vm874, %v752, 0
      %v1088 = vsel %vm874, %v753, 0
      %v1090 = vsel %vm874, %v754, 0
      %v1092 = vsel %vm874, %v755, 0
      %v1095 = vsel %vm917, %v680, 0
      %1097 = vmatprep.subr.bf16.mxu0 0
      %1098 = vmatpush1.bf16.msra.mxu0 0
      %1099 = vmatprep.subr.bf16.mxu0 0
      %1100 = vmatpush1.bf16.msra.mxu0 0
      %1101 = vmatprep.subr.bf16.mxu0 0
      %1102 = vmatpush1.bf16.msra.mxu0 0
      %1103 = vmatprep.subr.bf16.mxu0 0
      %1104 = vmatpush1.bf16.msra.mxu0 0
      %1105 = vmatprep.subr.bf16.mxu0 0
      %1106 = vmatpush1.bf16.msra.mxu0 0
      %1107 = vmatprep.subr.bf16.mxu0 0
      %1108 = vmatpush1.bf16.msra.mxu0 0
      %1109 = vmatprep.subr.bf16.mxu0 0
      %1110 = vmatpush1.bf16.msra.mxu0 0
      %1111 = vmatprep.subr.bf16.mxu0 0
      %1112 = vmatpush1.bf16.msra.mxu0 %v1095
      %1113 = vmatprep.subr.bf16.mxu0 0
      %1114 = vmatpush2.bf16.msra.mxu0 0
      %1115 = vmatprep.subr.bf16.mxu0 0
      %1116 = vmatpush2.bf16.msra.mxu0 0
      %1117 = vmatprep.subr.bf16.mxu0 0
      %1118 = vmatpush2.bf16.msra.mxu0 0
      %1119 = vmatprep.subr.bf16.mxu0 0
      %1120 = vmatpush2.bf16.msra.mxu0 0
      %1121 = vmatprep.subr.bf16.mxu0 0
      %1122 = vmatpush2.bf16.msra.mxu0 0
      %1123 = vmatprep.subr.bf16.mxu0 0
      %1124 = vmatpush2.bf16.msra.mxu0 0
      %1125 = vmatprep.subr.bf16.mxu0 0
      %1126 = vmatpush2.bf16.msra.mxu0 0
      %1127 = vmatprep.subr.bf16.mxu0 0
      %1128 = vmatpush2.bf16.msra.mxu0 0
      %1129 = vmatprep.mubr.bf16.mxu0 0
      %1130 = vmatmul.mubr.bf16.gmra.mxu0 %v1066
      %v1131 = vpop.f32.mrf.mxu0
      %v1132 = vadd.f32 %v956, %v1131
      %v1133 = vpop.f32.mrf.mxu0
      %v1134 = vpop.f32.mrf.mxu0
      %v1135 = vadd.f32 %v959, %v1134
      %v1136 = vpop.f32.mrf.mxu0
      %1137 = vmatprep.mubr.bf16.mxu0 0
      %1138 = vmatmul.mubr.bf16.gmra.mxu0 %v1068
      %v1139 = vpop.f32.mrf.mxu0
      %v1140 = vadd.f32 %v964, %v1139
      %v1141 = vpop.f32.mrf.mxu0
      %v1142 = vpop.f32.mrf.mxu0
      %v1143 = vadd.f32 %v967, %v1142
      %v1144 = vpop.f32.mrf.mxu0
      %1145 = vmatprep.mubr.bf16.mxu0 0
      %1146 = vmatmul.mubr.bf16.gmra.mxu0 %v1070
      %v1147 = vpop.f32.mrf.mxu0
      %v1148 = vadd.f32 %v972, %v1147
      %v1149 = vpop.f32.mrf.mxu0
      %v1150 = vpop.f32.mrf.mxu0
      %v1151 = vadd.f32 %v975, %v1150
      %v1152 = vpop.f32.mrf.mxu0
      %1153 = vmatprep.mubr.bf16.mxu0 0
      %1154 = vmatmul.mubr.bf16.gmra.mxu0 %v1072
      %v1155 = vpop.f32.mrf.mxu0
      %v1156 = vadd.f32 %v980, %v1155
      %v1157 = vpop.f32.mrf.mxu0
      %v1158 = vpop.f32.mrf.mxu0
      %v1159 = vadd.f32 %v983, %v1158
      %v1160 = vpop.f32.mrf.mxu0
      %1161 = vmatprep.mubr.bf16.mxu0 0
      %1162 = vmatmul.mubr.bf16.gmra.mxu0 %v1074
      %v1163 = vpop.f32.mrf.mxu0
      %v1164 = vadd.f32 %v988, %v1163
      %v1165 = vpop.f32.mrf.mxu0
      %v1166 = vpop.f32.mrf.mxu0
      %v1167 = vadd.f32 %v991, %v1166
      %v1168 = vpop.f32.mrf.mxu0
      %1169 = vmatprep.mubr.bf16.mxu0 0
      %1170 = vmatmul.mubr.bf16.gmra.mxu0 %v1076
      %v1171 = vpop.f32.mrf.mxu0
      %v1172 = vadd.f32 %v996, %v1171
      %v1173 = vpop.f32.mrf.mxu0
      %v1174 = vpop.f32.mrf.mxu0
      %v1175 = vadd.f32 %v999, %v1174
      %v1176 = vpop.f32.mrf.mxu0
      %1177 = vmatprep.mubr.bf16.mxu0 0
      %1178 = vmatmul.mubr.bf16.gmra.mxu0 %v1078
      %v1179 = vpop.f32.mrf.mxu0
      %v1180 = vadd.f32 %v1004, %v1179
      %v1181 = vpop.f32.mrf.mxu0
      %v1182 = vpop.f32.mrf.mxu0
      %v1183 = vadd.f32 %v1007, %v1182
      %v1184 = vpop.f32.mrf.mxu0
      %1185 = vmatprep.mubr.bf16.mxu0 0
      %1186 = vmatmul.mubr.bf16.gmra.mxu0 %v1080
      %v1187 = vpop.f32.mrf.mxu0
      %v1188 = vadd.f32 %v1012, %v1187
      %v1189 = vpop.f32.mrf.mxu0
      %v1190 = vpop.f32.mrf.mxu0
      %v1191 = vadd.f32 %v1015, %v1190
      %v1192 = vpop.f32.mrf.mxu0
      %1193 = vmatprep.mubr.bf16.mxu0 0
      %1194 = vmatmul.mubr.bf16.gmra.mxu0 %v1082
      %v1195 = vpop.f32.mrf.mxu0
      %v1196 = vadd.f32 %v1020, %v1195
      %v1197 = vpop.f32.mrf.mxu0
      %v1198 = vpop.f32.mrf.mxu0
      %v1199 = vadd.f32 %v1023, %v1198
      %v1200 = vpop.f32.mrf.mxu0
      %1201 = vmatprep.mubr.bf16.mxu0 0
      %1202 = vmatmul.mubr.bf16.gmra.mxu0 %v1084
      %v1203 = vpop.f32.mrf.mxu0
      %v1204 = vadd.f32 %v1028, %v1203
      %v1205 = vpop.f32.mrf.mxu0
      %v1206 = vpop.f32.mrf.mxu0
      %v1207 = vadd.f32 %v1031, %v1206
      %v1208 = vpop.f32.mrf.mxu0
      %1209 = vmatprep.mubr.bf16.mxu0 0
      %1210 = vmatmul.mubr.bf16.gmra.mxu0 %v1086
      %v1211 = vpop.f32.mrf.mxu0
      %v1212 = vadd.f32 %v1036, %v1211
      %v1213 = vpop.f32.mrf.mxu0
      %v1214 = vpop.f32.mrf.mxu0
      %v1215 = vadd.f32 %v1039, %v1214
      %v1216 = vpop.f32.mrf.mxu0
      %1217 = vmatprep.mubr.bf16.mxu0 0
      %1218 = vmatmul.mubr.bf16.gmra.mxu0 %v1088
      %v1219 = vpop.f32.mrf.mxu0
      %v1220 = vadd.f32 %v1044, %v1219
      %v1221 = vpop.f32.mrf.mxu0
      %v1222 = vpop.f32.mrf.mxu0
      %v1223 = vadd.f32 %v1047, %v1222
      %v1224 = vpop.f32.mrf.mxu0
      %1225 = vmatprep.mubr.bf16.mxu0 0
      %1226 = vmatmul.mubr.bf16.gmra.mxu0 %v1090
      %v1227 = vpop.f32.mrf.mxu0
      %v1228 = vadd.f32 %v1052, %v1227
      %v1229 = vpop.f32.mrf.mxu0
      %v1230 = vpop.f32.mrf.mxu0
      %v1231 = vadd.f32 %v1055, %v1230
      %v1232 = vpop.f32.mrf.mxu0
      %1233 = vmatprep.mubr.bf16.mxu0 0
      %1234 = vmatmul.mubr.bf16.gmra.mxu0 %v1092
      %v1235 = vpop.f32.mrf.mxu0
      %v1236 = vadd.f32 %v1060, %v1235
      %v1237 = vpop.f32.mrf.mxu0
      %v1238 = vpop.f32.mrf.mxu0
      %v1239 = vadd.f32 %v1063, %v1238
      %v1240 = vpop.f32.mrf.mxu0
      %1241 = vdwg.mxu0
      %v1242 = vld [vmem:[#allocation2] sm:$0xe]
      %s1243 = scalar_lea.vmem %s3, 4
      %v1244 = vld [vmem:[%s1243] sm:$0x3]
      %v1246 = vunpack.c.l.b16 %v1242
      %v1247 = vpack.c.b16 %v714, %v1246
      %vm1248 = vcmask 1046528
      %v1249 = vrot.slane %v1247, 1
      %v1250 = vrot.slane %v743, 1
      %v1251 = vsel %vm1248, %v1249, %v1250
      %v1252 = vrot.slane %v744, 1
      %v1253 = vsel %vm1248, %v1250, %v1252
      %v1254 = vrot.slane %v745, 1
      %v1255 = vsel %vm1248, %v1252, %v1254
      %v1256 = vrot.slane %v746, 1
      %v1257 = vsel %vm1248, %v1254, %v1256
      %v1258 = vrot.slane %v747, 1
      %v1259 = vsel %vm1248, %v1256, %v1258
      %v1260 = vrot.slane %v748, 1
      %v1261 = vsel %vm1248, %v1258, %v1260
      %v1262 = vrot.slane %v749, 1
      %v1263 = vsel %vm1248, %v1260, %v1262
      %v1264 = vrot.slane %v750, 1
      %v1265 = vsel %vm1248, %v1262, %v1264
      %v1266 = vrot.slane %v751, 1
      %v1267 = vsel %vm1248, %v1264, %v1266
      %v1268 = vrot.slane %v752, 1
      %v1269 = vsel %vm1248, %v1266, %v1268
      %v1270 = vrot.slane %v753, 1
      %v1271 = vsel %vm1248, %v1268, %v1270
      %v1272 = vrot.slane %v754, 1
      %v1273 = vsel %vm1248, %v1270, %v1272
      %v1274 = vrot.slane %v755, 1
      %v1275 = vsel %vm1248, %v1272, %v1274
      %v1276 = vrot.slane %v756, 1
      %v1277 = vsel %vm1248, %v1274, %v1276
      %v1279 = vsel %vm874, %v1251, 0
      %v1282 = vsel %vm874, %v1253, 0
      %v1285 = vsel %vm874, %v1255, 0
      %v1288 = vsel %vm874, %v1257, 0
      %v1291 = vsel %vm874, %v1259, 0
      %v1294 = vsel %vm874, %v1261, 0
      %v1297 = vsel %vm874, %v1263, 0
      %v1300 = vsel %vm874, %v1265, 0
      %v1303 = vsel %vm874, %v1267, 0
      %v1306 = vsel %vm874, %v1269, 0
      %v1309 = vsel %vm874, %v1271, 0
      %v1312 = vsel %vm874, %v1273, 0
      %v1315 = vsel %vm874, %v1275, 0
      %v1318 = vsel %vm874, %v1277, 0
      %v1321 = vsel %vm917, %v1244, 0
      %1323 = vmatprep.subr.bf16.mxu0 0
      %1324 = vmatpush1.bf16.msra.mxu0 0
      %1325 = vmatprep.subr.bf16.mxu0 0
      %1326 = vmatpush1.bf16.msra.mxu0 0
      %1327 = vmatprep.subr.bf16.mxu0 0
      %1328 = vmatpush1.bf16.msra.mxu0 0
      %1329 = vmatprep.subr.bf16.mxu0 0
      %1330 = vmatpush1.bf16.msra.mxu0 0
      %1331 = vmatprep.subr.bf16.mxu0 0
      %1332 = vmatpush1.bf16.msra.mxu0 0
      %1333 = vmatprep.subr.bf16.mxu0 0
      %1334 = vmatpush1.bf16.msra.mxu0 0
      %1335 = vmatprep.subr.bf16.mxu0 0
      %1336 = vmatpush1.bf16.msra.mxu0 0
      %1337 = vmatprep.subr.bf16.mxu0 0
      %1338 = vmatpush1.bf16.msra.mxu0 %v1321
      %1339 = vmatprep.subr.bf16.mxu0 0
      %1340 = vmatpush2.bf16.msra.mxu0 0
      %1341 = vmatprep.subr.bf16.mxu0 0
      %1342 = vmatpush2.bf16.msra.mxu0 0
      %1343 = vmatprep.subr.bf16.mxu0 0
      %1344 = vmatpush2.bf16.msra.mxu0 0
      %1345 = vmatprep.subr.bf16.mxu0 0
      %1346 = vmatpush2.bf16.msra.mxu0 0
      %1347 = vmatprep.subr.bf16.mxu0 0
      %1348 = vmatpush2.bf16.msra.mxu0 0
      %1349 = vmatprep.subr.bf16.mxu0 0
      %1350 = vmatpush2.bf16.msra.mxu0 0
      %1351 = vmatprep.subr.bf16.mxu0 0
      %1352 = vmatpush2.bf16.msra.mxu0 0
      %1353 = vmatprep.subr.bf16.mxu0 0
      %1354 = vmatpush2.bf16.msra.mxu0 0
      %1355 = vmatprep.mubr.bf16.mxu0 0
      %1356 = vmatmul.mubr.bf16.gmra.mxu0 %v1279
      %v1357 = vpop.f32.mrf.mxu0
      %v1358 = vadd.f32 0.0, %v1357
      %v1359 = vpop.f32.mrf.mxu0
      %v1360 = vpop.f32.mrf.mxu0
      %v1361 = vadd.f32 0.0, %v1360
      %v1362 = vpop.f32.mrf.mxu0
      %1363 = vmatprep.mubr.bf16.mxu0 0
      %1364 = vmatmul.mubr.bf16.gmra.mxu0 %v1282
      %v1365 = vpop.f32.mrf.mxu0
      %v1366 = vadd.f32 0.0, %v1365
      %v1367 = vpop.f32.mrf.mxu0
      %v1368 = vpop.f32.mrf.mxu0
      %v1369 = vadd.f32 0.0, %v1368
      %v1370 = vpop.f32.mrf.mxu0
      %1371 = vmatprep.mubr.bf16.mxu0 0
      %1372 = vmatmul.mubr.bf16.gmra.mxu0 %v1285
      %v1373 = vpop.f32.mrf.mxu0
      %v1374 = vadd.f32 0.0, %v1373
      %v1375 = vpop.f32.mrf.mxu0
      %v1376 = vpop.f32.mrf.mxu0
      %v1377 = vadd.f32 0.0, %v1376
      %v1378 = vpop.f32.mrf.mxu0
      %1379 = vmatprep.mubr.bf16.mxu0 0
      %1380 = vmatmul.mubr.bf16.gmra.mxu0 %v1288
      %v1381 = vpop.f32.mrf.mxu0
      %v1382 = vadd.f32 0.0, %v1381
      %v1383 = vpop.f32.mrf.mxu0
      %v1384 = vpop.f32.mrf.mxu0
      %v1385 = vadd.f32 0.0, %v1384
      %v1386 = vpop.f32.mrf.mxu0
      %1387 = vmatprep.mubr.bf16.mxu0 0
      %1388 = vmatmul.mubr.bf16.gmra.mxu0 %v1291
      %v1389 = vpop.f32.mrf.mxu0
      %v1390 = vadd.f32 0.0, %v1389
      %v1391 = vpop.f32.mrf.mxu0
      %v1392 = vpop.f32.mrf.mxu0
      %v1393 = vadd.f32 0.0, %v1392
      %v1394 = vpop.f32.mrf.mxu0
      %1395 = vmatprep.mubr.bf16.mxu0 0
      %1396 = vmatmul.mubr.bf16.gmra.mxu0 %v1294
      %v1397 = vpop.f32.mrf.mxu0
      %v1398 = vadd.f32 0.0, %v1397
      %v1399 = vpop.f32.mrf.mxu0
      %v1400 = vpop.f32.mrf.mxu0
      %v1401 = vadd.f32 0.0, %v1400
      %v1402 = vpop.f32.mrf.mxu0
      %1403 = vmatprep.mubr.bf16.mxu0 0
      %1404 = vmatmul.mubr.bf16.gmra.mxu0 %v1297
      %v1405 = vpop.f32.mrf.mxu0
      %v1406 = vadd.f32 0.0, %v1405
      %v1407 = vpop.f32.mrf.mxu0
      %v1408 = vpop.f32.mrf.mxu0
      %v1409 = vadd.f32 0.0, %v1408
      %v1410 = vpop.f32.mrf.mxu0
      %1411 = vmatprep.mubr.bf16.mxu0 0
      %1412 = vmatmul.mubr.bf16.gmra.mxu0 %v1300
      %v1413 = vpop.f32.mrf.mxu0
      %v1414 = vadd.f32 0.0, %v1413
      %v1415 = vpop.f32.mrf.mxu0
      %v1416 = vpop.f32.mrf.mxu0
      %v1417 = vadd.f32 0.0, %v1416
      %v1418 = vpop.f32.mrf.mxu0
      %1419 = vmatprep.mubr.bf16.mxu0 0
      %1420 = vmatmul.mubr.bf16.gmra.mxu0 %v1303
      %v1421 = vpop.f32.mrf.mxu0
      %v1422 = vadd.f32 0.0, %v1421
      %v1423 = vpop.f32.mrf.mxu0
      %v1424 = vpop.f32.mrf.mxu0
      %v1425 = vadd.f32 0.0, %v1424
      %v1426 = vpop.f32.mrf.mxu0
      %1427 = vmatprep.mubr.bf16.mxu0 0
      %1428 = vmatmul.mubr.bf16.gmra.mxu0 %v1306
      %v1429 = vpop.f32.mrf.mxu0
      %v1430 = vadd.f32 0.0, %v1429
      %v1431 = vpop.f32.mrf.mxu0
      %v1432 = vpop.f32.mrf.mxu0
      %v1433 = vadd.f32 0.0, %v1432
      %v1434 = vpop.f32.mrf.mxu0
      %1435 = vmatprep.mubr.bf16.mxu0 0
      %1436 = vmatmul.mubr.bf16.gmra.mxu0 %v1309
      %v1437 = vpop.f32.mrf.mxu0
      %v1438 = vadd.f32 0.0, %v1437
      %v1439 = vpop.f32.mrf.mxu0
      %v1440 = vpop.f32.mrf.mxu0
      %v1441 = vadd.f32 0.0, %v1440
      %v1442 = vpop.f32.mrf.mxu0
      %1443 = vmatprep.mubr.bf16.mxu0 0
      %1444 = vmatmul.mubr.bf16.gmra.mxu0 %v1312
      %v1445 = vpop.f32.mrf.mxu0
      %v1446 = vadd.f32 0.0, %v1445
      %v1447 = vpop.f32.mrf.mxu0
      %v1448 = vpop.f32.mrf.mxu0
      %v1449 = vadd.f32 0.0, %v1448
      %v1450 = vpop.f32.mrf.mxu0
      %1451 = vmatprep.mubr.bf16.mxu0 0
      %1452 = vmatmul.mubr.bf16.gmra.mxu0 %v1315
      %v1453 = vpop.f32.mrf.mxu0
      %v1454 = vadd.f32 0.0, %v1453
      %v1455 = vpop.f32.mrf.mxu0
      %v1456 = vpop.f32.mrf.mxu0
      %v1457 = vadd.f32 0.0, %v1456
      %v1458 = vpop.f32.mrf.mxu0
      %1459 = vmatprep.mubr.bf16.mxu0 0
      %1460 = vmatmul.mubr.bf16.gmra.mxu0 %v1318
      %v1461 = vpop.f32.mrf.mxu0
      %v1462 = vadd.f32 0.0, %v1461
      %v1463 = vpop.f32.mrf.mxu0
      %v1464 = vpop.f32.mrf.mxu0
      %v1465 = vadd.f32 0.0, %v1464
      %v1466 = vpop.f32.mrf.mxu0
      %1467 = vdwg.mxu0
      %v1468 = vadd.f32 %v1132, %v1358
      %v1469 = vadd.f32 %v1135, %v1361
      %v1470 = vadd.f32 %v1140, %v1366
      %v1471 = vadd.f32 %v1143, %v1369
      %v1472 = vadd.f32 %v1148, %v1374
      %v1473 = vadd.f32 %v1151, %v1377
      %v1474 = vadd.f32 %v1156, %v1382
      %v1475 = vadd.f32 %v1159, %v1385
      %v1476 = vadd.f32 %v1164, %v1390
      %v1477 = vadd.f32 %v1167, %v1393
      %v1478 = vadd.f32 %v1172, %v1398
      %v1479 = vadd.f32 %v1175, %v1401
      %v1480 = vadd.f32 %v1180, %v1406
      %v1481 = vadd.f32 %v1183, %v1409
      %v1482 = vadd.f32 %v1188, %v1414
      %v1483 = vadd.f32 %v1191, %v1417
      %v1484 = vadd.f32 %v1196, %v1422
      %v1485 = vadd.f32 %v1199, %v1425
      %v1486 = vadd.f32 %v1204, %v1430
      %v1487 = vadd.f32 %v1207, %v1433
      %v1488 = vadd.f32 %v1212, %v1438
      %v1489 = vadd.f32 %v1215, %v1441
      %v1490 = vadd.f32 %v1220, %v1446
      %v1491 = vadd.f32 %v1223, %v1449
      %v1492 = vadd.f32 %v1228, %v1454
      %v1493 = vadd.f32 %v1231, %v1457
      %v1494 = vadd.f32 %v1236, %v1462
      %v1495 = vadd.f32 %v1239, %v1465
      %v1496 = vld [vmem:[#allocation2 + $0x8] sm:$0xf]
      %v1497 = vld [vmem:[#allocation2 + $0xc] sm:$0xf]
      %v1498 = vld [vmem:[#allocation2 + $0x10] sm:$0xf]
      %v1499 = vld [vmem:[#allocation2 + $0x14] sm:$0xf]
      %v1500 = vld [vmem:[#allocation2 + $0x18] sm:$0xf]
      %v1501 = vld [vmem:[#allocation2 + $0x1c] sm:$0xf]
      %v1502 = vld [vmem:[#allocation2 + $0x20] sm:$0xf]
      %v1503 = vld [vmem:[#allocation2 + $0x24] sm:$0xf]
      %v1504 = vld [vmem:[#allocation2 + $0x28] sm:$0xf]
      %v1505 = vld [vmem:[#allocation2 + $0x2c] sm:$0xf]
      %v1506 = vld [vmem:[#allocation2 + $0x30] sm:$0xf]
      %v1507 = vld [vmem:[#allocation2 + $0x34] sm:$0xf]
      %v1508 = vld [vmem:[#allocation2 + $0x38] sm:$0xf]
      %v1509 = vld [vmem:[#allocation2 + $0x3c] sm:$0xf]
      %v1510 = vld [vmem:[#allocation2 + $0x40] sm:$0xf]
      %v1511 = vld [vmem:[#allocation2 + $0x44] sm:$0xf]
      %v1512 = vld [vmem:[#allocation2 + $0x48] sm:$0xf]
      %v1513 = vld [vmem:[#allocation2 + $0x4c] sm:$0xf]
      %v1514 = vld [vmem:[#allocation2 + $0x50] sm:$0xf]
      %v1515 = vld [vmem:[#allocation2 + $0x54] sm:$0xf]
      %v1516 = vld [vmem:[#allocation2 + $0x58] sm:$0xf]
      %v1517 = vld [vmem:[#allocation2 + $0x5c] sm:$0xf]
      %v1518 = vld [vmem:[#allocation2 + $0x60] sm:$0xf]
      %v1519 = vld [vmem:[#allocation2 + $0x64] sm:$0xf]
      %v1520 = vld [vmem:[#allocation2 + $0x68] sm:$0xf]
      %v1521 = vld [vmem:[#allocation2 + $0x6c] sm:$0xf]
      %v1522 = vld [vmem:[#allocation2 + $0x70] sm:$0xf]
      %v1523 = vld [vmem:[#allocation2 + $0x74] sm:$0xf]
      %s1524 = scalar_lea.vmem %s3, 6
      %v1525 = vld [vmem:[%s1524] sm:$0x3]
      %v1554 = vunpack.c.l.b16 %v1496
      %v1555 = vunpack.c.l.b16 %v1497
      %v1556 = vunpack.c.l.b16 %v1498
      %v1557 = vunpack.c.l.b16 %v1499
      %v1558 = vunpack.c.l.b16 %v1500
      %v1559 = vunpack.c.l.b16 %v1501
      %v1560 = vunpack.c.l.b16 %v1502
      %v1561 = vunpack.c.l.b16 %v1503
      %v1562 = vunpack.c.l.b16 %v1504
      %v1563 = vunpack.c.l.b16 %v1505
      %v1564 = vunpack.c.l.b16 %v1506
      %v1565 = vunpack.c.l.b16 %v1507
      %v1566 = vunpack.c.l.b16 %v1508
      %v1567 = vunpack.c.l.b16 %v1509
      %v1568 = vunpack.c.l.b16 %v1510
      %v1569 = vunpack.c.l.b16 %v1511
      %v1570 = vunpack.c.l.b16 %v1512
      %v1571 = vunpack.c.l.b16 %v1513
      %v1572 = vunpack.c.l.b16 %v1514
      %v1573 = vunpack.c.l.b16 %v1515
      %v1574 = vunpack.c.l.b16 %v1516
      %v1575 = vunpack.c.l.b16 %v1517
      %v1576 = vunpack.c.l.b16 %v1518
      %v1577 = vunpack.c.l.b16 %v1519
      %v1578 = vunpack.c.l.b16 %v1520
      %v1579 = vunpack.c.l.b16 %v1521
      %v1580 = vunpack.c.l.b16 %v1522
      %v1581 = vunpack.c.l.b16 %v1523
      %v1582 = vpack.c.b16 %v1555, %v1554
      %v1583 = vpack.c.b16 %v1557, %v1556
      %v1584 = vpack.c.b16 %v1559, %v1558
      %v1585 = vpack.c.b16 %v1561, %v1560
      %v1586 = vpack.c.b16 %v1563, %v1562
      %v1587 = vpack.c.b16 %v1565, %v1564
      %v1588 = vpack.c.b16 %v1567, %v1566
      %v1589 = vpack.c.b16 %v1569, %v1568
      %v1590 = vpack.c.b16 %v1571, %v1570
      %v1591 = vpack.c.b16 %v1573, %v1572
      %v1592 = vpack.c.b16 %v1575, %v1574
      %v1593 = vpack.c.b16 %v1577, %v1576
      %v1594 = vpack.c.b16 %v1579, %v1578
      %v1595 = vpack.c.b16 %v1581, %v1580
      %v1597 = vsel %vm874, %v1582, 0
      %v1600 = vsel %vm874, %v1583, 0
      %v1603 = vsel %vm874, %v1584, 0
      %v1606 = vsel %vm874, %v1585, 0
      %v1609 = vsel %vm874, %v1586, 0
      %v1612 = vsel %vm874, %v1587, 0
      %v1615 = vsel %vm874, %v1588, 0
      %v1618 = vsel %vm874, %v1589, 0
      %v1621 = vsel %vm874, %v1590, 0
      %v1624 = vsel %vm874, %v1591, 0
      %v1627 = vsel %vm874, %v1592, 0
      %v1630 = vsel %vm874, %v1593, 0
      %v1633 = vsel %vm874, %v1594, 0
      %v1636 = vsel %vm874, %v1595, 0
      %v1639 = vsel %vm917, %v1525, 0
      %1641 = vmatprep.subr.bf16.mxu0 0
      %1642 = vmatpush1.bf16.msra.mxu0 0
      %1643 = vmatprep.subr.bf16.mxu0 0
      %1644 = vmatpush1.bf16.msra.mxu0 0
      %1645 = vmatprep.subr.bf16.mxu0 0
      %1646 = vmatpush1.bf16.msra.mxu0 0
      %1647 = vmatprep.subr.bf16.mxu0 0
      %1648 = vmatpush1.bf16.msra.mxu0 0
      %1649 = vmatprep.subr.bf16.mxu0 0
      %1650 = vmatpush1.bf16.msra.mxu0 0
      %1651 = vmatprep.subr.bf16.mxu0 0
      %1652 = vmatpush1.bf16.msra.mxu0 0
      %1653 = vmatprep.subr.bf16.mxu0 0
      %1654 = vmatpush1.bf16.msra.mxu0 0
      %1655 = vmatprep.subr.bf16.mxu0 0
      %1656 = vmatpush1.bf16.msra.mxu0 %v1639
      %1657 = vmatprep.subr.bf16.mxu0 0
      %1658 = vmatpush2.bf16.msra.mxu0 0
      %1659 = vmatprep.subr.bf16.mxu0 0
      %1660 = vmatpush2.bf16.msra.mxu0 0
      %1661 = vmatprep.subr.bf16.mxu0 0
      %1662 = vmatpush2.bf16.msra.mxu0 0
      %1663 = vmatprep.subr.bf16.mxu0 0
      %1664 = vmatpush2.bf16.msra.mxu0 0
      %1665 = vmatprep.subr.bf16.mxu0 0
      %1666 = vmatpush2.bf16.msra.mxu0 0
      %1667 = vmatprep.subr.bf16.mxu0 0
      %1668 = vmatpush2.bf16.msra.mxu0 0
      %1669 = vmatprep.subr.bf16.mxu0 0
      %1670 = vmatpush2.bf16.msra.mxu0 0
      %1671 = vmatprep.subr.bf16.mxu0 0
      %1672 = vmatpush2.bf16.msra.mxu0 0
      %1673 = vmatprep.mubr.bf16.mxu0 0
      %1674 = vmatmul.mubr.bf16.gmra.mxu0 %v1597
      %v1675 = vpop.f32.mrf.mxu0
      %v1676 = vadd.f32 0.0, %v1675
      %v1677 = vpop.f32.mrf.mxu0
      %v1678 = vpop.f32.mrf.mxu0
      %v1679 = vadd.f32 0.0, %v1678
      %v1680 = vpop.f32.mrf.mxu0
      %1681 = vmatprep.mubr.bf16.mxu0 0
      %1682 = vmatmul.mubr.bf16.gmra.mxu0 %v1600
      %v1683 = vpop.f32.mrf.mxu0
      %v1684 = vadd.f32 0.0, %v1683
      %v1685 = vpop.f32.mrf.mxu0
      %v1686 = vpop.f32.mrf.mxu0
      %v1687 = vadd.f32 0.0, %v1686
      %v1688 = vpop.f32.mrf.mxu0
      %1689 = vmatprep.mubr.bf16.mxu0 0
      %1690 = vmatmul.mubr.bf16.gmra.mxu0 %v1603
      %v1691 = vpop.f32.mrf.mxu0
      %v1692 = vadd.f32 0.0, %v1691
      %v1693 = vpop.f32.mrf.mxu0
      %v1694 = vpop.f32.mrf.mxu0
      %v1695 = vadd.f32 0.0, %v1694
      %v1696 = vpop.f32.mrf.mxu0
      %1697 = vmatprep.mubr.bf16.mxu0 0
      %1698 = vmatmul.mubr.bf16.gmra.mxu0 %v1606
      %v1699 = vpop.f32.mrf.mxu0
      %v1700 = vadd.f32 0.0, %v1699
      %v1701 = vpop.f32.mrf.mxu0
      %v1702 = vpop.f32.mrf.mxu0
      %v1703 = vadd.f32 0.0, %v1702
      %v1704 = vpop.f32.mrf.mxu0
      %1705 = vmatprep.mubr.bf16.mxu0 0
      %1706 = vmatmul.mubr.bf16.gmra.mxu0 %v1609
      %v1707 = vpop.f32.mrf.mxu0
      %v1708 = vadd.f32 0.0, %v1707
      %v1709 = vpop.f32.mrf.mxu0
      %v1710 = vpop.f32.mrf.mxu0
      %v1711 = vadd.f32 0.0, %v1710
      %v1712 = vpop.f32.mrf.mxu0
      %1713 = vmatprep.mubr.bf16.mxu0 0
      %1714 = vmatmul.mubr.bf16.gmra.mxu0 %v1612
      %v1715 = vpop.f32.mrf.mxu0
      %v1716 = vadd.f32 0.0, %v1715
      %v1717 = vpop.f32.mrf.mxu0
      %v1718 = vpop.f32.mrf.mxu0
      %v1719 = vadd.f32 0.0, %v1718
      %v1720 = vpop.f32.mrf.mxu0
      %1721 = vmatprep.mubr.bf16.mxu0 0
      %1722 = vmatmul.mubr.bf16.gmra.mxu0 %v1615
      %v1723 = vpop.f32.mrf.mxu0
      %v1724 = vadd.f32 0.0, %v1723
      %v1725 = vpop.f32.mrf.mxu0
      %v1726 = vpop.f32.mrf.mxu0
      %v1727 = vadd.f32 0.0, %v1726
      %v1728 = vpop.f32.mrf.mxu0
      %1729 = vmatprep.mubr.bf16.mxu0 0
      %1730 = vmatmul.mubr.bf16.gmra.mxu0 %v1618
      %v1731 = vpop.f32.mrf.mxu0
      %v1732 = vadd.f32 0.0, %v1731
      %v1733 = vpop.f32.mrf.mxu0
      %v1734 = vpop.f32.mrf.mxu0
      %v1735 = vadd.f32 0.0, %v1734
      %v1736 = vpop.f32.mrf.mxu0
      %1737 = vmatprep.mubr.bf16.mxu0 0
      %1738 = vmatmul.mubr.bf16.gmra.mxu0 %v1621
      %v1739 = vpop.f32.mrf.mxu0
      %v1740 = vadd.f32 0.0, %v1739
      %v1741 = vpop.f32.mrf.mxu0
      %v1742 = vpop.f32.mrf.mxu0
      %v1743 = vadd.f32 0.0, %v1742
      %v1744 = vpop.f32.mrf.mxu0
      %1745 = vmatprep.mubr.bf16.mxu0 0
      %1746 = vmatmul.mubr.bf16.gmra.mxu0 %v1624
      %v1747 = vpop.f32.mrf.mxu0
      %v1748 = vadd.f32 0.0, %v1747
      %v1749 = vpop.f32.mrf.mxu0
      %v1750 = vpop.f32.mrf.mxu0
      %v1751 = vadd.f32 0.0, %v1750
      %v1752 = vpop.f32.mrf.mxu0
      %1753 = vmatprep.mubr.bf16.mxu0 0
      %1754 = vmatmul.mubr.bf16.gmra.mxu0 %v1627
      %v1755 = vpop.f32.mrf.mxu0
      %v1756 = vadd.f32 0.0, %v1755
      %v1757 = vpop.f32.mrf.mxu0
      %v1758 = vpop.f32.mrf.mxu0
      %v1759 = vadd.f32 0.0, %v1758
      %v1760 = vpop.f32.mrf.mxu0
      %1761 = vmatprep.mubr.bf16.mxu0 0
      %1762 = vmatmul.mubr.bf16.gmra.mxu0 %v1630
      %v1763 = vpop.f32.mrf.mxu0
      %v1764 = vadd.f32 0.0, %v1763
      %v1765 = vpop.f32.mrf.mxu0
      %v1766 = vpop.f32.mrf.mxu0
      %v1767 = vadd.f32 0.0, %v1766
      %v1768 = vpop.f32.mrf.mxu0
      %1769 = vmatprep.mubr.bf16.mxu0 0
      %1770 = vmatmul.mubr.bf16.gmra.mxu0 %v1633
      %v1771 = vpop.f32.mrf.mxu0
      %v1772 = vadd.f32 0.0, %v1771
      %v1773 = vpop.f32.mrf.mxu0
      %v1774 = vpop.f32.mrf.mxu0
      %v1775 = vadd.f32 0.0, %v1774
      %v1776 = vpop.f32.mrf.mxu0
      %1777 = vmatprep.mubr.bf16.mxu0 0
      %1778 = vmatmul.mubr.bf16.gmra.mxu0 %v1636
      %v1779 = vpop.f32.mrf.mxu0
      %v1780 = vadd.f32 0.0, %v1779
      %v1781 = vpop.f32.mrf.mxu0
      %v1782 = vpop.f32.mrf.mxu0
      %v1783 = vadd.f32 0.0, %v1782
      %v1784 = vpop.f32.mrf.mxu0
      %1785 = vdwg.mxu0
      %v1786 = vadd.f32 %v1468, %v1676
      %v1787 = vadd.f32 %v1469, %v1679
      %v1788 = vadd.f32 %v1470, %v1684
      %v1789 = vadd.f32 %v1471, %v1687
      %v1790 = vadd.f32 %v1472, %v1692
      %v1791 = vadd.f32 %v1473, %v1695
      %v1792 = vadd.f32 %v1474, %v1700
      %v1793 = vadd.f32 %v1475, %v1703
      %v1794 = vadd.f32 %v1476, %v1708
      %v1795 = vadd.f32 %v1477, %v1711
      %v1796 = vadd.f32 %v1478, %v1716
      %v1797 = vadd.f32 %v1479, %v1719
      %v1798 = vadd.f32 %v1480, %v1724
      %v1799 = vadd.f32 %v1481, %v1727
      %v1800 = vadd.f32 %v1482, %v1732
      %v1801 = vadd.f32 %v1483, %v1735
      %v1802 = vadd.f32 %v1484, %v1740
      %v1803 = vadd.f32 %v1485, %v1743
      %v1804 = vadd.f32 %v1486, %v1748
      %v1805 = vadd.f32 %v1487, %v1751
      %v1806 = vadd.f32 %v1488, %v1756
      %v1807 = vadd.f32 %v1489, %v1759
      %v1808 = vadd.f32 %v1490, %v1764
      %v1809 = vadd.f32 %v1491, %v1767
      %v1810 = vadd.f32 %v1492, %v1772
      %v1811 = vadd.f32 %v1493, %v1775
      %v1812 = vadd.f32 %v1494, %v1780
      %v1813 = vadd.f32 %v1495, %v1783
      %v1814 = vld [vmem:[#allocation2 + $0x8] sm:$0xf]
      %v1815 = vld [vmem:[#allocation2 + $0xc] sm:$0xf]
      %v1816 = vld [vmem:[#allocation2 + $0x10] sm:$0xf]
      %v1817 = vld [vmem:[#allocation2 + $0x14] sm:$0xf]
      %v1818 = vld [vmem:[#allocation2 + $0x18] sm:$0xf]
      %v1819 = vld [vmem:[#allocation2 + $0x1c] sm:$0xf]
      %v1820 = vld [vmem:[#allocation2 + $0x20] sm:$0xf]
      %v1821 = vld [vmem:[#allocation2 + $0x24] sm:$0xf]
      %v1822 = vld [vmem:[#allocation2 + $0x28] sm:$0xf]
      %v1823 = vld [vmem:[#allocation2 + $0x2c] sm:$0xf]
      %v1824 = vld [vmem:[#allocation2 + $0x30] sm:$0xf]
      %v1825 = vld [vmem:[#allocation2 + $0x34] sm:$0xf]
      %v1826 = vld [vmem:[#allocation2 + $0x38] sm:$0xf]
      %v1827 = vld [vmem:[#allocation2 + $0x3c] sm:$0xf]
      %v1828 = vld [vmem:[#allocation2 + $0x40] sm:$0xf]
      %v1829 = vld [vmem:[#allocation2 + $0x44] sm:$0xf]
      %v1830 = vld [vmem:[#allocation2 + $0x48] sm:$0xf]
      %v1831 = vld [vmem:[#allocation2 + $0x4c] sm:$0xf]
      %v1832 = vld [vmem:[#allocation2 + $0x50] sm:$0xf]
      %v1833 = vld [vmem:[#allocation2 + $0x54] sm:$0xf]
      %v1834 = vld [vmem:[#allocation2 + $0x58] sm:$0xf]
      %v1835 = vld [vmem:[#allocation2 + $0x5c] sm:$0xf]
      %v1836 = vld [vmem:[#allocation2 + $0x60] sm:$0xf]
      %v1837 = vld [vmem:[#allocation2 + $0x64] sm:$0xf]
      %v1838 = vld [vmem:[#allocation2 + $0x68] sm:$0xf]
      %v1839 = vld [vmem:[#allocation2 + $0x6c] sm:$0xf]
      %v1840 = vld [vmem:[#allocation2 + $0x70] sm:$0xf]
      %v1841 = vld [vmem:[#allocation2 + $0x74] sm:$0xf]
      %v1842 = vld [vmem:[#allocation2 + $0x78] sm:$0x1]
      %s1843 = scalar_lea.vmem %s3, 8
      %v1844 = vld [vmem:[%s1843] sm:$0x3]
      %v1874 = vunpack.c.l.b16 %v1814
      %v1875 = vunpack.c.l.b16 %v1815
      %v1876 = vunpack.c.l.b16 %v1816
      %v1877 = vunpack.c.l.b16 %v1817
      %v1878 = vunpack.c.l.b16 %v1818
      %v1879 = vunpack.c.l.b16 %v1819
      %v1880 = vunpack.c.l.b16 %v1820
      %v1881 = vunpack.c.l.b16 %v1821
      %v1882 = vunpack.c.l.b16 %v1822
      %v1883 = vunpack.c.l.b16 %v1823
      %v1884 = vunpack.c.l.b16 %v1824
      %v1885 = vunpack.c.l.b16 %v1825
      %v1886 = vunpack.c.l.b16 %v1826
      %v1887 = vunpack.c.l.b16 %v1827
      %v1888 = vunpack.c.l.b16 %v1828
      %v1889 = vunpack.c.l.b16 %v1829
      %v1890 = vunpack.c.l.b16 %v1830
      %v1891 = vunpack.c.l.b16 %v1831
      %v1892 = vunpack.c.l.b16 %v1832
      %v1893 = vunpack.c.l.b16 %v1833
      %v1894 = vunpack.c.l.b16 %v1834
      %v1895 = vunpack.c.l.b16 %v1835
      %v1896 = vunpack.c.l.b16 %v1836
      %v1897 = vunpack.c.l.b16 %v1837
      %v1898 = vunpack.c.l.b16 %v1838
      %v1899 = vunpack.c.l.b16 %v1839
      %v1900 = vunpack.c.l.b16 %v1840
      %v1901 = vunpack.c.l.b16 %v1841
      %v1902 = vunpack.c.l.b16 %v1842
      %v1903 = vpack.c.b16 %v1875, %v1874
      %v1904 = vpack.c.b16 %v1877, %v1876
      %v1905 = vpack.c.b16 %v1879, %v1878
      %v1906 = vpack.c.b16 %v1881, %v1880
      %v1907 = vpack.c.b16 %v1883, %v1882
      %v1908 = vpack.c.b16 %v1885, %v1884
      %v1909 = vpack.c.b16 %v1887, %v1886
      %v1910 = vpack.c.b16 %v1889, %v1888
      %v1911 = vpack.c.b16 %v1891, %v1890
      %v1912 = vpack.c.b16 %v1893, %v1892
      %v1913 = vpack.c.b16 %v1895, %v1894
      %v1914 = vpack.c.b16 %v1897, %v1896
      %v1915 = vpack.c.b16 %v1899, %v1898
      %v1916 = vpack.c.b16 %v1901, %v1900
      %v1917 = vpack.c.b16 %v1902, %v1902
      %v1919 = vshrl.u32 %v1903, 16
      %v1921 = vshll.u32 %v1903, 16
      %v1923 = vrot.slane %v1921, 1
      %v1924 = vor.u32 %v1919, %v1923
      %v1926 = vshll.u32 %v1904, 16
      %v1928 = vrot.slane %v1926, 1
      %v1929 = vsel %vm757, %v1924, %v1928
      %v1930 = vshrl.u32 %v1904, 16
      %v1932 = vor.u32 %v1930, %v1928
      %v1934 = vshll.u32 %v1905, 16
      %v1936 = vrot.slane %v1934, 1
      %v1937 = vsel %vm757, %v1932, %v1936
      %v1938 = vshrl.u32 %v1905, 16
      %v1940 = vor.u32 %v1938, %v1936
      %v1942 = vshll.u32 %v1906, 16
      %v1944 = vrot.slane %v1942, 1
      %v1945 = vsel %vm757, %v1940, %v1944
      %v1946 = vshrl.u32 %v1906, 16
      %v1948 = vor.u32 %v1946, %v1944
      %v1950 = vshll.u32 %v1907, 16
      %v1952 = vrot.slane %v1950, 1
      %v1953 = vsel %vm757, %v1948, %v1952
      %v1954 = vshrl.u32 %v1907, 16
      %v1956 = vor.u32 %v1954, %v1952
      %v1958 = vshll.u32 %v1908, 16
      %v1960 = vrot.slane %v1958, 1
      %v1961 = vsel %vm757, %v1956, %v1960
      %v1962 = vshrl.u32 %v1908, 16
      %v1964 = vor.u32 %v1962, %v1960
      %v1966 = vshll.u32 %v1909, 16
      %v1968 = vrot.slane %v1966, 1
      %v1969 = vsel %vm757, %v1964, %v1968
      %v1970 = vshrl.u32 %v1909, 16
      %v1972 = vor.u32 %v1970, %v1968
      %v1974 = vshll.u32 %v1910, 16
      %v1976 = vrot.slane %v1974, 1
      %v1977 = vsel %vm757, %v1972, %v1976
      %v1978 = vshrl.u32 %v1910, 16
      %v1980 = vor.u32 %v1978, %v1976
      %v1982 = vshll.u32 %v1911, 16
      %v1984 = vrot.slane %v1982, 1
      %v1985 = vsel %vm757, %v1980, %v1984
      %v1986 = vshrl.u32 %v1911, 16
      %v1988 = vor.u32 %v1986, %v1984
      %v1990 = vshll.u32 %v1912, 16
      %v1992 = vrot.slane %v1990, 1
      %v1993 = vsel %vm757, %v1988, %v1992
      %v1994 = vshrl.u32 %v1912, 16
      %v1996 = vor.u32 %v1994, %v1992
      %v1998 = vshll.u32 %v1913, 16
      %v2000 = vrot.slane %v1998, 1
      %v2001 = vsel %vm757, %v1996, %v2000
      %v2002 = vshrl.u32 %v1913, 16
      %v2004 = vor.u32 %v2002, %v2000
      %v2006 = vshll.u32 %v1914, 16
      %v2008 = vrot.slane %v2006, 1
      %v2009 = vsel %vm757, %v2004, %v2008
      %v2010 = vshrl.u32 %v1914, 16
      %v2012 = vor.u32 %v2010, %v2008
      %v2014 = vshll.u32 %v1915, 16
      %v2016 = vrot.slane %v2014, 1
      %v2017 = vsel %vm757, %v2012, %v2016
      %v2018 = vshrl.u32 %v1915, 16
      %v2020 = vor.u32 %v2018, %v2016
      %v2022 = vshll.u32 %v1916, 16
      %v2024 = vrot.slane %v2022, 1
      %v2025 = vsel %vm757, %v2020, %v2024
      %v2026 = vshrl.u32 %v1916, 16
      %v2028 = vor.u32 %v2026, %v2024
      %v2030 = vshll.u32 %v1917, 16
      %v2032 = vrot.slane %v2030, 1
      %v2033 = vsel %vm757, %v2028, %v2032
      %v2035 = vsel %vm874, %v1929, 0
      %v2038 = vsel %vm874, %v1937, 0
      %v2041 = vsel %vm874, %v1945, 0
      %v2044 = vsel %vm874, %v1953, 0
      %v2047 = vsel %vm874, %v1961, 0
      %v2050 = vsel %vm874, %v1969, 0
      %v2053 = vsel %vm874, %v1977, 0
      %v2056 = vsel %vm874, %v1985, 0
      %v2059 = vsel %vm874, %v1993, 0
      %v2062 = vsel %vm874, %v2001, 0
      %v2065 = vsel %vm874, %v2009, 0
      %v2068 = vsel %vm874, %v2017, 0
      %v2071 = vsel %vm874, %v2025, 0
      %v2074 = vsel %vm874, %v2033, 0
      %v2077 = vsel %vm917, %v1844, 0
      %2079 = vmatprep.subr.bf16.mxu0 0
      %2080 = vmatpush1.bf16.msra.mxu0 0
      %2081 = vmatprep.subr.bf16.mxu0 0
      %2082 = vmatpush1.bf16.msra.mxu0 0
      %2083 = vmatprep.subr.bf16.mxu0 0
      %2084 = vmatpush1.bf16.msra.mxu0 0
      %2085 = vmatprep.subr.bf16.mxu0 0
      %2086 = vmatpush1.bf16.msra.mxu0 0
      %2087 = vmatprep.subr.bf16.mxu0 0
      %2088 = vmatpush1.bf16.msra.mxu0 0
      %2089 = vmatprep.subr.bf16.mxu0 0
      %2090 = vmatpush1.bf16.msra.mxu0 0
      %2091 = vmatprep.subr.bf16.mxu0 0
      %2092 = vmatpush1.bf16.msra.mxu0 0
      %2093 = vmatprep.subr.bf16.mxu0 0
      %2094 = vmatpush1.bf16.msra.mxu0 %v2077
      %2095 = vmatprep.subr.bf16.mxu0 0
      %2096 = vmatpush2.bf16.msra.mxu0 0
      %2097 = vmatprep.subr.bf16.mxu0 0
      %2098 = vmatpush2.bf16.msra.mxu0 0
      %2099 = vmatprep.subr.bf16.mxu0 0
      %2100 = vmatpush2.bf16.msra.mxu0 0
      %2101 = vmatprep.subr.bf16.mxu0 0
      %2102 = vmatpush2.bf16.msra.mxu0 0
      %2103 = vmatprep.subr.bf16.mxu0 0
      %2104 = vmatpush2.bf16.msra.mxu0 0
      %2105 = vmatprep.subr.bf16.mxu0 0
      %2106 = vmatpush2.bf16.msra.mxu0 0
      %2107 = vmatprep.subr.bf16.mxu0 0
      %2108 = vmatpush2.bf16.msra.mxu0 0
      %2109 = vmatprep.subr.bf16.mxu0 0
      %2110 = vmatpush2.bf16.msra.mxu0 0
      %2111 = vmatprep.mubr.bf16.mxu0 0
      %2112 = vmatmul.mubr.bf16.gmra.mxu0 %v2035
      %v2113 = vpop.f32.mrf.mxu0
      %v2114 = vadd.f32 0.0, %v2113
      %v2115 = vpop.f32.mrf.mxu0
      %v2116 = vpop.f32.mrf.mxu0
      %v2117 = vadd.f32 0.0, %v2116
      %v2118 = vpop.f32.mrf.mxu0
      %2119 = vmatprep.mubr.bf16.mxu0 0
      %2120 = vmatmul.mubr.bf16.gmra.mxu0 %v2038
      %v2121 = vpop.f32.mrf.mxu0
      %v2122 = vadd.f32 0.0, %v2121
      %v2123 = vpop.f32.mrf.mxu0
      %v2124 = vpop.f32.mrf.mxu0
      %v2125 = vadd.f32 0.0, %v2124
      %v2126 = vpop.f32.mrf.mxu0
      %2127 = vmatprep.mubr.bf16.mxu0 0
      %2128 = vmatmul.mubr.bf16.gmra.mxu0 %v2041
      %v2129 = vpop.f32.mrf.mxu0
      %v2130 = vadd.f32 0.0, %v2129
      %v2131 = vpop.f32.mrf.mxu0
      %v2132 = vpop.f32.mrf.mxu0
      %v2133 = vadd.f32 0.0, %v2132
      %v2134 = vpop.f32.mrf.mxu0
      %2135 = vmatprep.mubr.bf16.mxu0 0
      %2136 = vmatmul.mubr.bf16.gmra.mxu0 %v2044
      %v2137 = vpop.f32.mrf.mxu0
      %v2138 = vadd.f32 0.0, %v2137
      %v2139 = vpop.f32.mrf.mxu0
      %v2140 = vpop.f32.mrf.mxu0
      %v2141 = vadd.f32 0.0, %v2140
      %v2142 = vpop.f32.mrf.mxu0
      %2143 = vmatprep.mubr.bf16.mxu0 0
      %2144 = vmatmul.mubr.bf16.gmra.mxu0 %v2047
      %v2145 = vpop.f32.mrf.mxu0
      %v2146 = vadd.f32 0.0, %v2145
      %v2147 = vpop.f32.mrf.mxu0
      %v2148 = vpop.f32.mrf.mxu0
      %v2149 = vadd.f32 0.0, %v2148
      %v2150 = vpop.f32.mrf.mxu0
      %2151 = vmatprep.mubr.bf16.mxu0 0
      %2152 = vmatmul.mubr.bf16.gmra.mxu0 %v2050
      %v2153 = vpop.f32.mrf.mxu0
      %v2154 = vadd.f32 0.0, %v2153
      %v2155 = vpop.f32.mrf.mxu0
      %v2156 = vpop.f32.mrf.mxu0
      %v2157 = vadd.f32 0.0, %v2156
      %v2158 = vpop.f32.mrf.mxu0
      %2159 = vmatprep.mubr.bf16.mxu0 0
      %2160 = vmatmul.mubr.bf16.gmra.mxu0 %v2053
      %v2161 = vpop.f32.mrf.mxu0
      %v2162 = vadd.f32 0.0, %v2161
      %v2163 = vpop.f32.mrf.mxu0
      %v2164 = vpop.f32.mrf.mxu0
      %v2165 = vadd.f32 0.0, %v2164
      %v2166 = vpop.f32.mrf.mxu0
      %2167 = vmatprep.mubr.bf16.mxu0 0
      %2168 = vmatmul.mubr.bf16.gmra.mxu0 %v2056
      %v2169 = vpop.f32.mrf.mxu0
      %v2170 = vadd.f32 0.0, %v2169
      %v2171 = vpop.f32.mrf.mxu0
      %v2172 = vpop.f32.mrf.mxu0
      %v2173 = vadd.f32 0.0, %v2172
      %v2174 = vpop.f32.mrf.mxu0
      %2175 = vmatprep.mubr.bf16.mxu0 0
      %2176 = vmatmul.mubr.bf16.gmra.mxu0 %v2059
      %v2177 = vpop.f32.mrf.mxu0
      %v2178 = vadd.f32 0.0, %v2177
      %v2179 = vpop.f32.mrf.mxu0
      %v2180 = vpop.f32.mrf.mxu0
      %v2181 = vadd.f32 0.0, %v2180
      %v2182 = vpop.f32.mrf.mxu0
      %2183 = vmatprep.mubr.bf16.mxu0 0
      %2184 = vmatmul.mubr.bf16.gmra.mxu0 %v2062
      %v2185 = vpop.f32.mrf.mxu0
      %v2186 = vadd.f32 0.0, %v2185
      %v2187 = vpop.f32.mrf.mxu0
      %v2188 = vpop.f32.mrf.mxu0
      %v2189 = vadd.f32 0.0, %v2188
      %v2190 = vpop.f32.mrf.mxu0
      %2191 = vmatprep.mubr.bf16.mxu0 0
      %2192 = vmatmul.mubr.bf16.gmra.mxu0 %v2065
      %v2193 = vpop.f32.mrf.mxu0
      %v2194 = vadd.f32 0.0, %v2193
      %v2195 = vpop.f32.mrf.mxu0
      %v2196 = vpop.f32.mrf.mxu0
      %v2197 = vadd.f32 0.0, %v2196
      %v2198 = vpop.f32.mrf.mxu0
      %2199 = vmatprep.mubr.bf16.mxu0 0
      %2200 = vmatmul.mubr.bf16.gmra.mxu0 %v2068
      %v2201 = vpop.f32.mrf.mxu0
      %v2202 = vadd.f32 0.0, %v2201
      %v2203 = vpop.f32.mrf.mxu0
      %v2204 = vpop.f32.mrf.mxu0
      %v2205 = vadd.f32 0.0, %v2204
      %v2206 = vpop.f32.mrf.mxu0
      %2207 = vmatprep.mubr.bf16.mxu0 0
      %2208 = vmatmul.mubr.bf16.gmra.mxu0 %v2071
      %v2209 = vpop.f32.mrf.mxu0
      %v2210 = vadd.f32 0.0, %v2209
      %v2211 = vpop.f32.mrf.mxu0
      %v2212 = vpop.f32.mrf.mxu0
      %v2213 = vadd.f32 0.0, %v2212
      %v2214 = vpop.f32.mrf.mxu0
      %2215 = vmatprep.mubr.bf16.mxu0 0
      %2216 = vmatmul.mubr.bf16.gmra.mxu0 %v2074
      %v2217 = vpop.f32.mrf.mxu0
      %v2218 = vadd.f32 0.0, %v2217
      %v2219 = vpop.f32.mrf.mxu0
      %v2220 = vpop.f32.mrf.mxu0
      %v2221 = vadd.f32 0.0, %v2220
      %v2222 = vpop.f32.mrf.mxu0
      %2223 = vdwg.mxu0
      %v2224 = vadd.f32 %v1786, %v2114
      %v2225 = vadd.f32 %v1787, %v2117
      %v2226 = vadd.f32 %v1788, %v2122
      %v2227 = vadd.f32 %v1789, %v2125
      %v2228 = vadd.f32 %v1790, %v2130
      %v2229 = vadd.f32 %v1791, %v2133
      %v2230 = vadd.f32 %v1792, %v2138
      %v2231 = vadd.f32 %v1793, %v2141
      %v2232 = vadd.f32 %v1794, %v2146
      %v2233 = vadd.f32 %v1795, %v2149
      %v2234 = vadd.f32 %v1796, %v2154
      %v2235 = vadd.f32 %v1797, %v2157
      %v2236 = vadd.f32 %v1798, %v2162
      %v2237 = vadd.f32 %v1799, %v2165
      %v2238 = vadd.f32 %v1800, %v2170
      %v2239 = vadd.f32 %v1801, %v2173
      %v2240 = vadd.f32 %v1802, %v2178
      %v2241 = vadd.f32 %v1803, %v2181
      %v2242 = vadd.f32 %v1804, %v2186
      %v2243 = vadd.f32 %v1805, %v2189
      %v2244 = vadd.f32 %v1806, %v2194
      %v2245 = vadd.f32 %v1807, %v2197
      %v2246 = vadd.f32 %v1808, %v2202
      %v2247 = vadd.f32 %v1809, %v2205
      %v2248 = vadd.f32 %v1810, %v2210
      %v2249 = vadd.f32 %v1811, %v2213
      %v2250 = vadd.f32 %v1812, %v2218
      %v2251 = vadd.f32 %v1813, %v2221
      %v2252 = vld [vmem:[#allocation2 + $0x8] sm:$0xe]
      %s2253 = scalar_lea.vmem %s3, 10
      %v2254 = vld [vmem:[%s2253] sm:$0x3]
      %v2256 = vunpack.c.l.b16 %v2252
      %v2257 = vpack.c.b16 %v1875, %v2256
      %v2258 = vrot.slane %v2257, 1
      %v2259 = vrot.slane %v1904, 1
      %v2260 = vsel %vm1248, %v2258, %v2259
      %v2261 = vrot.slane %v1905, 1
      %v2262 = vsel %vm1248, %v2259, %v2261
      %v2263 = vrot.slane %v1906, 1
      %v2264 = vsel %vm1248, %v2261, %v2263
      %v2265 = vrot.slane %v1907, 1
      %v2266 = vsel %vm1248, %v2263, %v2265
      %v2267 = vrot.slane %v1908, 1
      %v2268 = vsel %vm1248, %v2265, %v2267
      %v2269 = vrot.slane %v1909, 1
      %v2270 = vsel %vm1248, %v2267, %v2269
      %v2271 = vrot.slane %v1910, 1
      %v2272 = vsel %vm1248, %v2269, %v2271
      %v2273 = vrot.slane %v1911, 1
      %v2274 = vsel %vm1248, %v2271, %v2273
      %v2275 = vrot.slane %v1912, 1
      %v2276 = vsel %vm1248, %v2273, %v2275
      %v2277 = vrot.slane %v1913, 1
      %v2278 = vsel %vm1248, %v2275, %v2277
      %v2279 = vrot.slane %v1914, 1
      %v2280 = vsel %vm1248, %v2277, %v2279
      %v2281 = vrot.slane %v1915, 1
      %v2282 = vsel %vm1248, %v2279, %v2281
      %v2283 = vrot.slane %v1916, 1
      %v2284 = vsel %vm1248, %v2281, %v2283
      %v2285 = vrot.slane %v1917, 1
      %v2286 = vsel %vm1248, %v2283, %v2285
      %v2288 = vsel %vm874, %v2260, 0
      %v2291 = vsel %vm874, %v2262, 0
      %v2294 = vsel %vm874, %v2264, 0
      %v2297 = vsel %vm874, %v2266, 0
      %v2300 = vsel %vm874, %v2268, 0
      %v2303 = vsel %vm874, %v2270, 0
      %v2306 = vsel %vm874, %v2272, 0
      %v2309 = vsel %vm874, %v2274, 0
      %v2312 = vsel %vm874, %v2276, 0
      %v2315 = vsel %vm874, %v2278, 0
      %v2318 = vsel %vm874, %v2280, 0
      %v2321 = vsel %vm874, %v2282, 0
      %v2324 = vsel %vm874, %v2284, 0
      %v2327 = vsel %vm874, %v2286, 0
      %v2330 = vsel %vm917, %v2254, 0
      %2332 = vmatprep.subr.bf16.mxu0 0
      %2333 = vmatpush1.bf16.msra.mxu0 0
      %2334 = vmatprep.subr.bf16.mxu0 0
      %2335 = vmatpush1.bf16.msra.mxu0 0
      %2336 = vmatprep.subr.bf16.mxu0 0
      %2337 = vmatpush1.bf16.msra.mxu0 0
      %2338 = vmatprep.subr.bf16.mxu0 0
      %2339 = vmatpush1.bf16.msra.mxu0 0
      %2340 = vmatprep.subr.bf16.mxu0 0
      %2341 = vmatpush1.bf16.msra.mxu0 0
      %2342 = vmatprep.subr.bf16.mxu0 0
      %2343 = vmatpush1.bf16.msra.mxu0 0
      %2344 = vmatprep.subr.bf16.mxu0 0
      %2345 = vmatpush1.bf16.msra.mxu0 0
      %2346 = vmatprep.subr.bf16.mxu0 0
      %2347 = vmatpush1.bf16.msra.mxu0 %v2330
      %2348 = vmatprep.subr.bf16.mxu0 0
      %2349 = vmatpush2.bf16.msra.mxu0 0
      %2350 = vmatprep.subr.bf16.mxu0 0
      %2351 = vmatpush2.bf16.msra.mxu0 0
      %2352 = vmatprep.subr.bf16.mxu0 0
      %2353 = vmatpush2.bf16.msra.mxu0 0
      %2354 = vmatprep.subr.bf16.mxu0 0
      %2355 = vmatpush2.bf16.msra.mxu0 0
      %2356 = vmatprep.subr.bf16.mxu0 0
      %2357 = vmatpush2.bf16.msra.mxu0 0
      %2358 = vmatprep.subr.bf16.mxu0 0
      %2359 = vmatpush2.bf16.msra.mxu0 0
      %2360 = vmatprep.subr.bf16.mxu0 0
      %2361 = vmatpush2.bf16.msra.mxu0 0
      %2362 = vmatprep.subr.bf16.mxu0 0
      %2363 = vmatpush2.bf16.msra.mxu0 0
      %2364 = vmatprep.mubr.bf16.mxu0 0
      %2365 = vmatmul.mubr.bf16.gmra.mxu0 %v2288
      %v2366 = vpop.f32.mrf.mxu0
      %v2367 = vadd.f32 0.0, %v2366
      %v2368 = vpop.f32.mrf.mxu0
      %v2369 = vpop.f32.mrf.mxu0
      %v2370 = vadd.f32 0.0, %v2369
      %v2371 = vpop.f32.mrf.mxu0
      %2372 = vmatprep.mubr.bf16.mxu0 0
      %2373 = vmatmul.mubr.bf16.gmra.mxu0 %v2291
      %v2374 = vpop.f32.mrf.mxu0
      %v2375 = vadd.f32 0.0, %v2374
      %v2376 = vpop.f32.mrf.mxu0
      %v2377 = vpop.f32.mrf.mxu0
      %v2378 = vadd.f32 0.0, %v2377
      %v2379 = vpop.f32.mrf.mxu0
      %2380 = vmatprep.mubr.bf16.mxu0 0
      %2381 = vmatmul.mubr.bf16.gmra.mxu0 %v2294
      %v2382 = vpop.f32.mrf.mxu0
      %v2383 = vadd.f32 0.0, %v2382
      %v2384 = vpop.f32.mrf.mxu0
      %v2385 = vpop.f32.mrf.mxu0
      %v2386 = vadd.f32 0.0, %v2385
      %v2387 = vpop.f32.mrf.mxu0
      %2388 = vmatprep.mubr.bf16.mxu0 0
      %2389 = vmatmul.mubr.bf16.gmra.mxu0 %v2297
      %v2390 = vpop.f32.mrf.mxu0
      %v2391 = vadd.f32 0.0, %v2390
      %v2392 = vpop.f32.mrf.mxu0
      %v2393 = vpop.f32.mrf.mxu0
      %v2394 = vadd.f32 0.0, %v2393
      %v2395 = vpop.f32.mrf.mxu0
      %2396 = vmatprep.mubr.bf16.mxu0 0
      %2397 = vmatmul.mubr.bf16.gmra.mxu0 %v2300
      %v2398 = vpop.f32.mrf.mxu0
      %v2399 = vadd.f32 0.0, %v2398
      %v2400 = vpop.f32.mrf.mxu0
      %v2401 = vpop.f32.mrf.mxu0
      %v2402 = vadd.f32 0.0, %v2401
      %v2403 = vpop.f32.mrf.mxu0
      %2404 = vmatprep.mubr.bf16.mxu0 0
      %2405 = vmatmul.mubr.bf16.gmra.mxu0 %v2303
      %v2406 = vpop.f32.mrf.mxu0
      %v2407 = vadd.f32 0.0, %v2406
      %v2408 = vpop.f32.mrf.mxu0
      %v2409 = vpop.f32.mrf.mxu0
      %v2410 = vadd.f32 0.0, %v2409
      %v2411 = vpop.f32.mrf.mxu0
      %2412 = vmatprep.mubr.bf16.mxu0 0
      %2413 = vmatmul.mubr.bf16.gmra.mxu0 %v2306
      %v2414 = vpop.f32.mrf.mxu0
      %v2415 = vadd.f32 0.0, %v2414
      %v2416 = vpop.f32.mrf.mxu0
      %v2417 = vpop.f32.mrf.mxu0
      %v2418 = vadd.f32 0.0, %v2417
      %v2419 = vpop.f32.mrf.mxu0
      %2420 = vmatprep.mubr.bf16.mxu0 0
      %2421 = vmatmul.mubr.bf16.gmra.mxu0 %v2309
      %v2422 = vpop.f32.mrf.mxu0
      %v2423 = vadd.f32 0.0, %v2422
      %v2424 = vpop.f32.mrf.mxu0
      %v2425 = vpop.f32.mrf.mxu0
      %v2426 = vadd.f32 0.0, %v2425
      %v2427 = vpop.f32.mrf.mxu0
      %2428 = vmatprep.mubr.bf16.mxu0 0
      %2429 = vmatmul.mubr.bf16.gmra.mxu0 %v2312
      %v2430 = vpop.f32.mrf.mxu0
      %v2431 = vadd.f32 0.0, %v2430
      %v2432 = vpop.f32.mrf.mxu0
      %v2433 = vpop.f32.mrf.mxu0
      %v2434 = vadd.f32 0.0, %v2433
      %v2435 = vpop.f32.mrf.mxu0
      %2436 = vmatprep.mubr.bf16.mxu0 0
      %2437 = vmatmul.mubr.bf16.gmra.mxu0 %v2315
      %v2438 = vpop.f32.mrf.mxu0
      %v2439 = vadd.f32 0.0, %v2438
      %v2440 = vpop.f32.mrf.mxu0
      %v2441 = vpop.f32.mrf.mxu0
      %v2442 = vadd.f32 0.0, %v2441
      %v2443 = vpop.f32.mrf.mxu0
      %2444 = vmatprep.mubr.bf16.mxu0 0
      %2445 = vmatmul.mubr.bf16.gmra.mxu0 %v2318
      %v2446 = vpop.f32.mrf.mxu0
      %v2447 = vadd.f32 0.0, %v2446
      %v2448 = vpop.f32.mrf.mxu0
      %v2449 = vpop.f32.mrf.mxu0
      %v2450 = vadd.f32 0.0, %v2449
      %v2451 = vpop.f32.mrf.mxu0
      %2452 = vmatprep.mubr.bf16.mxu0 0
      %2453 = vmatmul.mubr.bf16.gmra.mxu0 %v2321
      %v2454 = vpop.f32.mrf.mxu0
      %v2455 = vadd.f32 0.0, %v2454
      %v2456 = vpop.f32.mrf.mxu0
      %v2457 = vpop.f32.mrf.mxu0
      %v2458 = vadd.f32 0.0, %v2457
      %v2459 = vpop.f32.mrf.mxu0
      %2460 = vmatprep.mubr.bf16.mxu0 0
      %2461 = vmatmul.mubr.bf16.gmra.mxu0 %v2324
      %v2462 = vpop.f32.mrf.mxu0
      %v2463 = vadd.f32 0.0, %v2462
      %v2464 = vpop.f32.mrf.mxu0
      %v2465 = vpop.f32.mrf.mxu0
      %v2466 = vadd.f32 0.0, %v2465
      %v2467 = vpop.f32.mrf.mxu0
      %2468 = vmatprep.mubr.bf16.mxu0 0
      %2469 = vmatmul.mubr.bf16.gmra.mxu0 %v2327
      %v2470 = vpop.f32.mrf.mxu0
      %v2471 = vadd.f32 0.0, %v2470
      %v2472 = vpop.f32.mrf.mxu0
      %v2473 = vpop.f32.mrf.mxu0
      %v2474 = vadd.f32 0.0, %v2473
      %v2475 = vpop.f32.mrf.mxu0
      %2476 = vdwg.mxu0
      %v2477 = vadd.f32 %v2224, %v2367
      %v2478 = vadd.f32 %v2225, %v2370
      %v2479 = vadd.f32 %v2226, %v2375
      %v2480 = vadd.f32 %v2227, %v2378
      %v2481 = vadd.f32 %v2228, %v2383
      %v2482 = vadd.f32 %v2229, %v2386
      %v2483 = vadd.f32 %v2230, %v2391
      %v2484 = vadd.f32 %v2231, %v2394
      %v2485 = vadd.f32 %v2232, %v2399
      %v2486 = vadd.f32 %v2233, %v2402
      %v2487 = vadd.f32 %v2234, %v2407
      %v2488 = vadd.f32 %v2235, %v2410
      %v2489 = vadd.f32 %v2236, %v2415
      %v2490 = vadd.f32 %v2237, %v2418
      %v2491 = vadd.f32 %v2238, %v2423
      %v2492 = vadd.f32 %v2239, %v2426
      %v2493 = vadd.f32 %v2240, %v2431
      %v2494 = vadd.f32 %v2241, %v2434
      %v2495 = vadd.f32 %v2242, %v2439
      %v2496 = vadd.f32 %v2243, %v2442
      %v2497 = vadd.f32 %v2244, %v2447
      %v2498 = vadd.f32 %v2245, %v2450
      %v2499 = vadd.f32 %v2246, %v2455
      %v2500 = vadd.f32 %v2247, %v2458
      %v2501 = vadd.f32 %v2248, %v2463
      %v2502 = vadd.f32 %v2249, %v2466
      %v2503 = vadd.f32 %v2250, %v2471
      %v2504 = vadd.f32 %v2251, %v2474
      %v2505 = vld [vmem:[#allocation2 + $0x10] sm:$0xf]
      %v2506 = vld [vmem:[#allocation2 + $0x14] sm:$0xf]
      %v2507 = vld [vmem:[#allocation2 + $0x18] sm:$0xf]
      %v2508 = vld [vmem:[#allocation2 + $0x1c] sm:$0xf]
      %v2509 = vld [vmem:[#allocation2 + $0x20] sm:$0xf]
      %v2510 = vld [vmem:[#allocation2 + $0x24] sm:$0xf]
      %v2511 = vld [vmem:[#allocation2 + $0x28] sm:$0xf]
      %v2512 = vld [vmem:[#allocation2 + $0x2c] sm:$0xf]
      %v2513 = vld [vmem:[#allocation2 + $0x30] sm:$0xf]
      %v2514 = vld [vmem:[#allocation2 + $0x34] sm:$0xf]
      %v2515 = vld [vmem:[#allocation2 + $0x38] sm:$0xf]
      %v2516 = vld [vmem:[#allocation2 + $0x3c] sm:$0xf]
      %v2517 = vld [vmem:[#allocation2 + $0x40] sm:$0xf]
      %v2518 = vld [vmem:[#allocation2 + $0x44] sm:$0xf]
      %v2519 = vld [vmem:[#allocation2 + $0x48] sm:$0xf]
      %v2520 = vld [vmem:[#allocation2 + $0x4c] sm:$0xf]
      %v2521 = vld [vmem:[#allocation2 + $0x50] sm:$0xf]
      %v2522 = vld [vmem:[#allocation2 + $0x54] sm:$0xf]
      %v2523 = vld [vmem:[#allocation2 + $0x58] sm:$0xf]
      %v2524 = vld [vmem:[#allocation2 + $0x5c] sm:$0xf]
      %v2525 = vld [vmem:[#allocation2 + $0x60] sm:$0xf]
      %v2526 = vld [vmem:[#allocation2 + $0x64] sm:$0xf]
      %v2527 = vld [vmem:[#allocation2 + $0x68] sm:$0xf]
      %v2528 = vld [vmem:[#allocation2 + $0x6c] sm:$0xf]
      %v2529 = vld [vmem:[#allocation2 + $0x70] sm:$0xf]
      %v2530 = vld [vmem:[#allocation2 + $0x74] sm:$0xf]
      %v2531 = vld [vmem:[#allocation2 + $0x78] sm:$0xf]
      %v2532 = vld [vmem:[#allocation2 + $0x7c] sm:$0xf]
      %s2533 = scalar_lea.vmem %s3, 12
      %v2534 = vld [vmem:[%s2533] sm:$0x3]
      %v2563 = vunpack.c.l.b16 %v2505
      %v2564 = vunpack.c.l.b16 %v2506
      %v2565 = vunpack.c.l.b16 %v2507
      %v2566 = vunpack.c.l.b16 %v2508
      %v2567 = vunpack.c.l.b16 %v2509
      %v2568 = vunpack.c.l.b16 %v2510
      %v2569 = vunpack.c.l.b16 %v2511
      %v2570 = vunpack.c.l.b16 %v2512
      %v2571 = vunpack.c.l.b16 %v2513
      %v2572 = vunpack.c.l.b16 %v2514
      %v2573 = vunpack.c.l.b16 %v2515
      %v2574 = vunpack.c.l.b16 %v2516
      %v2575 = vunpack.c.l.b16 %v2517
      %v2576 = vunpack.c.l.b16 %v2518
      %v2577 = vunpack.c.l.b16 %v2519
      %v2578 = vunpack.c.l.b16 %v2520
      %v2579 = vunpack.c.l.b16 %v2521
      %v2580 = vunpack.c.l.b16 %v2522
      %v2581 = vunpack.c.l.b16 %v2523
      %v2582 = vunpack.c.l.b16 %v2524
      %v2583 = vunpack.c.l.b16 %v2525
      %v2584 = vunpack.c.l.b16 %v2526
      %v2585 = vunpack.c.l.b16 %v2527
      %v2586 = vunpack.c.l.b16 %v2528
      %v2587 = vunpack.c.l.b16 %v2529
      %v2588 = vunpack.c.l.b16 %v2530
      %v2589 = vunpack.c.l.b16 %v2531
      %v2590 = vunpack.c.l.b16 %v2532
      %v2591 = vpack.c.b16 %v2564, %v2563
      %v2592 = vpack.c.b16 %v2566, %v2565
      %v2593 = vpack.c.b16 %v2568, %v2567
      %v2594 = vpack.c.b16 %v2570, %v2569
      %v2595 = vpack.c.b16 %v2572, %v2571
      %v2596 = vpack.c.b16 %v2574, %v2573
      %v2597 = vpack.c.b16 %v2576, %v2575
      %v2598 = vpack.c.b16 %v2578, %v2577
      %v2599 = vpack.c.b16 %v2580, %v2579
      %v2600 = vpack.c.b16 %v2582, %v2581
      %v2601 = vpack.c.b16 %v2584, %v2583
      %v2602 = vpack.c.b16 %v2586, %v2585
      %v2603 = vpack.c.b16 %v2588, %v2587
      %v2604 = vpack.c.b16 %v2590, %v2589
      %v2606 = vsel %vm874, %v2591, 0
      %v2609 = vsel %vm874, %v2592, 0
      %v2612 = vsel %vm874, %v2593, 0
      %v2615 = vsel %vm874, %v2594, 0
      %v2618 = vsel %vm874, %v2595, 0
      %v2621 = vsel %vm874, %v2596, 0
      %v2624 = vsel %vm874, %v2597, 0
      %v2627 = vsel %vm874, %v2598, 0
      %v2630 = vsel %vm874, %v2599, 0
      %v2633 = vsel %vm874, %v2600, 0
      %v2636 = vsel %vm874, %v2601, 0
      %v2639 = vsel %vm874, %v2602, 0
      %v2642 = vsel %vm874, %v2603, 0
      %v2645 = vsel %vm874, %v2604, 0
      %v2648 = vsel %vm917, %v2534, 0
      %2650 = vmatprep.subr.bf16.mxu0 0
      %2651 = vmatpush1.bf16.msra.mxu0 0
      %2652 = vmatprep.subr.bf16.mxu0 0
      %2653 = vmatpush1.bf16.msra.mxu0 0
      %2654 = vmatprep.subr.bf16.mxu0 0
      %2655 = vmatpush1.bf16.msra.mxu0 0
      %2656 = vmatprep.subr.bf16.mxu0 0
      %2657 = vmatpush1.bf16.msra.mxu0 0
      %2658 = vmatprep.subr.bf16.mxu0 0
      %2659 = vmatpush1.bf16.msra.mxu0 0
      %2660 = vmatprep.subr.bf16.mxu0 0
      %2661 = vmatpush1.bf16.msra.mxu0 0
      %2662 = vmatprep.subr.bf16.mxu0 0
      %2663 = vmatpush1.bf16.msra.mxu0 0
      %2664 = vmatprep.subr.bf16.mxu0 0
      %2665 = vmatpush1.bf16.msra.mxu0 %v2648
      %2666 = vmatprep.subr.bf16.mxu0 0
      %2667 = vmatpush2.bf16.msra.mxu0 0
      %2668 = vmatprep.subr.bf16.mxu0 0
      %2669 = vmatpush2.bf16.msra.mxu0 0
      %2670 = vmatprep.subr.bf16.mxu0 0
      %2671 = vmatpush2.bf16.msra.mxu0 0
      %2672 = vmatprep.subr.bf16.mxu0 0
      %2673 = vmatpush2.bf16.msra.mxu0 0
      %2674 = vmatprep.subr.bf16.mxu0 0
      %2675 = vmatpush2.bf16.msra.mxu0 0
      %2676 = vmatprep.subr.bf16.mxu0 0
      %2677 = vmatpush2.bf16.msra.mxu0 0
      %2678 = vmatprep.subr.bf16.mxu0 0
      %2679 = vmatpush2.bf16.msra.mxu0 0
      %2680 = vmatprep.subr.bf16.mxu0 0
      %2681 = vmatpush2.bf16.msra.mxu0 0
      %2682 = vmatprep.mubr.bf16.mxu0 0
      %2683 = vmatmul.mubr.bf16.gmra.mxu0 %v2606
      %v2684 = vpop.f32.mrf.mxu0
      %v2685 = vadd.f32 0.0, %v2684
      %v2686 = vpop.f32.mrf.mxu0
      %v2687 = vpop.f32.mrf.mxu0
      %v2688 = vadd.f32 0.0, %v2687
      %v2689 = vpop.f32.mrf.mxu0
      %2690 = vmatprep.mubr.bf16.mxu0 0
      %2691 = vmatmul.mubr.bf16.gmra.mxu0 %v2609
      %v2692 = vpop.f32.mrf.mxu0
      %v2693 = vadd.f32 0.0, %v2692
      %v2694 = vpop.f32.mrf.mxu0
      %v2695 = vpop.f32.mrf.mxu0
      %v2696 = vadd.f32 0.0, %v2695
      %v2697 = vpop.f32.mrf.mxu0
      %2698 = vmatprep.mubr.bf16.mxu0 0
      %2699 = vmatmul.mubr.bf16.gmra.mxu0 %v2612
      %v2700 = vpop.f32.mrf.mxu0
      %v2701 = vadd.f32 0.0, %v2700
      %v2702 = vpop.f32.mrf.mxu0
      %v2703 = vpop.f32.mrf.mxu0
      %v2704 = vadd.f32 0.0, %v2703
      %v2705 = vpop.f32.mrf.mxu0
      %2706 = vmatprep.mubr.bf16.mxu0 0
      %2707 = vmatmul.mubr.bf16.gmra.mxu0 %v2615
      %v2708 = vpop.f32.mrf.mxu0
      %v2709 = vadd.f32 0.0, %v2708
      %v2710 = vpop.f32.mrf.mxu0
      %v2711 = vpop.f32.mrf.mxu0
      %v2712 = vadd.f32 0.0, %v2711
      %v2713 = vpop.f32.mrf.mxu0
      %2714 = vmatprep.mubr.bf16.mxu0 0
      %2715 = vmatmul.mubr.bf16.gmra.mxu0 %v2618
      %v2716 = vpop.f32.mrf.mxu0
      %v2717 = vadd.f32 0.0, %v2716
      %v2718 = vpop.f32.mrf.mxu0
      %v2719 = vpop.f32.mrf.mxu0
      %v2720 = vadd.f32 0.0, %v2719
      %v2721 = vpop.f32.mrf.mxu0
      %2722 = vmatprep.mubr.bf16.mxu0 0
      %2723 = vmatmul.mubr.bf16.gmra.mxu0 %v2621
      %v2724 = vpop.f32.mrf.mxu0
      %v2725 = vadd.f32 0.0, %v2724
      %v2726 = vpop.f32.mrf.mxu0
      %v2727 = vpop.f32.mrf.mxu0
      %v2728 = vadd.f32 0.0, %v2727
      %v2729 = vpop.f32.mrf.mxu0
      %2730 = vmatprep.mubr.bf16.mxu0 0
      %2731 = vmatmul.mubr.bf16.gmra.mxu0 %v2624
      %v2732 = vpop.f32.mrf.mxu0
      %v2733 = vadd.f32 0.0, %v2732
      %v2734 = vpop.f32.mrf.mxu0
      %v2735 = vpop.f32.mrf.mxu0
      %v2736 = vadd.f32 0.0, %v2735
      %v2737 = vpop.f32.mrf.mxu0
      %2738 = vmatprep.mubr.bf16.mxu0 0
      %2739 = vmatmul.mubr.bf16.gmra.mxu0 %v2627
      %v2740 = vpop.f32.mrf.mxu0
      %v2741 = vadd.f32 0.0, %v2740
      %v2742 = vpop.f32.mrf.mxu0
      %v2743 = vpop.f32.mrf.mxu0
      %v2744 = vadd.f32 0.0, %v2743
      %v2745 = vpop.f32.mrf.mxu0
      %2746 = vmatprep.mubr.bf16.mxu0 0
      %2747 = vmatmul.mubr.bf16.gmra.mxu0 %v2630
      %v2748 = vpop.f32.mrf.mxu0
      %v2749 = vadd.f32 0.0, %v2748
      %v2750 = vpop.f32.mrf.mxu0
      %v2751 = vpop.f32.mrf.mxu0
      %v2752 = vadd.f32 0.0, %v2751
      %v2753 = vpop.f32.mrf.mxu0
      %2754 = vmatprep.mubr.bf16.mxu0 0
      %2755 = vmatmul.mubr.bf16.gmra.mxu0 %v2633
      %v2756 = vpop.f32.mrf.mxu0
      %v2757 = vadd.f32 0.0, %v2756
      %v2758 = vpop.f32.mrf.mxu0
      %v2759 = vpop.f32.mrf.mxu0
      %v2760 = vadd.f32 0.0, %v2759
      %v2761 = vpop.f32.mrf.mxu0
      %2762 = vmatprep.mubr.bf16.mxu0 0
      %2763 = vmatmul.mubr.bf16.gmra.mxu0 %v2636
      %v2764 = vpop.f32.mrf.mxu0
      %v2765 = vadd.f32 0.0, %v2764
      %v2766 = vpop.f32.mrf.mxu0
      %v2767 = vpop.f32.mrf.mxu0
      %v2768 = vadd.f32 0.0, %v2767
      %v2769 = vpop.f32.mrf.mxu0
      %2770 = vmatprep.mubr.bf16.mxu0 0
      %2771 = vmatmul.mubr.bf16.gmra.mxu0 %v2639
      %v2772 = vpop.f32.mrf.mxu0
      %v2773 = vadd.f32 0.0, %v2772
      %v2774 = vpop.f32.mrf.mxu0
      %v2775 = vpop.f32.mrf.mxu0
      %v2776 = vadd.f32 0.0, %v2775
      %v2777 = vpop.f32.mrf.mxu0
      %2778 = vmatprep.mubr.bf16.mxu0 0
      %2779 = vmatmul.mubr.bf16.gmra.mxu0 %v2642
      %v2780 = vpop.f32.mrf.mxu0
      %v2781 = vadd.f32 0.0, %v2780
      %v2782 = vpop.f32.mrf.mxu0
      %v2783 = vpop.f32.mrf.mxu0
      %v2784 = vadd.f32 0.0, %v2783
      %v2785 = vpop.f32.mrf.mxu0
      %2786 = vmatprep.mubr.bf16.mxu0 0
      %2787 = vmatmul.mubr.bf16.gmra.mxu0 %v2645
      %v2788 = vpop.f32.mrf.mxu0
      %v2789 = vadd.f32 0.0, %v2788
      %v2790 = vpop.f32.mrf.mxu0
      %v2791 = vpop.f32.mrf.mxu0
      %v2792 = vadd.f32 0.0, %v2791
      %v2793 = vpop.f32.mrf.mxu0
      %2794 = vdwg.mxu0
      %v2795 = vadd.f32 %v2477, %v2685
      %v2796 = vadd.f32 %v2478, %v2688
      %v2797 = vadd.f32 %v2479, %v2693
      %v2798 = vadd.f32 %v2480, %v2696
      %v2799 = vadd.f32 %v2481, %v2701
      %v2800 = vadd.f32 %v2482, %v2704
      %v2801 = vadd.f32 %v2483, %v2709
      %v2802 = vadd.f32 %v2484, %v2712
      %v2803 = vadd.f32 %v2485, %v2717
      %v2804 = vadd.f32 %v2486, %v2720
      %v2805 = vadd.f32 %v2487, %v2725
      %v2806 = vadd.f32 %v2488, %v2728
      %v2807 = vadd.f32 %v2489, %v2733
      %v2808 = vadd.f32 %v2490, %v2736
      %v2809 = vadd.f32 %v2491, %v2741
      %v2810 = vadd.f32 %v2492, %v2744
      %v2811 = vadd.f32 %v2493, %v2749
      %v2812 = vadd.f32 %v2494, %v2752
      %v2813 = vadd.f32 %v2495, %v2757
      %v2814 = vadd.f32 %v2496, %v2760
      %v2815 = vadd.f32 %v2497, %v2765
      %v2816 = vadd.f32 %v2498, %v2768
      %v2817 = vadd.f32 %v2499, %v2773
      %v2818 = vadd.f32 %v2500, %v2776
      %v2819 = vadd.f32 %v2501, %v2781
      %v2820 = vadd.f32 %v2502, %v2784
      %v2821 = vadd.f32 %v2503, %v2789
      %v2822 = vadd.f32 %v2504, %v2792
      %v2823 = vld [vmem:[#allocation2 + $0x10] sm:$0xf]
      %v2824 = vld [vmem:[#allocation2 + $0x14] sm:$0xf]
      %v2825 = vld [vmem:[#allocation2 + $0x18] sm:$0xf]
      %v2826 = vld [vmem:[#allocation2 + $0x1c] sm:$0xf]
      %v2827 = vld [vmem:[#allocation2 + $0x20] sm:$0xf]
      %v2828 = vld [vmem:[#allocation2 + $0x24] sm:$0xf]
      %v2829 = vld [vmem:[#allocation2 + $0x28] sm:$0xf]
      %v2830 = vld [vmem:[#allocation2 + $0x2c] sm:$0xf]
      %v2831 = vld [vmem:[#allocation2 + $0x30] sm:$0xf]
      %v2832 = vld [vmem:[#allocation2 + $0x34] sm:$0xf]
      %v2833 = vld [vmem:[#allocation2 + $0x38] sm:$0xf]
      %v2834 = vld [vmem:[#allocation2 + $0x3c] sm:$0xf]
      %v2835 = vld [vmem:[#allocation2 + $0x40] sm:$0xf]
      %v2836 = vld [vmem:[#allocation2 + $0x44] sm:$0xf]
      %v2837 = vld [vmem:[#allocation2 + $0x48] sm:$0xf]
      %v2838 = vld [vmem:[#allocation2 + $0x4c] sm:$0xf]
      %v2839 = vld [vmem:[#allocation2 + $0x50] sm:$0xf]
      %v2840 = vld [vmem:[#allocation2 + $0x54] sm:$0xf]
      %v2841 = vld [vmem:[#allocation2 + $0x58] sm:$0xf]
      %v2842 = vld [vmem:[#allocation2 + $0x5c] sm:$0xf]
      %v2843 = vld [vmem:[#allocation2 + $0x60] sm:$0xf]
      %v2844 = vld [vmem:[#allocation2 + $0x64] sm:$0xf]
      %v2845 = vld [vmem:[#allocation2 + $0x68] sm:$0xf]
      %v2846 = vld [vmem:[#allocation2 + $0x6c] sm:$0xf]
      %v2847 = vld [vmem:[#allocation2 + $0x70] sm:$0xf]
      %v2848 = vld [vmem:[#allocation2 + $0x74] sm:$0xf]
      %v2849 = vld [vmem:[#allocation2 + $0x78] sm:$0xf]
      %v2850 = vld [vmem:[#allocation2 + $0x7c] sm:$0xf]
      %v2851 = vld [vmem:[#allocation2 + $0x80] sm:$0x1]
      %s2852 = scalar_lea.vmem %s3, 14
      %v2853 = vld [vmem:[%s2852] sm:$0x3]
      %v2883 = vunpack.c.l.b16 %v2823
      %v2884 = vunpack.c.l.b16 %v2824
      %v2885 = vunpack.c.l.b16 %v2825
      %v2886 = vunpack.c.l.b16 %v2826
      %v2887 = vunpack.c.l.b16 %v2827
      %v2888 = vunpack.c.l.b16 %v2828
      %v2889 = vunpack.c.l.b16 %v2829
      %v2890 = vunpack.c.l.b16 %v2830
      %v2891 = vunpack.c.l.b16 %v2831
      %v2892 = vunpack.c.l.b16 %v2832
      %v2893 = vunpack.c.l.b16 %v2833
      %v2894 = vunpack.c.l.b16 %v2834
      %v2895 = vunpack.c.l.b16 %v2835
      %v2896 = vunpack.c.l.b16 %v2836
      %v2897 = vunpack.c.l.b16 %v2837
      %v2898 = vunpack.c.l.b16 %v2838
      %v2899 = vunpack.c.l.b16 %v2839
      %v2900 = vunpack.c.l.b16 %v2840
      %v2901 = vunpack.c.l.b16 %v2841
      %v2902 = vunpack.c.l.b16 %v2842
      %v2903 = vunpack.c.l.b16 %v2843
      %v2904 = vunpack.c.l.b16 %v2844
      %v2905 = vunpack.c.l.b16 %v2845
      %v2906 = vunpack.c.l.b16 %v2846
      %v2907 = vunpack.c.l.b16 %v2847
      %v2908 = vunpack.c.l.b16 %v2848
      %v2909 = vunpack.c.l.b16 %v2849
      %v2910 = vunpack.c.l.b16 %v2850
      %v2911 = vunpack.c.l.b16 %v2851
      %v2912 = vpack.c.b16 %v2884, %v2883
      %v2913 = vpack.c.b16 %v2886, %v2885
      %v2914 = vpack.c.b16 %v2888, %v2887
      %v2915 = vpack.c.b16 %v2890, %v2889
      %v2916 = vpack.c.b16 %v2892, %v2891
      %v2917 = vpack.c.b16 %v2894, %v2893
      %v2918 = vpack.c.b16 %v2896, %v2895
      %v2919 = vpack.c.b16 %v2898, %v2897
      %v2920 = vpack.c.b16 %v2900, %v2899
      %v2921 = vpack.c.b16 %v2902, %v2901
      %v2922 = vpack.c.b16 %v2904, %v2903
      %v2923 = vpack.c.b16 %v2906, %v2905
      %v2924 = vpack.c.b16 %v2908, %v2907
      %v2925 = vpack.c.b16 %v2910, %v2909
      %v2926 = vpack.c.b16 %v2911, %v2911
      %v2928 = vshrl.u32 %v2912, 16
      %v2930 = vshll.u32 %v2912, 16
      %v2932 = vrot.slane %v2930, 1
      %v2933 = vor.u32 %v2928, %v2932
      %v2935 = vshll.u32 %v2913, 16
      %v2937 = vrot.slane %v2935, 1
      %v2938 = vsel %vm757, %v2933, %v2937
      %v2939 = vshrl.u32 %v2913, 16
      %v2941 = vor.u32 %v2939, %v2937
      %v2943 = vshll.u32 %v2914, 16
      %v2945 = vrot.slane %v2943, 1
      %v2946 = vsel %vm757, %v2941, %v2945
      %v2947 = vshrl.u32 %v2914, 16
      %v2949 = vor.u32 %v2947, %v2945
      %v2951 = vshll.u32 %v2915, 16
      %v2953 = vrot.slane %v2951, 1
      %v2954 = vsel %vm757, %v2949, %v2953
      %v2955 = vshrl.u32 %v2915, 16
      %v2957 = vor.u32 %v2955, %v2953
      %v2959 = vshll.u32 %v2916, 16
      %v2961 = vrot.slane %v2959, 1
      %v2962 = vsel %vm757, %v2957, %v2961
      %v2963 = vshrl.u32 %v2916, 16
      %v2965 = vor.u32 %v2963, %v2961
      %v2967 = vshll.u32 %v2917, 16
      %v2969 = vrot.slane %v2967, 1
      %v2970 = vsel %vm757, %v2965, %v2969
      %v2971 = vshrl.u32 %v2917, 16
      %v2973 = vor.u32 %v2971, %v2969
      %v2975 = vshll.u32 %v2918, 16
      %v2977 = vrot.slane %v2975, 1
      %v2978 = vsel %vm757, %v2973, %v2977
      %v2979 = vshrl.u32 %v2918, 16
      %v2981 = vor.u32 %v2979, %v2977
      %v2983 = vshll.u32 %v2919, 16
      %v2985 = vrot.slane %v2983, 1
      %v2986 = vsel %vm757, %v2981, %v2985
      %v2987 = vshrl.u32 %v2919, 16
      %v2989 = vor.u32 %v2987, %v2985
      %v2991 = vshll.u32 %v2920, 16
      %v2993 = vrot.slane %v2991, 1
      %v2994 = vsel %vm757, %v2989, %v2993
      %v2995 = vshrl.u32 %v2920, 16
      %v2997 = vor.u32 %v2995, %v2993
      %v2999 = vshll.u32 %v2921, 16
      %v3001 = vrot.slane %v2999, 1
      %v3002 = vsel %vm757, %v2997, %v3001
      %v3003 = vshrl.u32 %v2921, 16
      %v3005 = vor.u32 %v3003, %v3001
      %v3007 = vshll.u32 %v2922, 16
      %v3009 = vrot.slane %v3007, 1
      %v3010 = vsel %vm757, %v3005, %v3009
      %v3011 = vshrl.u32 %v2922, 16
      %v3013 = vor.u32 %v3011, %v3009
      %v3015 = vshll.u32 %v2923, 16
      %v3017 = vrot.slane %v3015, 1
      %v3018 = vsel %vm757, %v3013, %v3017
      %v3019 = vshrl.u32 %v2923, 16
      %v3021 = vor.u32 %v3019, %v3017
      %v3023 = vshll.u32 %v2924, 16
      %v3025 = vrot.slane %v3023, 1
      %v3026 = vsel %vm757, %v3021, %v3025
      %v3027 = vshrl.u32 %v2924, 16
      %v3029 = vor.u32 %v3027, %v3025
      %v3031 = vshll.u32 %v2925, 16
      %v3033 = vrot.slane %v3031, 1
      %v3034 = vsel %vm757, %v3029, %v3033
      %v3035 = vshrl.u32 %v2925, 16
      %v3037 = vor.u32 %v3035, %v3033
      %v3039 = vshll.u32 %v2926, 16
      %v3041 = vrot.slane %v3039, 1
      %v3042 = vsel %vm757, %v3037, %v3041
      %v3044 = vsel %vm874, %v2938, 0
      %v3047 = vsel %vm874, %v2946, 0
      %v3050 = vsel %vm874, %v2954, 0
      %v3053 = vsel %vm874, %v2962, 0
      %v3056 = vsel %vm874, %v2970, 0
      %v3059 = vsel %vm874, %v2978, 0
      %v3062 = vsel %vm874, %v2986, 0
      %v3065 = vsel %vm874, %v2994, 0
      %v3068 = vsel %vm874, %v3002, 0
      %v3071 = vsel %vm874, %v3010, 0
      %v3074 = vsel %vm874, %v3018, 0
      %v3077 = vsel %vm874, %v3026, 0
      %v3080 = vsel %vm874, %v3034, 0
      %v3083 = vsel %vm874, %v3042, 0
      %v3086 = vsel %vm917, %v2853, 0
      %3088 = vmatprep.subr.bf16.mxu0 0
      %3089 = vmatpush1.bf16.msra.mxu0 0
      %3090 = vmatprep.subr.bf16.mxu0 0
      %3091 = vmatpush1.bf16.msra.mxu0 0
      %3092 = vmatprep.subr.bf16.mxu0 0
      %3093 = vmatpush1.bf16.msra.mxu0 0
      %3094 = vmatprep.subr.bf16.mxu0 0
      %3095 = vmatpush1.bf16.msra.mxu0 0
      %3096 = vmatprep.subr.bf16.mxu0 0
      %3097 = vmatpush1.bf16.msra.mxu0 0
      %3098 = vmatprep.subr.bf16.mxu0 0
      %3099 = vmatpush1.bf16.msra.mxu0 0
      %3100 = vmatprep.subr.bf16.mxu0 0
      %3101 = vmatpush1.bf16.msra.mxu0 0
      %3102 = vmatprep.subr.bf16.mxu0 0
      %3103 = vmatpush1.bf16.msra.mxu0 %v3086
      %3104 = vmatprep.subr.bf16.mxu0 0
      %3105 = vmatpush2.bf16.msra.mxu0 0
      %3106 = vmatprep.subr.bf16.mxu0 0
      %3107 = vmatpush2.bf16.msra.mxu0 0
      %3108 = vmatprep.subr.bf16.mxu0 0
      %3109 = vmatpush2.bf16.msra.mxu0 0
      %3110 = vmatprep.subr.bf16.mxu0 0
      %3111 = vmatpush2.bf16.msra.mxu0 0
      %3112 = vmatprep.subr.bf16.mxu0 0
      %3113 = vmatpush2.bf16.msra.mxu0 0
      %3114 = vmatprep.subr.bf16.mxu0 0
      %3115 = vmatpush2.bf16.msra.mxu0 0
      %3116 = vmatprep.subr.bf16.mxu0 0
      %3117 = vmatpush2.bf16.msra.mxu0 0
      %3118 = vmatprep.subr.bf16.mxu0 0
      %3119 = vmatpush2.bf16.msra.mxu0 0
      %3120 = vmatprep.mubr.bf16.mxu0 0
      %3121 = vmatmul.mubr.bf16.gmra.mxu0 %v3044
      %v3122 = vpop.f32.mrf.mxu0
      %v3123 = vadd.f32 0.0, %v3122
      %v3124 = vpop.f32.mrf.mxu0
      %v3125 = vpop.f32.mrf.mxu0
      %v3126 = vadd.f32 0.0, %v3125
      %v3127 = vpop.f32.mrf.mxu0
      %3128 = vmatprep.mubr.bf16.mxu0 0
      %3129 = vmatmul.mubr.bf16.gmra.mxu0 %v3047
      %v3130 = vpop.f32.mrf.mxu0
      %v3131 = vadd.f32 0.0, %v3130
      %v3132 = vpop.f32.mrf.mxu0
      %v3133 = vpop.f32.mrf.mxu0
      %v3134 = vadd.f32 0.0, %v3133
      %v3135 = vpop.f32.mrf.mxu0
      %3136 = vmatprep.mubr.bf16.mxu0 0
      %3137 = vmatmul.mubr.bf16.gmra.mxu0 %v3050
      %v3138 = vpop.f32.mrf.mxu0
      %v3139 = vadd.f32 0.0, %v3138
      %v3140 = vpop.f32.mrf.mxu0
      %v3141 = vpop.f32.mrf.mxu0
      %v3142 = vadd.f32 0.0, %v3141
      %v3143 = vpop.f32.mrf.mxu0
      %3144 = vmatprep.mubr.bf16.mxu0 0
      %3145 = vmatmul.mubr.bf16.gmra.mxu0 %v3053
      %v3146 = vpop.f32.mrf.mxu0
      %v3147 = vadd.f32 0.0, %v3146
      %v3148 = vpop.f32.mrf.mxu0
      %v3149 = vpop.f32.mrf.mxu0
      %v3150 = vadd.f32 0.0, %v3149
      %v3151 = vpop.f32.mrf.mxu0
      %3152 = vmatprep.mubr.bf16.mxu0 0
      %3153 = vmatmul.mubr.bf16.gmra.mxu0 %v3056
      %v3154 = vpop.f32.mrf.mxu0
      %v3155 = vadd.f32 0.0, %v3154
      %v3156 = vpop.f32.mrf.mxu0
      %v3157 = vpop.f32.mrf.mxu0
      %v3158 = vadd.f32 0.0, %v3157
      %v3159 = vpop.f32.mrf.mxu0
      %3160 = vmatprep.mubr.bf16.mxu0 0
      %3161 = vmatmul.mubr.bf16.gmra.mxu0 %v3059
      %v3162 = vpop.f32.mrf.mxu0
      %v3163 = vadd.f32 0.0, %v3162
      %v3164 = vpop.f32.mrf.mxu0
      %v3165 = vpop.f32.mrf.mxu0
      %v3166 = vadd.f32 0.0, %v3165
      %v3167 = vpop.f32.mrf.mxu0
      %3168 = vmatprep.mubr.bf16.mxu0 0
      %3169 = vmatmul.mubr.bf16.gmra.mxu0 %v3062
      %v3170 = vpop.f32.mrf.mxu0
      %v3171 = vadd.f32 0.0, %v3170
      %v3172 = vpop.f32.mrf.mxu0
      %v3173 = vpop.f32.mrf.mxu0
      %v3174 = vadd.f32 0.0, %v3173
      %v3175 = vpop.f32.mrf.mxu0
      %3176 = vmatprep.mubr.bf16.mxu0 0
      %3177 = vmatmul.mubr.bf16.gmra.mxu0 %v3065
      %v3178 = vpop.f32.mrf.mxu0
      %v3179 = vadd.f32 0.0, %v3178
      %v3180 = vpop.f32.mrf.mxu0
      %v3181 = vpop.f32.mrf.mxu0
      %v3182 = vadd.f32 0.0, %v3181
      %v3183 = vpop.f32.mrf.mxu0
      %3184 = vmatprep.mubr.bf16.mxu0 0
      %3185 = vmatmul.mubr.bf16.gmra.mxu0 %v3068
      %v3186 = vpop.f32.mrf.mxu0
      %v3187 = vadd.f32 0.0, %v3186
      %v3188 = vpop.f32.mrf.mxu0
      %v3189 = vpop.f32.mrf.mxu0
      %v3190 = vadd.f32 0.0, %v3189
      %v3191 = vpop.f32.mrf.mxu0
      %3192 = vmatprep.mubr.bf16.mxu0 0
      %3193 = vmatmul.mubr.bf16.gmra.mxu0 %v3071
      %v3194 = vpop.f32.mrf.mxu0
      %v3195 = vadd.f32 0.0, %v3194
      %v3196 = vpop.f32.mrf.mxu0
      %v3197 = vpop.f32.mrf.mxu0
      %v3198 = vadd.f32 0.0, %v3197
      %v3199 = vpop.f32.mrf.mxu0
      %3200 = vmatprep.mubr.bf16.mxu0 0
      %3201 = vmatmul.mubr.bf16.gmra.mxu0 %v3074
      %v3202 = vpop.f32.mrf.mxu0
      %v3203 = vadd.f32 0.0, %v3202
      %v3204 = vpop.f32.mrf.mxu0
      %v3205 = vpop.f32.mrf.mxu0
      %v3206 = vadd.f32 0.0, %v3205
      %v3207 = vpop.f32.mrf.mxu0
      %3208 = vmatprep.mubr.bf16.mxu0 0
      %3209 = vmatmul.mubr.bf16.gmra.mxu0 %v3077
      %v3210 = vpop.f32.mrf.mxu0
      %v3211 = vadd.f32 0.0, %v3210
      %v3212 = vpop.f32.mrf.mxu0
      %v3213 = vpop.f32.mrf.mxu0
      %v3214 = vadd.f32 0.0, %v3213
      %v3215 = vpop.f32.mrf.mxu0
      %3216 = vmatprep.mubr.bf16.mxu0 0
      %3217 = vmatmul.mubr.bf16.gmra.mxu0 %v3080
      %v3218 = vpop.f32.mrf.mxu0
      %v3219 = vadd.f32 0.0, %v3218
      %v3220 = vpop.f32.mrf.mxu0
      %v3221 = vpop.f32.mrf.mxu0
      %v3222 = vadd.f32 0.0, %v3221
      %v3223 = vpop.f32.mrf.mxu0
      %3224 = vmatprep.mubr.bf16.mxu0 0
      %3225 = vmatmul.mubr.bf16.gmra.mxu0 %v3083
      %v3226 = vpop.f32.mrf.mxu0
      %v3227 = vadd.f32 0.0, %v3226
      %v3228 = vpop.f32.mrf.mxu0
      %v3229 = vpop.f32.mrf.mxu0
      %v3230 = vadd.f32 0.0, %v3229
      %v3231 = vpop.f32.mrf.mxu0
      %3232 = vdwg.mxu0
      %v3233 = vadd.f32 %v2795, %v3123
      %v3234 = vadd.f32 %v2796, %v3126
      %v3235 = vadd.f32 %v2797, %v3131
      %v3236 = vadd.f32 %v2798, %v3134
      %v3237 = vadd.f32 %v2799, %v3139
      %v3238 = vadd.f32 %v2800, %v3142
      %v3239 = vadd.f32 %v2801, %v3147
      %v3240 = vadd.f32 %v2802, %v3150
      %v3241 = vadd.f32 %v2803, %v3155
      %v3242 = vadd.f32 %v2804, %v3158
      %v3243 = vadd.f32 %v2805, %v3163
      %v3244 = vadd.f32 %v2806, %v3166
      %v3245 = vadd.f32 %v2807, %v3171
      %v3246 = vadd.f32 %v2808, %v3174
      %v3247 = vadd.f32 %v2809, %v3179
      %v3248 = vadd.f32 %v2810, %v3182
      %v3249 = vadd.f32 %v2811, %v3187
      %v3250 = vadd.f32 %v2812, %v3190
      %v3251 = vadd.f32 %v2813, %v3195
      %v3252 = vadd.f32 %v2814, %v3198
      %v3253 = vadd.f32 %v2815, %v3203
      %v3254 = vadd.f32 %v2816, %v3206
      %v3255 = vadd.f32 %v2817, %v3211
      %v3256 = vadd.f32 %v2818, %v3214
      %v3257 = vadd.f32 %v2819, %v3219
      %v3258 = vadd.f32 %v2820, %v3222
      %v3259 = vadd.f32 %v2821, %v3227
      %v3260 = vadd.f32 %v2822, %v3230
      %v3261 = vld [vmem:[#allocation2 + $0x10] sm:$0xe]
      %s3262 = scalar_lea.vmem %s3, 16
      %v3263 = vld [vmem:[%s3262] sm:$0x3]
      %v3265 = vunpack.c.l.b16 %v3261
      %v3266 = vpack.c.b16 %v2884, %v3265
      %v3267 = vrot.slane %v3266, 1
      %v3268 = vrot.slane %v2913, 1
      %v3269 = vsel %vm1248, %v3267, %v3268
      %v3270 = vrot.slane %v2914, 1
      %v3271 = vsel %vm1248, %v3268, %v3270
      %v3272 = vrot.slane %v2915, 1
      %v3273 = vsel %vm1248, %v3270, %v3272
      %v3274 = vrot.slane %v2916, 1
      %v3275 = vsel %vm1248, %v3272, %v3274
      %v3276 = vrot.slane %v2917, 1
      %v3277 = vsel %vm1248, %v3274, %v3276
      %v3278 = vrot.slane %v2918, 1
      %v3279 = vsel %vm1248, %v3276, %v3278
      %v3280 = vrot.slane %v2919, 1
      %v3281 = vsel %vm1248, %v3278, %v3280
      %v3282 = vrot.slane %v2920, 1
      %v3283 = vsel %vm1248, %v3280, %v3282
      %v3284 = vrot.slane %v2921, 1
      %v3285 = vsel %vm1248, %v3282, %v3284
      %v3286 = vrot.slane %v2922, 1
      %v3287 = vsel %vm1248, %v3284, %v3286
      %v3288 = vrot.slane %v2923, 1
      %v3289 = vsel %vm1248, %v3286, %v3288
      %v3290 = vrot.slane %v2924, 1
      %v3291 = vsel %vm1248, %v3288, %v3290
      %v3292 = vrot.slane %v2925, 1
      %v3293 = vsel %vm1248, %v3290, %v3292
      %v3294 = vrot.slane %v2926, 1
      %v3295 = vsel %vm1248, %v3292, %v3294
      %v3297 = vsel %vm874, %v3269, 0
      %v3300 = vsel %vm874, %v3271, 0
      %v3303 = vsel %vm874, %v3273, 0
      %v3306 = vsel %vm874, %v3275, 0
      %v3309 = vsel %vm874, %v3277, 0
      %v3312 = vsel %vm874, %v3279, 0
      %v3315 = vsel %vm874, %v3281, 0
      %v3318 = vsel %vm874, %v3283, 0
      %v3321 = vsel %vm874, %v3285, 0
      %v3324 = vsel %vm874, %v3287, 0
      %v3327 = vsel %vm874, %v3289, 0
      %v3330 = vsel %vm874, %v3291, 0
      %v3333 = vsel %vm874, %v3293, 0
      %v3336 = vsel %vm874, %v3295, 0
      %v3339 = vsel %vm917, %v3263, 0
      %3341 = vmatprep.subr.bf16.mxu0 0
      %3342 = vmatpush1.bf16.msra.mxu0 0
      %3343 = vmatprep.subr.bf16.mxu0 0
      %3344 = vmatpush1.bf16.msra.mxu0 0
      %3345 = vmatprep.subr.bf16.mxu0 0
      %3346 = vmatpush1.bf16.msra.mxu0 0
      %3347 = vmatprep.subr.bf16.mxu0 0
      %3348 = vmatpush1.bf16.msra.mxu0 0
      %3349 = vmatprep.subr.bf16.mxu0 0
      %3350 = vmatpush1.bf16.msra.mxu0 0
      %3351 = vmatprep.subr.bf16.mxu0 0
      %3352 = vmatpush1.bf16.msra.mxu0 0
      %3353 = vmatprep.subr.bf16.mxu0 0
      %3354 = vmatpush1.bf16.msra.mxu0 0
      %3355 = vmatprep.subr.bf16.mxu0 0
      %3356 = vmatpush1.bf16.msra.mxu0 %v3339
      %3357 = vmatprep.subr.bf16.mxu0 0
      %3358 = vmatpush2.bf16.msra.mxu0 0
      %3359 = vmatprep.subr.bf16.mxu0 0
      %3360 = vmatpush2.bf16.msra.mxu0 0
      %3361 = vmatprep.subr.bf16.mxu0 0
      %3362 = vmatpush2.bf16.msra.mxu0 0
      %3363 = vmatprep.subr.bf16.mxu0 0
      %3364 = vmatpush2.bf16.msra.mxu0 0
      %3365 = vmatprep.subr.bf16.mxu0 0
      %3366 = vmatpush2.bf16.msra.mxu0 0
      %3367 = vmatprep.subr.bf16.mxu0 0
      %3368 = vmatpush2.bf16.msra.mxu0 0
      %3369 = vmatprep.subr.bf16.mxu0 0
      %3370 = vmatpush2.bf16.msra.mxu0 0
      %3371 = vmatprep.subr.bf16.mxu0 0
      %3372 = vmatpush2.bf16.msra.mxu0 0
      %3373 = vmatprep.mubr.bf16.mxu0 0
      %3374 = vmatmul.mubr.bf16.gmra.mxu0 %v3297
      %v3375 = vpop.f32.mrf.mxu0
      %v3376 = vadd.f32 0.0, %v3375
      %v3377 = vpop.f32.mrf.mxu0
      %v3378 = vpop.f32.mrf.mxu0
      %v3379 = vadd.f32 0.0, %v3378
      %v3380 = vpop.f32.mrf.mxu0
      %3381 = vmatprep.mubr.bf16.mxu0 0
      %3382 = vmatmul.mubr.bf16.gmra.mxu0 %v3300
      %v3383 = vpop.f32.mrf.mxu0
      %v3384 = vadd.f32 0.0, %v3383
      %v3385 = vpop.f32.mrf.mxu0
      %v3386 = vpop.f32.mrf.mxu0
      %v3387 = vadd.f32 0.0, %v3386
      %v3388 = vpop.f32.mrf.mxu0
      %3389 = vmatprep.mubr.bf16.mxu0 0
      %3390 = vmatmul.mubr.bf16.gmra.mxu0 %v3303
      %v3391 = vpop.f32.mrf.mxu0
      %v3392 = vadd.f32 0.0, %v3391
      %v3393 = vpop.f32.mrf.mxu0
      %v3394 = vpop.f32.mrf.mxu0
      %v3395 = vadd.f32 0.0, %v3394
      %v3396 = vpop.f32.mrf.mxu0
      %3397 = vmatprep.mubr.bf16.mxu0 0
      %3398 = vmatmul.mubr.bf16.gmra.mxu0 %v3306
      %v3399 = vpop.f32.mrf.mxu0
      %v3400 = vadd.f32 0.0, %v3399
      %v3401 = vpop.f32.mrf.mxu0
      %v3402 = vpop.f32.mrf.mxu0
      %v3403 = vadd.f32 0.0, %v3402
      %v3404 = vpop.f32.mrf.mxu0
      %3405 = vmatprep.mubr.bf16.mxu0 0
      %3406 = vmatmul.mubr.bf16.gmra.mxu0 %v3309
      %v3407 = vpop.f32.mrf.mxu0
      %v3408 = vadd.f32 0.0, %v3407
      %v3409 = vpop.f32.mrf.mxu0
      %v3410 = vpop.f32.mrf.mxu0
      %v3411 = vadd.f32 0.0, %v3410
      %v3412 = vpop.f32.mrf.mxu0
      %3413 = vmatprep.mubr.bf16.mxu0 0
      %3414 = vmatmul.mubr.bf16.gmra.mxu0 %v3312
      %v3415 = vpop.f32.mrf.mxu0
      %v3416 = vadd.f32 0.0, %v3415
      %v3417 = vpop.f32.mrf.mxu0
      %v3418 = vpop.f32.mrf.mxu0
      %v3419 = vadd.f32 0.0, %v3418
      %v3420 = vpop.f32.mrf.mxu0
      %3421 = vmatprep.mubr.bf16.mxu0 0
      %3422 = vmatmul.mubr.bf16.gmra.mxu0 %v3315
      %v3423 = vpop.f32.mrf.mxu0
      %v3424 = vadd.f32 0.0, %v3423
      %v3425 = vpop.f32.mrf.mxu0
      %v3426 = vpop.f32.mrf.mxu0
      %v3427 = vadd.f32 0.0, %v3426
      %v3428 = vpop.f32.mrf.mxu0
      %3429 = vmatprep.mubr.bf16.mxu0 0
      %3430 = vmatmul.mubr.bf16.gmra.mxu0 %v3318
      %v3431 = vpop.f32.mrf.mxu0
      %v3432 = vadd.f32 0.0, %v3431
      %v3433 = vpop.f32.mrf.mxu0
      %v3434 = vpop.f32.mrf.mxu0
      %v3435 = vadd.f32 0.0, %v3434
      %v3436 = vpop.f32.mrf.mxu0
      %3437 = vmatprep.mubr.bf16.mxu0 0
      %3438 = vmatmul.mubr.bf16.gmra.mxu0 %v3321
      %v3439 = vpop.f32.mrf.mxu0
      %v3440 = vadd.f32 0.0, %v3439
      %v3441 = vpop.f32.mrf.mxu0
      %v3442 = vpop.f32.mrf.mxu0
      %v3443 = vadd.f32 0.0, %v3442
      %v3444 = vpop.f32.mrf.mxu0
      %3445 = vmatprep.mubr.bf16.mxu0 0
      %3446 = vmatmul.mubr.bf16.gmra.mxu0 %v3324
      %v3447 = vpop.f32.mrf.mxu0
      %v3448 = vadd.f32 0.0, %v3447
      %v3449 = vpop.f32.mrf.mxu0
      %v3450 = vpop.f32.mrf.mxu0
      %v3451 = vadd.f32 0.0, %v3450
      %v3452 = vpop.f32.mrf.mxu0
      %3453 = vmatprep.mubr.bf16.mxu0 0
      %3454 = vmatmul.mubr.bf16.gmra.mxu0 %v3327
      %v3455 = vpop.f32.mrf.mxu0
      %v3456 = vadd.f32 0.0, %v3455
      %v3457 = vpop.f32.mrf.mxu0
      %v3458 = vpop.f32.mrf.mxu0
      %v3459 = vadd.f32 0.0, %v3458
      %v3460 = vpop.f32.mrf.mxu0
      %3461 = vmatprep.mubr.bf16.mxu0 0
      %3462 = vmatmul.mubr.bf16.gmra.mxu0 %v3330
      %v3463 = vpop.f32.mrf.mxu0
      %v3464 = vadd.f32 0.0, %v3463
      %v3465 = vpop.f32.mrf.mxu0
      %v3466 = vpop.f32.mrf.mxu0
      %v3467 = vadd.f32 0.0, %v3466
      %v3468 = vpop.f32.mrf.mxu0
      %3469 = vmatprep.mubr.bf16.mxu0 0
      %3470 = vmatmul.mubr.bf16.gmra.mxu0 %v3333
      %v3471 = vpop.f32.mrf.mxu0
      %v3472 = vadd.f32 0.0, %v3471
      %v3473 = vpop.f32.mrf.mxu0
      %v3474 = vpop.f32.mrf.mxu0
      %v3475 = vadd.f32 0.0, %v3474
      %v3476 = vpop.f32.mrf.mxu0
      %3477 = vmatprep.mubr.bf16.mxu0 0
      %3478 = vmatmul.mubr.bf16.gmra.mxu0 %v3336
      %v3479 = vpop.f32.mrf.mxu0
      %v3480 = vadd.f32 0.0, %v3479
      %v3481 = vpop.f32.mrf.mxu0
      %v3482 = vpop.f32.mrf.mxu0
      %v3483 = vadd.f32 0.0, %v3482
      %v3484 = vpop.f32.mrf.mxu0
      %3485 = vdwg.mxu0
      %v3486 = vadd.f32 %v3233, %v3376
      %v3487 = vadd.f32 %v3234, %v3379
      %v3488 = vadd.f32 %v3235, %v3384
      %v3489 = vadd.f32 %v3236, %v3387
      %v3490 = vadd.f32 %v3237, %v3392
      %v3491 = vadd.f32 %v3238, %v3395
      %v3492 = vadd.f32 %v3239, %v3400
      %v3493 = vadd.f32 %v3240, %v3403
      %v3494 = vadd.f32 %v3241, %v3408
      %v3495 = vadd.f32 %v3242, %v3411
      %v3496 = vadd.f32 %v3243, %v3416
      %v3497 = vadd.f32 %v3244, %v3419
      %v3498 = vadd.f32 %v3245, %v3424
      %v3499 = vadd.f32 %v3246, %v3427
      %v3500 = vadd.f32 %v3247, %v3432
      %v3501 = vadd.f32 %v3248, %v3435
      %v3502 = vadd.f32 %v3249, %v3440
      %v3503 = vadd.f32 %v3250, %v3443
      %v3504 = vadd.f32 %v3251, %v3448
      %v3505 = vadd.f32 %v3252, %v3451
      %v3506 = vadd.f32 %v3253, %v3456
      %v3507 = vadd.f32 %v3254, %v3459
      %v3508 = vadd.f32 %v3255, %v3464
      %v3509 = vadd.f32 %v3256, %v3467
      %v3510 = vadd.f32 %v3257, %v3472
      %v3511 = vadd.f32 %v3258, %v3475
      %v3512 = vadd.f32 %v3259, %v3480
      %v3513 = vadd.f32 %v3260, %v3483
      %v3514 = vld [vmem:[%s4] sm:$0x1]
      %v3516 = vlaneseq
      %v3517 = vshrl.u32 %v3516, 7
      %v3518 = vsub.s32 0, %v3517
      %v3519 = vrot.slane %v3514, %v3518
      %v3521 = vadd.f32 %v3486, %v3519
      %v3522 = vadd.f32 %v3487, %v3519
      %v3523 = vadd.f32 %v3488, %v3519
      %v3524 = vadd.f32 %v3489, %v3519
      %v3525 = vadd.f32 %v3490, %v3519
      %v3526 = vadd.f32 %v3491, %v3519
      %v3527 = vadd.f32 %v3492, %v3519
      %v3528 = vadd.f32 %v3493, %v3519
      %v3529 = vadd.f32 %v3494, %v3519
      %v3530 = vadd.f32 %v3495, %v3519
      %v3531 = vadd.f32 %v3496, %v3519
      %v3532 = vadd.f32 %v3497, %v3519
      %v3533 = vadd.f32 %v3498, %v3519
      %v3534 = vadd.f32 %v3499, %v3519
      %v3535 = vadd.f32 %v3500, %v3519
      %v3536 = vadd.f32 %v3501, %v3519
      %v3537 = vadd.f32 %v3502, %v3519
      %v3538 = vadd.f32 %v3503, %v3519
      %v3539 = vadd.f32 %v3504, %v3519
      %v3540 = vadd.f32 %v3505, %v3519
      %v3541 = vadd.f32 %v3506, %v3519
      %v3542 = vadd.f32 %v3507, %v3519
      %v3543 = vadd.f32 %v3508, %v3519
      %v3544 = vadd.f32 %v3509, %v3519
      %v3545 = vadd.f32 %v3510, %v3519
      %v3546 = vadd.f32 %v3511, %v3519
      %v3547 = vadd.f32 %v3512, %v3519
      %v3548 = vadd.f32 %v3513, %v3519
      %v3549 = vpack.c.bf16 %v3522, %v3521
      %v3550 = vpack.c.bf16 %v3524, %v3523
      %v3551 = vpack.c.bf16 %v3526, %v3525
      %v3552 = vpack.c.bf16 %v3528, %v3527
      %v3553 = vpack.c.bf16 %v3530, %v3529
      %v3554 = vpack.c.bf16 %v3532, %v3531
      %v3555 = vpack.c.bf16 %v3534, %v3533
      %v3556 = vpack.c.bf16 %v3536, %v3535
      %v3557 = vpack.c.bf16 %v3538, %v3537
      %v3558 = vpack.c.bf16 %v3540, %v3539
      %v3559 = vpack.c.bf16 %v3542, %v3541
      %v3560 = vpack.c.bf16 %v3544, %v3543
      %v3561 = vpack.c.bf16 %v3546, %v3545
      %v3562 = vpack.c.bf16 %v3548, %v3547
      %v3577 = vunpack.c.l.b16 %v3549
      %v3578 = vunpack.c.h.b16 %v3549
      %v3579 = vunpack.c.l.b16 %v3550
      %v3580 = vunpack.c.h.b16 %v3550
      %v3581 = vunpack.c.l.b16 %v3551
      %v3582 = vunpack.c.h.b16 %v3551
      %v3583 = vunpack.c.l.b16 %v3552
      %v3584 = vunpack.c.h.b16 %v3552
      %v3585 = vunpack.c.l.b16 %v3553
      %v3586 = vunpack.c.h.b16 %v3553
      %v3587 = vunpack.c.l.b16 %v3554
      %v3588 = vunpack.c.h.b16 %v3554
      %v3589 = vunpack.c.l.b16 %v3555
      %v3590 = vunpack.c.h.b16 %v3555
      %v3591 = vunpack.c.l.b16 %v3556
      %v3592 = vunpack.c.h.b16 %v3556
      %v3593 = vunpack.c.l.b16 %v3557
      %v3594 = vunpack.c.h.b16 %v3557
      %v3595 = vunpack.c.l.b16 %v3558
      %v3596 = vunpack.c.h.b16 %v3558
      %v3597 = vunpack.c.l.b16 %v3559
      %v3598 = vunpack.c.h.b16 %v3559
      %v3599 = vunpack.c.l.b16 %v3560
      %v3600 = vunpack.c.h.b16 %v3560
      %v3601 = vunpack.c.l.b16 %v3561
      %v3602 = vunpack.c.h.b16 %v3561
      %v3603 = vunpack.c.l.b16 %v3562
      %v3604 = vunpack.c.h.b16 %v3562
      %v3605 = vpack.c.b16 %v3577, %v3577
      %v3606 = vpack.c.b16 %v3578, %v3578
      %v3607 = vpack.c.b16 %v3579, %v3579
      %v3608 = vpack.c.b16 %v3580, %v3580
      %v3609 = vpack.c.b16 %v3581, %v3581
      %v3610 = vpack.c.b16 %v3582, %v3582
      %v3611 = vpack.c.b16 %v3583, %v3583
      %v3612 = vpack.c.b16 %v3584, %v3584
      %v3613 = vpack.c.b16 %v3585, %v3585
      %v3614 = vpack.c.b16 %v3586, %v3586
      %v3615 = vpack.c.b16 %v3587, %v3587
      %v3616 = vpack.c.b16 %v3588, %v3588
      %v3617 = vpack.c.b16 %v3589, %v3589
      %v3618 = vpack.c.b16 %v3590, %v3590
      %v3619 = vpack.c.b16 %v3591, %v3591
      %v3620 = vpack.c.b16 %v3592, %v3592
      %v3621 = vpack.c.b16 %v3593, %v3593
      %v3622 = vpack.c.b16 %v3594, %v3594
      %v3623 = vpack.c.b16 %v3595, %v3595
      %v3624 = vpack.c.b16 %v3596, %v3596
      %v3625 = vpack.c.b16 %v3597, %v3597
      %v3626 = vpack.c.b16 %v3598, %v3598
      %v3627 = vpack.c.b16 %v3599, %v3599
      %v3628 = vpack.c.b16 %v3600, %v3600
      %v3629 = vpack.c.b16 %v3601, %v3601
      %v3630 = vpack.c.b16 %v3602, %v3602
      %v3631 = vpack.c.b16 %v3603, %v3603
      %v3632 = vpack.c.b16 %v3604, %v3604
      %3661 = vst [vmem:[%s448] sm:$0xf] %v3605
      %3662 = vst [vmem:[%s448 + $0x4] sm:$0xf] %v3606
      %3663 = vst [vmem:[%s448 + $0x8] sm:$0xf] %v3607
      %3664 = vst [vmem:[%s448 + $0xc] sm:$0xf] %v3608
      %3665 = vst [vmem:[%s448 + $0x10] sm:$0xf] %v3609
      %3666 = vst [vmem:[%s448 + $0x14] sm:$0xf] %v3610
      %3667 = vst [vmem:[%s448 + $0x18] sm:$0xf] %v3611
      %3668 = vst [vmem:[%s448 + $0x1c] sm:$0xf] %v3612
      %3669 = vst [vmem:[%s448 + $0x20] sm:$0xf] %v3613
      %3670 = vst [vmem:[%s448 + $0x24] sm:$0xf] %v3614
      %3671 = vst [vmem:[%s448 + $0x28] sm:$0xf] %v3615
      %3672 = vst [vmem:[%s448 + $0x2c] sm:$0xf] %v3616
      %3673 = vst [vmem:[%s448 + $0x30] sm:$0xf] %v3617
      %3674 = vst [vmem:[%s448 + $0x34] sm:$0xf] %v3618
      %3675 = vst [vmem:[%s448 + $0x38] sm:$0xf] %v3619
      %3676 = vst [vmem:[%s448 + $0x3c] sm:$0xf] %v3620
      %3677 = vst [vmem:[%s448 + $0x40] sm:$0xf] %v3621
      %3678 = vst [vmem:[%s448 + $0x44] sm:$0xf] %v3622
      %3679 = vst [vmem:[%s448 + $0x48] sm:$0xf] %v3623
      %3680 = vst [vmem:[%s448 + $0x4c] sm:$0xf] %v3624
      %3681 = vst [vmem:[%s448 + $0x50] sm:$0xf] %v3625
      %3682 = vst [vmem:[%s448 + $0x54] sm:$0xf] %v3626
      %3683 = vst [vmem:[%s448 + $0x58] sm:$0xf] %v3627
      %3684 = vst [vmem:[%s448 + $0x5c] sm:$0xf] %v3628
      %3685 = vst [vmem:[%s448 + $0x60] sm:$0xf] %v3629
      %3686 = vst [vmem:[%s448 + $0x64] sm:$0xf] %v3630
      %3687 = vst [vmem:[%s448 + $0x68] sm:$0xf] %v3631
      %3688 = vst [vmem:[%s448 + $0x6c] sm:$0xf] %v3632
      %v3689 = vld [vmem:[%s5] sm:$0xff]
      %v3690 = vld [vmem:[%s5 + $0x8] sm:$0xff]
      %v3691 = vld [vmem:[%s5 + $0x10] sm:$0xff]
      %v3692 = vld [vmem:[%s5 + $0x18] sm:$0xff]
      %v3693 = vld [vmem:[%s5 + $0x20] sm:$0xff]
      %v3694 = vld [vmem:[%s5 + $0x28] sm:$0xff]
      %v3695 = vld [vmem:[%s5 + $0x30] sm:$0xff]
      %v3696 = vld [vmem:[%s5 + $0x38] sm:$0xff]
      %v3697 = vld [vmem:[%s5 + $0x40] sm:$0xff]
      %v3698 = vld [vmem:[%s5 + $0x48] sm:$0xff]
      %v3699 = vld [vmem:[%s5 + $0x50] sm:$0xff]
      %v3700 = vld [vmem:[%s5 + $0x58] sm:$0xff]
      %v3701 = vld [vmem:[%s5 + $0x60] sm:$0xff]
      %v3702 = vld [vmem:[%s5 + $0x68] sm:$0xff]
      %v3703 = vld [vmem:[%s5 + $0x70] sm:$0xff]
      %v3704 = vld [vmem:[%s5 + $0x78] sm:$0xff]
      %v3705 = vld [vmem:[%s5 + $0x80] sm:$0xff]
      %v3706 = vld [vmem:[%s5 + $0x88] sm:$0xff]
      %v3707 = vld [vmem:[%s5 + $0x90] sm:$0xff]
      %v3708 = vld [vmem:[%s5 + $0x98] sm:$0xff]
      %v3709 = vld [vmem:[%s5 + $0xa0] sm:$0xff]
      %v3710 = vld [vmem:[%s5 + $0xa8] sm:$0xff]
      %v3711 = vld [vmem:[%s5 + $0xb0] sm:$0xff]
      %v3712 = vld [vmem:[%s5 + $0xb8] sm:$0xff]
      %v3713 = vld [vmem:[%s5 + $0xc0] sm:$0xff]
      %v3714 = vld [vmem:[%s5 + $0xc8] sm:$0xff]
      %v3715 = vld [vmem:[%s5 + $0xd0] sm:$0xff]
      %v3716 = vld [vmem:[%s5 + $0xd8] sm:$0xff]
      %vm3717 = vcmp.gt.f32.partialorder %v3689, 0.5
      %vm3718 = vcmp.gt.f32.partialorder %v3690, 0.5
      %vm3719 = vcmp.gt.f32.partialorder %v3691, 0.5
      %vm3720 = vcmp.gt.f32.partialorder %v3692, 0.5
      %vm3721 = vcmp.gt.f32.partialorder %v3693, 0.5
      %vm3722 = vcmp.gt.f32.partialorder %v3694, 0.5
      %vm3723 = vcmp.gt.f32.partialorder %v3695, 0.5
      %vm3724 = vcmp.gt.f32.partialorder %v3696, 0.5
      %vm3725 = vcmp.gt.f32.partialorder %v3697, 0.5
      %vm3726 = vcmp.gt.f32.partialorder %v3698, 0.5
      %vm3727 = vcmp.gt.f32.partialorder %v3699, 0.5
      %vm3728 = vcmp.gt.f32.partialorder %v3700, 0.5
      %vm3729 = vcmp.gt.f32.partialorder %v3701, 0.5
      %vm3730 = vcmp.gt.f32.partialorder %v3702, 0.5
      %vm3731 = vcmp.gt.f32.partialorder %v3703, 0.5
      %vm3732 = vcmp.gt.f32.partialorder %v3704, 0.5
      %vm3733 = vcmp.gt.f32.partialorder %v3705, 0.5
      %vm3734 = vcmp.gt.f32.partialorder %v3706, 0.5
      %vm3735 = vcmp.gt.f32.partialorder %v3707, 0.5
      %vm3736 = vcmp.gt.f32.partialorder %v3708, 0.5
      %vm3737 = vcmp.gt.f32.partialorder %v3709, 0.5
      %vm3738 = vcmp.gt.f32.partialorder %v3710, 0.5
      %vm3739 = vcmp.gt.f32.partialorder %v3711, 0.5
      %vm3740 = vcmp.gt.f32.partialorder %v3712, 0.5
      %vm3741 = vcmp.gt.f32.partialorder %v3713, 0.5
      %vm3742 = vcmp.gt.f32.partialorder %v3714, 0.5
      %vm3743 = vcmp.gt.f32.partialorder %v3715, 0.5
      %vm3744 = vcmp.gt.f32.partialorder %v3716, 0.5
      %v3745 = vsel %vm3717, 1, 0
      %v3746 = vsel %vm3718, 1, 0
      %v3747 = vsel %vm3719, 1, 0
      %v3748 = vsel %vm3720, 1, 0
      %v3749 = vsel %vm3721, 1, 0
      %v3750 = vsel %vm3722, 1, 0
      %v3751 = vsel %vm3723, 1, 0
      %v3752 = vsel %vm3724, 1, 0
      %v3753 = vsel %vm3725, 1, 0
      %v3754 = vsel %vm3726, 1, 0
      %v3755 = vsel %vm3727, 1, 0
      %v3756 = vsel %vm3728, 1, 0
      %v3757 = vsel %vm3729, 1, 0
      %v3758 = vsel %vm3730, 1, 0
      %v3759 = vsel %vm3731, 1, 0
      %v3760 = vsel %vm3732, 1, 0
      %v3761 = vsel %vm3733, 1, 0
      %v3762 = vsel %vm3734, 1, 0
      %v3763 = vsel %vm3735, 1, 0
      %v3764 = vsel %vm3736, 1, 0
      %v3765 = vsel %vm3737, 1, 0
      %v3766 = vsel %vm3738, 1, 0
      %v3767 = vsel %vm3739, 1, 0
      %v3768 = vsel %vm3740, 1, 0
      %v3769 = vsel %vm3741, 1, 0
      %v3770 = vsel %vm3742, 1, 0
      %v3771 = vsel %vm3743, 1, 0
      %v3772 = vsel %vm3744, 1, 0
      %3773 = vset.pattern.permute.xlu0 0
      %3774 = vperm.xlu0 %3773, %v3745
      %v3775 = vpop.permute.xlu0 %3774
      %3776 = vset.pattern.permute.xlu0 0
      %3777 = vperm.xlu0 %3776, %v3746
      %v3778 = vpop.permute.xlu0 %3777
      %3779 = vset.pattern.permute.xlu0 0
      %3780 = vperm.xlu0 %3779, %v3747
      %v3781 = vpop.permute.xlu0 %3780
      %3782 = vset.pattern.permute.xlu0 0
      %3783 = vperm.xlu0 %3782, %v3748
      %v3784 = vpop.permute.xlu0 %3783
      %3785 = vset.pattern.permute.xlu0 0
      %3786 = vperm.xlu0 %3785, %v3749
      %v3787 = vpop.permute.xlu0 %3786
      %3788 = vset.pattern.permute.xlu0 0
      %3789 = vperm.xlu0 %3788, %v3750
      %v3790 = vpop.permute.xlu0 %3789
      %3791 = vset.pattern.permute.xlu0 0
      %3792 = vperm.xlu0 %3791, %v3751
      %v3793 = vpop.permute.xlu0 %3792
      %3794 = vset.pattern.permute.xlu0 0
      %3795 = vperm.xlu0 %3794, %v3752
      %v3796 = vpop.permute.xlu0 %3795
      %3797 = vset.pattern.permute.xlu0 0
      %3798 = vperm.xlu0 %3797, %v3753
      %v3799 = vpop.permute.xlu0 %3798
      %3800 = vset.pattern.permute.xlu0 0
      %3801 = vperm.xlu0 %3800, %v3754
      %v3802 = vpop.permute.xlu0 %3801
      %3803 = vset.pattern.permute.xlu0 0
      %3804 = vperm.xlu0 %3803, %v3755
      %v3805 = vpop.permute.xlu0 %3804
      %3806 = vset.pattern.permute.xlu0 0
      %3807 = vperm.xlu0 %3806, %v3756
      %v3808 = vpop.permute.xlu0 %3807
      %3809 = vset.pattern.permute.xlu0 0
      %3810 = vperm.xlu0 %3809, %v3757
      %v3811 = vpop.permute.xlu0 %3810
      %3812 = vset.pattern.permute.xlu0 0
      %3813 = vperm.xlu0 %3812, %v3758
      %v3814 = vpop.permute.xlu0 %3813
      %3815 = vset.pattern.permute.xlu0 0
      %3816 = vperm.xlu0 %3815, %v3759
      %v3817 = vpop.permute.xlu0 %3816
      %3818 = vset.pattern.permute.xlu0 0
      %3819 = vperm.xlu0 %3818, %v3760
      %v3820 = vpop.permute.xlu0 %3819
      %3821 = vset.pattern.permute.xlu0 0
      %3822 = vperm.xlu0 %3821, %v3761
      %v3823 = vpop.permute.xlu0 %3822
      %3824 = vset.pattern.permute.xlu0 0
      %3825 = vperm.xlu0 %3824, %v3762
      %v3826 = vpop.permute.xlu0 %3825
      %3827 = vset.pattern.permute.xlu0 0
      %3828 = vperm.xlu0 %3827, %v3763
      %v3829 = vpop.permute.xlu0 %3828
      %3830 = vset.pattern.permute.xlu0 0
      %3831 = vperm.xlu0 %3830, %v3764
      %v3832 = vpop.permute.xlu0 %3831
      %3833 = vset.pattern.permute.xlu0 0
      %3834 = vperm.xlu0 %3833, %v3765
      %v3835 = vpop.permute.xlu0 %3834
      %3836 = vset.pattern.permute.xlu0 0
      %3837 = vperm.xlu0 %3836, %v3766
      %v3838 = vpop.permute.xlu0 %3837
      %3839 = vset.pattern.permute.xlu0 0
      %3840 = vperm.xlu0 %3839, %v3767
      %v3841 = vpop.permute.xlu0 %3840
      %3842 = vset.pattern.permute.xlu0 0
      %3843 = vperm.xlu0 %3842, %v3768
      %v3844 = vpop.permute.xlu0 %3843
      %3845 = vset.pattern.permute.xlu0 0
      %3846 = vperm.xlu0 %3845, %v3769
      %v3847 = vpop.permute.xlu0 %3846
      %3848 = vset.pattern.permute.xlu0 0
      %3849 = vperm.xlu0 %3848, %v3770
      %v3850 = vpop.permute.xlu0 %3849
      %3851 = vset.pattern.permute.xlu0 0
      %3852 = vperm.xlu0 %3851, %v3771
      %v3853 = vpop.permute.xlu0 %3852
      %3854 = vset.pattern.permute.xlu0 0
      %3855 = vperm.xlu0 %3854, %v3772
      %v3856 = vpop.permute.xlu0 %3855
      %vm3857 = vcmp.eq.s32.totalorder %v3775, 1
      %vm3858 = vcmp.eq.s32.totalorder %v3778, 1
      %vm3859 = vcmp.eq.s32.totalorder %v3781, 1
      %vm3860 = vcmp.eq.s32.totalorder %v3784, 1
      %vm3861 = vcmp.eq.s32.totalorder %v3787, 1
      %vm3862 = vcmp.eq.s32.totalorder %v3790, 1
      %vm3863 = vcmp.eq.s32.totalorder %v3793, 1
      %vm3864 = vcmp.eq.s32.totalorder %v3796, 1
      %vm3865 = vcmp.eq.s32.totalorder %v3799, 1
      %vm3866 = vcmp.eq.s32.totalorder %v3802, 1
      %vm3867 = vcmp.eq.s32.totalorder %v3805, 1
      %vm3868 = vcmp.eq.s32.totalorder %v3808, 1
      %vm3869 = vcmp.eq.s32.totalorder %v3811, 1
      %vm3870 = vcmp.eq.s32.totalorder %v3814, 1
      %vm3871 = vcmp.eq.s32.totalorder %v3817, 1
      %vm3872 = vcmp.eq.s32.totalorder %v3820, 1
      %vm3873 = vcmp.eq.s32.totalorder %v3823, 1
      %vm3874 = vcmp.eq.s32.totalorder %v3826, 1
      %vm3875 = vcmp.eq.s32.totalorder %v3829, 1
      %vm3876 = vcmp.eq.s32.totalorder %v3832, 1
      %vm3877 = vcmp.eq.s32.totalorder %v3835, 1
      %vm3878 = vcmp.eq.s32.totalorder %v3838, 1
      %vm3879 = vcmp.eq.s32.totalorder %v3841, 1
      %vm3880 = vcmp.eq.s32.totalorder %v3844, 1
      %vm3881 = vcmp.eq.s32.totalorder %v3847, 1
      %vm3882 = vcmp.eq.s32.totalorder %v3850, 1
      %vm3883 = vcmp.eq.s32.totalorder %v3853, 1
      %vm3884 = vcmp.eq.s32.totalorder %v3856, 1
      %v3885 = vsel %vm3857, %v3521, 0.0
      %v3886 = vsel %vm3858, %v3522, 0.0
      %v3887 = vsel %vm3859, %v3523, 0.0
      %v3888 = vsel %vm3860, %v3524, 0.0
      %v3889 = vsel %vm3861, %v3525, 0.0
      %v3890 = vsel %vm3862, %v3526, 0.0
      %v3891 = vsel %vm3863, %v3527, 0.0
      %v3892 = vsel %vm3864, %v3528, 0.0
      %v3893 = vsel %vm3865, %v3529, 0.0
      %v3894 = vsel %vm3866, %v3530, 0.0
      %v3895 = vsel %vm3867, %v3531, 0.0
      %v3896 = vsel %vm3868, %v3532, 0.0
      %v3897 = vsel %vm3869, %v3533, 0.0
      %v3898 = vsel %vm3870, %v3534, 0.0
      %v3899 = vsel %vm3871, %v3535, 0.0
      %v3900 = vsel %vm3872, %v3536, 0.0
      %v3901 = vsel %vm3873, %v3537, 0.0
      %v3902 = vsel %vm3874, %v3538, 0.0
      %v3903 = vsel %vm3875, %v3539, 0.0
      %v3904 = vsel %vm3876, %v3540, 0.0
      %v3905 = vsel %vm3877, %v3541, 0.0
      %v3906 = vsel %vm3878, %v3542, 0.0
      %v3907 = vsel %vm3879, %v3543, 0.0
      %v3908 = vsel %vm3880, %v3544, 0.0
      %v3909 = vsel %vm3881, %v3545, 0.0
      %v3910 = vsel %vm3882, %v3546, 0.0
      %v3911 = vsel %vm3883, %v3547, 0.0
      %v3912 = vsel %vm3884, %v3548, 0.0
      %v3913 = vadd.f32 %v3885, %v3886
      %v3914 = vadd.f32 %v3913, %v3887
      %v3915 = vadd.f32 %v3914, %v3888
      %v3916 = vadd.f32 %v3915, %v3889
      %v3917 = vadd.f32 %v3916, %v3890
      %v3918 = vadd.f32 %v3917, %v3891
      %v3919 = vadd.f32 %v3918, %v3892
      %v3920 = vadd.f32 %v3919, %v3893
      %v3921 = vadd.f32 %v3920, %v3894
      %v3922 = vadd.f32 %v3921, %v3895
      %v3923 = vadd.f32 %v3922, %v3896
      %v3924 = vadd.f32 %v3923, %v3897
      %v3925 = vadd.f32 %v3924, %v3898
      %v3926 = vadd.f32 %v3925, %v3899
      %v3927 = vadd.f32 %v3926, %v3900
      %v3928 = vadd.f32 %v3927, %v3901
      %v3929 = vadd.f32 %v3928, %v3902
      %v3930 = vadd.f32 %v3929, %v3903
      %v3931 = vadd.f32 %v3930, %v3904
      %v3932 = vadd.f32 %v3931, %v3905
      %v3933 = vadd.f32 %v3932, %v3906
      %v3934 = vadd.f32 %v3933, %v3907
      %v3935 = vadd.f32 %v3934, %v3908
      %v3936 = vadd.f32 %v3935, %v3909
      %v3937 = vadd.f32 %v3936, %v3910
      %v3938 = vadd.f32 %v3937, %v3911
      %v3939 = vadd.f32 %v3938, %v3912
      %v3940 = vrot.slane %v3939, 4
      %v3941 = vadd.f32 %v3939, %v3940
      %v3942 = vrot.slane %v3941, 2
      %v3943 = vadd.f32 %v3941, %v3942
      %v3944 = vrot.slane %v3943, 1
      %v3945 = vadd.f32 %v3943, %v3944
      %3946 = vst [vmem:[%s456] sm:$0x1] %v3945
      %v3947 = vmul.f32 %v3885, %v3885
      %v3948 = vmul.f32 %v3886, %v3886
      %v3949 = vmul.f32 %v3887, %v3887
      %v3950 = vmul.f32 %v3888, %v3888
      %v3951 = vmul.f32 %v3889, %v3889
      %v3952 = vmul.f32 %v3890, %v3890
      %v3953 = vmul.f32 %v3891, %v3891
      %v3954 = vmul.f32 %v3892, %v3892
      %v3955 = vmul.f32 %v3893, %v3893
      %v3956 = vmul.f32 %v3894, %v3894
      %v3957 = vmul.f32 %v3895, %v3895
      %v3958 = vmul.f32 %v3896, %v3896
      %v3959 = vmul.f32 %v3897, %v3897
      %v3960 = vmul.f32 %v3898, %v3898
      %v3961 = vmul.f32 %v3899, %v3899
      %v3962 = vmul.f32 %v3900, %v3900
      %v3963 = vmul.f32 %v3901, %v3901
      %v3964 = vmul.f32 %v3902, %v3902
      %v3965 = vmul.f32 %v3903, %v3903
      %v3966 = vmul.f32 %v3904, %v3904
      %v3967 = vmul.f32 %v3905, %v3905
      %v3968 = vmul.f32 %v3906, %v3906
      %v3969 = vmul.f32 %v3907, %v3907
      %v3970 = vmul.f32 %v3908, %v3908
      %v3971 = vmul.f32 %v3909, %v3909
      %v3972 = vmul.f32 %v3910, %v3910
      %v3973 = vmul.f32 %v3911, %v3911
      %v3974 = vmul.f32 %v3912, %v3912
      %v3975 = vadd.f32 %v3947, %v3948
      %v3976 = vadd.f32 %v3975, %v3949
      %v3977 = vadd.f32 %v3976, %v3950
      %v3978 = vadd.f32 %v3977, %v3951
      %v3979 = vadd.f32 %v3978, %v3952
      %v3980 = vadd.f32 %v3979, %v3953
      %v3981 = vadd.f32 %v3980, %v3954
      %v3982 = vadd.f32 %v3981, %v3955
      %v3983 = vadd.f32 %v3982, %v3956
      %v3984 = vadd.f32 %v3983, %v3957
      %v3985 = vadd.f32 %v3984, %v3958
      %v3986 = vadd.f32 %v3985, %v3959
      %v3987 = vadd.f32 %v3986, %v3960
      %v3988 = vadd.f32 %v3987, %v3961
      %v3989 = vadd.f32 %v3988, %v3962
      %v3990 = vadd.f32 %v3989, %v3963
      %v3991 = vadd.f32 %v3990, %v3964
      %v3992 = vadd.f32 %v3991, %v3965
      %v3993 = vadd.f32 %v3992, %v3966
      %v3994 = vadd.f32 %v3993, %v3967
      %v3995 = vadd.f32 %v3994, %v3968
      %v3996 = vadd.f32 %v3995, %v3969
      %v3997 = vadd.f32 %v3996, %v3970
      %v3998 = vadd.f32 %v3997, %v3971
      %v3999 = vadd.f32 %v3998, %v3972
      %v4000 = vadd.f32 %v3999, %v3973
      %v4001 = vadd.f32 %v4000, %v3974
      %v4002 = vrot.slane %v4001, 4
      %v4003 = vadd.f32 %v4001, %v4002
      %v4004 = vrot.slane %v4003, 2
      %v4005 = vadd.f32 %v4003, %v4004
      %v4006 = vrot.slane %v4005, 1
      %v4007 = vadd.f32 %v4005, %v4006
      %4008 = vst [vmem:[%s456 + $0x1] sm:$0x1] %v4007
      %s4009 = smul.u32 28, %s24
      %p4010 = scmp.lt.s32.totalorder %s23, 1
      %s4011 = scalar_select %p4010, %s23, 1
      %p4012 = scmp.lt.s32.totalorder %s4009, 27
      %s4013 = scalar_select %p4012, %s4009, 27
      %s4014 = smul.addr %s4011, 28
      %s4015 = sadd.s32 %s4013, %s4014
      %s4016 = smul.addr %s4015, 4
      %s4017 = scalar_lea.vmem %s6, %s4016
      %p4018 = scmp.lt.s32.totalorder %s23, 1
      %s4019 = scalar_select %p4018, %s23, 1
      %p4020 = scmp.lt.s32.totalorder %s24, 0
      %s4021 = scalar_select %p4020, %s24, 0
      %s4022 = sadd.s32 %s4021, %s4019
      %s4023 = smul.addr %s4022, 2
      %s4024 = scalar_lea.vmem %s7, %s4023
      // Predicated region
      $region45: #{conv_block2d.4} parent=43 // pred_check
        %p4025 = pneg %p206
      $region46: #{conv_block2d.4} parent=43 // pred_check_branch
        %4027 = sbr.rel (%p4025) target = $region48
      $region47: #{conv_block2d.4} parent=43 // pred_region
        %s4028 = smul.u32 28, %s24
      $region48: #{conv_block2d.4} parent=43 // pred_fallthru
        _
      // Predicated region
      $region49: #{conv_block2d.4} parent=43 // pred_check
        %p4029 = pneg %p234
      $region50: #{conv_block2d.4} parent=43 // pred_check_branch
        %4031 = sbr.rel (%p4029) target = $region52
      $region51: #{conv_block2d.4} parent=43 // pred_region
        _
      $region52: #{conv_block2d.4} parent=43 // pred_fallthru
        _
    $region44: #{conv_block2d.4} parent=5 // pred_fallthru
      _
    %p4032 = scmp.le.s32.totalorder 2, %s14
    // Predicated region
    $region53: #{conv_block2d.4} parent=5 // pred_check
      %p4033 = pneg %p4032
    $region54: #{conv_block2d.4} parent=5 // pred_check_branch
      %4035 = sbr.rel (%p4033) target = $region56
    $region55: #{conv_block2d.4} parent=5 // pred_region
      %s4036 = ssub.s32 %s14, 2
      // Predicated region
      $region57: #{conv_block2d.4} parent=55 // pred_check
        %p4037 = pneg %p212
      $region58: #{conv_block2d.4} parent=55 // pred_check_branch
        %4039 = sbr.rel (%p4037) target = $region60
      $region59: #{conv_block2d.4} parent=55 // pred_region
        %s4040 = smul.u32 28, %s26
        %p4041 = scmp.lt.s32.totalorder %s25, 1
        %s4042 = scalar_select %p4041, %s25, 1
        %p4043 = scmp.lt.s32.totalorder %s4040, 27
        %s4044 = scalar_select %p4043, %s4040, 27
        %s4045 = smul.addr %s4042, 28
        %s4046 = sadd.s32 %s4044, %s4045
        %s4047 = smul.addr %s4046, 4
        %s4048 = scalar_lea.vmem %s6, %s4047
      $region60: #{conv_block2d.4} parent=55 // pred_fallthru
        _
      // Predicated region
      $region61: #{conv_block2d.4} parent=55 // pred_check
        %p4049 = pneg %p240
      $region62: #{conv_block2d.4} parent=55 // pred_check_branch
        %4051 = sbr.rel (%p4049) target = $region64
      $region63: #{conv_block2d.4} parent=55 // pred_region
        %p4052 = scmp.lt.s32.totalorder %s25, 1
        %s4053 = scalar_select %p4052, %s25, 1
        %p4054 = scmp.lt.s32.totalorder %s26, 0
        %s4055 = scalar_select %p4054, %s26, 0
        %s4056 = sadd.s32 %s4055, %s4053
        %s4057 = smul.addr %s4056, 2
        %s4058 = scalar_lea.vmem %s7, %s4057
      $region64: #{conv_block2d.4} parent=55 // pred_fallthru
        _
    $region56: #{conv_block2d.4} parent=5 // pred_fallthru
      _
  $region6: #{conv_block2d.4} parent=0 // loop_footer
    %s18 = sadd.s32 1, %s14
  $region7: #{conv_block2d.4} parent=0 // loop_footer_branch
    %13 = sbr.rel target = $region3
  $region8: #{conv_block2d.4} parent=0 // loop_exit
    _

// kernel: conv_block2d.5
$region0: #{conv_block2d.5}
  #allocation0 [shape = 'u32[]', space=smem, size = 0x4, offset = 0x4, fixed_abs, tag = 'smem constant byte address 0x4 - core index']
  #allocation1 [shape = 'u32[144,128]{1,0:T(1,128)}', space=vmem, size = 0x12000, scoped, tag = 'internal scratch']
  #allocation2 [shape = 'bf16[232,128]{1,0:T(8,128)(2,1)}', space=vmem, size = 0xe800, scoped, tag = 'scratch operand']
  %s0 = inlined_call_operand.vmem [shape: bf16[2,224,128], index: 0, kind: input, shape index: {}, may-alias: {0,1,2}]
  %s1 = inlined_call_operand.vmem [shape: bf16[2,224,128], index: 1, kind: input, shape index: {}, may-alias: {0,1,2}]
  %s2 = inlined_call_operand.vmem [shape: bf16[2,224,128], index: 2, kind: input, shape index: {}, may-alias: {0,1,2}]
  %s3 = inlined_call_operand.vmem [shape: f32[1,128], index: 3, kind: input, shape index: {}]
  %s4 = inlined_call_operand.vmem [shape: f32[1,128], index: 4, kind: input, shape index: {}]
  %s5 = inlined_call_operand.vmem [shape: bf16[3,3,128,128], index: 5, kind: input, shape index: {}]
  %s6 = inlined_call_operand.vmem [shape: f32[1,128], index: 6, kind: input, shape index: {}]
  %s7 = inlined_call_operand.vmem [shape: f32[192,1], index: 7, kind: input, shape index: {}]
  %s8 = inlined_call_operand.vmem [shape: bf16[2,192,128], index: 8, kind: output, shape index: {0}]
  %s9 = inlined_call_operand.vmem [shape: f32[2,1,2,128], index: 9, kind: output, shape index: {1}]
  %10 = xla_tuple %s8, %s9
  %s11 = sld [smem:[#allocation0]]
  $region73: #{conv_block2d.5} parent=0
    _
  %s13 = ssub.s32 1, %s11
  %s14 = scalar_select 0, %s13, %s11
  loop: start=0, step=1, limit=4
  $region2: #{conv_block2d.5} parent=0 // loop_pre_header
    _
  $region3: #{conv_block2d.5} parent=0 // loop_header
    %s16 = sphi 0, %s20
    %p17 = scmp.ge.s32.totalorder %s16, 4
    %s23 = sphi 0, %s35
    %s24 = sphi 0, %s31
    %s25 = sphi 0, %s23
    %s26 = sphi 0, %s24
    %s27 = sphi 0, %s25
    %s28 = sphi 0, %s26
    %s40 = sphi 0, %s42
    %s43 = sphi 0, %s40
    %s44 = sphi 0, %s43
    %s60 = sphi 0, %s44
    %s72 = sphi 0, %s74
    %s75 = sphi 0, %s72
    %s76 = sphi 0, %s75
    %s92 = sphi 0, %s76
    %s104 = sphi 0, %s106
    %s107 = sphi 0, %s104
    %s108 = sphi 0, %s107
    %s124 = sphi 0, %s108
    %s128 = sphi 0, %s128
    %s130 = sphi 0, %s128
    %s131 = sphi 0, %s130
    %s145 = sphi 0, %s131
    %s149 = sphi 0, %s149
    %s151 = sphi 0, %s149
    %s152 = sphi 0, %s151
    %s166 = sphi 0, %s152
    %s170 = sphi 0, %s170
    %s172 = sphi 0, %s170
    %s173 = sphi 0, %s172
    %s187 = sphi 0, %s173
    %s191 = sphi 0, %s191
    %s193 = sphi 0, %s191
    %s194 = sphi 0, %s193
    %s208 = sphi 0, %s194
    %s212 = sphi 0, %s212
    %s214 = sphi 0, %s212
    %s215 = sphi 0, %s214
    %s229 = sphi 0, %s215
    %s237 = sphi 0, %s239
    %s240 = sphi 0, %s237
    %s241 = sphi 0, %s240
    %s257 = sphi 0, %s241
    %s265 = sphi 0, %s267
    %s268 = sphi 0, %s265
    %s269 = sphi 0, %s268
    %s285 = sphi 0, %s269
  $region4: #{conv_block2d.5} parent=0 // loop_header_branch
    %19 = sbr.rel (%p17) target = $region8
  $region5: #{conv_block2d.5} parent=0 // loop_body
    %s21 = ssub.s32 %s16, 1
    %s22 = ssub.s32 %s16, 2
    %s29 = sadd.s32 1, %s24
    %p30 = scmp.ge.s32.totalorder %s29, 1
    %s31 = scalar_select %p30, 0, %s29
    %s32 = sadd.s32 1, %s23
    %s33 = scalar_select %p30, %s32, %s23
    %p34 = scmp.ge.s32.totalorder %s33, 2
    %s35 = scalar_select %p34, 0, %s33
    %s36 = ssub.s32 %s23, %s35
    %s37 = ssub.s32 %s24, %s31
    %s38 = sor.u32 %s36, %s37
    %p39 = scmp.eq.s32.totalorder %s38, 0
    %s41 = sadd.s32 %s40, 1
    %s42 = scalar_select %p39, %s40, %s41
    %p45 = pneg %p39
    %p46 = scmp.eq.s32.totalorder %s16, 1
    %p47 = por %p45, %p46
    %p48 = scmp.ne.s32.totalorder %s40, %s43
    %p49 = scmp.eq.s32.totalorder %s16, 0
    %p50 = por %p48, %p49
    %p51 = scmp.ne.s32.totalorder %s40, %s43
    %p52 = scmp.eq.s32.totalorder %s21, 1
    %p53 = por %p51, %p52
    %p54 = scmp.ne.s32.totalorder %s43, %s44
    %p55 = scmp.eq.s32.totalorder %s21, 0
    %p56 = por %p54, %p55
    %p57 = scmp.ne.s32.totalorder %s43, %s44
    %p58 = scmp.eq.s32.totalorder %s22, 1
    %p59 = por %p57, %p58
    %p61 = scmp.ne.s32.totalorder %s44, %s60
    %p62 = scmp.eq.s32.totalorder %s22, 0
    %p63 = por %p61, %p62
    %s64 = smul.u32 %s24, 12
    %s65 = sadd.s32 %s64, 12
    %s66 = smul.u32 %s31, 12
    %s67 = sadd.s32 %s66, 12
    %s68 = ssub.s32 %s23, %s35
    %s69 = ssub.s32 %s65, %s67
    %s70 = sor.u32 %s68, %s69
    %p71 = scmp.eq.s32.totalorder %s70, 0
    %s73 = sadd.s32 %s72, 1
    %s74 = scalar_select %p71, %s72, %s73
    %p77 = pneg %p71
    %p78 = scmp.eq.s32.totalorder %s16, 1
    %p79 = por %p77, %p78
    %p80 = scmp.ne.s32.totalorder %s72, %s75
    %p81 = scmp.eq.s32.totalorder %s16, 0
    %p82 = por %p80, %p81
    %p83 = scmp.ne.s32.totalorder %s72, %s75
    %p84 = scmp.eq.s32.totalorder %s21, 1
    %p85 = por %p83, %p84
    %p86 = scmp.ne.s32.totalorder %s75, %s76
    %p87 = scmp.eq.s32.totalorder %s21, 0
    %p88 = por %p86, %p87
    %p89 = scmp.ne.s32.totalorder %s75, %s76
    %p90 = scmp.eq.s32.totalorder %s22, 1
    %p91 = por %p89, %p90
    %p93 = scmp.ne.s32.totalorder %s76, %s92
    %p94 = scmp.eq.s32.totalorder %s22, 0
    %p95 = por %p93, %p94
    %s96 = smul.u32 %s24, 12
    %s97 = sadd.s32 %s96, 13
    %s98 = smul.u32 %s31, 12
    %s99 = sadd.s32 %s98, 13
    %s100 = ssub.s32 %s23, %s35
    %s101 = ssub.s32 %s97, %s99
    %s102 = sor.u32 %s100, %s101
    %p103 = scmp.eq.s32.totalorder %s102, 0
    %s105 = sadd.s32 %s104, 1
    %s106 = scalar_select %p103, %s104, %s105
    %p109 = pneg %p103
    %p110 = scmp.eq.s32.totalorder %s16, 1
    %p111 = por %p109, %p110
    %p112 = scmp.ne.s32.totalorder %s104, %s107
    %p113 = scmp.eq.s32.totalorder %s16, 0
    %p114 = por %p112, %p113
    %p115 = scmp.ne.s32.totalorder %s104, %s107
    %p116 = scmp.eq.s32.totalorder %s21, 1
    %p117 = por %p115, %p116
    %p118 = scmp.ne.s32.totalorder %s107, %s108
    %p119 = scmp.eq.s32.totalorder %s21, 0
    %p120 = por %p118, %p119
    %p121 = scmp.ne.s32.totalorder %s107, %s108
    %p122 = scmp.eq.s32.totalorder %s22, 1
    %p123 = por %p121, %p122
    %p125 = scmp.ne.s32.totalorder %s108, %s124
    %p126 = scmp.eq.s32.totalorder %s22, 0
    %p127 = por %p125, %p126
    %s129 = sadd.s32 %s128, 1
    %p132 = scmp.eq.s32.totalorder %s16, 1
    %p133 = scmp.ne.s32.totalorder %s128, %s130
    %p134 = scmp.eq.s32.totalorder %s16, 0
    %p135 = por %p133, %p134
    %p136 = scmp.ne.s32.totalorder %s128, %s130
    %p137 = scmp.eq.s32.totalorder %s21, 1
    %p138 = por %p136, %p137
    %p139 = scmp.ne.s32.totalorder %s130, %s131
    %p140 = scmp.eq.s32.totalorder %s21, 0
    %p141 = por %p139, %p140
    %p142 = scmp.ne.s32.totalorder %s130, %s131
    %p143 = scmp.eq.s32.totalorder %s22, 1
    %p144 = por %p142, %p143
    %p146 = scmp.ne.s32.totalorder %s131, %s145
    %p147 = scmp.eq.s32.totalorder %s22, 0
    %p148 = por %p146, %p147
    %s150 = sadd.s32 %s149, 1
    %p153 = scmp.eq.s32.totalorder %s16, 1
    %p154 = scmp.ne.s32.totalorder %s149, %s151
    %p155 = scmp.eq.s32.totalorder %s16, 0
    %p156 = por %p154, %p155
    %p157 = scmp.ne.s32.totalorder %s149, %s151
    %p158 = scmp.eq.s32.totalorder %s21, 1
    %p159 = por %p157, %p158
    %p160 = scmp.ne.s32.totalorder %s151, %s152
    %p161 = scmp.eq.s32.totalorder %s21, 0
    %p162 = por %p160, %p161
    %p163 = scmp.ne.s32.totalorder %s151, %s152
    %p164 = scmp.eq.s32.totalorder %s22, 1
    %p165 = por %p163, %p164
    %p167 = scmp.ne.s32.totalorder %s152, %s166
    %p168 = scmp.eq.s32.totalorder %s22, 0
    %p169 = por %p167, %p168
    %s171 = sadd.s32 %s170, 1
    %p174 = scmp.eq.s32.totalorder %s16, 1
    %p175 = scmp.ne.s32.totalorder %s170, %s172
    %p176 = scmp.eq.s32.totalorder %s16, 0
    %p177 = por %p175, %p176
    %p178 = scmp.ne.s32.totalorder %s170, %s172
    %p179 = scmp.eq.s32.totalorder %s21, 1
    %p180 = por %p178, %p179
    %p181 = scmp.ne.s32.totalorder %s172, %s173
    %p182 = scmp.eq.s32.totalorder %s21, 0
    %p183 = por %p181, %p182
    %p184 = scmp.ne.s32.totalorder %s172, %s173
    %p185 = scmp.eq.s32.totalorder %s22, 1
    %p186 = por %p184, %p185
    %p188 = scmp.ne.s32.totalorder %s173, %s187
    %p189 = scmp.eq.s32.totalorder %s22, 0
    %p190 = por %p188, %p189
    %s192 = sadd.s32 %s191, 1
    %p195 = scmp.eq.s32.totalorder %s16, 1
    %p196 = scmp.ne.s32.totalorder %s191, %s193
    %p197 = scmp.eq.s32.totalorder %s16, 0
    %p198 = por %p196, %p197
    %p199 = scmp.ne.s32.totalorder %s191, %s193
    %p200 = scmp.eq.s32.totalorder %s21, 1
    %p201 = por %p199, %p200
    %p202 = scmp.ne.s32.totalorder %s193, %s194
    %p203 = scmp.eq.s32.totalorder %s21, 0
    %p204 = por %p202, %p203
    %p205 = scmp.ne.s32.totalorder %s193, %s194
    %p206 = scmp.eq.s32.totalorder %s22, 1
    %p207 = por %p205, %p206
    %p209 = scmp.ne.s32.totalorder %s194, %s208
    %p210 = scmp.eq.s32.totalorder %s22, 0
    %p211 = por %p209, %p210
    %s213 = sadd.s32 %s212, 1
    %p216 = scmp.eq.s32.totalorder %s16, 1
    %p217 = scmp.ne.s32.totalorder %s212, %s214
    %p218 = scmp.eq.s32.totalorder %s16, 0
    %p219 = por %p217, %p218
    %p220 = scmp.ne.s32.totalorder %s212, %s214
    %p221 = scmp.eq.s32.totalorder %s21, 1
    %p222 = por %p220, %p221
    %p223 = scmp.ne.s32.totalorder %s214, %s215
    %p224 = scmp.eq.s32.totalorder %s21, 0
    %p225 = por %p223, %p224
    %p226 = scmp.ne.s32.totalorder %s214, %s215
    %p227 = scmp.eq.s32.totalorder %s22, 1
    %p228 = por %p226, %p227
    %p230 = scmp.ne.s32.totalorder %s215, %s229
    %p231 = scmp.eq.s32.totalorder %s22, 0
    %p232 = por %p230, %p231
    %s233 = ssub.s32 %s23, %s35
    %s234 = ssub.s32 %s24, %s31
    %s235 = sor.u32 %s233, %s234
    %p236 = scmp.eq.s32.totalorder %s235, 0
    %s238 = sadd.s32 %s237, 1
    %s239 = scalar_select %p236, %s237, %s238
    %p242 = pneg %p236
    %p243 = scmp.eq.s32.totalorder %s16, 1
    %p244 = por %p242, %p243
    %p245 = scmp.ne.s32.totalorder %s237, %s240
    %p246 = scmp.eq.s32.totalorder %s16, 0
    %p247 = por %p245, %p246
    %p248 = scmp.ne.s32.totalorder %s237, %s240
    %p249 = scmp.eq.s32.totalorder %s21, 1
    %p250 = por %p248, %p249
    %p251 = scmp.ne.s32.totalorder %s240, %s241
    %p252 = scmp.eq.s32.totalorder %s21, 0
    %p253 = por %p251, %p252
    %p254 = scmp.ne.s32.totalorder %s240, %s241
    %p255 = scmp.eq.s32.totalorder %s22, 1
    %p256 = por %p254, %p255
    %p258 = scmp.ne.s32.totalorder %s241, %s257
    %p259 = scmp.eq.s32.totalorder %s22, 0
    %p260 = por %p258, %p259
    %s261 = ssub.s32 %s23, %s35
    %s262 = ssub.s32 %s24, %s31
    %s263 = sor.u32 %s261, %s262
    %p264 = scmp.eq.s32.totalorder %s263, 0
    %s266 = sadd.s32 %s265, 1
    %s267 = scalar_select %p264, %s265, %s266
    %p270 = pneg %p264
    %p271 = scmp.eq.s32.totalorder %s16, 1
    %p272 = por %p270, %p271
    %p273 = scmp.ne.s32.totalorder %s265, %s268
    %p274 = scmp.eq.s32.totalorder %s16, 0
    %p275 = por %p273, %p274
    %p276 = scmp.ne.s32.totalorder %s265, %s268
    %p277 = scmp.eq.s32.totalorder %s21, 1
    %p278 = por %p276, %p277
    %p279 = scmp.ne.s32.totalorder %s268, %s269
    %p280 = scmp.eq.s32.totalorder %s21, 0
    %p281 = por %p279, %p280
    %p282 = scmp.ne.s32.totalorder %s268, %s269
    %p283 = scmp.eq.s32.totalorder %s22, 1
    %p284 = por %p282, %p283
    %p286 = scmp.ne.s32.totalorder %s269, %s285
    %p287 = scmp.eq.s32.totalorder %s22, 0
    %p288 = por %p286, %p287
    %p289 = scmp.le.s32.totalorder 1, %s16
    %p290 = scmp.lt.s32.totalorder %s16, 3
    %p291 = pnand %p289, %p290
    %p292 = pneg %p291
    // Predicated region
    $region9: #{conv_block2d.5} parent=5 // pred_check
      _
    $region10: #{conv_block2d.5} parent=5 // pred_check_branch
      %294 = sbr.rel (%p291) target = $region12
    $region11: #{conv_block2d.5} parent=5 // pred_region
      %s295 = ssub.s32 %s16, 1
      // Predicated region
      $region13: #{conv_block2d.5} parent=11 // pred_check
        %p296 = pneg %p141
      $region14: #{conv_block2d.5} parent=11 // pred_check_branch
        %298 = sbr.rel (%p296) target = $region16
      $region15: #{conv_block2d.5} parent=11 // pred_region
        _
      $region16: #{conv_block2d.5} parent=11 // pred_fallthru
        _
      // Predicated region
      $region17: #{conv_block2d.5} parent=11 // pred_check
        %p299 = pneg %p162
      $region18: #{conv_block2d.5} parent=11 // pred_check_branch
        %301 = sbr.rel (%p299) target = $region20
      $region19: #{conv_block2d.5} parent=11 // pred_region
        _
      $region20: #{conv_block2d.5} parent=11 // pred_fallthru
        _
      // Predicated region
      $region21: #{conv_block2d.5} parent=11 // pred_check
        %p302 = pneg %p183
      $region22: #{conv_block2d.5} parent=11 // pred_check_branch
        %304 = sbr.rel (%p302) target = $region24
      $region23: #{conv_block2d.5} parent=11 // pred_region
        _
      $region24: #{conv_block2d.5} parent=11 // pred_fallthru
        _
      // Predicated region
      $region25: #{conv_block2d.5} parent=11 // pred_check
        %p305 = pneg %p204
      $region26: #{conv_block2d.5} parent=11 // pred_check_branch
        %307 = sbr.rel (%p305) target = $region28
      $region27: #{conv_block2d.5} parent=11 // pred_region
        _
      $region28: #{conv_block2d.5} parent=11 // pred_fallthru
        _
      // Predicated region
      $region29: #{conv_block2d.5} parent=11 // pred_check
        %p308 = pneg %p225
      $region30: #{conv_block2d.5} parent=11 // pred_check_branch
        %310 = sbr.rel (%p308) target = $region32
      $region31: #{conv_block2d.5} parent=11 // pred_region
        _
      $region32: #{conv_block2d.5} parent=11 // pred_fallthru
        _
    $region12: #{conv_block2d.5} parent=5 // pred_fallthru
      _
    %p311 = scmp.lt.s32.totalorder %s16, 2
    // Predicated region
    $region33: #{conv_block2d.5} parent=5 // pred_check
      %p312 = pneg %p311
    $region34: #{conv_block2d.5} parent=5 // pred_check_branch
      %314 = sbr.rel (%p312) target = $region36
    $region35: #{conv_block2d.5} parent=5 // pred_region
      // Predicated region
      $region37: #{conv_block2d.5} parent=35 // pred_check
        %p315 = pneg %p50
      $region38: #{conv_block2d.5} parent=35 // pred_check_branch
        %317 = sbr.rel (%p315) target = $region40
      $region39: #{conv_block2d.5} parent=35 // pred_region
        %s318 = smul.u32 24, %s24
        %s319 = ssub.s32 28, %s318
        %p320 = scmp.lt.s32.totalorder %s319, 24
        %s321 = scalar_select %p320, %s319, 24
        %s322 = smul.u32 64, %s321
        %p323 = scmp.lt.s32.totalorder %s23, 1
        %s324 = scalar_select %p323, %s23, 1
        %p325 = scmp.lt.s32.totalorder %s318, 27
        %s326 = scalar_select %p325, %s318, 27
        %s327 = smul.addr %s324, 28
        %s328 = sadd.s32 %s326, %s327
        %s329 = smul.addr %s328, 4
        %s330 = scalar_lea.vmem %s0, %s329
        %s331 = smul.u32 24, %s24
        %s332 = ssub.s32 28, %s331
        %p333 = scmp.lt.s32.totalorder %s332, 24
        %s334 = scalar_select %p333, %s332, 24
        %s335 = smul.u32 64, %s334
      $region40: #{conv_block2d.5} parent=35 // pred_fallthru
        _
      // Predicated region
      $region41: #{conv_block2d.5} parent=35 // pred_check
        %p336 = pneg %p82
      $region42: #{conv_block2d.5} parent=35 // pred_check_branch
        %338 = sbr.rel (%p336) target = $region44
      $region43: #{conv_block2d.5} parent=35 // pred_region
        %s339 = smul.u32 %s24, 12
        %s340 = sadd.s32 %s339, 12
        %s341 = smul.u32 2, %s340
        %p342 = scmp.lt.s32.totalorder %s23, 1
        %s343 = scalar_select %p342, %s23, 1
        %p344 = scmp.lt.s32.totalorder %s341, 27
        %s345 = scalar_select %p344, %s341, 27
        %s346 = smul.addr %s343, 28
        %s347 = sadd.s32 %s345, %s346
        %s348 = smul.addr %s347, 4
        %s349 = scalar_lea.vmem %s1, %s348
        %s350 = smul.u32 %s24, 12
        %s351 = sadd.s32 %s350, 12
        %s352 = smul.u32 2, %s351
      $region44: #{conv_block2d.5} parent=35 // pred_fallthru
        _
      // Predicated region
      $region45: #{conv_block2d.5} parent=35 // pred_check
        %p353 = pneg %p114
      $region46: #{conv_block2d.5} parent=35 // pred_check_branch
        %355 = sbr.rel (%p353) target = $region48
      $region47: #{conv_block2d.5} parent=35 // pred_region
        %s356 = smul.u32 %s24, 12
        %s357 = sadd.s32 %s356, 13
        %s358 = smul.u32 2, %s357
        %p359 = scmp.lt.s32.totalorder %s23, 1
        %s360 = scalar_select %p359, %s23, 1
        %p361 = scmp.lt.s32.totalorder %s358, 27
        %s362 = scalar_select %p361, %s358, 27
        %s363 = smul.addr %s360, 28
        %s364 = sadd.s32 %s362, %s363
        %s365 = smul.addr %s364, 4
        %s366 = scalar_lea.vmem %s2, %s365
        %s367 = smul.u32 %s24, 12
        %s368 = sadd.s32 %s367, 13
        %s369 = smul.u32 2, %s368
      $region48: #{conv_block2d.5} parent=35 // pred_fallthru
        _
    $region36: #{conv_block2d.5} parent=5 // pred_fallthru
      _
    %p370 = scmp.le.s32.totalorder 1, %s16
    %p371 = scmp.lt.s32.totalorder %s16, 3
    %p372 = pnand %p370, %p371
    %p373 = pneg %p372
    // Predicated region
    $region49: #{conv_block2d.5} parent=5 // pred_check
      _
    $region50: #{conv_block2d.5} parent=5 // pred_check_branch
      %375 = sbr.rel (%p372) target = $region52
    $region51: #{conv_block2d.5} parent=5 // pred_region
      %s376 = ssub.s32 %s16, 1
      %s377 = smul.u32 24, %s26
      %s378 = ssub.s32 28, %s377
      %p379 = scmp.lt.s32.totalorder %s378, 24
      %s380 = scalar_select %p379, %s378, 24
      %s381 = smul.u32 64, %s380
      %p382 = scmp.lt.s32.totalorder %s25, 1
      %s383 = scalar_select %p382, %s25, 1
      %p384 = scmp.lt.s32.totalorder %s377, 27
      %s385 = scalar_select %p384, %s377, 27
      %s386 = smul.addr %s383, 28
      %s387 = sadd.s32 %s385, %s386
      %s388 = smul.addr %s387, 4
      %s389 = scalar_lea.vmem %s0, %s388
      %p390 = pneg %p56
      %p391 = pneg %p53
      %s392 = smul.u32 %s26, 12
      %s393 = sadd.s32 %s392, 12
      %s394 = smul.u32 2, %s393
      %p395 = scmp.lt.s32.totalorder %s25, 1
      %s396 = scalar_select %p395, %s25, 1
      %p397 = scmp.lt.s32.totalorder %s394, 27
      %s398 = scalar_select %p397, %s394, 27
      %s399 = smul.addr %s396, 28
      %s400 = sadd.s32 %s398, %s399
      %s401 = smul.addr %s400, 4
      %s402 = scalar_lea.vmem %s1, %s401
      %p403 = pneg %p88
      %p404 = pneg %p85
      %s405 = smul.u32 %s26, 12
      %s406 = sadd.s32 %s405, 13
      %s407 = smul.u32 2, %s406
      %p408 = scmp.lt.s32.totalorder %s25, 1
      %s409 = scalar_select %p408, %s25, 1
      %p410 = scmp.lt.s32.totalorder %s407, 27
      %s411 = scalar_select %p410, %s407, 27
      %s412 = smul.addr %s409, 28
      %s413 = sadd.s32 %s411, %s412
      %s414 = smul.addr %s413, 4
      %s415 = scalar_lea.vmem %s2, %s414
      %p416 = pneg %p120
      %p417 = pneg %p117
      %p418 = pneg %p141
      %p419 = pneg %p138
      %p420 = pneg %p162
      %p421 = pneg %p159
      %p422 = pneg %p183
      %p423 = pneg %p180
      %p424 = pneg %p204
      %p425 = pneg %p201
      %p426 = pneg %p225
      %p427 = pneg %p222
      %p428 = pneg %p253
      %p429 = pneg %p250
      %s430 = smul.u32 24, %s26
      %p431 = scmp.lt.s32.totalorder %s25, 1
      %s432 = scalar_select %p431, %s25, 1
      %p433 = scmp.lt.s32.totalorder %s430, 23
      %s434 = scalar_select %p433, %s430, 23
      %s435 = smul.addr %s432, 24
      %s436 = sadd.s32 %s434, %s435
      %s437 = smul.addr %s436, 4
      %s438 = scalar_lea.vmem %s8, %s437
      %p439 = pneg %p281
      %p440 = pneg %p278
      %p441 = scmp.lt.s32.totalorder %s25, 1
      %s442 = scalar_select %p441, %s25, 1
      %p443 = scmp.lt.s32.totalorder %s26, 0
      %s444 = scalar_select %p443, %s26, 0
      %s445 = sadd.s32 %s444, %s442
      %s446 = smul.addr %s445, 2
      %s447 = scalar_lea.vmem %s9, %s446
      %s448 = smul.u32 24, %s26
      %s449 = ssub.s32 28, %s448
      %p450 = scmp.lt.s32.totalorder %s449, 24
      %s451 = scalar_select %p450, %s449, 24
      %s452 = smul.u32 64, %s451
      %p453 = scmp.lt.s32.totalorder %s25, 1
      %s454 = scalar_select %p453, %s25, 1
      %p455 = scmp.lt.s32.totalorder %s448, 27
      %s456 = scalar_select %p455, %s448, 27
      %s457 = smul.addr %s454, 28
      %s458 = sadd.s32 %s456, %s457
      %s459 = smul.addr %s458, 4
      %s460 = scalar_lea.vmem %s0, %s459
      %s461 = smul.u32 24, %s26
      %s462 = ssub.s32 28, %s461
      %p463 = scmp.lt.s32.totalorder %s462, 24
      %s464 = scalar_select %p463, %s462, 24
      %s465 = smul.u32 64, %s464
      %s466 = smul.u32 %s26, 12
      %s467 = sadd.s32 %s466, 12
      %s468 = smul.u32 2, %s467
      %p469 = scmp.lt.s32.totalorder %s25, 1
      %s470 = scalar_select %p469, %s25, 1
      %p471 = scmp.lt.s32.totalorder %s468, 27
      %s472 = scalar_select %p471, %s468, 27
      %s473 = smul.addr %s470, 28
      %s474 = sadd.s32 %s472, %s473
      %s475 = smul.addr %s474, 4
      %s476 = scalar_lea.vmem %s1, %s475
      %s477 = smul.u32 %s26, 12
      %s478 = sadd.s32 %s477, 12
      %s479 = smul.u32 2, %s478
      %s480 = smul.u32 %s26, 12
      %s481 = sadd.s32 %s480, 13
      %s482 = smul.u32 2, %s481
      %p483 = scmp.lt.s32.totalorder %s25, 1
      %s484 = scalar_select %p483, %s25, 1
      %p485 = scmp.lt.s32.totalorder %s482, 27
      %s486 = scalar_select %p485, %s482, 27
      %s487 = smul.addr %s484, 28
      %s488 = sadd.s32 %s486, %s487
      %s489 = smul.addr %s488, 4
      %s490 = scalar_lea.vmem %s2, %s489
      %s491 = smul.u32 %s26, 12
      %s492 = sadd.s32 %s491, 13
      %s493 = smul.u32 2, %s492
      %s494 = smul.u32 24, %s26
      %p495 = scmp.lt.s32.totalorder %s25, 1
      %s496 = scalar_select %p495, %s25, 1
      %p497 = scmp.lt.s32.totalorder %s494, 23
      %s498 = scalar_select %p497, %s494, 23
      %s499 = smul.addr %s496, 24
      %s500 = sadd.s32 %s498, %s499
      %s501 = smul.addr %s500, 4
      %s502 = scalar_lea.vmem %s8, %s501
      %s503 = smul.u32 24, %s26
      %p504 = scmp.lt.s32.totalorder %s25, 1
      %s505 = scalar_select %p504, %s25, 1
      %p506 = scmp.lt.s32.totalorder %s26, 0
      %s507 = scalar_select %p506, %s26, 0
      %s508 = sadd.s32 %s507, %s505
      %s509 = smul.addr %s508, 2
      %s510 = scalar_lea.vmem %s9, %s509
      %v512 = vld [vmem:[%s460] sm:$0xf]
      %v513 = vld [vmem:[%s460 + $0x4] sm:$0xf]
      %v514 = vld [vmem:[%s460 + $0x8] sm:$0xf]
      %v515 = vld [vmem:[%s460 + $0xc] sm:$0xf]
      %v516 = vld [vmem:[%s460 + $0x10] sm:$0xf]
      %v517 = vld [vmem:[%s460 + $0x14] sm:$0xf]
      %v518 = vld [vmem:[%s460 + $0x18] sm:$0xf]
      %v519 = vld [vmem:[%s460 + $0x1c] sm:$0xf]
      %v520 = vld [vmem:[%s460 + $0x20] sm:$0xf]
      %v521 = vld [vmem:[%s460 + $0x24] sm:$0xf]
      %v522 = vld [vmem:[%s460 + $0x28] sm:$0xf]
      %v523 = vld [vmem:[%s460 + $0x2c] sm:$0xf]
      %v524 = vld [vmem:[%s460 + $0x30] sm:$0xf]
      %v525 = vld [vmem:[%s460 + $0x34] sm:$0xf]
      %v526 = vld [vmem:[%s460 + $0x38] sm:$0xf]
      %v527 = vld [vmem:[%s460 + $0x3c] sm:$0xf]
      %v528 = vld [vmem:[%s460 + $0x40] sm:$0xf]
      %v529 = vld [vmem:[%s460 + $0x44] sm:$0xf]
      %v530 = vld [vmem:[%s460 + $0x48] sm:$0xf]
      %v531 = vld [vmem:[%s460 + $0x4c] sm:$0xf]
      %v532 = vld [vmem:[%s460 + $0x50] sm:$0xf]
      %v533 = vld [vmem:[%s460 + $0x54] sm:$0xf]
      %v534 = vld [vmem:[%s460 + $0x58] sm:$0xf]
      %v535 = vld [vmem:[%s460 + $0x5c] sm:$0xf]
      %v536 = vunpack.c.l.bf16 %v512
      %v537 = vunpack.c.l.bf16 %v513
      %v538 = vunpack.c.l.bf16 %v514
      %v539 = vunpack.c.l.bf16 %v515
      %v540 = vunpack.c.l.bf16 %v516
      %v541 = vunpack.c.l.bf16 %v517
      %v542 = vunpack.c.l.bf16 %v518
      %v543 = vunpack.c.l.bf16 %v519
      %v544 = vunpack.c.l.bf16 %v520
      %v545 = vunpack.c.l.bf16 %v521
      %v546 = vunpack.c.l.bf16 %v522
      %v547 = vunpack.c.l.bf16 %v523
      %v548 = vunpack.c.l.bf16 %v524
      %v549 = vunpack.c.l.bf16 %v525
      %v550 = vunpack.c.l.bf16 %v526
      %v551 = vunpack.c.l.bf16 %v527
      %v552 = vunpack.c.l.bf16 %v528
      %v553 = vunpack.c.l.bf16 %v529
      %v554 = vunpack.c.l.bf16 %v530
      %v555 = vunpack.c.l.bf16 %v531
      %v556 = vunpack.c.l.bf16 %v532
      %v557 = vunpack.c.l.bf16 %v533
      %v558 = vunpack.c.l.bf16 %v534
      %v559 = vunpack.c.l.bf16 %v535
      %v560 = vld [vmem:[%s3] sm:$0x1]
      %v562 = vlaneseq
      %v563 = vshrl.u32 %v562, 7
      %v564 = vsub.s32 0, %v563
      %v565 = vrot.slane %v560, %v564
      %v567 = vmul.f32 %v536, %v565
      %v568 = vmul.f32 %v537, %v565
      %v569 = vmul.f32 %v538, %v565
      %v570 = vmul.f32 %v539, %v565
      %v571 = vmul.f32 %v540, %v565
      %v572 = vmul.f32 %v541, %v565
      %v573 = vmul.f32 %v542, %v565
      %v574 = vmul.f32 %v543, %v565
      %v575 = vmul.f32 %v544, %v565
      %v576 = vmul.f32 %v545, %v565
      %v577 = vmul.f32 %v546, %v565
      %v578 = vmul.f32 %v547, %v565
      %v579 = vmul.f32 %v548, %v565
      %v580 = vmul.f32 %v549, %v565
      %v581 = vmul.f32 %v550, %v565
      %v582 = vmul.f32 %v551, %v565
      %v583 = vmul.f32 %v552, %v565
      %v584 = vmul.f32 %v553, %v565
      %v585 = vmul.f32 %v554, %v565
      %v586 = vmul.f32 %v555, %v565
      %v587 = vmul.f32 %v556, %v565
      %v588 = vmul.f32 %v557, %v565
      %v589 = vmul.f32 %v558, %v565
      %v590 = vmul.f32 %v559, %v565
      %v591 = vld [vmem:[%s4] sm:$0x1]
      %v593 = vlaneseq
      %v594 = vshrl.u32 %v593, 7
      %v595 = vsub.s32 0, %v594
      %v596 = vrot.slane %v591, %v595
      %v598 = vadd.f32 %v567, %v596
      %v599 = vadd.f32 %v568, %v596
      %v600 = vadd.f32 %v569, %v596
      %v601 = vadd.f32 %v570, %v596
      %v602 = vadd.f32 %v571, %v596
      %v603 = vadd.f32 %v572, %v596
      %v604 = vadd.f32 %v573, %v596
      %v605 = vadd.f32 %v574, %v596
      %v606 = vadd.f32 %v575, %v596
      %v607 = vadd.f32 %v576, %v596
      %v608 = vadd.f32 %v577, %v596
      %v609 = vadd.f32 %v578, %v596
      %v610 = vadd.f32 %v579, %v596
      %v611 = vadd.f32 %v580, %v596
      %v612 = vadd.f32 %v581, %v596
      %v613 = vadd.f32 %v582, %v596
      %v614 = vadd.f32 %v583, %v596
      %v615 = vadd.f32 %v584, %v596
      %v616 = vadd.f32 %v585, %v596
      %v617 = vadd.f32 %v586, %v596
      %v618 = vadd.f32 %v587, %v596
      %v619 = vadd.f32 %v588, %v596
      %v620 = vadd.f32 %v589, %v596
      %v621 = vadd.f32 %v590, %v596
      %vm622 = vcmp.gt.f32.partialorder %v598, 0.0
      %vm623 = vcmp.gt.f32.partialorder %v599, 0.0
      %vm624 = vcmp.gt.f32.partialorder %v600, 0.0
      %vm625 = vcmp.gt.f32.partialorder %v601, 0.0
      %vm626 = vcmp.gt.f32.partialorder %v602, 0.0
      %vm627 = vcmp.gt.f32.partialorder %v603, 0.0
      %vm628 = vcmp.gt.f32.partialorder %v604, 0.0
      %vm629 = vcmp.gt.f32.partialorder %v605, 0.0
      %vm630 = vcmp.gt.f32.partialorder %v606, 0.0
      %vm631 = vcmp.gt.f32.partialorder %v607, 0.0
      %vm632 = vcmp.gt.f32.partialorder %v608, 0.0
      %vm633 = vcmp.gt.f32.partialorder %v609, 0.0
      %vm634 = vcmp.gt.f32.partialorder %v610, 0.0
      %vm635 = vcmp.gt.f32.partialorder %v611, 0.0
      %vm636 = vcmp.gt.f32.partialorder %v612, 0.0
      %vm637 = vcmp.gt.f32.partialorder %v613, 0.0
      %vm638 = vcmp.gt.f32.partialorder %v614, 0.0
      %vm639 = vcmp.gt.f32.partialorder %v615, 0.0
      %vm640 = vcmp.gt.f32.partialorder %v616, 0.0
      %vm641 = vcmp.gt.f32.partialorder %v617, 0.0
      %vm642 = vcmp.gt.f32.partialorder %v618, 0.0
      %vm643 = vcmp.gt.f32.partialorder %v619, 0.0
      %vm644 = vcmp.gt.f32.partialorder %v620, 0.0
      %vm645 = vcmp.gt.f32.partialorder %v621, 0.0
      %v646 = vmul.f32 %v598, 0.01
      %v647 = vmul.f32 %v599, 0.01
      %v648 = vmul.f32 %v600, 0.01
      %v649 = vmul.f32 %v601, 0.01
      %v650 = vmul.f32 %v602, 0.01
      %v651 = vmul.f32 %v603, 0.01
      %v652 = vmul.f32 %v604, 0.01
      %v653 = vmul.f32 %v605, 0.01
      %v654 = vmul.f32 %v606, 0.01
      %v655 = vmul.f32 %v607, 0.01
      %v656 = vmul.f32 %v608, 0.01
      %v657 = vmul.f32 %v609, 0.01
      %v658 = vmul.f32 %v610, 0.01
      %v659 = vmul.f32 %v611, 0.01
      %v660 = vmul.f32 %v612, 0.01
      %v661 = vmul.f32 %v613, 0.01
      %v662 = vmul.f32 %v614, 0.01
      %v663 = vmul.f32 %v615, 0.01
      %v664 = vmul.f32 %v616, 0.01
      %v665 = vmul.f32 %v617, 0.01
      %v666 = vmul.f32 %v618, 0.01
      %v667 = vmul.f32 %v619, 0.01
      %v668 = vmul.f32 %v620, 0.01
      %v669 = vmul.f32 %v621, 0.01
      %v670 = vsel %vm622, %v598, %v646
      %v671 = vsel %vm623, %v599, %v647
      %v672 = vsel %vm624, %v600, %v648
      %v673 = vsel %vm625, %v601, %v649
      %v674 = vsel %vm626, %v602, %v650
      %v675 = vsel %vm627, %v603, %v651
      %v676 = vsel %vm628, %v604, %v652
      %v677 = vsel %vm629, %v605, %v653
      %v678 = vsel %vm630, %v606, %v654
      %v679 = vsel %vm631, %v607, %v655
      %v680 = vsel %vm632, %v608, %v656
      %v681 = vsel %vm633, %v609, %v657
      %v682 = vsel %vm634, %v610, %v658
      %v683 = vsel %vm635, %v611, %v659
      %v684 = vsel %vm636, %v612, %v660
      %v685 = vsel %vm637, %v613, %v661
      %v686 = vsel %vm638, %v614, %v662
      %v687 = vsel %vm639, %v615, %v663
      %v688 = vsel %vm640, %v616, %v664
      %v689 = vsel %vm641, %v617, %v665
      %v690 = vsel %vm642, %v618, %v666
      %v691 = vsel %vm643, %v619, %v667
      %v692 = vsel %vm644, %v620, %v668
      %v693 = vsel %vm645, %v621, %v669
      %v694 = vpack.c.bf16 %v671, %v670
      %v695 = vpack.c.bf16 %v673, %v672
      %v696 = vpack.c.bf16 %v675, %v674
      %v697 = vpack.c.bf16 %v677, %v676
      %v698 = vpack.c.bf16 %v679, %v678
      %v699 = vpack.c.bf16 %v681, %v680
      %v700 = vpack.c.bf16 %v683, %v682
      %v701 = vpack.c.bf16 %v685, %v684
      %v702 = vpack.c.bf16 %v687, %v686
      %v703 = vpack.c.bf16 %v689, %v688
      %v704 = vpack.c.bf16 %v691, %v690
      %v705 = vpack.c.bf16 %v693, %v692
      %v718 = vunpack.c.l.b16 %v694
      %v719 = vunpack.c.h.b16 %v694
      %v720 = vunpack.c.l.b16 %v695
      %v721 = vunpack.c.h.b16 %v695
      %v722 = vunpack.c.l.b16 %v696
      %v723 = vunpack.c.h.b16 %v696
      %v724 = vunpack.c.l.b16 %v697
      %v725 = vunpack.c.h.b16 %v697
      %v726 = vunpack.c.l.b16 %v698
      %v727 = vunpack.c.h.b16 %v698
      %v728 = vunpack.c.l.b16 %v699
      %v729 = vunpack.c.h.b16 %v699
      %v730 = vunpack.c.l.b16 %v700
      %v731 = vunpack.c.h.b16 %v700
      %v732 = vunpack.c.l.b16 %v701
      %v733 = vunpack.c.h.b16 %v701
      %v734 = vunpack.c.l.b16 %v702
      %v735 = vunpack.c.h.b16 %v702
      %v736 = vunpack.c.l.b16 %v703
      %v737 = vunpack.c.h.b16 %v703
      %v738 = vunpack.c.l.b16 %v704
      %v739 = vunpack.c.h.b16 %v704
      %v740 = vunpack.c.l.b16 %v705
      %v741 = vunpack.c.h.b16 %v705
      %v742 = vpack.c.b16 %v718, %v718
      %v743 = vpack.c.b16 %v719, %v719
      %v744 = vpack.c.b16 %v720, %v720
      %v745 = vpack.c.b16 %v721, %v721
      %v746 = vpack.c.b16 %v722, %v722
      %v747 = vpack.c.b16 %v723, %v723
      %v748 = vpack.c.b16 %v724, %v724
      %v749 = vpack.c.b16 %v725, %v725
      %v750 = vpack.c.b16 %v726, %v726
      %v751 = vpack.c.b16 %v727, %v727
      %v752 = vpack.c.b16 %v728, %v728
      %v753 = vpack.c.b16 %v729, %v729
      %v754 = vpack.c.b16 %v730, %v730
      %v755 = vpack.c.b16 %v731, %v731
      %v756 = vpack.c.b16 %v732, %v732
      %v757 = vpack.c.b16 %v733, %v733
      %v758 = vpack.c.b16 %v734, %v734
      %v759 = vpack.c.b16 %v735, %v735
      %v760 = vpack.c.b16 %v736, %v736
      %v761 = vpack.c.b16 %v737, %v737
      %v762 = vpack.c.b16 %v738, %v738
      %v763 = vpack.c.b16 %v739, %v739
      %v764 = vpack.c.b16 %v740, %v740
      %v765 = vpack.c.b16 %v741, %v741
      %790 = vst [vmem:[#allocation2] sm:$0xf] %v742
      %791 = vst [vmem:[#allocation2 + $0x4] sm:$0xf] %v743
      %792 = vst [vmem:[#allocation2 + $0x8] sm:$0xf] %v744
      %793 = vst [vmem:[#allocation2 + $0xc] sm:$0xf] %v745
      %794 = vst [vmem:[#allocation2 + $0x10] sm:$0xf] %v746
      %795 = vst [vmem:[#allocation2 + $0x14] sm:$0xf] %v747
      %796 = vst [vmem:[#allocation2 + $0x18] sm:$0xf] %v748
      %797 = vst [vmem:[#allocation2 + $0x1c] sm:$0xf] %v749
      %798 = vst [vmem:[#allocation2 + $0x20] sm:$0xf] %v750
      %799 = vst [vmem:[#allocation2 + $0x24] sm:$0xf] %v751
      %800 = vst [vmem:[#allocation2 + $0x28] sm:$0xf] %v752
      %801 = vst [vmem:[#allocation2 + $0x2c] sm:$0xf] %v753
      %802 = vst [vmem:[#allocation2 + $0x30] sm:$0xf] %v754
      %803 = vst [vmem:[#allocation2 + $0x34] sm:$0xf] %v755
      %804 = vst [vmem:[#allocation2 + $0x38] sm:$0xf] %v756
      %805 = vst [vmem:[#allocation2 + $0x3c] sm:$0xf] %v757
      %806 = vst [vmem:[#allocation2 + $0x40] sm:$0xf] %v758
      %807 = vst [vmem:[#allocation2 + $0x44] sm:$0xf] %v759
      %808 = vst [vmem:[#allocation2 + $0x48] sm:$0xf] %v760
      %809 = vst [vmem:[#allocation2 + $0x4c] sm:$0xf] %v761
      %810 = vst [vmem:[#allocation2 + $0x50] sm:$0xf] %v762
      %811 = vst [vmem:[#allocation2 + $0x54] sm:$0xf] %v763
      %812 = vst [vmem:[#allocation2 + $0x58] sm:$0xf] %v764
      %813 = vst [vmem:[#allocation2 + $0x5c] sm:$0xf] %v765
      %v814 = vld [vmem:[%s476] sm:$0xf]
      %v815 = vld [vmem:[%s476 + $0x4] sm:$0xf]
      %v816 = vunpack.c.l.bf16 %v814
      %v817 = vunpack.c.l.bf16 %v815
      %v818 = vld [vmem:[%s3] sm:$0x1]
      %v820 = vlaneseq
      %v821 = vshrl.u32 %v820, 7
      %v822 = vsub.s32 0, %v821
      %v823 = vrot.slane %v818, %v822
      %v825 = vmul.f32 %v816, %v823
      %v826 = vmul.f32 %v817, %v823
      %v827 = vld [vmem:[%s4] sm:$0x1]
      %v829 = vlaneseq
      %v830 = vshrl.u32 %v829, 7
      %v831 = vsub.s32 0, %v830
      %v832 = vrot.slane %v827, %v831
      %v834 = vadd.f32 %v825, %v832
      %v835 = vadd.f32 %v826, %v832
      %vm836 = vcmp.gt.f32.partialorder %v834, 0.0
      %vm837 = vcmp.gt.f32.partialorder %v835, 0.0
      %v838 = vmul.f32 %v834, 0.01
      %v839 = vmul.f32 %v835, 0.01
      %v840 = vsel %vm836, %v834, %v838
      %v841 = vsel %vm837, %v835, %v839
      %v842 = vpack.c.bf16 %v841, %v840
      %v844 = vunpack.c.l.b16 %v842
      %v845 = vunpack.c.h.b16 %v842
      %v846 = vpack.c.b16 %v844, %v844
      %v847 = vpack.c.b16 %v845, %v845
      %850 = vst [vmem:[#allocation2 + $0x60] sm:$0xf] %v846
      %851 = vst [vmem:[#allocation2 + $0x64] sm:$0xf] %v847
      %v852 = vld [vmem:[%s490] sm:$0xf]
      %v853 = vld [vmem:[%s490 + $0x4] sm:$0xf]
      %v854 = vunpack.c.l.bf16 %v852
      %v855 = vunpack.c.l.bf16 %v853
      %v856 = vld [vmem:[%s3] sm:$0x1]
      %v858 = vlaneseq
      %v859 = vshrl.u32 %v858, 7
      %v860 = vsub.s32 0, %v859
      %v861 = vrot.slane %v856, %v860
      %v863 = vmul.f32 %v854, %v861
      %v864 = vmul.f32 %v855, %v861
      %v865 = vld [vmem:[%s4] sm:$0x1]
      %v867 = vlaneseq
      %v868 = vshrl.u32 %v867, 7
      %v869 = vsub.s32 0, %v868
      %v870 = vrot.slane %v865, %v869
      %v872 = vadd.f32 %v863, %v870
      %v873 = vadd.f32 %v864, %v870
      %vm874 = vcmp.gt.f32.partialorder %v872, 0.0
      %vm875 = vcmp.gt.f32.partialorder %v873, 0.0
      %v876 = vmul.f32 %v872, 0.01
      %v877 = vmul.f32 %v873, 0.01
      %v878 = vsel %vm874, %v872, %v876
      %v879 = vsel %vm875, %v873, %v877
      %v880 = vpack.c.bf16 %v879, %v878
      %v882 = vunpack.c.l.b16 %v880
      %v883 = vunpack.c.h.b16 %v880
      %v884 = vpack.c.b16 %v882, %v882
      %v885 = vpack.c.b16 %v883, %v883
      %888 = vst [vmem:[#allocation2 + $0x68] sm:$0xf] %v884
      %889 = vst [vmem:[#allocation2 + $0x6c] sm:$0xf] %v885
      %890 = vst [vmem:[#allocation2 + $0x70] sm:$0xf] 0
      %v891 = vld [vmem:[#allocation2] sm:$0xf]
      %v892 = vld [vmem:[#allocation2 + $0x4] sm:$0xf]
      %v893 = vld [vmem:[#allocation2 + $0x8] sm:$0xf]
      %v894 = vld [vmem:[#allocation2 + $0xc] sm:$0xf]
      %v895 = vld [vmem:[#allocation2 + $0x10] sm:$0xf]
      %v896 = vld [vmem:[#allocation2 + $0x14] sm:$0xf]
      %v897 = vld [vmem:[#allocation2 + $0x18] sm:$0xf]
      %v898 = vld [vmem:[#allocation2 + $0x1c] sm:$0xf]
      %v899 = vld [vmem:[#allocation2 + $0x20] sm:$0xf]
      %v900 = vld [vmem:[#allocation2 + $0x24] sm:$0xf]
      %v901 = vld [vmem:[#allocation2 + $0x28] sm:$0xf]
      %v902 = vld [vmem:[#allocation2 + $0x2c] sm:$0xf]
      %v903 = vld [vmem:[#allocation2 + $0x30] sm:$0xf]
      %v904 = vld [vmem:[#allocation2 + $0x34] sm:$0xf]
      %v905 = vld [vmem:[#allocation2 + $0x38] sm:$0xf]
      %v906 = vld [vmem:[#allocation2 + $0x3c] sm:$0xf]
      %v907 = vld [vmem:[#allocation2 + $0x40] sm:$0xf]
      %v908 = vld [vmem:[#allocation2 + $0x44] sm:$0xf]
      %v909 = vld [vmem:[#allocation2 + $0x48] sm:$0xf]
      %v910 = vld [vmem:[#allocation2 + $0x4c] sm:$0xf]
      %v911 = vld [vmem:[#allocation2 + $0x50] sm:$0xf]
      %v912 = vld [vmem:[#allocation2 + $0x54] sm:$0xf]
      %v913 = vld [vmem:[#allocation2 + $0x58] sm:$0xf]
      %v914 = vld [vmem:[#allocation2 + $0x5c] sm:$0xf]
      %v915 = vld [vmem:[%s5] sm:$0xf]
      %v916 = vld [vmem:[%s5 + $0x4] sm:$0xf]
      %v917 = vld [vmem:[%s5 + $0x8] sm:$0xf]
      %v918 = vld [vmem:[%s5 + $0xc] sm:$0xf]
      %v919 = vld [vmem:[%s5 + $0x10] sm:$0xf]
      %v920 = vld [vmem:[%s5 + $0x14] sm:$0xf]
      %v921 = vld [vmem:[%s5 + $0x18] sm:$0xf]
      %v922 = vld [vmem:[%s5 + $0x1c] sm:$0xf]
      %v923 = vld [vmem:[%s5 + $0x20] sm:$0xf]
      %v924 = vld [vmem:[%s5 + $0x24] sm:$0xf]
      %v925 = vld [vmem:[%s5 + $0x28] sm:$0xf]
      %v926 = vld [vmem:[%s5 + $0x2c] sm:$0xf]
      %v927 = vld [vmem:[%s5 + $0x30] sm:$0xf]
      %v928 = vld [vmem:[%s5 + $0x34] sm:$0xf]
      %v929 = vld [vmem:[%s5 + $0x38] sm:$0xf]
      %v930 = vld [vmem:[%s5 + $0x3c] sm:$0xf]
      %v931 = vld [vmem:[#allocation2 + $0x60] sm:$0x1]
      %s932 = scalar_lea.vmem %s5, 64
      %v933 = vld [vmem:[%s932] sm:$0xf]
      %v934 = vld [vmem:[%s932 + $0x4] sm:$0xf]
      %v935 = vld [vmem:[%s932 + $0x8] sm:$0xf]
      %v936 = vld [vmem:[%s932 + $0xc] sm:$0xf]
      %v937 = vld [vmem:[%s932 + $0x10] sm:$0xf]
      %v938 = vld [vmem:[%s932 + $0x14] sm:$0xf]
      %v939 = vld [vmem:[%s932 + $0x18] sm:$0xf]
      %v940 = vld [vmem:[%s932 + $0x1c] sm:$0xf]
      %v941 = vld [vmem:[%s932 + $0x20] sm:$0xf]
      %v942 = vld [vmem:[%s932 + $0x24] sm:$0xf]
      %v943 = vld [vmem:[%s932 + $0x28] sm:$0xf]
      %v944 = vld [vmem:[%s932 + $0x2c] sm:$0xf]
      %v945 = vld [vmem:[%s932 + $0x30] sm:$0xf]
      %v946 = vld [vmem:[%s932 + $0x34] sm:$0xf]
      %v947 = vld [vmem:[%s932 + $0x38] sm:$0xf]
      %v948 = vld [vmem:[%s932 + $0x3c] sm:$0xf]
      %v974 = vunpack.c.l.b16 %v891
      %v975 = vunpack.c.l.b16 %v892
      %v976 = vunpack.c.l.b16 %v893
      %v977 = vunpack.c.l.b16 %v894
      %v978 = vunpack.c.l.b16 %v895
      %v979 = vunpack.c.l.b16 %v896
      %v980 = vunpack.c.l.b16 %v897
      %v981 = vunpack.c.l.b16 %v898
      %v982 = vunpack.c.l.b16 %v899
      %v983 = vunpack.c.l.b16 %v900
      %v984 = vunpack.c.l.b16 %v901
      %v985 = vunpack.c.l.b16 %v902
      %v986 = vunpack.c.l.b16 %v903
      %v987 = vunpack.c.l.b16 %v904
      %v988 = vunpack.c.l.b16 %v905
      %v989 = vunpack.c.l.b16 %v906
      %v990 = vunpack.c.l.b16 %v907
      %v991 = vunpack.c.l.b16 %v908
      %v992 = vunpack.c.l.b16 %v909
      %v993 = vunpack.c.l.b16 %v910
      %v994 = vunpack.c.l.b16 %v911
      %v995 = vunpack.c.l.b16 %v912
      %v996 = vunpack.c.l.b16 %v913
      %v997 = vunpack.c.l.b16 %v914
      %v998 = vunpack.c.l.b16 %v931
      %v999 = vpack.c.b16 %v975, %v974
      %v1000 = vpack.c.b16 %v977, %v976
      %v1001 = vpack.c.b16 %v979, %v978
      %v1002 = vpack.c.b16 %v981, %v980
      %v1003 = vpack.c.b16 %v983, %v982
      %v1004 = vpack.c.b16 %v985, %v984
      %v1005 = vpack.c.b16 %v987, %v986
      %v1006 = vpack.c.b16 %v989, %v988
      %v1007 = vpack.c.b16 %v991, %v990
      %v1008 = vpack.c.b16 %v993, %v992
      %v1009 = vpack.c.b16 %v995, %v994
      %v1010 = vpack.c.b16 %v997, %v996
      %v1011 = vpack.c.b16 %v998, %v998
      %vm1012 = vsmask.f32 7424
      %v1014 = vshrl.u32 %v999, 16
      %v1016 = vshll.u32 %v999, 16
      %v1018 = vrot.slane %v1016, 1
      %v1019 = vor.u32 %v1014, %v1018
      %v1021 = vshll.u32 %v1000, 16
      %v1023 = vrot.slane %v1021, 1
      %v1024 = vsel %vm1012, %v1019, %v1023
      %v1025 = vshrl.u32 %v1000, 16
      %v1027 = vor.u32 %v1025, %v1023
      %v1029 = vshll.u32 %v1001, 16
      %v1031 = vrot.slane %v1029, 1
      %v1032 = vsel %vm1012, %v1027, %v1031
      %v1033 = vshrl.u32 %v1001, 16
      %v1035 = vor.u32 %v1033, %v1031
      %v1037 = vshll.u32 %v1002, 16
      %v1039 = vrot.slane %v1037, 1
      %v1040 = vsel %vm1012, %v1035, %v1039
      %v1041 = vshrl.u32 %v1002, 16
      %v1043 = vor.u32 %v1041, %v1039
      %v1045 = vshll.u32 %v1003, 16
      %v1047 = vrot.slane %v1045, 1
      %v1048 = vsel %vm1012, %v1043, %v1047
      %v1049 = vshrl.u32 %v1003, 16
      %v1051 = vor.u32 %v1049, %v1047
      %v1053 = vshll.u32 %v1004, 16
      %v1055 = vrot.slane %v1053, 1
      %v1056 = vsel %vm1012, %v1051, %v1055
      %v1057 = vshrl.u32 %v1004, 16
      %v1059 = vor.u32 %v1057, %v1055
      %v1061 = vshll.u32 %v1005, 16
      %v1063 = vrot.slane %v1061, 1
      %v1064 = vsel %vm1012, %v1059, %v1063
      %v1065 = vshrl.u32 %v1005, 16
      %v1067 = vor.u32 %v1065, %v1063
      %v1069 = vshll.u32 %v1006, 16
      %v1071 = vrot.slane %v1069, 1
      %v1072 = vsel %vm1012, %v1067, %v1071
      %v1073 = vshrl.u32 %v1006, 16
      %v1075 = vor.u32 %v1073, %v1071
      %v1077 = vshll.u32 %v1007, 16
      %v1079 = vrot.slane %v1077, 1
      %v1080 = vsel %vm1012, %v1075, %v1079
      %v1081 = vshrl.u32 %v1007, 16
      %v1083 = vor.u32 %v1081, %v1079
      %v1085 = vshll.u32 %v1008, 16
      %v1087 = vrot.slane %v1085, 1
      %v1088 = vsel %vm1012, %v1083, %v1087
      %v1089 = vshrl.u32 %v1008, 16
      %v1091 = vor.u32 %v1089, %v1087
      %v1093 = vshll.u32 %v1009, 16
      %v1095 = vrot.slane %v1093, 1
      %v1096 = vsel %vm1012, %v1091, %v1095
      %v1097 = vshrl.u32 %v1009, 16
      %v1099 = vor.u32 %v1097, %v1095
      %v1101 = vshll.u32 %v1010, 16
      %v1103 = vrot.slane %v1101, 1
      %v1104 = vsel %vm1012, %v1099, %v1103
      %v1105 = vshrl.u32 %v1010, 16
      %v1107 = vor.u32 %v1105, %v1103
      %v1109 = vshll.u32 %v1011, 16
      %v1111 = vrot.slane %v1109, 1
      %v1112 = vsel %vm1012, %v1107, %v1111
      %v1141 = vunpack.c.l.b16 %v933
      %v1142 = vunpack.c.l.b16 %v934
      %v1143 = vunpack.c.l.b16 %v935
      %v1144 = vunpack.c.l.b16 %v936
      %v1145 = vunpack.c.l.b16 %v937
      %v1146 = vunpack.c.l.b16 %v938
      %v1147 = vunpack.c.l.b16 %v939
      %v1148 = vunpack.c.l.b16 %v940
      %v1149 = vunpack.c.l.b16 %v941
      %v1150 = vunpack.c.l.b16 %v942
      %v1151 = vunpack.c.l.b16 %v943
      %v1152 = vunpack.c.l.b16 %v944
      %v1153 = vunpack.c.l.b16 %v945
      %v1154 = vunpack.c.l.b16 %v946
      %v1155 = vunpack.c.l.b16 %v947
      %v1156 = vunpack.c.l.b16 %v948
      %v1157 = vpack.c.b16 %v1142, %v1141
      %v1158 = vpack.c.b16 %v1144, %v1143
      %v1159 = vpack.c.b16 %v1146, %v1145
      %v1160 = vpack.c.b16 %v1148, %v1147
      %v1161 = vpack.c.b16 %v1150, %v1149
      %v1162 = vpack.c.b16 %v1152, %v1151
      %v1163 = vpack.c.b16 %v1154, %v1153
      %v1164 = vpack.c.b16 %v1156, %v1155
      %1173 = vmatprep.subr.bf16.mxu0 0
      %1174 = vmatpush1.bf16.msra.mxu0 %v1164
      %1175 = vmatprep.subr.bf16.mxu0 0
      %1176 = vmatpush1.bf16.msra.mxu0 %v1163
      %1177 = vmatprep.subr.bf16.mxu0 0
      %1178 = vmatpush1.bf16.msra.mxu0 %v1162
      %1179 = vmatprep.subr.bf16.mxu0 0
      %1180 = vmatpush1.bf16.msra.mxu0 %v1161
      %1181 = vmatprep.subr.bf16.mxu0 0
      %1182 = vmatpush1.bf16.msra.mxu0 %v1160
      %1183 = vmatprep.subr.bf16.mxu0 0
      %1184 = vmatpush1.bf16.msra.mxu0 %v1159
      %1185 = vmatprep.subr.bf16.mxu0 0
      %1186 = vmatpush1.bf16.msra.mxu0 %v1158
      %1187 = vmatprep.subr.bf16.mxu0 0
      %1188 = vmatpush1.bf16.msra.mxu0 %v1157
      %1189 = vmatprep.subr.bf16.mxu0 0
      %1190 = vmatpush2.bf16.msra.mxu0 0
      %1191 = vmatprep.subr.bf16.mxu0 0
      %1192 = vmatpush2.bf16.msra.mxu0 0
      %1193 = vmatprep.subr.bf16.mxu0 0
      %1194 = vmatpush2.bf16.msra.mxu0 0
      %1195 = vmatprep.subr.bf16.mxu0 0
      %1196 = vmatpush2.bf16.msra.mxu0 0
      %1197 = vmatprep.subr.bf16.mxu0 0
      %1198 = vmatpush2.bf16.msra.mxu0 0
      %1199 = vmatprep.subr.bf16.mxu0 0
      %1200 = vmatpush2.bf16.msra.mxu0 0
      %1201 = vmatprep.subr.bf16.mxu0 0
      %1202 = vmatpush2.bf16.msra.mxu0 0
      %1203 = vmatprep.subr.bf16.mxu0 0
      %1204 = vmatpush2.bf16.msra.mxu0 0
      %1205 = vmatprep.mubr.bf16.mxu0 0
      %1206 = vmatmul.mubr.bf16.gmra.mxu0 %v1024
      %v1207 = vpop.f32.mrf.mxu0
      %v1208 = vadd.f32 0.0, %v1207
      %v1209 = vpop.f32.mrf.mxu0
      %v1210 = vpop.f32.mrf.mxu0
      %v1211 = vadd.f32 0.0, %v1210
      %v1212 = vpop.f32.mrf.mxu0
      %1213 = vmatprep.mubr.bf16.mxu0 0
      %1214 = vmatmul.mubr.bf16.gmra.mxu0 %v1032
      %v1215 = vpop.f32.mrf.mxu0
      %v1216 = vadd.f32 0.0, %v1215
      %v1217 = vpop.f32.mrf.mxu0
      %v1218 = vpop.f32.mrf.mxu0
      %v1219 = vadd.f32 0.0, %v1218
      %v1220 = vpop.f32.mrf.mxu0
      %1221 = vmatprep.mubr.bf16.mxu0 0
      %1222 = vmatmul.mubr.bf16.gmra.mxu0 %v1040
      %v1223 = vpop.f32.mrf.mxu0
      %v1224 = vadd.f32 0.0, %v1223
      %v1225 = vpop.f32.mrf.mxu0
      %v1226 = vpop.f32.mrf.mxu0
      %v1227 = vadd.f32 0.0, %v1226
      %v1228 = vpop.f32.mrf.mxu0
      %1229 = vmatprep.mubr.bf16.mxu0 0
      %1230 = vmatmul.mubr.bf16.gmra.mxu0 %v1048
      %v1231 = vpop.f32.mrf.mxu0
      %v1232 = vadd.f32 0.0, %v1231
      %v1233 = vpop.f32.mrf.mxu0
      %v1234 = vpop.f32.mrf.mxu0
      %v1235 = vadd.f32 0.0, %v1234
      %v1236 = vpop.f32.mrf.mxu0
      %1237 = vmatprep.mubr.bf16.mxu0 0
      %1238 = vmatmul.mubr.bf16.gmra.mxu0 %v1056
      %v1239 = vpop.f32.mrf.mxu0
      %v1240 = vadd.f32 0.0, %v1239
      %v1241 = vpop.f32.mrf.mxu0
      %v1242 = vpop.f32.mrf.mxu0
      %v1243 = vadd.f32 0.0, %v1242
      %v1244 = vpop.f32.mrf.mxu0
      %1245 = vmatprep.mubr.bf16.mxu0 0
      %1246 = vmatmul.mubr.bf16.gmra.mxu0 %v1064
      %v1247 = vpop.f32.mrf.mxu0
      %v1248 = vadd.f32 0.0, %v1247
      %v1249 = vpop.f32.mrf.mxu0
      %v1250 = vpop.f32.mrf.mxu0
      %v1251 = vadd.f32 0.0, %v1250
      %v1252 = vpop.f32.mrf.mxu0
      %1253 = vmatprep.mubr.bf16.mxu0 0
      %1254 = vmatmul.mubr.bf16.gmra.mxu0 %v1072
      %v1255 = vpop.f32.mrf.mxu0
      %v1256 = vadd.f32 0.0, %v1255
      %v1257 = vpop.f32.mrf.mxu0
      %v1258 = vpop.f32.mrf.mxu0
      %v1259 = vadd.f32 0.0, %v1258
      %v1260 = vpop.f32.mrf.mxu0
      %1261 = vmatprep.mubr.bf16.mxu0 0
      %1262 = vmatmul.mubr.bf16.gmra.mxu0 %v1080
      %v1263 = vpop.f32.mrf.mxu0
      %v1264 = vadd.f32 0.0, %v1263
      %v1265 = vpop.f32.mrf.mxu0
      %v1266 = vpop.f32.mrf.mxu0
      %v1267 = vadd.f32 0.0, %v1266
      %v1268 = vpop.f32.mrf.mxu0
      %1269 = vmatprep.mubr.bf16.mxu0 0
      %1270 = vmatmul.mubr.bf16.gmra.mxu0 %v1088
      %v1271 = vpop.f32.mrf.mxu0
      %v1272 = vadd.f32 0.0, %v1271
      %v1273 = vpop.f32.mrf.mxu0
      %v1274 = vpop.f32.mrf.mxu0
      %v1275 = vadd.f32 0.0, %v1274
      %v1276 = vpop.f32.mrf.mxu0
      %1277 = vmatprep.mubr.bf16.mxu0 0
      %1278 = vmatmul.mubr.bf16.gmra.mxu0 %v1096
      %v1279 = vpop.f32.mrf.mxu0
      %v1280 = vadd.f32 0.0, %v1279
      %v1281 = vpop.f32.mrf.mxu0
      %v1282 = vpop.f32.mrf.mxu0
      %v1283 = vadd.f32 0.0, %v1282
      %v1284 = vpop.f32.mrf.mxu0
      %1285 = vmatprep.mubr.bf16.mxu0 0
      %1286 = vmatmul.mubr.bf16.gmra.mxu0 %v1104
      %v1287 = vpop.f32.mrf.mxu0
      %v1288 = vadd.f32 0.0, %v1287
      %v1289 = vpop.f32.mrf.mxu0
      %v1290 = vpop.f32.mrf.mxu0
      %v1291 = vadd.f32 0.0, %v1290
      %v1292 = vpop.f32.mrf.mxu0
      %1293 = vmatprep.mubr.bf16.mxu0 0
      %1294 = vmatmul.mubr.bf16.gmra.mxu0 %v1112
      %v1295 = vpop.f32.mrf.mxu0
      %v1296 = vadd.f32 0.0, %v1295
      %v1297 = vpop.f32.mrf.mxu0
      %v1298 = vpop.f32.mrf.mxu0
      %v1299 = vadd.f32 0.0, %v1298
      %v1300 = vpop.f32.mrf.mxu0
      %1301 = vdwg.mxu0
      %v1330 = vunpack.c.l.b16 %v915
      %v1331 = vunpack.c.l.b16 %v916
      %v1332 = vunpack.c.l.b16 %v917
      %v1333 = vunpack.c.l.b16 %v918
      %v1334 = vunpack.c.l.b16 %v919
      %v1335 = vunpack.c.l.b16 %v920
      %v1336 = vunpack.c.l.b16 %v921
      %v1337 = vunpack.c.l.b16 %v922
      %v1338 = vunpack.c.l.b16 %v923
      %v1339 = vunpack.c.l.b16 %v924
      %v1340 = vunpack.c.l.b16 %v925
      %v1341 = vunpack.c.l.b16 %v926
      %v1342 = vunpack.c.l.b16 %v927
      %v1343 = vunpack.c.l.b16 %v928
      %v1344 = vunpack.c.l.b16 %v929
      %v1345 = vunpack.c.l.b16 %v930
      %v1346 = vpack.c.b16 %v1331, %v1330
      %v1347 = vpack.c.b16 %v1333, %v1332
      %v1348 = vpack.c.b16 %v1335, %v1334
      %v1349 = vpack.c.b16 %v1337, %v1336
      %v1350 = vpack.c.b16 %v1339, %v1338
      %v1351 = vpack.c.b16 %v1341, %v1340
      %v1352 = vpack.c.b16 %v1343, %v1342
      %v1353 = vpack.c.b16 %v1345, %v1344
      %1362 = vmatprep.subr.bf16.mxu0 0
      %1363 = vmatpush1.bf16.msra.mxu0 %v1353
      %1364 = vmatprep.subr.bf16.mxu0 0
      %1365 = vmatpush1.bf16.msra.mxu0 %v1352
      %1366 = vmatprep.subr.bf16.mxu0 0
      %1367 = vmatpush1.bf16.msra.mxu0 %v1351
      %1368 = vmatprep.subr.bf16.mxu0 0
      %1369 = vmatpush1.bf16.msra.mxu0 %v1350
      %1370 = vmatprep.subr.bf16.mxu0 0
      %1371 = vmatpush1.bf16.msra.mxu0 %v1349
      %1372 = vmatprep.subr.bf16.mxu0 0
      %1373 = vmatpush1.bf16.msra.mxu0 %v1348
      %1374 = vmatprep.subr.bf16.mxu0 0
      %1375 = vmatpush1.bf16.msra.mxu0 %v1347
      %1376 = vmatprep.subr.bf16.mxu0 0
      %1377 = vmatpush1.bf16.msra.mxu0 %v1346
      %1378 = vmatprep.subr.bf16.mxu0 0
      %1379 = vmatpush2.bf16.msra.mxu0 0
      %1380 = vmatprep.subr.bf16.mxu0 0
      %1381 = vmatpush2.bf16.msra.mxu0 0
      %1382 = vmatprep.subr.bf16.mxu0 0
      %1383 = vmatpush2.bf16.msra.mxu0 0
      %1384 = vmatprep.subr.bf16.mxu0 0
      %1385 = vmatpush2.bf16.msra.mxu0 0
      %1386 = vmatprep.subr.bf16.mxu0 0
      %1387 = vmatpush2.bf16.msra.mxu0 0
      %1388 = vmatprep.subr.bf16.mxu0 0
      %1389 = vmatpush2.bf16.msra.mxu0 0
      %1390 = vmatprep.subr.bf16.mxu0 0
      %1391 = vmatpush2.bf16.msra.mxu0 0
      %1392 = vmatprep.subr.bf16.mxu0 0
      %1393 = vmatpush2.bf16.msra.mxu0 0
      %1394 = vmatprep.mubr.bf16.mxu0 0
      %1395 = vmatmul.mubr.bf16.gmra.mxu0 %v999
      %v1396 = vpop.f32.mrf.mxu0
      %v1397 = vadd.f32 %v1208, %v1396
      %v1398 = vpop.f32.mrf.mxu0
      %v1399 = vpop.f32.mrf.mxu0
      %v1400 = vadd.f32 %v1211, %v1399
      %v1401 = vpop.f32.mrf.mxu0
      %1402 = vmatprep.mubr.bf16.mxu0 0
      %1403 = vmatmul.mubr.bf16.gmra.mxu0 %v1000
      %v1404 = vpop.f32.mrf.mxu0
      %v1405 = vadd.f32 %v1216, %v1404
      %v1406 = vpop.f32.mrf.mxu0
      %v1407 = vpop.f32.mrf.mxu0
      %v1408 = vadd.f32 %v1219, %v1407
      %v1409 = vpop.f32.mrf.mxu0
      %1410 = vmatprep.mubr.bf16.mxu0 0
      %1411 = vmatmul.mubr.bf16.gmra.mxu0 %v1001
      %v1412 = vpop.f32.mrf.mxu0
      %v1413 = vadd.f32 %v1224, %v1412
      %v1414 = vpop.f32.mrf.mxu0
      %v1415 = vpop.f32.mrf.mxu0
      %v1416 = vadd.f32 %v1227, %v1415
      %v1417 = vpop.f32.mrf.mxu0
      %1418 = vmatprep.mubr.bf16.mxu0 0
      %1419 = vmatmul.mubr.bf16.gmra.mxu0 %v1002
      %v1420 = vpop.f32.mrf.mxu0
      %v1421 = vadd.f32 %v1232, %v1420
      %v1422 = vpop.f32.mrf.mxu0
      %v1423 = vpop.f32.mrf.mxu0
      %v1424 = vadd.f32 %v1235, %v1423
      %v1425 = vpop.f32.mrf.mxu0
      %1426 = vmatprep.mubr.bf16.mxu0 0
      %1427 = vmatmul.mubr.bf16.gmra.mxu0 %v1003
      %v1428 = vpop.f32.mrf.mxu0
      %v1429 = vadd.f32 %v1240, %v1428
      %v1430 = vpop.f32.mrf.mxu0
      %v1431 = vpop.f32.mrf.mxu0
      %v1432 = vadd.f32 %v1243, %v1431
      %v1433 = vpop.f32.mrf.mxu0
      %1434 = vmatprep.mubr.bf16.mxu0 0
      %1435 = vmatmul.mubr.bf16.gmra.mxu0 %v1004
      %v1436 = vpop.f32.mrf.mxu0
      %v1437 = vadd.f32 %v1248, %v1436
      %v1438 = vpop.f32.mrf.mxu0
      %v1439 = vpop.f32.mrf.mxu0
      %v1440 = vadd.f32 %v1251, %v1439
      %v1441 = vpop.f32.mrf.mxu0
      %1442 = vmatprep.mubr.bf16.mxu0 0
      %1443 = vmatmul.mubr.bf16.gmra.mxu0 %v1005
      %v1444 = vpop.f32.mrf.mxu0
      %v1445 = vadd.f32 %v1256, %v1444
      %v1446 = vpop.f32.mrf.mxu0
      %v1447 = vpop.f32.mrf.mxu0
      %v1448 = vadd.f32 %v1259, %v1447
      %v1449 = vpop.f32.mrf.mxu0
      %1450 = vmatprep.mubr.bf16.mxu0 0
      %1451 = vmatmul.mubr.bf16.gmra.mxu0 %v1006
      %v1452 = vpop.f32.mrf.mxu0
      %v1453 = vadd.f32 %v1264, %v1452
      %v1454 = vpop.f32.mrf.mxu0
      %v1455 = vpop.f32.mrf.mxu0
      %v1456 = vadd.f32 %v1267, %v1455
      %v1457 = vpop.f32.mrf.mxu0
      %1458 = vmatprep.mubr.bf16.mxu0 0
      %1459 = vmatmul.mubr.bf16.gmra.mxu0 %v1007
      %v1460 = vpop.f32.mrf.mxu0
      %v1461 = vadd.f32 %v1272, %v1460
      %v1462 = vpop.f32.mrf.mxu0
      %v1463 = vpop.f32.mrf.mxu0
      %v1464 = vadd.f32 %v1275, %v1463
      %v1465 = vpop.f32.mrf.mxu0
      %1466 = vmatprep.mubr.bf16.mxu0 0
      %1467 = vmatmul.mubr.bf16.gmra.mxu0 %v1008
      %v1468 = vpop.f32.mrf.mxu0
      %v1469 = vadd.f32 %v1280, %v1468
      %v1470 = vpop.f32.mrf.mxu0
      %v1471 = vpop.f32.mrf.mxu0
      %v1472 = vadd.f32 %v1283, %v1471
      %v1473 = vpop.f32.mrf.mxu0
      %1474 = vmatprep.mubr.bf16.mxu0 0
      %1475 = vmatmul.mubr.bf16.gmra.mxu0 %v1009
      %v1476 = vpop.f32.mrf.mxu0
      %v1477 = vadd.f32 %v1288, %v1476
      %v1478 = vpop.f32.mrf.mxu0
      %v1479 = vpop.f32.mrf.mxu0
      %v1480 = vadd.f32 %v1291, %v1479
      %v1481 = vpop.f32.mrf.mxu0
      %1482 = vmatprep.mubr.bf16.mxu0 0
      %1483 = vmatmul.mubr.bf16.gmra.mxu0 %v1010
      %v1484 = vpop.f32.mrf.mxu0
      %v1485 = vadd.f32 %v1296, %v1484
      %v1486 = vpop.f32.mrf.mxu0
      %v1487 = vpop.f32.mrf.mxu0
      %v1488 = vadd.f32 %v1299, %v1487
      %v1489 = vpop.f32.mrf.mxu0
      %1490 = vdwg.mxu0
      %v1491 = vld [vmem:[#allocation2] sm:$0xe]
      %s1492 = scalar_lea.vmem %s5, 128
      %v1493 = vld [vmem:[%s1492] sm:$0xf]
      %v1494 = vld [vmem:[%s1492 + $0x4] sm:$0xf]
      %v1495 = vld [vmem:[%s1492 + $0x8] sm:$0xf]
      %v1496 = vld [vmem:[%s1492 + $0xc] sm:$0xf]
      %v1497 = vld [vmem:[%s1492 + $0x10] sm:$0xf]
      %v1498 = vld [vmem:[%s1492 + $0x14] sm:$0xf]
      %v1499 = vld [vmem:[%s1492 + $0x18] sm:$0xf]
      %v1500 = vld [vmem:[%s1492 + $0x1c] sm:$0xf]
      %v1501 = vld [vmem:[%s1492 + $0x20] sm:$0xf]
      %v1502 = vld [vmem:[%s1492 + $0x24] sm:$0xf]
      %v1503 = vld [vmem:[%s1492 + $0x28] sm:$0xf]
      %v1504 = vld [vmem:[%s1492 + $0x2c] sm:$0xf]
      %v1505 = vld [vmem:[%s1492 + $0x30] sm:$0xf]
      %v1506 = vld [vmem:[%s1492 + $0x34] sm:$0xf]
      %v1507 = vld [vmem:[%s1492 + $0x38] sm:$0xf]
      %v1508 = vld [vmem:[%s1492 + $0x3c] sm:$0xf]
      %v1510 = vunpack.c.l.b16 %v1491
      %v1511 = vpack.c.b16 %v975, %v1510
      %vm1512 = vcmask 1046528
      %v1513 = vrot.slane %v1511, 1
      %v1514 = vrot.slane %v1000, 1
      %v1515 = vsel %vm1512, %v1513, %v1514
      %v1516 = vrot.slane %v1001, 1
      %v1517 = vsel %vm1512, %v1514, %v1516
      %v1518 = vrot.slane %v1002, 1
      %v1519 = vsel %vm1512, %v1516, %v1518
      %v1520 = vrot.slane %v1003, 1
      %v1521 = vsel %vm1512, %v1518, %v1520
      %v1522 = vrot.slane %v1004, 1
      %v1523 = vsel %vm1512, %v1520, %v1522
      %v1524 = vrot.slane %v1005, 1
      %v1525 = vsel %vm1512, %v1522, %v1524
      %v1526 = vrot.slane %v1006, 1
      %v1527 = vsel %vm1512, %v1524, %v1526
      %v1528 = vrot.slane %v1007, 1
      %v1529 = vsel %vm1512, %v1526, %v1528
      %v1530 = vrot.slane %v1008, 1
      %v1531 = vsel %vm1512, %v1528, %v1530
      %v1532 = vrot.slane %v1009, 1
      %v1533 = vsel %vm1512, %v1530, %v1532
      %v1534 = vrot.slane %v1010, 1
      %v1535 = vsel %vm1512, %v1532, %v1534
      %v1536 = vrot.slane %v1011, 1
      %v1537 = vsel %vm1512, %v1534, %v1536
      %v1566 = vunpack.c.l.b16 %v1493
      %v1567 = vunpack.c.l.b16 %v1494
      %v1568 = vunpack.c.l.b16 %v1495
      %v1569 = vunpack.c.l.b16 %v1496
      %v1570 = vunpack.c.l.b16 %v1497
      %v1571 = vunpack.c.l.b16 %v1498
      %v1572 = vunpack.c.l.b16 %v1499
      %v1573 = vunpack.c.l.b16 %v1500
      %v1574 = vunpack.c.l.b16 %v1501
      %v1575 = vunpack.c.l.b16 %v1502
      %v1576 = vunpack.c.l.b16 %v1503
      %v1577 = vunpack.c.l.b16 %v1504
      %v1578 = vunpack.c.l.b16 %v1505
      %v1579 = vunpack.c.l.b16 %v1506
      %v1580 = vunpack.c.l.b16 %v1507
      %v1581 = vunpack.c.l.b16 %v1508
      %v1582 = vpack.c.b16 %v1567, %v1566
      %v1583 = vpack.c.b16 %v1569, %v1568
      %v1584 = vpack.c.b16 %v1571, %v1570
      %v1585 = vpack.c.b16 %v1573, %v1572
      %v1586 = vpack.c.b16 %v1575, %v1574
      %v1587 = vpack.c.b16 %v1577, %v1576
      %v1588 = vpack.c.b16 %v1579, %v1578
      %v1589 = vpack.c.b16 %v1581, %v1580
      %1598 = vmatprep.subr.bf16.mxu0 0
      %1599 = vmatpush1.bf16.msra.mxu0 %v1589
      %1600 = vmatprep.subr.bf16.mxu0 0
      %1601 = vmatpush1.bf16.msra.mxu0 %v1588
      %1602 = vmatprep.subr.bf16.mxu0 0
      %1603 = vmatpush1.bf16.msra.mxu0 %v1587
      %1604 = vmatprep.subr.bf16.mxu0 0
      %1605 = vmatpush1.bf16.msra.mxu0 %v1586
      %1606 = vmatprep.subr.bf16.mxu0 0
      %1607 = vmatpush1.bf16.msra.mxu0 %v1585
      %1608 = vmatprep.subr.bf16.mxu0 0
      %1609 = vmatpush1.bf16.msra.mxu0 %v1584
      %1610 = vmatprep.subr.bf16.mxu0 0
      %1611 = vmatpush1.bf16.msra.mxu0 %v1583
      %1612 = vmatprep.subr.bf16.mxu0 0
      %1613 = vmatpush1.bf16.msra.mxu0 %v1582
      %1614 = vmatprep.subr.bf16.mxu0 0
      %1615 = vmatpush2.bf16.msra.mxu0 0
      %1616 = vmatprep.subr.bf16.mxu0 0
      %1617 = vmatpush2.bf16.msra.mxu0 0
      %1618 = vmatprep.subr.bf16.mxu0 0
      %1619 = vmatpush2.bf16.msra.mxu0 0
      %1620 = vmatprep.subr.bf16.mxu0 0
      %1621 = vmatpush2.bf16.msra.mxu0 0
      %1622 = vmatprep.subr.bf16.mxu0 0
      %1623 = vmatpush2.bf16.msra.mxu0 0
      %1624 = vmatprep.subr.bf16.mxu0 0
      %1625 = vmatpush2.bf16.msra.mxu0 0
      %1626 = vmatprep.subr.bf16.mxu0 0
      %1627 = vmatpush2.bf16.msra.mxu0 0
      %1628 = vmatprep.subr.bf16.mxu0 0
      %1629 = vmatpush2.bf16.msra.mxu0 0
      %1630 = vmatprep.mubr.bf16.mxu0 0
      %1631 = vmatmul.mubr.bf16.gmra.mxu0 %v1515
      %v1632 = vpop.f32.mrf.mxu0
      %v1633 = vadd.f32 0.0, %v1632
      %v1634 = vpop.f32.mrf.mxu0
      %v1635 = vpop.f32.mrf.mxu0
      %v1636 = vadd.f32 0.0, %v1635
      %v1637 = vpop.f32.mrf.mxu0
      %1638 = vmatprep.mubr.bf16.mxu0 0
      %1639 = vmatmul.mubr.bf16.gmra.mxu0 %v1517
      %v1640 = vpop.f32.mrf.mxu0
      %v1641 = vadd.f32 0.0, %v1640
      %v1642 = vpop.f32.mrf.mxu0
      %v1643 = vpop.f32.mrf.mxu0
      %v1644 = vadd.f32 0.0, %v1643
      %v1645 = vpop.f32.mrf.mxu0
      %1646 = vmatprep.mubr.bf16.mxu0 0
      %1647 = vmatmul.mubr.bf16.gmra.mxu0 %v1519
      %v1648 = vpop.f32.mrf.mxu0
      %v1649 = vadd.f32 0.0, %v1648
      %v1650 = vpop.f32.mrf.mxu0
      %v1651 = vpop.f32.mrf.mxu0
      %v1652 = vadd.f32 0.0, %v1651
      %v1653 = vpop.f32.mrf.mxu0
      %1654 = vmatprep.mubr.bf16.mxu0 0
      %1655 = vmatmul.mubr.bf16.gmra.mxu0 %v1521
      %v1656 = vpop.f32.mrf.mxu0
      %v1657 = vadd.f32 0.0, %v1656
      %v1658 = vpop.f32.mrf.mxu0
      %v1659 = vpop.f32.mrf.mxu0
      %v1660 = vadd.f32 0.0, %v1659
      %v1661 = vpop.f32.mrf.mxu0
      %1662 = vmatprep.mubr.bf16.mxu0 0
      %1663 = vmatmul.mubr.bf16.gmra.mxu0 %v1523
      %v1664 = vpop.f32.mrf.mxu0
      %v1665 = vadd.f32 0.0, %v1664
      %v1666 = vpop.f32.mrf.mxu0
      %v1667 = vpop.f32.mrf.mxu0
      %v1668 = vadd.f32 0.0, %v1667
      %v1669 = vpop.f32.mrf.mxu0
      %1670 = vmatprep.mubr.bf16.mxu0 0
      %1671 = vmatmul.mubr.bf16.gmra.mxu0 %v1525
      %v1672 = vpop.f32.mrf.mxu0
      %v1673 = vadd.f32 0.0, %v1672
      %v1674 = vpop.f32.mrf.mxu0
      %v1675 = vpop.f32.mrf.mxu0
      %v1676 = vadd.f32 0.0, %v1675
      %v1677 = vpop.f32.mrf.mxu0
      %1678 = vmatprep.mubr.bf16.mxu0 0
      %1679 = vmatmul.mubr.bf16.gmra.mxu0 %v1527
      %v1680 = vpop.f32.mrf.mxu0
      %v1681 = vadd.f32 0.0, %v1680
      %v1682 = vpop.f32.mrf.mxu0
      %v1683 = vpop.f32.mrf.mxu0
      %v1684 = vadd.f32 0.0, %v1683
      %v1685 = vpop.f32.mrf.mxu0
      %1686 = vmatprep.mubr.bf16.mxu0 0
      %1687 = vmatmul.mubr.bf16.gmra.mxu0 %v1529
      %v1688 = vpop.f32.mrf.mxu0
      %v1689 = vadd.f32 0.0, %v1688
      %v1690 = vpop.f32.mrf.mxu0
      %v1691 = vpop.f32.mrf.mxu0
      %v1692 = vadd.f32 0.0, %v1691
      %v1693 = vpop.f32.mrf.mxu0
      %1694 = vmatprep.mubr.bf16.mxu0 0
      %1695 = vmatmul.mubr.bf16.gmra.mxu0 %v1531
      %v1696 = vpop.f32.mrf.mxu0
      %v1697 = vadd.f32 0.0, %v1696
      %v1698 = vpop.f32.mrf.mxu0
      %v1699 = vpop.f32.mrf.mxu0
      %v1700 = vadd.f32 0.0, %v1699
      %v1701 = vpop.f32.mrf.mxu0
      %1702 = vmatprep.mubr.bf16.mxu0 0
      %1703 = vmatmul.mubr.bf16.gmra.mxu0 %v1533
      %v1704 = vpop.f32.mrf.mxu0
      %v1705 = vadd.f32 0.0, %v1704
      %v1706 = vpop.f32.mrf.mxu0
      %v1707 = vpop.f32.mrf.mxu0
      %v1708 = vadd.f32 0.0, %v1707
      %v1709 = vpop.f32.mrf.mxu0
      %1710 = vmatprep.mubr.bf16.mxu0 0
      %1711 = vmatmul.mubr.bf16.gmra.mxu0 %v1535
      %v1712 = vpop.f32.mrf.mxu0
      %v1713 = vadd.f32 0.0, %v1712
      %v1714 = vpop.f32.mrf.mxu0
      %v1715 = vpop.f32.mrf.mxu0
      %v1716 = vadd.f32 0.0, %v1715
      %v1717 = vpop.f32.mrf.mxu0
      %1718 = vmatprep.mubr.bf16.mxu0 0
      %1719 = vmatmul.mubr.bf16.gmra.mxu0 %v1537
      %v1720 = vpop.f32.mrf.mxu0
      %v1721 = vadd.f32 0.0, %v1720
      %v1722 = vpop.f32.mrf.mxu0
      %v1723 = vpop.f32.mrf.mxu0
      %v1724 = vadd.f32 0.0, %v1723
      %v1725 = vpop.f32.mrf.mxu0
      %1726 = vdwg.mxu0
      %v1727 = vadd.f32 %v1397, %v1633
      %v1728 = vadd.f32 %v1400, %v1636
      %v1729 = vadd.f32 %v1405, %v1641
      %v1730 = vadd.f32 %v1408, %v1644
      %v1731 = vadd.f32 %v1413, %v1649
      %v1732 = vadd.f32 %v1416, %v1652
      %v1733 = vadd.f32 %v1421, %v1657
      %v1734 = vadd.f32 %v1424, %v1660
      %v1735 = vadd.f32 %v1429, %v1665
      %v1736 = vadd.f32 %v1432, %v1668
      %v1737 = vadd.f32 %v1437, %v1673
      %v1738 = vadd.f32 %v1440, %v1676
      %v1739 = vadd.f32 %v1445, %v1681
      %v1740 = vadd.f32 %v1448, %v1684
      %v1741 = vadd.f32 %v1453, %v1689
      %v1742 = vadd.f32 %v1456, %v1692
      %v1743 = vadd.f32 %v1461, %v1697
      %v1744 = vadd.f32 %v1464, %v1700
      %v1745 = vadd.f32 %v1469, %v1705
      %v1746 = vadd.f32 %v1472, %v1708
      %v1747 = vadd.f32 %v1477, %v1713
      %v1748 = vadd.f32 %v1480, %v1716
      %v1749 = vadd.f32 %v1485, %v1721
      %v1750 = vadd.f32 %v1488, %v1724
      %v1751 = vld [vmem:[#allocation2 + $0x8] sm:$0xf]
      %v1752 = vld [vmem:[#allocation2 + $0xc] sm:$0xf]
      %v1753 = vld [vmem:[#allocation2 + $0x10] sm:$0xf]
      %v1754 = vld [vmem:[#allocation2 + $0x14] sm:$0xf]
      %v1755 = vld [vmem:[#allocation2 + $0x18] sm:$0xf]
      %v1756 = vld [vmem:[#allocation2 + $0x1c] sm:$0xf]
      %v1757 = vld [vmem:[#allocation2 + $0x20] sm:$0xf]
      %v1758 = vld [vmem:[#allocation2 + $0x24] sm:$0xf]
      %v1759 = vld [vmem:[#allocation2 + $0x28] sm:$0xf]
      %v1760 = vld [vmem:[#allocation2 + $0x2c] sm:$0xf]
      %v1761 = vld [vmem:[#allocation2 + $0x30] sm:$0xf]
      %v1762 = vld [vmem:[#allocation2 + $0x34] sm:$0xf]
      %v1763 = vld [vmem:[#allocation2 + $0x38] sm:$0xf]
      %v1764 = vld [vmem:[#allocation2 + $0x3c] sm:$0xf]
      %v1765 = vld [vmem:[#allocation2 + $0x40] sm:$0xf]
      %v1766 = vld [vmem:[#allocation2 + $0x44] sm:$0xf]
      %v1767 = vld [vmem:[#allocation2 + $0x48] sm:$0xf]
      %v1768 = vld [vmem:[#allocation2 + $0x4c] sm:$0xf]
      %v1769 = vld [vmem:[#allocation2 + $0x50] sm:$0xf]
      %v1770 = vld [vmem:[#allocation2 + $0x54] sm:$0xf]
      %v1771 = vld [vmem:[#allocation2 + $0x58] sm:$0xf]
      %v1772 = vld [vmem:[#allocation2 + $0x5c] sm:$0xf]
      %v1773 = vld [vmem:[#allocation2 + $0x60] sm:$0xf]
      %v1774 = vld [vmem:[#allocation2 + $0x64] sm:$0xf]
      %s1775 = scalar_lea.vmem %s5, 192
      %v1776 = vld [vmem:[%s1775] sm:$0xf]
      %v1777 = vld [vmem:[%s1775 + $0x4] sm:$0xf]
      %v1778 = vld [vmem:[%s1775 + $0x8] sm:$0xf]
      %v1779 = vld [vmem:[%s1775 + $0xc] sm:$0xf]
      %v1780 = vld [vmem:[%s1775 + $0x10] sm:$0xf]
      %v1781 = vld [vmem:[%s1775 + $0x14] sm:$0xf]
      %v1782 = vld [vmem:[%s1775 + $0x18] sm:$0xf]
      %v1783 = vld [vmem:[%s1775 + $0x1c] sm:$0xf]
      %v1784 = vld [vmem:[%s1775 + $0x20] sm:$0xf]
      %v1785 = vld [vmem:[%s1775 + $0x24] sm:$0xf]
      %v1786 = vld [vmem:[%s1775 + $0x28] sm:$0xf]
      %v1787 = vld [vmem:[%s1775 + $0x2c] sm:$0xf]
      %v1788 = vld [vmem:[%s1775 + $0x30] sm:$0xf]
      %v1789 = vld [vmem:[%s1775 + $0x34] sm:$0xf]
      %v1790 = vld [vmem:[%s1775 + $0x38] sm:$0xf]
      %v1791 = vld [vmem:[%s1775 + $0x3c] sm:$0xf]
      %v1816 = vunpack.c.l.b16 %v1751
      %v1817 = vunpack.c.l.b16 %v1752
      %v1818 = vunpack.c.l.b16 %v1753
      %v1819 = vunpack.c.l.b16 %v1754
      %v1820 = vunpack.c.l.b16 %v1755
      %v1821 = vunpack.c.l.b16 %v1756
      %v1822 = vunpack.c.l.b16 %v1757
      %v1823 = vunpack.c.l.b16 %v1758
      %v1824 = vunpack.c.l.b16 %v1759
      %v1825 = vunpack.c.l.b16 %v1760
      %v1826 = vunpack.c.l.b16 %v1761
      %v1827 = vunpack.c.l.b16 %v1762
      %v1828 = vunpack.c.l.b16 %v1763
      %v1829 = vunpack.c.l.b16 %v1764
      %v1830 = vunpack.c.l.b16 %v1765
      %v1831 = vunpack.c.l.b16 %v1766
      %v1832 = vunpack.c.l.b16 %v1767
      %v1833 = vunpack.c.l.b16 %v1768
      %v1834 = vunpack.c.l.b16 %v1769
      %v1835 = vunpack.c.l.b16 %v1770
      %v1836 = vunpack.c.l.b16 %v1771
      %v1837 = vunpack.c.l.b16 %v1772
      %v1838 = vunpack.c.l.b16 %v1773
      %v1839 = vunpack.c.l.b16 %v1774
      %v1840 = vpack.c.b16 %v1817, %v1816
      %v1841 = vpack.c.b16 %v1819, %v1818
      %v1842 = vpack.c.b16 %v1821, %v1820
      %v1843 = vpack.c.b16 %v1823, %v1822
      %v1844 = vpack.c.b16 %v1825, %v1824
      %v1845 = vpack.c.b16 %v1827, %v1826
      %v1846 = vpack.c.b16 %v1829, %v1828
      %v1847 = vpack.c.b16 %v1831, %v1830
      %v1848 = vpack.c.b16 %v1833, %v1832
      %v1849 = vpack.c.b16 %v1835, %v1834
      %v1850 = vpack.c.b16 %v1837, %v1836
      %v1851 = vpack.c.b16 %v1839, %v1838
      %v1880 = vunpack.c.l.b16 %v1776
      %v1881 = vunpack.c.l.b16 %v1777
      %v1882 = vunpack.c.l.b16 %v1778
      %v1883 = vunpack.c.l.b16 %v1779
      %v1884 = vunpack.c.l.b16 %v1780
      %v1885 = vunpack.c.l.b16 %v1781
      %v1886 = vunpack.c.l.b16 %v1782
      %v1887 = vunpack.c.l.b16 %v1783
      %v1888 = vunpack.c.l.b16 %v1784
      %v1889 = vunpack.c.l.b16 %v1785
      %v1890 = vunpack.c.l.b16 %v1786
      %v1891 = vunpack.c.l.b16 %v1787
      %v1892 = vunpack.c.l.b16 %v1788
      %v1893 = vunpack.c.l.b16 %v1789
      %v1894 = vunpack.c.l.b16 %v1790
      %v1895 = vunpack.c.l.b16 %v1791
      %v1896 = vpack.c.b16 %v1881, %v1880
      %v1897 = vpack.c.b16 %v1883, %v1882
      %v1898 = vpack.c.b16 %v1885, %v1884
      %v1899 = vpack.c.b16 %v1887, %v1886
      %v1900 = vpack.c.b16 %v1889, %v1888
      %v1901 = vpack.c.b16 %v1891, %v1890
      %v1902 = vpack.c.b16 %v1893, %v1892
      %v1903 = vpack.c.b16 %v1895, %v1894
      %1912 = vmatprep.subr.bf16.mxu0 0
      %1913 = vmatpush1.bf16.msra.mxu0 %v1903
      %1914 = vmatprep.subr.bf16.mxu0 0
      %1915 = vmatpush1.bf16.msra.mxu0 %v1902
      %1916 = vmatprep.subr.bf16.mxu0 0
      %1917 = vmatpush1.bf16.msra.mxu0 %v1901
      %1918 = vmatprep.subr.bf16.mxu0 0
      %1919 = vmatpush1.bf16.msra.mxu0 %v1900
      %1920 = vmatprep.subr.bf16.mxu0 0
      %1921 = vmatpush1.bf16.msra.mxu0 %v1899
      %1922 = vmatprep.subr.bf16.mxu0 0
      %1923 = vmatpush1.bf16.msra.mxu0 %v1898
      %1924 = vmatprep.subr.bf16.mxu0 0
      %1925 = vmatpush1.bf16.msra.mxu0 %v1897
      %1926 = vmatprep.subr.bf16.mxu0 0
      %1927 = vmatpush1.bf16.msra.mxu0 %v1896
      %1928 = vmatprep.subr.bf16.mxu0 0
      %1929 = vmatpush2.bf16.msra.mxu0 0
      %1930 = vmatprep.subr.bf16.mxu0 0
      %1931 = vmatpush2.bf16.msra.mxu0 0
      %1932 = vmatprep.subr.bf16.mxu0 0
      %1933 = vmatpush2.bf16.msra.mxu0 0
      %1934 = vmatprep.subr.bf16.mxu0 0
      %1935 = vmatpush2.bf16.msra.mxu0 0
      %1936 = vmatprep.subr.bf16.mxu0 0
      %1937 = vmatpush2.bf16.msra.mxu0 0
      %1938 = vmatprep.subr.bf16.mxu0 0
      %1939 = vmatpush2.bf16.msra.mxu0 0
      %1940 = vmatprep.subr.bf16.mxu0 0
      %1941 = vmatpush2.bf16.msra.mxu0 0
      %1942 = vmatprep.subr.bf16.mxu0 0
      %1943 = vmatpush2.bf16.msra.mxu0 0
      %1944 = vmatprep.mubr.bf16.mxu0 0
      %1945 = vmatmul.mubr.bf16.gmra.mxu0 %v1840
      %v1946 = vpop.f32.mrf.mxu0
      %v1947 = vadd.f32 0.0, %v1946
      %v1948 = vpop.f32.mrf.mxu0
      %v1949 = vpop.f32.mrf.mxu0
      %v1950 = vadd.f32 0.0, %v1949
      %v1951 = vpop.f32.mrf.mxu0
      %1952 = vmatprep.mubr.bf16.mxu0 0
      %1953 = vmatmul.mubr.bf16.gmra.mxu0 %v1841
      %v1954 = vpop.f32.mrf.mxu0
      %v1955 = vadd.f32 0.0, %v1954
      %v1956 = vpop.f32.mrf.mxu0
      %v1957 = vpop.f32.mrf.mxu0
      %v1958 = vadd.f32 0.0, %v1957
      %v1959 = vpop.f32.mrf.mxu0
      %1960 = vmatprep.mubr.bf16.mxu0 0
      %1961 = vmatmul.mubr.bf16.gmra.mxu0 %v1842
      %v1962 = vpop.f32.mrf.mxu0
      %v1963 = vadd.f32 0.0, %v1962
      %v1964 = vpop.f32.mrf.mxu0
      %v1965 = vpop.f32.mrf.mxu0
      %v1966 = vadd.f32 0.0, %v1965
      %v1967 = vpop.f32.mrf.mxu0
      %1968 = vmatprep.mubr.bf16.mxu0 0
      %1969 = vmatmul.mubr.bf16.gmra.mxu0 %v1843
      %v1970 = vpop.f32.mrf.mxu0
      %v1971 = vadd.f32 0.0, %v1970
      %v1972 = vpop.f32.mrf.mxu0
      %v1973 = vpop.f32.mrf.mxu0
      %v1974 = vadd.f32 0.0, %v1973
      %v1975 = vpop.f32.mrf.mxu0
      %1976 = vmatprep.mubr.bf16.mxu0 0
      %1977 = vmatmul.mubr.bf16.gmra.mxu0 %v1844
      %v1978 = vpop.f32.mrf.mxu0
      %v1979 = vadd.f32 0.0, %v1978
      %v1980 = vpop.f32.mrf.mxu0
      %v1981 = vpop.f32.mrf.mxu0
      %v1982 = vadd.f32 0.0, %v1981
      %v1983 = vpop.f32.mrf.mxu0
      %1984 = vmatprep.mubr.bf16.mxu0 0
      %1985 = vmatmul.mubr.bf16.gmra.mxu0 %v1845
      %v1986 = vpop.f32.mrf.mxu0
      %v1987 = vadd.f32 0.0, %v1986
      %v1988 = vpop.f32.mrf.mxu0
      %v1989 = vpop.f32.mrf.mxu0
      %v1990 = vadd.f32 0.0, %v1989
      %v1991 = vpop.f32.mrf.mxu0
      %1992 = vmatprep.mubr.bf16.mxu0 0
      %1993 = vmatmul.mubr.bf16.gmra.mxu0 %v1846
      %v1994 = vpop.f32.mrf.mxu0
      %v1995 = vadd.f32 0.0, %v1994
      %v1996 = vpop.f32.mrf.mxu0
      %v1997 = vpop.f32.mrf.mxu0
      %v1998 = vadd.f32 0.0, %v1997
      %v1999 = vpop.f32.mrf.mxu0
      %2000 = vmatprep.mubr.bf16.mxu0 0
      %2001 = vmatmul.mubr.bf16.gmra.mxu0 %v1847
      %v2002 = vpop.f32.mrf.mxu0
      %v2003 = vadd.f32 0.0, %v2002
      %v2004 = vpop.f32.mrf.mxu0
      %v2005 = vpop.f32.mrf.mxu0
      %v2006 = vadd.f32 0.0, %v2005
      %v2007 = vpop.f32.mrf.mxu0
      %2008 = vmatprep.mubr.bf16.mxu0 0
      %2009 = vmatmul.mubr.bf16.gmra.mxu0 %v1848
      %v2010 = vpop.f32.mrf.mxu0
      %v2011 = vadd.f32 0.0, %v2010
      %v2012 = vpop.f32.mrf.mxu0
      %v2013 = vpop.f32.mrf.mxu0
      %v2014 = vadd.f32 0.0, %v2013
      %v2015 = vpop.f32.mrf.mxu0
      %2016 = vmatprep.mubr.bf16.mxu0 0
      %2017 = vmatmul.mubr.bf16.gmra.mxu0 %v1849
      %v2018 = vpop.f32.mrf.mxu0
      %v2019 = vadd.f32 0.0, %v2018
      %v2020 = vpop.f32.mrf.mxu0
      %v2021 = vpop.f32.mrf.mxu0
      %v2022 = vadd.f32 0.0, %v2021
      %v2023 = vpop.f32.mrf.mxu0
      %2024 = vmatprep.mubr.bf16.mxu0 0
      %2025 = vmatmul.mubr.bf16.gmra.mxu0 %v1850
      %v2026 = vpop.f32.mrf.mxu0
      %v2027 = vadd.f32 0.0, %v2026
      %v2028 = vpop.f32.mrf.mxu0
      %v2029 = vpop.f32.mrf.mxu0
      %v2030 = vadd.f32 0.0, %v2029
      %v2031 = vpop.f32.mrf.mxu0
      %2032 = vmatprep.mubr.bf16.mxu0 0
      %2033 = vmatmul.mubr.bf16.gmra.mxu0 %v1851
      %v2034 = vpop.f32.mrf.mxu0
      %v2035 = vadd.f32 0.0, %v2034
      %v2036 = vpop.f32.mrf.mxu0
      %v2037 = vpop.f32.mrf.mxu0
      %v2038 = vadd.f32 0.0, %v2037
      %v2039 = vpop.f32.mrf.mxu0
      %2040 = vdwg.mxu0
      %v2041 = vadd.f32 %v1727, %v1947
      %v2042 = vadd.f32 %v1728, %v1950
      %v2043 = vadd.f32 %v1729, %v1955
      %v2044 = vadd.f32 %v1730, %v1958
      %v2045 = vadd.f32 %v1731, %v1963
      %v2046 = vadd.f32 %v1732, %v1966
      %v2047 = vadd.f32 %v1733, %v1971
      %v2048 = vadd.f32 %v1734, %v1974
      %v2049 = vadd.f32 %v1735, %v1979
      %v2050 = vadd.f32 %v1736, %v1982
      %v2051 = vadd.f32 %v1737, %v1987
      %v2052 = vadd.f32 %v1738, %v1990
      %v2053 = vadd.f32 %v1739, %v1995
      %v2054 = vadd.f32 %v1740, %v1998
      %v2055 = vadd.f32 %v1741, %v2003
      %v2056 = vadd.f32 %v1742, %v2006
      %v2057 = vadd.f32 %v1743, %v2011
      %v2058 = vadd.f32 %v1744, %v2014
      %v2059 = vadd.f32 %v1745, %v2019
      %v2060 = vadd.f32 %v1746, %v2022
      %v2061 = vadd.f32 %v1747, %v2027
      %v2062 = vadd.f32 %v1748, %v2030
      %v2063 = vadd.f32 %v1749, %v2035
      %v2064 = vadd.f32 %v1750, %v2038
      %v2065 = vld [vmem:[#allocation2 + $0x8] sm:$0xf]
      %v2066 = vld [vmem:[#allocation2 + $0xc] sm:$0xf]
      %v2067 = vld [vmem:[#allocation2 + $0x10] sm:$0xf]
      %v2068 = vld [vmem:[#allocation2 + $0x14] sm:$0xf]
      %v2069 = vld [vmem:[#allocation2 + $0x18] sm:$0xf]
      %v2070 = vld [vmem:[#allocation2 + $0x1c] sm:$0xf]
      %v2071 = vld [vmem:[#allocation2 + $0x20] sm:$0xf]
      %v2072 = vld [vmem:[#allocation2 + $0x24] sm:$0xf]
      %v2073 = vld [vmem:[#allocation2 + $0x28] sm:$0xf]
      %v2074 = vld [vmem:[#allocation2 + $0x2c] sm:$0xf]
      %v2075 = vld [vmem:[#allocation2 + $0x30] sm:$0xf]
      %v2076 = vld [vmem:[#allocation2 + $0x34] sm:$0xf]
      %v2077 = vld [vmem:[#allocation2 + $0x38] sm:$0xf]
      %v2078 = vld [vmem:[#allocation2 + $0x3c] sm:$0xf]
      %v2079 = vld [vmem:[#allocation2 + $0x40] sm:$0xf]
      %v2080 = vld [vmem:[#allocation2 + $0x44] sm:$0xf]
      %v2081 = vld [vmem:[#allocation2 + $0x48] sm:$0xf]
      %v2082 = vld [vmem:[#allocation2 + $0x4c] sm:$0xf]
      %v2083 = vld [vmem:[#allocation2 + $0x50] sm:$0xf]
      %v2084 = vld [vmem:[#allocation2 + $0x54] sm:$0xf]
      %v2085 = vld [vmem:[#allocation2 + $0x58] sm:$0xf]
      %v2086 = vld [vmem:[#allocation2 + $0x5c] sm:$0xf]
      %v2087 = vld [vmem:[#allocation2 + $0x60] sm:$0xf]
      %v2088 = vld [vmem:[#allocation2 + $0x64] sm:$0xf]
      %v2089 = vld [vmem:[#allocation2 + $0x68] sm:$0x1]
      %s2090 = scalar_lea.vmem %s5, 256
      %v2091 = vld [vmem:[%s2090] sm:$0xf]
      %v2092 = vld [vmem:[%s2090 + $0x4] sm:$0xf]
      %v2093 = vld [vmem:[%s2090 + $0x8] sm:$0xf]
      %v2094 = vld [vmem:[%s2090 + $0xc] sm:$0xf]
      %v2095 = vld [vmem:[%s2090 + $0x10] sm:$0xf]
      %v2096 = vld [vmem:[%s2090 + $0x14] sm:$0xf]
      %v2097 = vld [vmem:[%s2090 + $0x18] sm:$0xf]
      %v2098 = vld [vmem:[%s2090 + $0x1c] sm:$0xf]
      %v2099 = vld [vmem:[%s2090 + $0x20] sm:$0xf]
      %v2100 = vld [vmem:[%s2090 + $0x24] sm:$0xf]
      %v2101 = vld [vmem:[%s2090 + $0x28] sm:$0xf]
      %v2102 = vld [vmem:[%s2090 + $0x2c] sm:$0xf]
      %v2103 = vld [vmem:[%s2090 + $0x30] sm:$0xf]
      %v2104 = vld [vmem:[%s2090 + $0x34] sm:$0xf]
      %v2105 = vld [vmem:[%s2090 + $0x38] sm:$0xf]
      %v2106 = vld [vmem:[%s2090 + $0x3c] sm:$0xf]
      %v2132 = vunpack.c.l.b16 %v2065
      %v2133 = vunpack.c.l.b16 %v2066
      %v2134 = vunpack.c.l.b16 %v2067
      %v2135 = vunpack.c.l.b16 %v2068
      %v2136 = vunpack.c.l.b16 %v2069
      %v2137 = vunpack.c.l.b16 %v2070
      %v2138 = vunpack.c.l.b16 %v2071
      %v2139 = vunpack.c.l.b16 %v2072
      %v2140 = vunpack.c.l.b16 %v2073
      %v2141 = vunpack.c.l.b16 %v2074
      %v2142 = vunpack.c.l.b16 %v2075
      %v2143 = vunpack.c.l.b16 %v2076
      %v2144 = vunpack.c.l.b16 %v2077
      %v2145 = vunpack.c.l.b16 %v2078
      %v2146 = vunpack.c.l.b16 %v2079
      %v2147 = vunpack.c.l.b16 %v2080
      %v2148 = vunpack.c.l.b16 %v2081
      %v2149 = vunpack.c.l.b16 %v2082
      %v2150 = vunpack.c.l.b16 %v2083
      %v2151 = vunpack.c.l.b16 %v2084
      %v2152 = vunpack.c.l.b16 %v2085
      %v2153 = vunpack.c.l.b16 %v2086
      %v2154 = vunpack.c.l.b16 %v2087
      %v2155 = vunpack.c.l.b16 %v2088
      %v2156 = vunpack.c.l.b16 %v2089
      %v2157 = vpack.c.b16 %v2133, %v2132
      %v2158 = vpack.c.b16 %v2135, %v2134
      %v2159 = vpack.c.b16 %v2137, %v2136
      %v2160 = vpack.c.b16 %v2139, %v2138
      %v2161 = vpack.c.b16 %v2141, %v2140
      %v2162 = vpack.c.b16 %v2143, %v2142
      %v2163 = vpack.c.b16 %v2145, %v2144
      %v2164 = vpack.c.b16 %v2147, %v2146
      %v2165 = vpack.c.b16 %v2149, %v2148
      %v2166 = vpack.c.b16 %v2151, %v2150
      %v2167 = vpack.c.b16 %v2153, %v2152
      %v2168 = vpack.c.b16 %v2155, %v2154
      %v2169 = vpack.c.b16 %v2156, %v2156
      %v2171 = vshrl.u32 %v2157, 16
      %v2173 = vshll.u32 %v2157, 16
      %v2175 = vrot.slane %v2173, 1
      %v2176 = vor.u32 %v2171, %v2175
      %v2178 = vshll.u32 %v2158, 16
      %v2180 = vrot.slane %v2178, 1
      %v2181 = vsel %vm1012, %v2176, %v2180
      %v2182 = vshrl.u32 %v2158, 16
      %v2184 = vor.u32 %v2182, %v2180
      %v2186 = vshll.u32 %v2159, 16
      %v2188 = vrot.slane %v2186, 1
      %v2189 = vsel %vm1012, %v2184, %v2188
      %v2190 = vshrl.u32 %v2159, 16
      %v2192 = vor.u32 %v2190, %v2188
      %v2194 = vshll.u32 %v2160, 16
      %v2196 = vrot.slane %v2194, 1
      %v2197 = vsel %vm1012, %v2192, %v2196
      %v2198 = vshrl.u32 %v2160, 16
      %v2200 = vor.u32 %v2198, %v2196
      %v2202 = vshll.u32 %v2161, 16
      %v2204 = vrot.slane %v2202, 1
      %v2205 = vsel %vm1012, %v2200, %v2204
      %v2206 = vshrl.u32 %v2161, 16
      %v2208 = vor.u32 %v2206, %v2204
      %v2210 = vshll.u32 %v2162, 16
      %v2212 = vrot.slane %v2210, 1
      %v2213 = vsel %vm1012, %v2208, %v2212
      %v2214 = vshrl.u32 %v2162, 16
      %v2216 = vor.u32 %v2214, %v2212
      %v2218 = vshll.u32 %v2163, 16
      %v2220 = vrot.slane %v2218, 1
      %v2221 = vsel %vm1012, %v2216, %v2220
      %v2222 = vshrl.u32 %v2163, 16
      %v2224 = vor.u32 %v2222, %v2220
      %v2226 = vshll.u32 %v2164, 16
      %v2228 = vrot.slane %v2226, 1
      %v2229 = vsel %vm1012, %v2224, %v2228
      %v2230 = vshrl.u32 %v2164, 16
      %v2232 = vor.u32 %v2230, %v2228
      %v2234 = vshll.u32 %v2165, 16
      %v2236 = vrot.slane %v2234, 1
      %v2237 = vsel %vm1012, %v2232, %v2236
      %v2238 = vshrl.u32 %v2165, 16
      %v2240 = vor.u32 %v2238, %v2236
      %v2242 = vshll.u32 %v2166, 16
      %v2244 = vrot.slane %v2242, 1
      %v2245 = vsel %vm1012, %v2240, %v2244
      %v2246 = vshrl.u32 %v2166, 16
      %v2248 = vor.u32 %v2246, %v2244
      %v2250 = vshll.u32 %v2167, 16
      %v2252 = vrot.slane %v2250, 1
      %v2253 = vsel %vm1012, %v2248, %v2252
      %v2254 = vshrl.u32 %v2167, 16
      %v2256 = vor.u32 %v2254, %v2252
      %v2258 = vshll.u32 %v2168, 16
      %v2260 = vrot.slane %v2258, 1
      %v2261 = vsel %vm1012, %v2256, %v2260
      %v2262 = vshrl.u32 %v2168, 16
      %v2264 = vor.u32 %v2262, %v2260
      %v2266 = vshll.u32 %v2169, 16
      %v2268 = vrot.slane %v2266, 1
      %v2269 = vsel %vm1012, %v2264, %v2268
      %v2298 = vunpack.c.l.b16 %v2091
      %v2299 = vunpack.c.l.b16 %v2092
      %v2300 = vunpack.c.l.b16 %v2093
      %v2301 = vunpack.c.l.b16 %v2094
      %v2302 = vunpack.c.l.b16 %v2095
      %v2303 = vunpack.c.l.b16 %v2096
      %v2304 = vunpack.c.l.b16 %v2097
      %v2305 = vunpack.c.l.b16 %v2098
      %v2306 = vunpack.c.l.b16 %v2099
      %v2307 = vunpack.c.l.b16 %v2100
      %v2308 = vunpack.c.l.b16 %v2101
      %v2309 = vunpack.c.l.b16 %v2102
      %v2310 = vunpack.c.l.b16 %v2103
      %v2311 = vunpack.c.l.b16 %v2104
      %v2312 = vunpack.c.l.b16 %v2105
      %v2313 = vunpack.c.l.b16 %v2106
      %v2314 = vpack.c.b16 %v2299, %v2298
      %v2315 = vpack.c.b16 %v2301, %v2300
      %v2316 = vpack.c.b16 %v2303, %v2302
      %v2317 = vpack.c.b16 %v2305, %v2304
      %v2318 = vpack.c.b16 %v2307, %v2306
      %v2319 = vpack.c.b16 %v2309, %v2308
      %v2320 = vpack.c.b16 %v2311, %v2310
      %v2321 = vpack.c.b16 %v2313, %v2312
      %2330 = vmatprep.subr.bf16.mxu0 0
      %2331 = vmatpush1.bf16.msra.mxu0 %v2321
      %2332 = vmatprep.subr.bf16.mxu0 0
      %2333 = vmatpush1.bf16.msra.mxu0 %v2320
      %2334 = vmatprep.subr.bf16.mxu0 0
      %2335 = vmatpush1.bf16.msra.mxu0 %v2319
      %2336 = vmatprep.subr.bf16.mxu0 0
      %2337 = vmatpush1.bf16.msra.mxu0 %v2318
      %2338 = vmatprep.subr.bf16.mxu0 0
      %2339 = vmatpush1.bf16.msra.mxu0 %v2317
      %2340 = vmatprep.subr.bf16.mxu0 0
      %2341 = vmatpush1.bf16.msra.mxu0 %v2316
      %2342 = vmatprep.subr.bf16.mxu0 0
      %2343 = vmatpush1.bf16.msra.mxu0 %v2315
      %2344 = vmatprep.subr.bf16.mxu0 0
      %2345 = vmatpush1.bf16.msra.mxu0 %v2314
      %2346 = vmatprep.subr.bf16.mxu0 0
      %2347 = vmatpush2.bf16.msra.mxu0 0
      %2348 = vmatprep.subr.bf16.mxu0 0
      %2349 = vmatpush2.bf16.msra.mxu0 0
      %2350 = vmatprep.subr.bf16.mxu0 0
      %2351 = vmatpush2.bf16.msra.mxu0 0
      %2352 = vmatprep.subr.bf16.mxu0 0
      %2353 = vmatpush2.bf16.msra.mxu0 0
      %2354 = vmatprep.subr.bf16.mxu0 0
      %2355 = vmatpush2.bf16.msra.mxu0 0
      %2356 = vmatprep.subr.bf16.mxu0 0
      %2357 = vmatpush2.bf16.msra.mxu0 0
      %2358 = vmatprep.subr.bf16.mxu0 0
      %2359 = vmatpush2.bf16.msra.mxu0 0
      %2360 = vmatprep.subr.bf16.mxu0 0
      %2361 = vmatpush2.bf16.msra.mxu0 0
      %2362 = vmatprep.mubr.bf16.mxu0 0
      %2363 = vmatmul.mubr.bf16.gmra.mxu0 %v2181
      %v2364 = vpop.f32.mrf.mxu0
      %v2365 = vadd.f32 0.0, %v2364
      %v2366 = vpop.f32.mrf.mxu0
      %v2367 = vpop.f32.mrf.mxu0
      %v2368 = vadd.f32 0.0, %v2367
      %v2369 = vpop.f32.mrf.mxu0
      %2370 = vmatprep.mubr.bf16.mxu0 0
      %2371 = vmatmul.mubr.bf16.gmra.mxu0 %v2189
      %v2372 = vpop.f32.mrf.mxu0
      %v2373 = vadd.f32 0.0, %v2372
      %v2374 = vpop.f32.mrf.mxu0
      %v2375 = vpop.f32.mrf.mxu0
      %v2376 = vadd.f32 0.0, %v2375
      %v2377 = vpop.f32.mrf.mxu0
      %2378 = vmatprep.mubr.bf16.mxu0 0
      %2379 = vmatmul.mubr.bf16.gmra.mxu0 %v2197
      %v2380 = vpop.f32.mrf.mxu0
      %v2381 = vadd.f32 0.0, %v2380
      %v2382 = vpop.f32.mrf.mxu0
      %v2383 = vpop.f32.mrf.mxu0
      %v2384 = vadd.f32 0.0, %v2383
      %v2385 = vpop.f32.mrf.mxu0
      %2386 = vmatprep.mubr.bf16.mxu0 0
      %2387 = vmatmul.mubr.bf16.gmra.mxu0 %v2205
      %v2388 = vpop.f32.mrf.mxu0
      %v2389 = vadd.f32 0.0, %v2388
      %v2390 = vpop.f32.mrf.mxu0
      %v2391 = vpop.f32.mrf.mxu0
      %v2392 = vadd.f32 0.0, %v2391
      %v2393 = vpop.f32.mrf.mxu0
      %2394 = vmatprep.mubr.bf16.mxu0 0
      %2395 = vmatmul.mubr.bf16.gmra.mxu0 %v2213
      %v2396 = vpop.f32.mrf.mxu0
      %v2397 = vadd.f32 0.0, %v2396
      %v2398 = vpop.f32.mrf.mxu0
      %v2399 = vpop.f32.mrf.mxu0
      %v2400 = vadd.f32 0.0, %v2399
      %v2401 = vpop.f32.mrf.mxu0
      %2402 = vmatprep.mubr.bf16.mxu0 0
      %2403 = vmatmul.mubr.bf16.gmra.mxu0 %v2221
      %v2404 = vpop.f32.mrf.mxu0
      %v2405 = vadd.f32 0.0, %v2404
      %v2406 = vpop.f32.mrf.mxu0
      %v2407 = vpop.f32.mrf.mxu0
      %v2408 = vadd.f32 0.0, %v2407
      %v2409 = vpop.f32.mrf.mxu0
      %2410 = vmatprep.mubr.bf16.mxu0 0
      %2411 = vmatmul.mubr.bf16.gmra.mxu0 %v2229
      %v2412 = vpop.f32.mrf.mxu0
      %v2413 = vadd.f32 0.0, %v2412
      %v2414 = vpop.f32.mrf.mxu0
      %v2415 = vpop.f32.mrf.mxu0
      %v2416 = vadd.f32 0.0, %v2415
      %v2417 = vpop.f32.mrf.mxu0
      %2418 = vmatprep.mubr.bf16.mxu0 0
      %2419 = vmatmul.mubr.bf16.gmra.mxu0 %v2237
      %v2420 = vpop.f32.mrf.mxu0
      %v2421 = vadd.f32 0.0, %v2420
      %v2422 = vpop.f32.mrf.mxu0
      %v2423 = vpop.f32.mrf.mxu0
      %v2424 = vadd.f32 0.0, %v2423
      %v2425 = vpop.f32.mrf.mxu0
      %2426 = vmatprep.mubr.bf16.mxu0 0
      %2427 = vmatmul.mubr.bf16.gmra.mxu0 %v2245
      %v2428 = vpop.f32.mrf.mxu0
      %v2429 = vadd.f32 0.0, %v2428
      %v2430 = vpop.f32.mrf.mxu0
      %v2431 = vpop.f32.mrf.mxu0
      %v2432 = vadd.f32 0.0, %v2431
      %v2433 = vpop.f32.mrf.mxu0
      %2434 = vmatprep.mubr.bf16.mxu0 0
      %2435 = vmatmul.mubr.bf16.gmra.mxu0 %v2253
      %v2436 = vpop.f32.mrf.mxu0
      %v2437 = vadd.f32 0.0, %v2436
      %v2438 = vpop.f32.mrf.mxu0
      %v2439 = vpop.f32.mrf.mxu0
      %v2440 = vadd.f32 0.0, %v2439
      %v2441 = vpop.f32.mrf.mxu0
      %2442 = vmatprep.mubr.bf16.mxu0 0
      %2443 = vmatmul.mubr.bf16.gmra.mxu0 %v2261
      %v2444 = vpop.f32.mrf.mxu0
      %v2445 = vadd.f32 0.0, %v2444
      %v2446 = vpop.f32.mrf.mxu0
      %v2447 = vpop.f32.mrf.mxu0
      %v2448 = vadd.f32 0.0, %v2447
      %v2449 = vpop.f32.mrf.mxu0
      %2450 = vmatprep.mubr.bf16.mxu0 0
      %2451 = vmatmul.mubr.bf16.gmra.mxu0 %v2269
      %v2452 = vpop.f32.mrf.mxu0
      %v2453 = vadd.f32 0.0, %v2452
      %v2454 = vpop.f32.mrf.mxu0
      %v2455 = vpop.f32.mrf.mxu0
      %v2456 = vadd.f32 0.0, %v2455
      %v2457 = vpop.f32.mrf.mxu0
      %2458 = vdwg.mxu0
      %v2459 = vadd.f32 %v2041, %v2365
      %v2460 = vadd.f32 %v2042, %v2368
      %v2461 = vadd.f32 %v2043, %v2373
      %v2462 = vadd.f32 %v2044, %v2376
      %v2463 = vadd.f32 %v2045, %v2381
      %v2464 = vadd.f32 %v2046, %v2384
      %v2465 = vadd.f32 %v2047, %v2389
      %v2466 = vadd.f32 %v2048, %v2392
      %v2467 = vadd.f32 %v2049, %v2397
      %v2468 = vadd.f32 %v2050, %v2400
      %v2469 = vadd.f32 %v2051, %v2405
      %v2470 = vadd.f32 %v2052, %v2408
      %v2471 = vadd.f32 %v2053, %v2413
      %v2472 = vadd.f32 %v2054, %v2416
      %v2473 = vadd.f32 %v2055, %v2421
      %v2474 = vadd.f32 %v2056, %v2424
      %v2475 = vadd.f32 %v2057, %v2429
      %v2476 = vadd.f32 %v2058, %v2432
      %v2477 = vadd.f32 %v2059, %v2437
      %v2478 = vadd.f32 %v2060, %v2440
      %v2479 = vadd.f32 %v2061, %v2445
      %v2480 = vadd.f32 %v2062, %v2448
      %v2481 = vadd.f32 %v2063, %v2453
      %v2482 = vadd.f32 %v2064, %v2456
      %v2483 = vld [vmem:[#allocation2 + $0x8] sm:$0xe]
      %s2484 = scalar_lea.vmem %s5, 320
      %v2485 = vld [vmem:[%s2484] sm:$0xf]
      %v2486 = vld [vmem:[%s2484 + $0x4] sm:$0xf]
      %v2487 = vld [vmem:[%s2484 + $0x8] sm:$0xf]
      %v2488 = vld [vmem:[%s2484 + $0xc] sm:$0xf]
      %v2489 = vld [vmem:[%s2484 + $0x10] sm:$0xf]
      %v2490 = vld [vmem:[%s2484 + $0x14] sm:$0xf]
      %v2491 = vld [vmem:[%s2484 + $0x18] sm:$0xf]
      %v2492 = vld [vmem:[%s2484 + $0x1c] sm:$0xf]
      %v2493 = vld [vmem:[%s2484 + $0x20] sm:$0xf]
      %v2494 = vld [vmem:[%s2484 + $0x24] sm:$0xf]
      %v2495 = vld [vmem:[%s2484 + $0x28] sm:$0xf]
      %v2496 = vld [vmem:[%s2484 + $0x2c] sm:$0xf]
      %v2497 = vld [vmem:[%s2484 + $0x30] sm:$0xf]
      %v2498 = vld [vmem:[%s2484 + $0x34] sm:$0xf]
      %v2499 = vld [vmem:[%s2484 + $0x38] sm:$0xf]
      %v2500 = vld [vmem:[%s2484 + $0x3c] sm:$0xf]
      %v2502 = vunpack.c.l.b16 %v2483
      %v2503 = vpack.c.b16 %v2133, %v2502
      %v2504 = vrot.slane %v2503, 1
      %v2505 = vrot.slane %v2158, 1
      %v2506 = vsel %vm1512, %v2504, %v2505
      %v2507 = vrot.slane %v2159, 1
      %v2508 = vsel %vm1512, %v2505, %v2507
      %v2509 = vrot.slane %v2160, 1
      %v2510 = vsel %vm1512, %v2507, %v2509
      %v2511 = vrot.slane %v2161, 1
      %v2512 = vsel %vm1512, %v2509, %v2511
      %v2513 = vrot.slane %v2162, 1
      %v2514 = vsel %vm1512, %v2511, %v2513
      %v2515 = vrot.slane %v2163, 1
      %v2516 = vsel %vm1512, %v2513, %v2515
      %v2517 = vrot.slane %v2164, 1
      %v2518 = vsel %vm1512, %v2515, %v2517
      %v2519 = vrot.slane %v2165, 1
      %v2520 = vsel %vm1512, %v2517, %v2519
      %v2521 = vrot.slane %v2166, 1
      %v2522 = vsel %vm1512, %v2519, %v2521
      %v2523 = vrot.slane %v2167, 1
      %v2524 = vsel %vm1512, %v2521, %v2523
      %v2525 = vrot.slane %v2168, 1
      %v2526 = vsel %vm1512, %v2523, %v2525
      %v2527 = vrot.slane %v2169, 1
      %v2528 = vsel %vm1512, %v2525, %v2527
      %v2557 = vunpack.c.l.b16 %v2485
      %v2558 = vunpack.c.l.b16 %v2486
      %v2559 = vunpack.c.l.b16 %v2487
      %v2560 = vunpack.c.l.b16 %v2488
      %v2561 = vunpack.c.l.b16 %v2489
      %v2562 = vunpack.c.l.b16 %v2490
      %v2563 = vunpack.c.l.b16 %v2491
      %v2564 = vunpack.c.l.b16 %v2492
      %v2565 = vunpack.c.l.b16 %v2493
      %v2566 = vunpack.c.l.b16 %v2494
      %v2567 = vunpack.c.l.b16 %v2495
      %v2568 = vunpack.c.l.b16 %v2496
      %v2569 = vunpack.c.l.b16 %v2497
      %v2570 = vunpack.c.l.b16 %v2498
      %v2571 = vunpack.c.l.b16 %v2499
      %v2572 = vunpack.c.l.b16 %v2500
      %v2573 = vpack.c.b16 %v2558, %v2557
      %v2574 = vpack.c.b16 %v2560, %v2559
      %v2575 = vpack.c.b16 %v2562, %v2561
      %v2576 = vpack.c.b16 %v2564, %v2563
      %v2577 = vpack.c.b16 %v2566, %v2565
      %v2578 = vpack.c.b16 %v2568, %v2567
      %v2579 = vpack.c.b16 %v2570, %v2569
      %v2580 = vpack.c.b16 %v2572, %v2571
      %2589 = vmatprep.subr.bf16.mxu0 0
      %2590 = vmatpush1.bf16.msra.mxu0 %v2580
      %2591 = vmatprep.subr.bf16.mxu0 0
      %2592 = vmatpush1.bf16.msra.mxu0 %v2579
      %2593 = vmatprep.subr.bf16.mxu0 0
      %2594 = vmatpush1.bf16.msra.mxu0 %v2578
      %2595 = vmatprep.subr.bf16.mxu0 0
      %2596 = vmatpush1.bf16.msra.mxu0 %v2577
      %2597 = vmatprep.subr.bf16.mxu0 0
      %2598 = vmatpush1.bf16.msra.mxu0 %v2576
      %2599 = vmatprep.subr.bf16.mxu0 0
      %2600 = vmatpush1.bf16.msra.mxu0 %v2575
      %2601 = vmatprep.subr.bf16.mxu0 0
      %2602 = vmatpush1.bf16.msra.mxu0 %v2574
      %2603 = vmatprep.subr.bf16.mxu0 0
      %2604 = vmatpush1.bf16.msra.mxu0 %v2573
      %2605 = vmatprep.subr.bf16.mxu0 0
      %2606 = vmatpush2.bf16.msra.mxu0 0
      %2607 = vmatprep.subr.bf16.mxu0 0
      %2608 = vmatpush2.bf16.msra.mxu0 0
      %2609 = vmatprep.subr.bf16.mxu0 0
      %2610 = vmatpush2.bf16.msra.mxu0 0
      %2611 = vmatprep.subr.bf16.mxu0 0
      %2612 = vmatpush2.bf16.msra.mxu0 0
      %2613 = vmatprep.subr.bf16.mxu0 0
      %2614 = vmatpush2.bf16.msra.mxu0 0
      %2615 = vmatprep.subr.bf16.mxu0 0
      %2616 = vmatpush2.bf16.msra.mxu0 0
      %2617 = vmatprep.subr.bf16.mxu0 0
      %2618 = vmatpush2.bf16.msra.mxu0 0
      %2619 = vmatprep.subr.bf16.mxu0 0
      %2620 = vmatpush2.bf16.msra.mxu0 0
      %2621 = vmatprep.mubr.bf16.mxu0 0
      %2622 = vmatmul.mubr.bf16.gmra.mxu0 %v2506
      %v2623 = vpop.f32.mrf.mxu0
      %v2624 = vadd.f32 0.0, %v2623
      %v2625 = vpop.f32.mrf.mxu0
      %v2626 = vpop.f32.mrf.mxu0
      %v2627 = vadd.f32 0.0, %v2626
      %v2628 = vpop.f32.mrf.mxu0
      %2629 = vmatprep.mubr.bf16.mxu0 0
      %2630 = vmatmul.mubr.bf16.gmra.mxu0 %v2508
      %v2631 = vpop.f32.mrf.mxu0
      %v2632 = vadd.f32 0.0, %v2631
      %v2633 = vpop.f32.mrf.mxu0
      %v2634 = vpop.f32.mrf.mxu0
      %v2635 = vadd.f32 0.0, %v2634
      %v2636 = vpop.f32.mrf.mxu0
      %2637 = vmatprep.mubr.bf16.mxu0 0
      %2638 = vmatmul.mubr.bf16.gmra.mxu0 %v2510
      %v2639 = vpop.f32.mrf.mxu0
      %v2640 = vadd.f32 0.0, %v2639
      %v2641 = vpop.f32.mrf.mxu0
      %v2642 = vpop.f32.mrf.mxu0
      %v2643 = vadd.f32 0.0, %v2642
      %v2644 = vpop.f32.mrf.mxu0
      %2645 = vmatprep.mubr.bf16.mxu0 0
      %2646 = vmatmul.mubr.bf16.gmra.mxu0 %v2512
      %v2647 = vpop.f32.mrf.mxu0
      %v2648 = vadd.f32 0.0, %v2647
      %v2649 = vpop.f32.mrf.mxu0
      %v2650 = vpop.f32.mrf.mxu0
      %v2651 = vadd.f32 0.0, %v2650
      %v2652 = vpop.f32.mrf.mxu0
      %2653 = vmatprep.mubr.bf16.mxu0 0
      %2654 = vmatmul.mubr.bf16.gmra.mxu0 %v2514
      %v2655 = vpop.f32.mrf.mxu0
      %v2656 = vadd.f32 0.0, %v2655
      %v2657 = vpop.f32.mrf.mxu0
      %v2658 = vpop.f32.mrf.mxu0
      %v2659 = vadd.f32 0.0, %v2658
      %v2660 = vpop.f32.mrf.mxu0
      %2661 = vmatprep.mubr.bf16.mxu0 0
      %2662 = vmatmul.mubr.bf16.gmra.mxu0 %v2516
      %v2663 = vpop.f32.mrf.mxu0
      %v2664 = vadd.f32 0.0, %v2663
      %v2665 = vpop.f32.mrf.mxu0
      %v2666 = vpop.f32.mrf.mxu0
      %v2667 = vadd.f32 0.0, %v2666
      %v2668 = vpop.f32.mrf.mxu0
      %2669 = vmatprep.mubr.bf16.mxu0 0
      %2670 = vmatmul.mubr.bf16.gmra.mxu0 %v2518
      %v2671 = vpop.f32.mrf.mxu0
      %v2672 = vadd.f32 0.0, %v2671
      %v2673 = vpop.f32.mrf.mxu0
      %v2674 = vpop.f32.mrf.mxu0
      %v2675 = vadd.f32 0.0, %v2674
      %v2676 = vpop.f32.mrf.mxu0
      %2677 = vmatprep.mubr.bf16.mxu0 0
      %2678 = vmatmul.mubr.bf16.gmra.mxu0 %v2520
      %v2679 = vpop.f32.mrf.mxu0
      %v2680 = vadd.f32 0.0, %v2679
      %v2681 = vpop.f32.mrf.mxu0
      %v2682 = vpop.f32.mrf.mxu0
      %v2683 = vadd.f32 0.0, %v2682
      %v2684 = vpop.f32.mrf.mxu0
      %2685 = vmatprep.mubr.bf16.mxu0 0
      %2686 = vmatmul.mubr.bf16.gmra.mxu0 %v2522
      %v2687 = vpop.f32.mrf.mxu0
      %v2688 = vadd.f32 0.0, %v2687
      %v2689 = vpop.f32.mrf.mxu0
      %v2690 = vpop.f32.mrf.mxu0
      %v2691 = vadd.f32 0.0, %v2690
      %v2692 = vpop.f32.mrf.mxu0
      %2693 = vmatprep.mubr.bf16.mxu0 0
      %2694 = vmatmul.mubr.bf16.gmra.mxu0 %v2524
      %v2695 = vpop.f32.mrf.mxu0
      %v2696 = vadd.f32 0.0, %v2695
      %v2697 = vpop.f32.mrf.mxu0
      %v2698 = vpop.f32.mrf.mxu0
      %v2699 = vadd.f32 0.0, %v2698
      %v2700 = vpop.f32.mrf.mxu0
      %2701 = vmatprep.mubr.bf16.mxu0 0
      %2702 = vmatmul.mubr.bf16.gmra.mxu0 %v2526
      %v2703 = vpop.f32.mrf.mxu0
      %v2704 = vadd.f32 0.0, %v2703
      %v2705 = vpop.f32.mrf.mxu0
      %v2706 = vpop.f32.mrf.mxu0
      %v2707 = vadd.f32 0.0, %v2706
      %v2708 = vpop.f32.mrf.mxu0
      %2709 = vmatprep.mubr.bf16.mxu0 0
      %2710 = vmatmul.mubr.bf16.gmra.mxu0 %v2528
      %v2711 = vpop.f32.mrf.mxu0
      %v2712 = vadd.f32 0.0, %v2711
      %v2713 = vpop.f32.mrf.mxu0
      %v2714 = vpop.f32.mrf.mxu0
      %v2715 = vadd.f32 0.0, %v2714
      %v2716 = vpop.f32.mrf.mxu0
      %2717 = vdwg.mxu0
      %v2718 = vadd.f32 %v2459, %v2624
      %v2719 = vadd.f32 %v2460, %v2627
      %v2720 = vadd.f32 %v2461, %v2632
      %v2721 = vadd.f32 %v2462, %v2635
      %v2722 = vadd.f32 %v2463, %v2640
      %v2723 = vadd.f32 %v2464, %v2643
      %v2724 = vadd.f32 %v2465, %v2648
      %v2725 = vadd.f32 %v2466, %v2651
      %v2726 = vadd.f32 %v2467, %v2656
      %v2727 = vadd.f32 %v2468, %v2659
      %v2728 = vadd.f32 %v2469, %v2664
      %v2729 = vadd.f32 %v2470, %v2667
      %v2730 = vadd.f32 %v2471, %v2672
      %v2731 = vadd.f32 %v2472, %v2675
      %v2732 = vadd.f32 %v2473, %v2680
      %v2733 = vadd.f32 %v2474, %v2683
      %v2734 = vadd.f32 %v2475, %v2688
      %v2735 = vadd.f32 %v2476, %v2691
      %v2736 = vadd.f32 %v2477, %v2696
      %v2737 = vadd.f32 %v2478, %v2699
      %v2738 = vadd.f32 %v2479, %v2704
      %v2739 = vadd.f32 %v2480, %v2707
      %v2740 = vadd.f32 %v2481, %v2712
      %v2741 = vadd.f32 %v2482, %v2715
      %v2742 = vld [vmem:[#allocation2 + $0x10] sm:$0xf]
      %v2743 = vld [vmem:[#allocation2 + $0x14] sm:$0xf]
      %v2744 = vld [vmem:[#allocation2 + $0x18] sm:$0xf]
      %v2745 = vld [vmem:[#allocation2 + $0x1c] sm:$0xf]
      %v2746 = vld [vmem:[#allocation2 + $0x20] sm:$0xf]
      %v2747 = vld [vmem:[#allocation2 + $0x24] sm:$0xf]
      %v2748 = vld [vmem:[#allocation2 + $0x28] sm:$0xf]
      %v2749 = vld [vmem:[#allocation2 + $0x2c] sm:$0xf]
      %v2750 = vld [vmem:[#allocation2 + $0x30] sm:$0xf]
      %v2751 = vld [vmem:[#allocation2 + $0x34] sm:$0xf]
      %v2752 = vld [vmem:[#allocation2 + $0x38] sm:$0xf]
      %v2753 = vld [vmem:[#allocation2 + $0x3c] sm:$0xf]
      %v2754 = vld [vmem:[#allocation2 + $0x40] sm:$0xf]
      %v2755 = vld [vmem:[#allocation2 + $0x44] sm:$0xf]
      %v2756 = vld [vmem:[#allocation2 + $0x48] sm:$0xf]
      %v2757 = vld [vmem:[#allocation2 + $0x4c] sm:$0xf]
      %v2758 = vld [vmem:[#allocation2 + $0x50] sm:$0xf]
      %v2759 = vld [vmem:[#allocation2 + $0x54] sm:$0xf]
      %v2760 = vld [vmem:[#allocation2 + $0x58] sm:$0xf]
      %v2761 = vld [vmem:[#allocation2 + $0x5c] sm:$0xf]
      %v2762 = vld [vmem:[#allocation2 + $0x60] sm:$0xf]
      %v2763 = vld [vmem:[#allocation2 + $0x64] sm:$0xf]
      %v2764 = vld [vmem:[#allocation2 + $0x68] sm:$0xf]
      %v2765 = vld [vmem:[#allocation2 + $0x6c] sm:$0xf]
      %s2766 = scalar_lea.vmem %s5, 384
      %v2767 = vld [vmem:[%s2766] sm:$0xf]
      %v2768 = vld [vmem:[%s2766 + $0x4] sm:$0xf]
      %v2769 = vld [vmem:[%s2766 + $0x8] sm:$0xf]
      %v2770 = vld [vmem:[%s2766 + $0xc] sm:$0xf]
      %v2771 = vld [vmem:[%s2766 + $0x10] sm:$0xf]
      %v2772 = vld [vmem:[%s2766 + $0x14] sm:$0xf]
      %v2773 = vld [vmem:[%s2766 + $0x18] sm:$0xf]
      %v2774 = vld [vmem:[%s2766 + $0x1c] sm:$0xf]
      %v2775 = vld [vmem:[%s2766 + $0x20] sm:$0xf]
      %v2776 = vld [vmem:[%s2766 + $0x24] sm:$0xf]
      %v2777 = vld [vmem:[%s2766 + $0x28] sm:$0xf]
      %v2778 = vld [vmem:[%s2766 + $0x2c] sm:$0xf]
      %v2779 = vld [vmem:[%s2766 + $0x30] sm:$0xf]
      %v2780 = vld [vmem:[%s2766 + $0x34] sm:$0xf]
      %v2781 = vld [vmem:[%s2766 + $0x38] sm:$0xf]
      %v2782 = vld [vmem:[%s2766 + $0x3c] sm:$0xf]
      %v2807 = vunpack.c.l.b16 %v2742
      %v2808 = vunpack.c.l.b16 %v2743
      %v2809 = vunpack.c.l.b16 %v2744
      %v2810 = vunpack.c.l.b16 %v2745
      %v2811 = vunpack.c.l.b16 %v2746
      %v2812 = vunpack.c.l.b16 %v2747
      %v2813 = vunpack.c.l.b16 %v2748
      %v2814 = vunpack.c.l.b16 %v2749
      %v2815 = vunpack.c.l.b16 %v2750
      %v2816 = vunpack.c.l.b16 %v2751
      %v2817 = vunpack.c.l.b16 %v2752
      %v2818 = vunpack.c.l.b16 %v2753
      %v2819 = vunpack.c.l.b16 %v2754
      %v2820 = vunpack.c.l.b16 %v2755
      %v2821 = vunpack.c.l.b16 %v2756
      %v2822 = vunpack.c.l.b16 %v2757
      %v2823 = vunpack.c.l.b16 %v2758
      %v2824 = vunpack.c.l.b16 %v2759
      %v2825 = vunpack.c.l.b16 %v2760
      %v2826 = vunpack.c.l.b16 %v2761
      %v2827 = vunpack.c.l.b16 %v2762
      %v2828 = vunpack.c.l.b16 %v2763
      %v2829 = vunpack.c.l.b16 %v2764
      %v2830 = vunpack.c.l.b16 %v2765
      %v2831 = vpack.c.b16 %v2808, %v2807
      %v2832 = vpack.c.b16 %v2810, %v2809
      %v2833 = vpack.c.b16 %v2812, %v2811
      %v2834 = vpack.c.b16 %v2814, %v2813
      %v2835 = vpack.c.b16 %v2816, %v2815
      %v2836 = vpack.c.b16 %v2818, %v2817
      %v2837 = vpack.c.b16 %v2820, %v2819
      %v2838 = vpack.c.b16 %v2822, %v2821
      %v2839 = vpack.c.b16 %v2824, %v2823
      %v2840 = vpack.c.b16 %v2826, %v2825
      %v2841 = vpack.c.b16 %v2828, %v2827
      %v2842 = vpack.c.b16 %v2830, %v2829
      %v2871 = vunpack.c.l.b16 %v2767
      %v2872 = vunpack.c.l.b16 %v2768
      %v2873 = vunpack.c.l.b16 %v2769
      %v2874 = vunpack.c.l.b16 %v2770
      %v2875 = vunpack.c.l.b16 %v2771
      %v2876 = vunpack.c.l.b16 %v2772
      %v2877 = vunpack.c.l.b16 %v2773
      %v2878 = vunpack.c.l.b16 %v2774
      %v2879 = vunpack.c.l.b16 %v2775
      %v2880 = vunpack.c.l.b16 %v2776
      %v2881 = vunpack.c.l.b16 %v2777
      %v2882 = vunpack.c.l.b16 %v2778
      %v2883 = vunpack.c.l.b16 %v2779
      %v2884 = vunpack.c.l.b16 %v2780
      %v2885 = vunpack.c.l.b16 %v2781
      %v2886 = vunpack.c.l.b16 %v2782
      %v2887 = vpack.c.b16 %v2872, %v2871
      %v2888 = vpack.c.b16 %v2874, %v2873
      %v2889 = vpack.c.b16 %v2876, %v2875
      %v2890 = vpack.c.b16 %v2878, %v2877
      %v2891 = vpack.c.b16 %v2880, %v2879
      %v2892 = vpack.c.b16 %v2882, %v2881
      %v2893 = vpack.c.b16 %v2884, %v2883
      %v2894 = vpack.c.b16 %v2886, %v2885
      %2903 = vmatprep.subr.bf16.mxu0 0
      %2904 = vmatpush1.bf16.msra.mxu0 %v2894
      %2905 = vmatprep.subr.bf16.mxu0 0
      %2906 = vmatpush1.bf16.msra.mxu0 %v2893
      %2907 = vmatprep.subr.bf16.mxu0 0
      %2908 = vmatpush1.bf16.msra.mxu0 %v2892
      %2909 = vmatprep.subr.bf16.mxu0 0
      %2910 = vmatpush1.bf16.msra.mxu0 %v2891
      %2911 = vmatprep.subr.bf16.mxu0 0
      %2912 = vmatpush1.bf16.msra.mxu0 %v2890
      %2913 = vmatprep.subr.bf16.mxu0 0
      %2914 = vmatpush1.bf16.msra.mxu0 %v2889
      %2915 = vmatprep.subr.bf16.mxu0 0
      %2916 = vmatpush1.bf16.msra.mxu0 %v2888
      %2917 = vmatprep.subr.bf16.mxu0 0
      %2918 = vmatpush1.bf16.msra.mxu0 %v2887
      %2919 = vmatprep.subr.bf16.mxu0 0
      %2920 = vmatpush2.bf16.msra.mxu0 0
      %2921 = vmatprep.subr.bf16.mxu0 0
      %2922 = vmatpush2.bf16.msra.mxu0 0
      %2923 = vmatprep.subr.bf16.mxu0 0
      %2924 = vmatpush2.bf16.msra.mxu0 0
      %2925 = vmatprep.subr.bf16.mxu0 0
      %2926 = vmatpush2.bf16.msra.mxu0 0
      %2927 = vmatprep.subr.bf16.mxu0 0
      %2928 = vmatpush2.bf16.msra.mxu0 0
      %2929 = vmatprep.subr.bf16.mxu0 0
      %2930 = vmatpush2.bf16.msra.mxu0 0
      %2931 = vmatprep.subr.bf16.mxu0 0
      %2932 = vmatpush2.bf16.msra.mxu0 0
      %2933 = vmatprep.subr.bf16.mxu0 0
      %2934 = vmatpush2.bf16.msra.mxu0 0
      %2935 = vmatprep.mubr.bf16.mxu0 0
      %2936 = vmatmul.mubr.bf16.gmra.mxu0 %v2831
      %v2937 = vpop.f32.mrf.mxu0
      %v2938 = vadd.f32 0.0, %v2937
      %v2939 = vpop.f32.mrf.mxu0
      %v2940 = vpop.f32.mrf.mxu0
      %v2941 = vadd.f32 0.0, %v2940
      %v2942 = vpop.f32.mrf.mxu0
      %2943 = vmatprep.mubr.bf16.mxu0 0
      %2944 = vmatmul.mubr.bf16.gmra.mxu0 %v2832
      %v2945 = vpop.f32.mrf.mxu0
      %v2946 = vadd.f32 0.0, %v2945
      %v2947 = vpop.f32.mrf.mxu0
      %v2948 = vpop.f32.mrf.mxu0
      %v2949 = vadd.f32 0.0, %v2948
      %v2950 = vpop.f32.mrf.mxu0
      %2951 = vmatprep.mubr.bf16.mxu0 0
      %2952 = vmatmul.mubr.bf16.gmra.mxu0 %v2833
      %v2953 = vpop.f32.mrf.mxu0
      %v2954 = vadd.f32 0.0, %v2953
      %v2955 = vpop.f32.mrf.mxu0
      %v2956 = vpop.f32.mrf.mxu0
      %v2957 = vadd.f32 0.0, %v2956
      %v2958 = vpop.f32.mrf.mxu0
      %2959 = vmatprep.mubr.bf16.mxu0 0
      %2960 = vmatmul.mubr.bf16.gmra.mxu0 %v2834
      %v2961 = vpop.f32.mrf.mxu0
      %v2962 = vadd.f32 0.0, %v2961
      %v2963 = vpop.f32.mrf.mxu0
      %v2964 = vpop.f32.mrf.mxu0
      %v2965 = vadd.f32 0.0, %v2964
      %v2966 = vpop.f32.mrf.mxu0
      %2967 = vmatprep.mubr.bf16.mxu0 0
      %2968 = vmatmul.mubr.bf16.gmra.mxu0 %v2835
      %v2969 = vpop.f32.mrf.mxu0
      %v2970 = vadd.f32 0.0, %v2969
      %v2971 = vpop.f32.mrf.mxu0
      %v2972 = vpop.f32.mrf.mxu0
      %v2973 = vadd.f32 0.0, %v2972
      %v2974 = vpop.f32.mrf.mxu0
      %2975 = vmatprep.mubr.bf16.mxu0 0
      %2976 = vmatmul.mubr.bf16.gmra.mxu0 %v2836
      %v2977 = vpop.f32.mrf.mxu0
      %v2978 = vadd.f32 0.0, %v2977
      %v2979 = vpop.f32.mrf.mxu0
      %v2980 = vpop.f32.mrf.mxu0
      %v2981 = vadd.f32 0.0, %v2980
      %v2982 = vpop.f32.mrf.mxu0
      %2983 = vmatprep.mubr.bf16.mxu0 0
      %2984 = vmatmul.mubr.bf16.gmra.mxu0 %v2837
      %v2985 = vpop.f32.mrf.mxu0
      %v2986 = vadd.f32 0.0, %v2985
      %v2987 = vpop.f32.mrf.mxu0
      %v2988 = vpop.f32.mrf.mxu0
      %v2989 = vadd.f32 0.0, %v2988
      %v2990 = vpop.f32.mrf.mxu0
      %2991 = vmatprep.mubr.bf16.mxu0 0
      %2992 = vmatmul.mubr.bf16.gmra.mxu0 %v2838
      %v2993 = vpop.f32.mrf.mxu0
      %v2994 = vadd.f32 0.0, %v2993
      %v2995 = vpop.f32.mrf.mxu0
      %v2996 = vpop.f32.mrf.mxu0
      %v2997 = vadd.f32 0.0, %v2996
      %v2998 = vpop.f32.mrf.mxu0
      %2999 = vmatprep.mubr.bf16.mxu0 0
      %3000 = vmatmul.mubr.bf16.gmra.mxu0 %v2839
      %v3001 = vpop.f32.mrf.mxu0
      %v3002 = vadd.f32 0.0, %v3001
      %v3003 = vpop.f32.mrf.mxu0
      %v3004 = vpop.f32.mrf.mxu0
      %v3005 = vadd.f32 0.0, %v3004
      %v3006 = vpop.f32.mrf.mxu0
      %3007 = vmatprep.mubr.bf16.mxu0 0
      %3008 = vmatmul.mubr.bf16.gmra.mxu0 %v2840
      %v3009 = vpop.f32.mrf.mxu0
      %v3010 = vadd.f32 0.0, %v3009
      %v3011 = vpop.f32.mrf.mxu0
      %v3012 = vpop.f32.mrf.mxu0
      %v3013 = vadd.f32 0.0, %v3012
      %v3014 = vpop.f32.mrf.mxu0
      %3015 = vmatprep.mubr.bf16.mxu0 0
      %3016 = vmatmul.mubr.bf16.gmra.mxu0 %v2841
      %v3017 = vpop.f32.mrf.mxu0
      %v3018 = vadd.f32 0.0, %v3017
      %v3019 = vpop.f32.mrf.mxu0
      %v3020 = vpop.f32.mrf.mxu0
      %v3021 = vadd.f32 0.0, %v3020
      %v3022 = vpop.f32.mrf.mxu0
      %3023 = vmatprep.mubr.bf16.mxu0 0
      %3024 = vmatmul.mubr.bf16.gmra.mxu0 %v2842
      %v3025 = vpop.f32.mrf.mxu0
      %v3026 = vadd.f32 0.0, %v3025
      %v3027 = vpop.f32.mrf.mxu0
      %v3028 = vpop.f32.mrf.mxu0
      %v3029 = vadd.f32 0.0, %v3028
      %v3030 = vpop.f32.mrf.mxu0
      %3031 = vdwg.mxu0
      %v3032 = vadd.f32 %v2718, %v2938
      %v3033 = vadd.f32 %v2719, %v2941
      %v3034 = vadd.f32 %v2720, %v2946
      %v3035 = vadd.f32 %v2721, %v2949
      %v3036 = vadd.f32 %v2722, %v2954
      %v3037 = vadd.f32 %v2723, %v2957
      %v3038 = vadd.f32 %v2724, %v2962
      %v3039 = vadd.f32 %v2725, %v2965
      %v3040 = vadd.f32 %v2726, %v2970
      %v3041 = vadd.f32 %v2727, %v2973
      %v3042 = vadd.f32 %v2728, %v2978
      %v3043 = vadd.f32 %v2729, %v2981
      %v3044 = vadd.f32 %v2730, %v2986
      %v3045 = vadd.f32 %v2731, %v2989
      %v3046 = vadd.f32 %v2732, %v2994
      %v3047 = vadd.f32 %v2733, %v2997
      %v3048 = vadd.f32 %v2734, %v3002
      %v3049 = vadd.f32 %v2735, %v3005
      %v3050 = vadd.f32 %v2736, %v3010
      %v3051 = vadd.f32 %v2737, %v3013
      %v3052 = vadd.f32 %v2738, %v3018
      %v3053 = vadd.f32 %v2739, %v3021
      %v3054 = vadd.f32 %v2740, %v3026
      %v3055 = vadd.f32 %v2741, %v3029
      %v3056 = vld [vmem:[#allocation2 + $0x10] sm:$0xf]
      %v3057 = vld [vmem:[#allocation2 + $0x14] sm:$0xf]
      %v3058 = vld [vmem:[#allocation2 + $0x18] sm:$0xf]
      %v3059 = vld [vmem:[#allocation2 + $0x1c] sm:$0xf]
      %v3060 = vld [vmem:[#allocation2 + $0x20] sm:$0xf]
      %v3061 = vld [vmem:[#allocation2 + $0x24] sm:$0xf]
      %v3062 = vld [vmem:[#allocation2 + $0x28] sm:$0xf]
      %v3063 = vld [vmem:[#allocation2 + $0x2c] sm:$0xf]
      %v3064 = vld [vmem:[#allocation2 + $0x30] sm:$0xf]
      %v3065 = vld [vmem:[#allocation2 + $0x34] sm:$0xf]
      %v3066 = vld [vmem:[#allocation2 + $0x38] sm:$0xf]
      %v3067 = vld [vmem:[#allocation2 + $0x3c] sm:$0xf]
      %v3068 = vld [vmem:[#allocation2 + $0x40] sm:$0xf]
      %v3069 = vld [vmem:[#allocation2 + $0x44] sm:$0xf]
      %v3070 = vld [vmem:[#allocation2 + $0x48] sm:$0xf]
      %v3071 = vld [vmem:[#allocation2 + $0x4c] sm:$0xf]
      %v3072 = vld [vmem:[#allocation2 + $0x50] sm:$0xf]
      %v3073 = vld [vmem:[#allocation2 + $0x54] sm:$0xf]
      %v3074 = vld [vmem:[#allocation2 + $0x58] sm:$0xf]
      %v3075 = vld [vmem:[#allocation2 + $0x5c] sm:$0xf]
      %v3076 = vld [vmem:[#allocation2 + $0x60] sm:$0xf]
      %v3077 = vld [vmem:[#allocation2 + $0x64] sm:$0xf]
      %v3078 = vld [vmem:[#allocation2 + $0x68] sm:$0xf]
      %v3079 = vld [vmem:[#allocation2 + $0x6c] sm:$0xf]
      %v3080 = vld [vmem:[#allocation2 + $0x70] sm:$0x1]
      %s3081 = scalar_lea.vmem %s5, 448
      %v3082 = vld [vmem:[%s3081] sm:$0xf]
      %v3083 = vld [vmem:[%s3081 + $0x4] sm:$0xf]
      %v3084 = vld [vmem:[%s3081 + $0x8] sm:$0xf]
      %v3085 = vld [vmem:[%s3081 + $0xc] sm:$0xf]
      %v3086 = vld [vmem:[%s3081 + $0x10] sm:$0xf]
      %v3087 = vld [vmem:[%s3081 + $0x14] sm:$0xf]
      %v3088 = vld [vmem:[%s3081 + $0x18] sm:$0xf]
      %v3089 = vld [vmem:[%s3081 + $0x1c] sm:$0xf]
      %v3090 = vld [vmem:[%s3081 + $0x20] sm:$0xf]
      %v3091 = vld [vmem:[%s3081 + $0x24] sm:$0xf]
      %v3092 = vld [vmem:[%s3081 + $0x28] sm:$0xf]
      %v3093 = vld [vmem:[%s3081 + $0x2c] sm:$0xf]
      %v3094 = vld [vmem:[%s3081 + $0x30] sm:$0xf]
      %v3095 = vld [vmem:[%s3081 + $0x34] sm:$0xf]
      %v3096 = vld [vmem:[%s3081 + $0x38] sm:$0xf]
      %v3097 = vld [vmem:[%s3081 + $0x3c] sm:$0xf]
      %v3123 = vunpack.c.l.b16 %v3056
      %v3124 = vunpack.c.l.b16 %v3057
      %v3125 = vunpack.c.l.b16 %v3058
      %v3126 = vunpack.c.l.b16 %v3059
      %v3127 = vunpack.c.l.b16 %v3060
      %v3128 = vunpack.c.l.b16 %v3061
      %v3129 = vunpack.c.l.b16 %v3062
      %v3130 = vunpack.c.l.b16 %v3063
      %v3131 = vunpack.c.l.b16 %v3064
      %v3132 = vunpack.c.l.b16 %v3065
      %v3133 = vunpack.c.l.b16 %v3066
      %v3134 = vunpack.c.l.b16 %v3067
      %v3135 = vunpack.c.l.b16 %v3068
      %v3136 = vunpack.c.l.b16 %v3069
      %v3137 = vunpack.c.l.b16 %v3070
      %v3138 = vunpack.c.l.b16 %v3071
      %v3139 = vunpack.c.l.b16 %v3072
      %v3140 = vunpack.c.l.b16 %v3073
      %v3141 = vunpack.c.l.b16 %v3074
      %v3142 = vunpack.c.l.b16 %v3075
      %v3143 = vunpack.c.l.b16 %v3076
      %v3144 = vunpack.c.l.b16 %v3077
      %v3145 = vunpack.c.l.b16 %v3078
      %v3146 = vunpack.c.l.b16 %v3079
      %v3147 = vunpack.c.l.b16 %v3080
      %v3148 = vpack.c.b16 %v3124, %v3123
      %v3149 = vpack.c.b16 %v3126, %v3125
      %v3150 = vpack.c.b16 %v3128, %v3127
      %v3151 = vpack.c.b16 %v3130, %v3129
      %v3152 = vpack.c.b16 %v3132, %v3131
      %v3153 = vpack.c.b16 %v3134, %v3133
      %v3154 = vpack.c.b16 %v3136, %v3135
      %v3155 = vpack.c.b16 %v3138, %v3137
      %v3156 = vpack.c.b16 %v3140, %v3139
      %v3157 = vpack.c.b16 %v3142, %v3141
      %v3158 = vpack.c.b16 %v3144, %v3143
      %v3159 = vpack.c.b16 %v3146, %v3145
      %v3160 = vpack.c.b16 %v3147, %v3147
      %v3162 = vshrl.u32 %v3148, 16
      %v3164 = vshll.u32 %v3148, 16
      %v3166 = vrot.slane %v3164, 1
      %v3167 = vor.u32 %v3162, %v3166
      %v3169 = vshll.u32 %v3149, 16
      %v3171 = vrot.slane %v3169, 1
      %v3172 = vsel %vm1012, %v3167, %v3171
      %v3173 = vshrl.u32 %v3149, 16
      %v3175 = vor.u32 %v3173, %v3171
      %v3177 = vshll.u32 %v3150, 16
      %v3179 = vrot.slane %v3177, 1
      %v3180 = vsel %vm1012, %v3175, %v3179
      %v3181 = vshrl.u32 %v3150, 16
      %v3183 = vor.u32 %v3181, %v3179
      %v3185 = vshll.u32 %v3151, 16
      %v3187 = vrot.slane %v3185, 1
      %v3188 = vsel %vm1012, %v3183, %v3187
      %v3189 = vshrl.u32 %v3151, 16
      %v3191 = vor.u32 %v3189, %v3187
      %v3193 = vshll.u32 %v3152, 16
      %v3195 = vrot.slane %v3193, 1
      %v3196 = vsel %vm1012, %v3191, %v3195
      %v3197 = vshrl.u32 %v3152, 16
      %v3199 = vor.u32 %v3197, %v3195
      %v3201 = vshll.u32 %v3153, 16
      %v3203 = vrot.slane %v3201, 1
      %v3204 = vsel %vm1012, %v3199, %v3203
      %v3205 = vshrl.u32 %v3153, 16
      %v3207 = vor.u32 %v3205, %v3203
      %v3209 = vshll.u32 %v3154, 16
      %v3211 = vrot.slane %v3209, 1
      %v3212 = vsel %vm1012, %v3207, %v3211
      %v3213 = vshrl.u32 %v3154, 16
      %v3215 = vor.u32 %v3213, %v3211
      %v3217 = vshll.u32 %v3155, 16
      %v3219 = vrot.slane %v3217, 1
      %v3220 = vsel %vm1012, %v3215, %v3219
      %v3221 = vshrl.u32 %v3155, 16
      %v3223 = vor.u32 %v3221, %v3219
      %v3225 = vshll.u32 %v3156, 16
      %v3227 = vrot.slane %v3225, 1
      %v3228 = vsel %vm1012, %v3223, %v3227
      %v3229 = vshrl.u32 %v3156, 16
      %v3231 = vor.u32 %v3229, %v3227
      %v3233 = vshll.u32 %v3157, 16
      %v3235 = vrot.slane %v3233, 1
      %v3236 = vsel %vm1012, %v3231, %v3235
      %v3237 = vshrl.u32 %v3157, 16
      %v3239 = vor.u32 %v3237, %v3235
      %v3241 = vshll.u32 %v3158, 16
      %v3243 = vrot.slane %v3241, 1
      %v3244 = vsel %vm1012, %v3239, %v3243
      %v3245 = vshrl.u32 %v3158, 16
      %v3247 = vor.u32 %v3245, %v3243
      %v3249 = vshll.u32 %v3159, 16
      %v3251 = vrot.slane %v3249, 1
      %v3252 = vsel %vm1012, %v3247, %v3251
      %v3253 = vshrl.u32 %v3159, 16
      %v3255 = vor.u32 %v3253, %v3251
      %v3257 = vshll.u32 %v3160, 16
      %v3259 = vrot.slane %v3257, 1
      %v3260 = vsel %vm1012, %v3255, %v3259
      %v3289 = vunpack.c.l.b16 %v3082
      %v3290 = vunpack.c.l.b16 %v3083
      %v3291 = vunpack.c.l.b16 %v3084
      %v3292 = vunpack.c.l.b16 %v3085
      %v3293 = vunpack.c.l.b16 %v3086
      %v3294 = vunpack.c.l.b16 %v3087
      %v3295 = vunpack.c.l.b16 %v3088
      %v3296 = vunpack.c.l.b16 %v3089
      %v3297 = vunpack.c.l.b16 %v3090
      %v3298 = vunpack.c.l.b16 %v3091
      %v3299 = vunpack.c.l.b16 %v3092
      %v3300 = vunpack.c.l.b16 %v3093
      %v3301 = vunpack.c.l.b16 %v3094
      %v3302 = vunpack.c.l.b16 %v3095
      %v3303 = vunpack.c.l.b16 %v3096
      %v3304 = vunpack.c.l.b16 %v3097
      %v3305 = vpack.c.b16 %v3290, %v3289
      %v3306 = vpack.c.b16 %v3292, %v3291
      %v3307 = vpack.c.b16 %v3294, %v3293
      %v3308 = vpack.c.b16 %v3296, %v3295
      %v3309 = vpack.c.b16 %v3298, %v3297
      %v3310 = vpack.c.b16 %v3300, %v3299
      %v3311 = vpack.c.b16 %v3302, %v3301
      %v3312 = vpack.c.b16 %v3304, %v3303
      %3321 = vmatprep.subr.bf16.mxu0 0
      %3322 = vmatpush1.bf16.msra.mxu0 %v3312
      %3323 = vmatprep.subr.bf16.mxu0 0
      %3324 = vmatpush1.bf16.msra.mxu0 %v3311
      %3325 = vmatprep.subr.bf16.mxu0 0
      %3326 = vmatpush1.bf16.msra.mxu0 %v3310
      %3327 = vmatprep.subr.bf16.mxu0 0
      %3328 = vmatpush1.bf16.msra.mxu0 %v3309
      %3329 = vmatprep.subr.bf16.mxu0 0
      %3330 = vmatpush1.bf16.msra.mxu0 %v3308
      %3331 = vmatprep.subr.bf16.mxu0 0
      %3332 = vmatpush1.bf16.msra.mxu0 %v3307
      %3333 = vmatprep.subr.bf16.mxu0 0
      %3334 = vmatpush1.bf16.msra.mxu0 %v3306
      %3335 = vmatprep.subr.bf16.mxu0 0
      %3336 = vmatpush1.bf16.msra.mxu0 %v3305
      %3337 = vmatprep.subr.bf16.mxu0 0
      %3338 = vmatpush2.bf16.msra.mxu0 0
      %3339 = vmatprep.subr.bf16.mxu0 0
      %3340 = vmatpush2.bf16.msra.mxu0 0
      %3341 = vmatprep.subr.bf16.mxu0 0
      %3342 = vmatpush2.bf16.msra.mxu0 0
      %3343 = vmatprep.subr.bf16.mxu0 0
      %3344 = vmatpush2.bf16.msra.mxu0 0
      %3345 = vmatprep.subr.bf16.mxu0 0
      %3346 = vmatpush2.bf16.msra.mxu0 0
      %3347 = vmatprep.subr.bf16.mxu0 0
      %3348 = vmatpush2.bf16.msra.mxu0 0
      %3349 = vmatprep.subr.bf16.mxu0 0
      %3350 = vmatpush2.bf16.msra.mxu0 0
      %3351 = vmatprep.subr.bf16.mxu0 0
      %3352 = vmatpush2.bf16.msra.mxu0 0
      %3353 = vmatprep.mubr.bf16.mxu0 0
      %3354 = vmatmul.mubr.bf16.gmra.mxu0 %v3172
      %v3355 = vpop.f32.mrf.mxu0
      %v3356 = vadd.f32 0.0, %v3355
      %v3357 = vpop.f32.mrf.mxu0
      %v3358 = vpop.f32.mrf.mxu0
      %v3359 = vadd.f32 0.0, %v3358
      %v3360 = vpop.f32.mrf.mxu0
      %3361 = vmatprep.mubr.bf16.mxu0 0
      %3362 = vmatmul.mubr.bf16.gmra.mxu0 %v3180
      %v3363 = vpop.f32.mrf.mxu0
      %v3364 = vadd.f32 0.0, %v3363
      %v3365 = vpop.f32.mrf.mxu0
      %v3366 = vpop.f32.mrf.mxu0
      %v3367 = vadd.f32 0.0, %v3366
      %v3368 = vpop.f32.mrf.mxu0
      %3369 = vmatprep.mubr.bf16.mxu0 0
      %3370 = vmatmul.mubr.bf16.gmra.mxu0 %v3188
      %v3371 = vpop.f32.mrf.mxu0
      %v3372 = vadd.f32 0.0, %v3371
      %v3373 = vpop.f32.mrf.mxu0
      %v3374 = vpop.f32.mrf.mxu0
      %v3375 = vadd.f32 0.0, %v3374
      %v3376 = vpop.f32.mrf.mxu0
      %3377 = vmatprep.mubr.bf16.mxu0 0
      %3378 = vmatmul.mubr.bf16.gmra.mxu0 %v3196
      %v3379 = vpop.f32.mrf.mxu0
      %v3380 = vadd.f32 0.0, %v3379
      %v3381 = vpop.f32.mrf.mxu0
      %v3382 = vpop.f32.mrf.mxu0
      %v3383 = vadd.f32 0.0, %v3382
      %v3384 = vpop.f32.mrf.mxu0
      %3385 = vmatprep.mubr.bf16.mxu0 0
      %3386 = vmatmul.mubr.bf16.gmra.mxu0 %v3204
      %v3387 = vpop.f32.mrf.mxu0
      %v3388 = vadd.f32 0.0, %v3387
      %v3389 = vpop.f32.mrf.mxu0
      %v3390 = vpop.f32.mrf.mxu0
      %v3391 = vadd.f32 0.0, %v3390
      %v3392 = vpop.f32.mrf.mxu0
      %3393 = vmatprep.mubr.bf16.mxu0 0
      %3394 = vmatmul.mubr.bf16.gmra.mxu0 %v3212
      %v3395 = vpop.f32.mrf.mxu0
      %v3396 = vadd.f32 0.0, %v3395
      %v3397 = vpop.f32.mrf.mxu0
      %v3398 = vpop.f32.mrf.mxu0
      %v3399 = vadd.f32 0.0, %v3398
      %v3400 = vpop.f32.mrf.mxu0
      %3401 = vmatprep.mubr.bf16.mxu0 0
      %3402 = vmatmul.mubr.bf16.gmra.mxu0 %v3220
      %v3403 = vpop.f32.mrf.mxu0
      %v3404 = vadd.f32 0.0, %v3403
      %v3405 = vpop.f32.mrf.mxu0
      %v3406 = vpop.f32.mrf.mxu0
      %v3407 = vadd.f32 0.0, %v3406
      %v3408 = vpop.f32.mrf.mxu0
      %3409 = vmatprep.mubr.bf16.mxu0 0
      %3410 = vmatmul.mubr.bf16.gmra.mxu0 %v3228
      %v3411 = vpop.f32.mrf.mxu0
      %v3412 = vadd.f32 0.0, %v3411
      %v3413 = vpop.f32.mrf.mxu0
      %v3414 = vpop.f32.mrf.mxu0
      %v3415 = vadd.f32 0.0, %v3414
      %v3416 = vpop.f32.mrf.mxu0
      %3417 = vmatprep.mubr.bf16.mxu0 0
      %3418 = vmatmul.mubr.bf16.gmra.mxu0 %v3236
      %v3419 = vpop.f32.mrf.mxu0
      %v3420 = vadd.f32 0.0, %v3419
      %v3421 = vpop.f32.mrf.mxu0
      %v3422 = vpop.f32.mrf.mxu0
      %v3423 = vadd.f32 0.0, %v3422
      %v3424 = vpop.f32.mrf.mxu0
      %3425 = vmatprep.mubr.bf16.mxu0 0
      %3426 = vmatmul.mubr.bf16.gmra.mxu0 %v3244
      %v3427 = vpop.f32.mrf.mxu0
      %v3428 = vadd.f32 0.0, %v3427
      %v3429 = vpop.f32.mrf.mxu0
      %v3430 = vpop.f32.mrf.mxu0
      %v3431 = vadd.f32 0.0, %v3430
      %v3432 = vpop.f32.mrf.mxu0
      %3433 = vmatprep.mubr.bf16.mxu0 0
      %3434 = vmatmul.mubr.bf16.gmra.mxu0 %v3252
      %v3435 = vpop.f32.mrf.mxu0
      %v3436 = vadd.f32 0.0, %v3435
      %v3437 = vpop.f32.mrf.mxu0
      %v3438 = vpop.f32.mrf.mxu0
      %v3439 = vadd.f32 0.0, %v3438
      %v3440 = vpop.f32.mrf.mxu0
      %3441 = vmatprep.mubr.bf16.mxu0 0
      %3442 = vmatmul.mubr.bf16.gmra.mxu0 %v3260
      %v3443 = vpop.f32.mrf.mxu0
      %v3444 = vadd.f32 0.0, %v3443
      %v3445 = vpop.f32.mrf.mxu0
      %v3446 = vpop.f32.mrf.mxu0
      %v3447 = vadd.f32 0.0, %v3446
      %v3448 = vpop.f32.mrf.mxu0
      %3449 = vdwg.mxu0
      %v3450 = vadd.f32 %v3032, %v3356
      %v3451 = vadd.f32 %v3033, %v3359
      %v3452 = vadd.f32 %v3034, %v3364
      %v3453 = vadd.f32 %v3035, %v3367
      %v3454 = vadd.f32 %v3036, %v3372
      %v3455 = vadd.f32 %v3037, %v3375
      %v3456 = vadd.f32 %v3038, %v3380
      %v3457 = vadd.f32 %v3039, %v3383
      %v3458 = vadd.f32 %v3040, %v3388
      %v3459 = vadd.f32 %v3041, %v3391
      %v3460 = vadd.f32 %v3042, %v3396
      %v3461 = vadd.f32 %v3043, %v3399
      %v3462 = vadd.f32 %v3044, %v3404
      %v3463 = vadd.f32 %v3045, %v3407
      %v3464 = vadd.f32 %v3046, %v3412
      %v3465 = vadd.f32 %v3047, %v3415
      %v3466 = vadd.f32 %v3048, %v3420
      %v3467 = vadd.f32 %v3049, %v3423
      %v3468 = vadd.f32 %v3050, %v3428
      %v3469 = vadd.f32 %v3051, %v3431
      %v3470 = vadd.f32 %v3052, %v3436
      %v3471 = vadd.f32 %v3053, %v3439
      %v3472 = vadd.f32 %v3054, %v3444
      %v3473 = vadd.f32 %v3055, %v3447
      %v3474 = vld [vmem:[#allocation2 + $0x10] sm:$0xe]
      %s3475 = scalar_lea.vmem %s5, 512
      %v3476 = vld [vmem:[%s3475] sm:$0xf]
      %v3477 = vld [vmem:[%s3475 + $0x4] sm:$0xf]
      %v3478 = vld [vmem:[%s3475 + $0x8] sm:$0xf]
      %v3479 = vld [vmem:[%s3475 + $0xc] sm:$0xf]
      %v3480 = vld [vmem:[%s3475 + $0x10] sm:$0xf]
      %v3481 = vld [vmem:[%s3475 + $0x14] sm:$0xf]
      %v3482 = vld [vmem:[%s3475 + $0x18] sm:$0xf]
      %v3483 = vld [vmem:[%s3475 + $0x1c] sm:$0xf]
      %v3484 = vld [vmem:[%s3475 + $0x20] sm:$0xf]
      %v3485 = vld [vmem:[%s3475 + $0x24] sm:$0xf]
      %v3486 = vld [vmem:[%s3475 + $0x28] sm:$0xf]
      %v3487 = vld [vmem:[%s3475 + $0x2c] sm:$0xf]
      %v3488 = vld [vmem:[%s3475 + $0x30] sm:$0xf]
      %v3489 = vld [vmem:[%s3475 + $0x34] sm:$0xf]
      %v3490 = vld [vmem:[%s3475 + $0x38] sm:$0xf]
      %v3491 = vld [vmem:[%s3475 + $0x3c] sm:$0xf]
      %v3493 = vunpack.c.l.b16 %v3474
      %v3494 = vpack.c.b16 %v3124, %v3493
      %v3495 = vrot.slane %v3494, 1
      %v3496 = vrot.slane %v3149, 1
      %v3497 = vsel %vm1512, %v3495, %v3496
      %v3498 = vrot.slane %v3150, 1
      %v3499 = vsel %vm1512, %v3496, %v3498
      %v3500 = vrot.slane %v3151, 1
      %v3501 = vsel %vm1512, %v3498, %v3500
      %v3502 = vrot.slane %v3152, 1
      %v3503 = vsel %vm1512, %v3500, %v3502
      %v3504 = vrot.slane %v3153, 1
      %v3505 = vsel %vm1512, %v3502, %v3504
      %v3506 = vrot.slane %v3154, 1
      %v3507 = vsel %vm1512, %v3504, %v3506
      %v3508 = vrot.slane %v3155, 1
      %v3509 = vsel %vm1512, %v3506, %v3508
      %v3510 = vrot.slane %v3156, 1
      %v3511 = vsel %vm1512, %v3508, %v3510
      %v3512 = vrot.slane %v3157, 1
      %v3513 = vsel %vm1512, %v3510, %v3512
      %v3514 = vrot.slane %v3158, 1
      %v3515 = vsel %vm1512, %v3512, %v3514
      %v3516 = vrot.slane %v3159, 1
      %v3517 = vsel %vm1512, %v3514, %v3516
      %v3518 = vrot.slane %v3160, 1
      %v3519 = vsel %vm1512, %v3516, %v3518
      %v3548 = vunpack.c.l.b16 %v3476
      %v3549 = vunpack.c.l.b16 %v3477
      %v3550 = vunpack.c.l.b16 %v3478
      %v3551 = vunpack.c.l.b16 %v3479
      %v3552 = vunpack.c.l.b16 %v3480
      %v3553 = vunpack.c.l.b16 %v3481
      %v3554 = vunpack.c.l.b16 %v3482
      %v3555 = vunpack.c.l.b16 %v3483
      %v3556 = vunpack.c.l.b16 %v3484
      %v3557 = vunpack.c.l.b16 %v3485
      %v3558 = vunpack.c.l.b16 %v3486
      %v3559 = vunpack.c.l.b16 %v3487
      %v3560 = vunpack.c.l.b16 %v3488
      %v3561 = vunpack.c.l.b16 %v3489
      %v3562 = vunpack.c.l.b16 %v3490
      %v3563 = vunpack.c.l.b16 %v3491
      %v3564 = vpack.c.b16 %v3549, %v3548
      %v3565 = vpack.c.b16 %v3551, %v3550
      %v3566 = vpack.c.b16 %v3553, %v3552
      %v3567 = vpack.c.b16 %v3555, %v3554
      %v3568 = vpack.c.b16 %v3557, %v3556
      %v3569 = vpack.c.b16 %v3559, %v3558
      %v3570 = vpack.c.b16 %v3561, %v3560
      %v3571 = vpack.c.b16 %v3563, %v3562
      %3580 = vmatprep.subr.bf16.mxu0 0
      %3581 = vmatpush1.bf16.msra.mxu0 %v3571
      %3582 = vmatprep.subr.bf16.mxu0 0
      %3583 = vmatpush1.bf16.msra.mxu0 %v3570
      %3584 = vmatprep.subr.bf16.mxu0 0
      %3585 = vmatpush1.bf16.msra.mxu0 %v3569
      %3586 = vmatprep.subr.bf16.mxu0 0
      %3587 = vmatpush1.bf16.msra.mxu0 %v3568
      %3588 = vmatprep.subr.bf16.mxu0 0
      %3589 = vmatpush1.bf16.msra.mxu0 %v3567
      %3590 = vmatprep.subr.bf16.mxu0 0
      %3591 = vmatpush1.bf16.msra.mxu0 %v3566
      %3592 = vmatprep.subr.bf16.mxu0 0
      %3593 = vmatpush1.bf16.msra.mxu0 %v3565
      %3594 = vmatprep.subr.bf16.mxu0 0
      %3595 = vmatpush1.bf16.msra.mxu0 %v3564
      %3596 = vmatprep.subr.bf16.mxu0 0
      %3597 = vmatpush2.bf16.msra.mxu0 0
      %3598 = vmatprep.subr.bf16.mxu0 0
      %3599 = vmatpush2.bf16.msra.mxu0 0
      %3600 = vmatprep.subr.bf16.mxu0 0
      %3601 = vmatpush2.bf16.msra.mxu0 0
      %3602 = vmatprep.subr.bf16.mxu0 0
      %3603 = vmatpush2.bf16.msra.mxu0 0
      %3604 = vmatprep.subr.bf16.mxu0 0
      %3605 = vmatpush2.bf16.msra.mxu0 0
      %3606 = vmatprep.subr.bf16.mxu0 0
      %3607 = vmatpush2.bf16.msra.mxu0 0
      %3608 = vmatprep.subr.bf16.mxu0 0
      %3609 = vmatpush2.bf16.msra.mxu0 0
      %3610 = vmatprep.subr.bf16.mxu0 0
      %3611 = vmatpush2.bf16.msra.mxu0 0
      %3612 = vmatprep.mubr.bf16.mxu0 0
      %3613 = vmatmul.mubr.bf16.gmra.mxu0 %v3497
      %v3614 = vpop.f32.mrf.mxu0
      %v3615 = vadd.f32 0.0, %v3614
      %v3616 = vpop.f32.mrf.mxu0
      %v3617 = vpop.f32.mrf.mxu0
      %v3618 = vadd.f32 0.0, %v3617
      %v3619 = vpop.f32.mrf.mxu0
      %3620 = vmatprep.mubr.bf16.mxu0 0
      %3621 = vmatmul.mubr.bf16.gmra.mxu0 %v3499
      %v3622 = vpop.f32.mrf.mxu0
      %v3623 = vadd.f32 0.0, %v3622
      %v3624 = vpop.f32.mrf.mxu0
      %v3625 = vpop.f32.mrf.mxu0
      %v3626 = vadd.f32 0.0, %v3625
      %v3627 = vpop.f32.mrf.mxu0
      %3628 = vmatprep.mubr.bf16.mxu0 0
      %3629 = vmatmul.mubr.bf16.gmra.mxu0 %v3501
      %v3630 = vpop.f32.mrf.mxu0
      %v3631 = vadd.f32 0.0, %v3630
      %v3632 = vpop.f32.mrf.mxu0
      %v3633 = vpop.f32.mrf.mxu0
      %v3634 = vadd.f32 0.0, %v3633
      %v3635 = vpop.f32.mrf.mxu0
      %3636 = vmatprep.mubr.bf16.mxu0 0
      %3637 = vmatmul.mubr.bf16.gmra.mxu0 %v3503
      %v3638 = vpop.f32.mrf.mxu0
      %v3639 = vadd.f32 0.0, %v3638
      %v3640 = vpop.f32.mrf.mxu0
      %v3641 = vpop.f32.mrf.mxu0
      %v3642 = vadd.f32 0.0, %v3641
      %v3643 = vpop.f32.mrf.mxu0
      %3644 = vmatprep.mubr.bf16.mxu0 0
      %3645 = vmatmul.mubr.bf16.gmra.mxu0 %v3505
      %v3646 = vpop.f32.mrf.mxu0
      %v3647 = vadd.f32 0.0, %v3646
      %v3648 = vpop.f32.mrf.mxu0
      %v3649 = vpop.f32.mrf.mxu0
      %v3650 = vadd.f32 0.0, %v3649
      %v3651 = vpop.f32.mrf.mxu0
      %3652 = vmatprep.mubr.bf16.mxu0 0
      %3653 = vmatmul.mubr.bf16.gmra.mxu0 %v3507
      %v3654 = vpop.f32.mrf.mxu0
      %v3655 = vadd.f32 0.0, %v3654
      %v3656 = vpop.f32.mrf.mxu0
      %v3657 = vpop.f32.mrf.mxu0
      %v3658 = vadd.f32 0.0, %v3657
      %v3659 = vpop.f32.mrf.mxu0
      %3660 = vmatprep.mubr.bf16.mxu0 0
      %3661 = vmatmul.mubr.bf16.gmra.mxu0 %v3509
      %v3662 = vpop.f32.mrf.mxu0
      %v3663 = vadd.f32 0.0, %v3662
      %v3664 = vpop.f32.mrf.mxu0
      %v3665 = vpop.f32.mrf.mxu0
      %v3666 = vadd.f32 0.0, %v3665
      %v3667 = vpop.f32.mrf.mxu0
      %3668 = vmatprep.mubr.bf16.mxu0 0
      %3669 = vmatmul.mubr.bf16.gmra.mxu0 %v3511
      %v3670 = vpop.f32.mrf.mxu0
      %v3671 = vadd.f32 0.0, %v3670
      %v3672 = vpop.f32.mrf.mxu0
      %v3673 = vpop.f32.mrf.mxu0
      %v3674 = vadd.f32 0.0, %v3673
      %v3675 = vpop.f32.mrf.mxu0
      %3676 = vmatprep.mubr.bf16.mxu0 0
      %3677 = vmatmul.mubr.bf16.gmra.mxu0 %v3513
      %v3678 = vpop.f32.mrf.mxu0
      %v3679 = vadd.f32 0.0, %v3678
      %v3680 = vpop.f32.mrf.mxu0
      %v3681 = vpop.f32.mrf.mxu0
      %v3682 = vadd.f32 0.0, %v3681
      %v3683 = vpop.f32.mrf.mxu0
      %3684 = vmatprep.mubr.bf16.mxu0 0
      %3685 = vmatmul.mubr.bf16.gmra.mxu0 %v3515
      %v3686 = vpop.f32.mrf.mxu0
      %v3687 = vadd.f32 0.0, %v3686
      %v3688 = vpop.f32.mrf.mxu0
      %v3689 = vpop.f32.mrf.mxu0
      %v3690 = vadd.f32 0.0, %v3689
      %v3691 = vpop.f32.mrf.mxu0
      %3692 = vmatprep.mubr.bf16.mxu0 0
      %3693 = vmatmul.mubr.bf16.gmra.mxu0 %v3517
      %v3694 = vpop.f32.mrf.mxu0
      %v3695 = vadd.f32 0.0, %v3694
      %v3696 = vpop.f32.mrf.mxu0
      %v3697 = vpop.f32.mrf.mxu0
      %v3698 = vadd.f32 0.0, %v3697
      %v3699 = vpop.f32.mrf.mxu0
      %3700 = vmatprep.mubr.bf16.mxu0 0
      %3701 = vmatmul.mubr.bf16.gmra.mxu0 %v3519
      %v3702 = vpop.f32.mrf.mxu0
      %v3703 = vadd.f32 0.0, %v3702
      %v3704 = vpop.f32.mrf.mxu0
      %v3705 = vpop.f32.mrf.mxu0
      %v3706 = vadd.f32 0.0, %v3705
      %v3707 = vpop.f32.mrf.mxu0
      %3708 = vdwg.mxu0
      %v3709 = vadd.f32 %v3450, %v3615
      %v3710 = vadd.f32 %v3451, %v3618
      %v3711 = vadd.f32 %v3452, %v3623
      %v3712 = vadd.f32 %v3453, %v3626
      %v3713 = vadd.f32 %v3454, %v3631
      %v3714 = vadd.f32 %v3455, %v3634
      %v3715 = vadd.f32 %v3456, %v3639
      %v3716 = vadd.f32 %v3457, %v3642
      %v3717 = vadd.f32 %v3458, %v3647
      %v3718 = vadd.f32 %v3459, %v3650
      %v3719 = vadd.f32 %v3460, %v3655
      %v3720 = vadd.f32 %v3461, %v3658
      %v3721 = vadd.f32 %v3462, %v3663
      %v3722 = vadd.f32 %v3463, %v3666
      %v3723 = vadd.f32 %v3464, %v3671
      %v3724 = vadd.f32 %v3465, %v3674
      %v3725 = vadd.f32 %v3466, %v3679
      %v3726 = vadd.f32 %v3467, %v3682
      %v3727 = vadd.f32 %v3468, %v3687
      %v3728 = vadd.f32 %v3469, %v3690
      %v3729 = vadd.f32 %v3470, %v3695
      %v3730 = vadd.f32 %v3471, %v3698
      %v3731 = vadd.f32 %v3472, %v3703
      %v3732 = vadd.f32 %v3473, %v3706
      %v3733 = vld [vmem:[%s6] sm:$0x1]
      %v3735 = vlaneseq
      %v3736 = vshrl.u32 %v3735, 7
      %v3737 = vsub.s32 0, %v3736
      %v3738 = vrot.slane %v3733, %v3737
      %v3740 = vadd.f32 %v3709, %v3738
      %v3741 = vadd.f32 %v3710, %v3738
      %v3742 = vadd.f32 %v3711, %v3738
      %v3743 = vadd.f32 %v3712, %v3738
      %v3744 = vadd.f32 %v3713, %v3738
      %v3745 = vadd.f32 %v3714, %v3738
      %v3746 = vadd.f32 %v3715, %v3738
      %v3747 = vadd.f32 %v3716, %v3738
      %v3748 = vadd.f32 %v3717, %v3738
      %v3749 = vadd.f32 %v3718, %v3738
      %v3750 = vadd.f32 %v3719, %v3738
      %v3751 = vadd.f32 %v3720, %v3738
      %v3752 = vadd.f32 %v3721, %v3738
      %v3753 = vadd.f32 %v3722, %v3738
      %v3754 = vadd.f32 %v3723, %v3738
      %v3755 = vadd.f32 %v3724, %v3738
      %v3756 = vadd.f32 %v3725, %v3738
      %v3757 = vadd.f32 %v3726, %v3738
      %v3758 = vadd.f32 %v3727, %v3738
      %v3759 = vadd.f32 %v3728, %v3738
      %v3760 = vadd.f32 %v3729, %v3738
      %v3761 = vadd.f32 %v3730, %v3738
      %v3762 = vadd.f32 %v3731, %v3738
      %v3763 = vadd.f32 %v3732, %v3738
      %v3764 = vpack.c.bf16 %v3741, %v3740
      %v3765 = vpack.c.bf16 %v3743, %v3742
      %v3766 = vpack.c.bf16 %v3745, %v3744
      %v3767 = vpack.c.bf16 %v3747, %v3746
      %v3768 = vpack.c.bf16 %v3749, %v3748
      %v3769 = vpack.c.bf16 %v3751, %v3750
      %v3770 = vpack.c.bf16 %v3753, %v3752
      %v3771 = vpack.c.bf16 %v3755, %v3754
      %v3772 = vpack.c.bf16 %v3757, %v3756
      %v3773 = vpack.c.bf16 %v3759, %v3758
      %v3774 = vpack.c.bf16 %v3761, %v3760
      %v3775 = vpack.c.bf16 %v3763, %v3762
      %v3788 = vunpack.c.l.b16 %v3764
      %v3789 = vunpack.c.h.b16 %v3764
      %v3790 = vunpack.c.l.b16 %v3765
      %v3791 = vunpack.c.h.b16 %v3765
      %v3792 = vunpack.c.l.b16 %v3766
      %v3793 = vunpack.c.h.b16 %v3766
      %v3794 = vunpack.c.l.b16 %v3767
      %v3795 = vunpack.c.h.b16 %v3767
      %v3796 = vunpack.c.l.b16 %v3768
      %v3797 = vunpack.c.h.b16 %v3768
      %v3798 = vunpack.c.l.b16 %v3769
      %v3799 = vunpack.c.h.b16 %v3769
      %v3800 = vunpack.c.l.b16 %v3770
      %v3801 = vunpack.c.h.b16 %v3770
      %v3802 = vunpack.c.l.b16 %v3771
      %v3803 = vunpack.c.h.b16 %v3771
      %v3804 = vunpack.c.l.b16 %v3772
      %v3805 = vunpack.c.h.b16 %v3772
      %v3806 = vunpack.c.l.b16 %v3773
      %v3807 = vunpack.c.h.b16 %v3773
      %v3808 = vunpack.c.l.b16 %v3774
      %v3809 = vunpack.c.h.b16 %v3774
      %v3810 = vunpack.c.l.b16 %v3775
      %v3811 = vunpack.c.h.b16 %v3775
      %v3812 = vpack.c.b16 %v3788, %v3788
      %v3813 = vpack.c.b16 %v3789, %v3789
      %v3814 = vpack.c.b16 %v3790, %v3790
      %v3815 = vpack.c.b16 %v3791, %v3791
      %v3816 = vpack.c.b16 %v3792, %v3792
      %v3817 = vpack.c.b16 %v3793, %v3793
      %v3818 = vpack.c.b16 %v3794, %v3794
      %v3819 = vpack.c.b16 %v3795, %v3795
      %v3820 = vpack.c.b16 %v3796, %v3796
      %v3821 = vpack.c.b16 %v3797, %v3797
      %v3822 = vpack.c.b16 %v3798, %v3798
      %v3823 = vpack.c.b16 %v3799, %v3799
      %v3824 = vpack.c.b16 %v3800, %v3800
      %v3825 = vpack.c.b16 %v3801, %v3801
      %v3826 = vpack.c.b16 %v3802, %v3802
      %v3827 = vpack.c.b16 %v3803, %v3803
      %v3828 = vpack.c.b16 %v3804, %v3804
      %v3829 = vpack.c.b16 %v3805, %v3805
      %v3830 = vpack.c.b16 %v3806, %v3806
      %v3831 = vpack.c.b16 %v3807, %v3807
      %v3832 = vpack.c.b16 %v3808, %v3808
      %v3833 = vpack.c.b16 %v3809, %v3809
      %v3834 = vpack.c.b16 %v3810, %v3810
      %v3835 = vpack.c.b16 %v3811, %v3811
      %3860 = vst [vmem:[%s502] sm:$0xf] %v3812
      %3861 = vst [vmem:[%s502 + $0x4] sm:$0xf] %v3813
      %3862 = vst [vmem:[%s502 + $0x8] sm:$0xf] %v3814
      %3863 = vst [vmem:[%s502 + $0xc] sm:$0xf] %v3815
      %3864 = vst [vmem:[%s502 + $0x10] sm:$0xf] %v3816
      %3865 = vst [vmem:[%s502 + $0x14] sm:$0xf] %v3817
      %3866 = vst [vmem:[%s502 + $0x18] sm:$0xf] %v3818
      %3867 = vst [vmem:[%s502 + $0x1c] sm:$0xf] %v3819
      %3868 = vst [vmem:[%s502 + $0x20] sm:$0xf] %v3820
      %3869 = vst [vmem:[%s502 + $0x24] sm:$0xf] %v3821
      %3870 = vst [vmem:[%s502 + $0x28] sm:$0xf] %v3822
      %3871 = vst [vmem:[%s502 + $0x2c] sm:$0xf] %v3823
      %3872 = vst [vmem:[%s502 + $0x30] sm:$0xf] %v3824
      %3873 = vst [vmem:[%s502 + $0x34] sm:$0xf] %v3825
      %3874 = vst [vmem:[%s502 + $0x38] sm:$0xf] %v3826
      %3875 = vst [vmem:[%s502 + $0x3c] sm:$0xf] %v3827
      %3876 = vst [vmem:[%s502 + $0x40] sm:$0xf] %v3828
      %3877 = vst [vmem:[%s502 + $0x44] sm:$0xf] %v3829
      %3878 = vst [vmem:[%s502 + $0x48] sm:$0xf] %v3830
      %3879 = vst [vmem:[%s502 + $0x4c] sm:$0xf] %v3831
      %3880 = vst [vmem:[%s502 + $0x50] sm:$0xf] %v3832
      %3881 = vst [vmem:[%s502 + $0x54] sm:$0xf] %v3833
      %3882 = vst [vmem:[%s502 + $0x58] sm:$0xf] %v3834
      %3883 = vst [vmem:[%s502 + $0x5c] sm:$0xf] %v3835
      %v3884 = vld [vmem:[%s7] sm:$0xff]
      %v3885 = vld [vmem:[%s7 + $0x8] sm:$0xff]
      %v3886 = vld [vmem:[%s7 + $0x10] sm:$0xff]
      %v3887 = vld [vmem:[%s7 + $0x18] sm:$0xff]
      %v3888 = vld [vmem:[%s7 + $0x20] sm:$0xff]
      %v3889 = vld [vmem:[%s7 + $0x28] sm:$0xff]
      %v3890 = vld [vmem:[%s7 + $0x30] sm:$0xff]
      %v3891 = vld [vmem:[%s7 + $0x38] sm:$0xff]
      %v3892 = vld [vmem:[%s7 + $0x40] sm:$0xff]
      %v3893 = vld [vmem:[%s7 + $0x48] sm:$0xff]
      %v3894 = vld [vmem:[%s7 + $0x50] sm:$0xff]
      %v3895 = vld [vmem:[%s7 + $0x58] sm:$0xff]
      %v3896 = vld [vmem:[%s7 + $0x60] sm:$0xff]
      %v3897 = vld [vmem:[%s7 + $0x68] sm:$0xff]
      %v3898 = vld [vmem:[%s7 + $0x70] sm:$0xff]
      %v3899 = vld [vmem:[%s7 + $0x78] sm:$0xff]
      %v3900 = vld [vmem:[%s7 + $0x80] sm:$0xff]
      %v3901 = vld [vmem:[%s7 + $0x88] sm:$0xff]
      %v3902 = vld [vmem:[%s7 + $0x90] sm:$0xff]
      %v3903 = vld [vmem:[%s7 + $0x98] sm:$0xff]
      %v3904 = vld [vmem:[%s7 + $0xa0] sm:$0xff]
      %v3905 = vld [vmem:[%s7 + $0xa8] sm:$0xff]
      %v3906 = vld [vmem:[%s7 + $0xb0] sm:$0xff]
      %v3907 = vld [vmem:[%s7 + $0xb8] sm:$0xff]
      %vm3908 = vcmp.gt.f32.partialorder %v3884, 0.5
      %vm3909 = vcmp.gt.f32.partialorder %v3885, 0.5
      %vm3910 = vcmp.gt.f32.partialorder %v3886, 0.5
      %vm3911 = vcmp.gt.f32.partialorder %v3887, 0.5
      %vm3912 = vcmp.gt.f32.partialorder %v3888, 0.5
      %vm3913 = vcmp.gt.f32.partialorder %v3889, 0.5
      %vm3914 = vcmp.gt.f32.partialorder %v3890, 0.5
      %vm3915 = vcmp.gt.f32.partialorder %v3891, 0.5
      %vm3916 = vcmp.gt.f32.partialorder %v3892, 0.5
      %vm3917 = vcmp.gt.f32.partialorder %v3893, 0.5
      %vm3918 = vcmp.gt.f32.partialorder %v3894, 0.5
      %vm3919 = vcmp.gt.f32.partialorder %v3895, 0.5
      %vm3920 = vcmp.gt.f32.partialorder %v3896, 0.5
      %vm3921 = vcmp.gt.f32.partialorder %v3897, 0.5
      %vm3922 = vcmp.gt.f32.partialorder %v3898, 0.5
      %vm3923 = vcmp.gt.f32.partialorder %v3899, 0.5
      %vm3924 = vcmp.gt.f32.partialorder %v3900, 0.5
      %vm3925 = vcmp.gt.f32.partialorder %v3901, 0.5
      %vm3926 = vcmp.gt.f32.partialorder %v3902, 0.5
      %vm3927 = vcmp.gt.f32.partialorder %v3903, 0.5
      %vm3928 = vcmp.gt.f32.partialorder %v3904, 0.5
      %vm3929 = vcmp.gt.f32.partialorder %v3905, 0.5
      %vm3930 = vcmp.gt.f32.partialorder %v3906, 0.5
      %vm3931 = vcmp.gt.f32.partialorder %v3907, 0.5
      %v3932 = vsel %vm3908, 1, 0
      %v3933 = vsel %vm3909, 1, 0
      %v3934 = vsel %vm3910, 1, 0
      %v3935 = vsel %vm3911, 1, 0
      %v3936 = vsel %vm3912, 1, 0
      %v3937 = vsel %vm3913, 1, 0
      %v3938 = vsel %vm3914, 1, 0
      %v3939 = vsel %vm3915, 1, 0
      %v3940 = vsel %vm3916, 1, 0
      %v3941 = vsel %vm3917, 1, 0
      %v3942 = vsel %vm3918, 1, 0
      %v3943 = vsel %vm3919, 1, 0
      %v3944 = vsel %vm3920, 1, 0
      %v3945 = vsel %vm3921, 1, 0
      %v3946 = vsel %vm3922, 1, 0
      %v3947 = vsel %vm3923, 1, 0
      %v3948 = vsel %vm3924, 1, 0
      %v3949 = vsel %vm3925, 1, 0
      %v3950 = vsel %vm3926, 1, 0
      %v3951 = vsel %vm3927, 1, 0
      %v3952 = vsel %vm3928, 1, 0
      %v3953 = vsel %vm3929, 1, 0
      %v3954 = vsel %vm3930, 1, 0
      %v3955 = vsel %vm3931, 1, 0
      %3956 = vset.pattern.permute.xlu0 0
      %3957 = vperm.xlu0 %3956, %v3932
      %v3958 = vpop.permute.xlu0 %3957
      %3959 = vset.pattern.permute.xlu0 0
      %3960 = vperm.xlu0 %3959, %v3933
      %v3961 = vpop.permute.xlu0 %3960
      %3962 = vset.pattern.permute.xlu0 0
      %3963 = vperm.xlu0 %3962, %v3934
      %v3964 = vpop.permute.xlu0 %3963
      %3965 = vset.pattern.permute.xlu0 0
      %3966 = vperm.xlu0 %3965, %v3935
      %v3967 = vpop.permute.xlu0 %3966
      %3968 = vset.pattern.permute.xlu0 0
      %3969 = vperm.xlu0 %3968, %v3936
      %v3970 = vpop.permute.xlu0 %3969
      %3971 = vset.pattern.permute.xlu0 0
      %3972 = vperm.xlu0 %3971, %v3937
      %v3973 = vpop.permute.xlu0 %3972
      %3974 = vset.pattern.permute.xlu0 0
      %3975 = vperm.xlu0 %3974, %v3938
      %v3976 = vpop.permute.xlu0 %3975
      %3977 = vset.pattern.permute.xlu0 0
      %3978 = vperm.xlu0 %3977, %v3939
      %v3979 = vpop.permute.xlu0 %3978
      %3980 = vset.pattern.permute.xlu0 0
      %3981 = vperm.xlu0 %3980, %v3940
      %v3982 = vpop.permute.xlu0 %3981
      %3983 = vset.pattern.permute.xlu0 0
      %3984 = vperm.xlu0 %3983, %v3941
      %v3985 = vpop.permute.xlu0 %3984
      %3986 = vset.pattern.permute.xlu0 0
      %3987 = vperm.xlu0 %3986, %v3942
      %v3988 = vpop.permute.xlu0 %3987
      %3989 = vset.pattern.permute.xlu0 0
      %3990 = vperm.xlu0 %3989, %v3943
      %v3991 = vpop.permute.xlu0 %3990
      %3992 = vset.pattern.permute.xlu0 0
      %3993 = vperm.xlu0 %3992, %v3944
      %v3994 = vpop.permute.xlu0 %3993
      %3995 = vset.pattern.permute.xlu0 0
      %3996 = vperm.xlu0 %3995, %v3945
      %v3997 = vpop.permute.xlu0 %3996
      %3998 = vset.pattern.permute.xlu0 0
      %3999 = vperm.xlu0 %3998, %v3946
      %v4000 = vpop.permute.xlu0 %3999
      %4001 = vset.pattern.permute.xlu0 0
      %4002 = vperm.xlu0 %4001, %v3947
      %v4003 = vpop.permute.xlu0 %4002
      %4004 = vset.pattern.permute.xlu0 0
      %4005 = vperm.xlu0 %4004, %v3948
      %v4006 = vpop.permute.xlu0 %4005
      %4007 = vset.pattern.permute.xlu0 0
      %4008 = vperm.xlu0 %4007, %v3949
      %v4009 = vpop.permute.xlu0 %4008
      %4010 = vset.pattern.permute.xlu0 0
      %4011 = vperm.xlu0 %4010, %v3950
      %v4012 = vpop.permute.xlu0 %4011
      %4013 = vset.pattern.permute.xlu0 0
      %4014 = vperm.xlu0 %4013, %v3951
      %v4015 = vpop.permute.xlu0 %4014
      %4016 = vset.pattern.permute.xlu0 0
      %4017 = vperm.xlu0 %4016, %v3952
      %v4018 = vpop.permute.xlu0 %4017
      %4019 = vset.pattern.permute.xlu0 0
      %4020 = vperm.xlu0 %4019, %v3953
      %v4021 = vpop.permute.xlu0 %4020
      %4022 = vset.pattern.permute.xlu0 0
      %4023 = vperm.xlu0 %4022, %v3954
      %v4024 = vpop.permute.xlu0 %4023
      %4025 = vset.pattern.permute.xlu0 0
      %4026 = vperm.xlu0 %4025, %v3955
      %v4027 = vpop.permute.xlu0 %4026
      %vm4028 = vcmp.eq.s32.totalorder %v3958, 1
      %vm4029 = vcmp.eq.s32.totalorder %v3961, 1
      %vm4030 = vcmp.eq.s32.totalorder %v3964, 1
      %vm4031 = vcmp.eq.s32.totalorder %v3967, 1
      %vm4032 = vcmp.eq.s32.totalorder %v3970, 1
      %vm4033 = vcmp.eq.s32.totalorder %v3973, 1
      %vm4034 = vcmp.eq.s32.totalorder %v3976, 1
      %vm4035 = vcmp.eq.s32.totalorder %v3979, 1
      %vm4036 = vcmp.eq.s32.totalorder %v3982, 1
      %vm4037 = vcmp.eq.s32.totalorder %v3985, 1
      %vm4038 = vcmp.eq.s32.totalorder %v3988, 1
      %vm4039 = vcmp.eq.s32.totalorder %v3991, 1
      %vm4040 = vcmp.eq.s32.totalorder %v3994, 1
      %vm4041 = vcmp.eq.s32.totalorder %v3997, 1
      %vm4042 = vcmp.eq.s32.totalorder %v4000, 1
      %vm4043 = vcmp.eq.s32.totalorder %v4003, 1
      %vm4044 = vcmp.eq.s32.totalorder %v4006, 1
      %vm4045 = vcmp.eq.s32.totalorder %v4009, 1
      %vm4046 = vcmp.eq.s32.totalorder %v4012, 1
      %vm4047 = vcmp.eq.s32.totalorder %v4015, 1
      %vm4048 = vcmp.eq.s32.totalorder %v4018, 1
      %vm4049 = vcmp.eq.s32.totalorder %v4021, 1
      %vm4050 = vcmp.eq.s32.totalorder %v4024, 1
      %vm4051 = vcmp.eq.s32.totalorder %v4027, 1
      %v4052 = vsel %vm4028, %v3740, 0.0
      %v4053 = vsel %vm4029, %v3741, 0.0
      %v4054 = vsel %vm4030, %v3742, 0.0
      %v4055 = vsel %vm4031, %v3743, 0.0
      %v4056 = vsel %vm4032, %v3744, 0.0
      %v4057 = vsel %vm4033, %v3745, 0.0
      %v4058 = vsel %vm4034, %v3746, 0.0
      %v4059 = vsel %vm4035, %v3747, 0.0
      %v4060 = vsel %vm4036, %v3748, 0.0
      %v4061 = vsel %vm4037, %v3749, 0.0
      %v4062 = vsel %vm4038, %v3750, 0.0
      %v4063 = vsel %vm4039, %v3751, 0.0
      %v4064 = vsel %vm4040, %v3752, 0.0
      %v4065 = vsel %vm4041, %v3753, 0.0
      %v4066 = vsel %vm4042, %v3754, 0.0
      %v4067 = vsel %vm4043, %v3755, 0.0
      %v4068 = vsel %vm4044, %v3756, 0.0
      %v4069 = vsel %vm4045, %v3757, 0.0
      %v4070 = vsel %vm4046, %v3758, 0.0
      %v4071 = vsel %vm4047, %v3759, 0.0
      %v4072 = vsel %vm4048, %v3760, 0.0
      %v4073 = vsel %vm4049, %v3761, 0.0
      %v4074 = vsel %vm4050, %v3762, 0.0
      %v4075 = vsel %vm4051, %v3763, 0.0
      %v4076 = vadd.f32 %v4052, %v4053
      %v4077 = vadd.f32 %v4076, %v4054
      %v4078 = vadd.f32 %v4077, %v4055
      %v4079 = vadd.f32 %v4078, %v4056
      %v4080 = vadd.f32 %v4079, %v4057
      %v4081 = vadd.f32 %v4080, %v4058
      %v4082 = vadd.f32 %v4081, %v4059
      %v4083 = vadd.f32 %v4082, %v4060
      %v4084 = vadd.f32 %v4083, %v4061
      %v4085 = vadd.f32 %v4084, %v4062
      %v4086 = vadd.f32 %v4085, %v4063
      %v4087 = vadd.f32 %v4086, %v4064
      %v4088 = vadd.f32 %v4087, %v4065
      %v4089 = vadd.f32 %v4088, %v4066
      %v4090 = vadd.f32 %v4089, %v4067
      %v4091 = vadd.f32 %v4090, %v4068
      %v4092 = vadd.f32 %v4091, %v4069
      %v4093 = vadd.f32 %v4092, %v4070
      %v4094 = vadd.f32 %v4093, %v4071
      %v4095 = vadd.f32 %v4094, %v4072
      %v4096 = vadd.f32 %v4095, %v4073
      %v4097 = vadd.f32 %v4096, %v4074
      %v4098 = vadd.f32 %v4097, %v4075
      %v4099 = vrot.slane %v4098, 4
      %v4100 = vadd.f32 %v4098, %v4099
      %v4101 = vrot.slane %v4100, 2
      %v4102 = vadd.f32 %v4100, %v4101
      %v4103 = vrot.slane %v4102, 1
      %v4104 = vadd.f32 %v4102, %v4103
      %4105 = vst [vmem:[%s510] sm:$0x1] %v4104
      %v4106 = vmul.f32 %v4052, %v4052
      %v4107 = vmul.f32 %v4053, %v4053
      %v4108 = vmul.f32 %v4054, %v4054
      %v4109 = vmul.f32 %v4055, %v4055
      %v4110 = vmul.f32 %v4056, %v4056
      %v4111 = vmul.f32 %v4057, %v4057
      %v4112 = vmul.f32 %v4058, %v4058
      %v4113 = vmul.f32 %v4059, %v4059
      %v4114 = vmul.f32 %v4060, %v4060
      %v4115 = vmul.f32 %v4061, %v4061
      %v4116 = vmul.f32 %v4062, %v4062
      %v4117 = vmul.f32 %v4063, %v4063
      %v4118 = vmul.f32 %v4064, %v4064
      %v4119 = vmul.f32 %v4065, %v4065
      %v4120 = vmul.f32 %v4066, %v4066
      %v4121 = vmul.f32 %v4067, %v4067
      %v4122 = vmul.f32 %v4068, %v4068
      %v4123 = vmul.f32 %v4069, %v4069
      %v4124 = vmul.f32 %v4070, %v4070
      %v4125 = vmul.f32 %v4071, %v4071
      %v4126 = vmul.f32 %v4072, %v4072
      %v4127 = vmul.f32 %v4073, %v4073
      %v4128 = vmul.f32 %v4074, %v4074
      %v4129 = vmul.f32 %v4075, %v4075
      %v4130 = vadd.f32 %v4106, %v4107
      %v4131 = vadd.f32 %v4130, %v4108
      %v4132 = vadd.f32 %v4131, %v4109
      %v4133 = vadd.f32 %v4132, %v4110
      %v4134 = vadd.f32 %v4133, %v4111
      %v4135 = vadd.f32 %v4134, %v4112
      %v4136 = vadd.f32 %v4135, %v4113
      %v4137 = vadd.f32 %v4136, %v4114
      %v4138 = vadd.f32 %v4137, %v4115
      %v4139 = vadd.f32 %v4138, %v4116
      %v4140 = vadd.f32 %v4139, %v4117
      %v4141 = vadd.f32 %v4140, %v4118
      %v4142 = vadd.f32 %v4141, %v4119
      %v4143 = vadd.f32 %v4142, %v4120
      %v4144 = vadd.f32 %v4143, %v4121
      %v4145 = vadd.f32 %v4144, %v4122
      %v4146 = vadd.f32 %v4145, %v4123
      %v4147 = vadd.f32 %v4146, %v4124
      %v4148 = vadd.f32 %v4147, %v4125
      %v4149 = vadd.f32 %v4148, %v4126
      %v4150 = vadd.f32 %v4149, %v4127
      %v4151 = vadd.f32 %v4150, %v4128
      %v4152 = vadd.f32 %v4151, %v4129
      %v4153 = vrot.slane %v4152, 4
      %v4154 = vadd.f32 %v4152, %v4153
      %v4155 = vrot.slane %v4154, 2
      %v4156 = vadd.f32 %v4154, %v4155
      %v4157 = vrot.slane %v4156, 1
      %v4158 = vadd.f32 %v4156, %v4157
      %4159 = vst [vmem:[%s510 + $0x1] sm:$0x1] %v4158
      %s4160 = smul.u32 24, %s26
      %p4161 = scmp.lt.s32.totalorder %s25, 1
      %s4162 = scalar_select %p4161, %s25, 1
      %p4163 = scmp.lt.s32.totalorder %s4160, 23
      %s4164 = scalar_select %p4163, %s4160, 23
      %s4165 = smul.addr %s4162, 24
      %s4166 = sadd.s32 %s4164, %s4165
      %s4167 = smul.addr %s4166, 4
      %s4168 = scalar_lea.vmem %s8, %s4167
      %p4169 = scmp.lt.s32.totalorder %s25, 1
      %s4170 = scalar_select %p4169, %s25, 1
      %p4171 = scmp.lt.s32.totalorder %s26, 0
      %s4172 = scalar_select %p4171, %s26, 0
      %s4173 = sadd.s32 %s4172, %s4170
      %s4174 = smul.addr %s4173, 2
      %s4175 = scalar_lea.vmem %s9, %s4174
      // Predicated region
      $region53: #{conv_block2d.5} parent=51 // pred_check
        %p4176 = pneg %p250
      $region54: #{conv_block2d.5} parent=51 // pred_check_branch
        %4178 = sbr.rel (%p4176) target = $region56
      $region55: #{conv_block2d.5} parent=51 // pred_region
        %s4179 = smul.u32 24, %s26
      $region56: #{conv_block2d.5} parent=51 // pred_fallthru
        _
      // Predicated region
      $region57: #{conv_block2d.5} parent=51 // pred_check
        %p4180 = pneg %p278
      $region58: #{conv_block2d.5} parent=51 // pred_check_branch
        %4182 = sbr.rel (%p4180) target = $region60
      $region59: #{conv_block2d.5} parent=51 // pred_region
        _
      $region60: #{conv_block2d.5} parent=51 // pred_fallthru
        _
    $region52: #{conv_block2d.5} parent=5 // pred_fallthru
      _
    %p4183 = scmp.le.s32.totalorder 2, %s16
    // Predicated region
    $region61: #{conv_block2d.5} parent=5 // pred_check
      %p4184 = pneg %p4183
    $region62: #{conv_block2d.5} parent=5 // pred_check_branch
      %4186 = sbr.rel (%p4184) target = $region64
    $region63: #{conv_block2d.5} parent=5 // pred_region
      %s4187 = ssub.s32 %s16, 2
      // Predicated region
      $region65: #{conv_block2d.5} parent=63 // pred_check
        %p4188 = pneg %p256
      $region66: #{conv_block2d.5} parent=63 // pred_check_branch
        %4190 = sbr.rel (%p4188) target = $region68
      $region67: #{conv_block2d.5} parent=63 // pred_region
        %s4191 = smul.u32 24, %s28
        %p4192 = scmp.lt.s32.totalorder %s27, 1
        %s4193 = scalar_select %p4192, %s27, 1
        %p4194 = scmp.lt.s32.totalorder %s4191, 23
        %s4195 = scalar_select %p4194, %s4191, 23
        %s4196 = smul.addr %s4193, 24
        %s4197 = sadd.s32 %s4195, %s4196
        %s4198 = smul.addr %s4197, 4
        %s4199 = scalar_lea.vmem %s8, %s4198
      $region68: #{conv_block2d.5} parent=63 // pred_fallthru
        _
      // Predicated region
      $region69: #{conv_block2d.5} parent=63 // pred_check
        %p4200 = pneg %p284
      $region70: #{conv_block2d.5} parent=63 // pred_check_branch
        %4202 = sbr.rel (%p4200) target = $region72
      $region71: #{conv_block2d.5} parent=63 // pred_region
        %p4203 = scmp.lt.s32.totalorder %s27, 1
        %s4204 = scalar_select %p4203, %s27, 1
        %p4205 = scmp.lt.s32.totalorder %s28, 0
        %s4206 = scalar_select %p4205, %s28, 0
        %s4207 = sadd.s32 %s4206, %s4204
        %s4208 = smul.addr %s4207, 2
        %s4209 = scalar_lea.vmem %s9, %s4208
      $region72: #{conv_block2d.5} parent=63 // pred_fallthru
        _
    $region64: #{conv_block2d.5} parent=5 // pred_fallthru
      _
  $region6: #{conv_block2d.5} parent=0 // loop_footer
    %s20 = sadd.s32 1, %s16
  $region7: #{conv_block2d.5} parent=0 // loop_footer_branch
    %15 = sbr.rel target = $region3
  $region8: #{conv_block2d.5} parent=0 // loop_exit
    _

</llo_original>
